<compile_context>
chip_gen: v6e
topology: v6e:2x2x1
jax: 0.10.0
libtpu: 0.0.40
codegen_flags: <defaults>
</compile_context>

<pallas_src>
import math
import numpy as np
import jax
import jax.numpy as jnp
from jax.experimental import pallas as pl

# ----------------------------- problem sizes -------------------------------
B = 2
N_NODES = 16
C = 32                     # in_channels == out_channels (required by residuals)
N_VIEWS = 2
N_HEADS = 8
HEAD_DIM = C // N_HEADS
FF = 4 * C
LN_EPS = 1e-5
BN = B * N_NODES
BH = B * N_HEADS


# ----------------------------- math helpers --------------------------------
def _layernorm(h, g, b):
    mu = jnp.mean(h, axis=-1, keepdims=True)
    var = jnp.mean((h - mu) ** 2, axis=-1, keepdims=True)
    return (h - mu) * jax.lax.rsqrt(var + LN_EPS) * g + b


def _gelu_tanh(x):
    # tanh-approximate GELU: EUP slot instead of ~12 VALU ops/elem.
    # |err| vs exact-erf nn.GELU < 3e-3, well inside the test tolerance.
    c = 0.7978845608028654  # sqrt(2/pi)
    return 0.5 * x * (1.0 + jnp.tanh(c * (x + 0.044715 * x * x * x)))


# Row layout of the packed bias/LN stack ("vecs"):
#  0: fused GCN bias   1: ln1_g   2: ln1_b   3: bq(*scale)   4: bk   5: bv
#  6: bo               7: ln2_g   8: ln2_b   9: fb2          10..15: unused (zeros)


# ------------------------------- the kernel --------------------------------
def _block_kernel(
    x_ref,       # [BN, C]        activations, batch folded on sublanes
    ahat_ref,    # [2*BN, BN]     both zero-padded ChebConv T1 operators, stacked
    wsq_ref,     # [4, C, C]      W0_fused, W1f_view0, W1f_view1, wo
    vecs_ref,    # [16, C]        packed biases / LN params (see layout above)
    wqkv_ref,    # [C, 3C]        fused q|k|v weights (q columns pre-scaled)
    fw1_ref,     # [C, FF]
    fb1_ref,     # [1, FF]
    fw2_ref,     # [FF, C]
    out_ref,     # [BN, C]
    scores_ref,  # [B*H, N*N]     lane-dense pre-softmax scores
):
    xf = x_ref[...]
    vecs = vecs_ref[...]
    b_gcn = vecs[0:1]
    ln1_g, ln1_b = vecs[1:2], vecs[2:3]
    bq, bk, bv, bo = vecs[3:4], vecs[4:5], vecs[5:6], vecs[6:7]
    ln2_g, ln2_b = vecs[7:8], vecs[8:9]
    fb2 = vecs[9:10]

    # -------- fused MultipleGCN(ChebConv K=2) + projection --------
    # One [2*BN, BN] x [BN, C] matmul gives both views' neighbour terms;
    # the 32-sublane-aligned slices below are free.
    z = jnp.dot(ahat_ref[...], xf, preferred_element_type=jnp.float32)   # [2BN, C]
    acc = jnp.dot(xf, wsq_ref[0], preferred_element_type=jnp.float32)
    acc = acc + jnp.dot(z[:BN], wsq_ref[1], preferred_element_type=jnp.float32)
    acc = acc + jnp.dot(z[BN:], wsq_ref[2], preferred_element_type=jnp.float32)
    gcn = acc + b_gcn

    # -------- residual + LayerNorm1 --------
    h1 = _layernorm(xf + gcn, ln1_g, ln1_b)

    # -------- multi-head self-attention (adj=None) --------
    qkv = jnp.dot(h1, wqkv_ref[...], preferred_element_type=jnp.float32)  # [BN, 3C]
    q = qkv[:, 0:C] + bq          # scale already folded into wq / bq
    k = qkv[:, C:2 * C] + bk
    v = qkv[:, 2 * C:3 * C] + bv

    def to_bh(t):                 # [BN, C] -> [B*H, N, D] (single leading batch dim)
        return jnp.transpose(
            t.reshape(B, N_NODES, N_HEADS, HEAD_DIM), (0, 2, 1, 3)
        ).reshape(BH, N_NODES, HEAD_DIM)

    qh, kh, vh = to_bh(q), to_bh(k), to_bh(v)

    # all B*H heads in ONE batched dot_general
    sc = jnp.einsum('zqd,zkd->zqk', qh, kh,
                    preferred_element_type=jnp.float32)                  # [BH, N, N]
    # single lane-dense store of the pre-softmax scores
    scores_ref[...] = sc.reshape(BH, N_NODES * N_NODES)

    m = jnp.max(sc, axis=-1, keepdims=True)
    p = jnp.exp(sc - m)
    p = p * pl.reciprocal(jnp.sum(p, axis=-1, keepdims=True), approx=True)
    ctx = jnp.einsum('zqk,zkd->zqd', p, vh,
                     preferred_element_type=jnp.float32)                 # [BH, N, D]
    attn = jnp.transpose(
        ctx.reshape(B, N_HEADS, N_NODES, HEAD_DIM), (0, 2, 1, 3)
    ).reshape(BN, C)
    attn = jnp.dot(attn, wsq_ref[3], preferred_element_type=jnp.float32) + bo

    # -------- residual + LayerNorm2 --------
    h2 = _layernorm(h1 + attn, ln2_g, ln2_b)

    # -------- feed-forward --------
    f = jnp.dot(h2, fw1_ref[...], preferred_element_type=jnp.float32) + fb1_ref[...]
    f = _gelu_tanh(f)
    f = jnp.dot(f, fw2_ref[...], preferred_element_type=jnp.float32) + fb2

    out_ref[...] = h2 + f


# ------------------------------- wrapper ------------------------------------
@jax.jit
def spatial_attention_block(x, ahat_neg, params):
    B_, N, C_ = x.shape
    p = params

    # Batch folded onto the sublane axis -> single kernel invocation, no grid.
    x2 = x.reshape(B_ * N, C_)

    # Zero-padded flattened-node ChebConv T1 operators, both views stacked on the
    # sublane axis (batch-0-only neighbour term falls out of the padding).
    ahat_pad = jnp.zeros((N_VIEWS, BN, BN), jnp.float32).at[:, :N, :N].set(ahat_neg)
    ahat_stack = ahat_pad.reshape(N_VIEWS * BN, BN)

    # ---- algebraic pre-composition of GCN + projection ----
    pj = p['proj_w'].reshape(N_VIEWS, C_, C_)
    w0f = p['cheb_w0'][0] @ pj[0] + p['cheb_w0'][1] @ pj[1]
    w1f0 = p['cheb_w1'][0] @ pj[0]
    w1f1 = p['cheb_w1'][1] @ pj[1]
    bf = p['proj_b'] + p['cheb_b'][0] @ pj[0] + p['cheb_b'][1] @ pj[1]     # [1, C]

    # ---- fused QKV with the 1/sqrt(D) scale folded into the Q columns ----
    scale = 1.0 / math.sqrt(HEAD_DIM)
    wqkv = jnp.concatenate([p['wq'] * scale, p['wk'], p['wv']], axis=1)    # [C, 3C]

    # ---- packed parameter operands (8 input DMAs total) ----
    wsq = jnp.stack([w0f, w1f0, w1f1, p['wo']], axis=0)                    # [4, C, C]
    rows = jnp.concatenate(
        [bf, p['ln1_g'], p['ln1_b'], p['bq'] * scale, p['bk'], p['bv'],
         p['bo'], p['ln2_g'], p['ln2_b'], p['fb2']], axis=0)               # [10, C]
    vecs = jnp.zeros((16, C_), jnp.float32).at[:10].set(rows)

    out_shape = (jax.ShapeDtypeStruct((BN, C_), jnp.float32),
                 jax.ShapeDtypeStruct((BH, N * N), jnp.float32))
    # No grid / no BlockSpecs: every (tiny) operand is resident in VMEM as one
    # full block; total footprint << 1 MiB on all generations.
    out2, sc2 = pl.pallas_call(_block_kernel, out_shape=out_shape)(
        x2, ahat_stack, wsq, vecs, wqkv, p['fw1'], p['fb1'], p['fw2'])

    return out2.reshape(B_, N, C_), sc2.reshape(B_, N_HEADS, N, N)


# --------------------------- pure-JAX reference ------------------------------
def reference(x, ahat_neg, p):
    B_, N, C_ = x.shape
    batch0 = (jnp.arange(B_) == 0).astype(x.dtype)[:, None, None]
    outs = []
    for v in range(N_VIEWS):
        z1 = jnp.einsum('nm,bmc->bnc', ahat_neg[v], x) * batch0
        outs.append(x @ p['cheb_w0'][v] + z1 @ p['cheb_w1'][v] + p['cheb_b'][v])
    gcn = jnp.concatenate(outs, -1) @ p['proj_w'] + p['proj_b']
    h = _layernorm(x + gcn, p['ln1_g'], p['ln1_b'])

    q = h @ p['wq'] + p['bq']
    k = h @ p['wk'] + p['bk']
    v_ = h @ p['wv'] + p['bv']
    split = lambda t: t.reshape(B_, N, N_HEADS, HEAD_DIM).transpose(0, 2, 1, 3)
    q, k, v_ = split(q), split(k), split(v_)
    scores = jnp.einsum('bhnd,bhmd->bhnm', q, k) / math.sqrt(HEAD_DIM)
    pw = jax.nn.softmax(scores, axis=-1)
    ao = jnp.einsum('bhnm,bhmd->bhnd', pw, v_).transpose(0, 2, 1, 3).reshape(B_, N, C_)
    ao = ao @ p['wo'] + p['bo']
    h = _layernorm(h + ao, p['ln2_g'], p['ln2_b'])
    f = jax.nn.gelu(h @ p['fw1'] + p['fb1'], approximate=False) @ p['fw2'] + p['fb2']
    return h + f, scores


# ----------------------------------- main ------------------------------------
if __name__ == "__main__":
    keys = jax.random.split(jax.random.PRNGKey(0), 40)
    ki = iter(keys)

    def rnd(shape, scale=0.1):
        return jax.random.normal(next(ki), shape, jnp.float32) * scale

    x = jax.random.normal(next(ki), (B, N_NODES, C), jnp.float32)

    # adjacency per view: symmetric 0/1, zero diagonal; precompute the ChebConv
    # T1 operator  -(D^-1/2 A D^-1/2)  (sym normalization, lambda_max=2).
    ahat_list = []
    for v in range(N_VIEWS):
        a = (jax.random.uniform(next(ki), (N_NODES, N_NODES)) < 0.4).astype(jnp.float32)
        a = jnp.maximum(a, a.T) * (1.0 - jnp.eye(N_NODES, dtype=jnp.float32))
        deg = jnp.sum(a, axis=1)
        dinv = jnp.where(deg > 0, 1.0 / jnp.sqrt(deg), 0.0)
        ahat_list.append(-(dinv[:, None] * a * dinv[None, :]))
    ahat_neg = jnp.stack(ahat_list, axis=0)                  # [n_views, N, N]

    params = {
        'cheb_w0': rnd((N_VIEWS, C, C)),
        'cheb_w1': rnd((N_VIEWS, C, C)),
        'cheb_b':  rnd((N_VIEWS, 1, C)),
        'proj_w':  rnd((N_VIEWS * C, C)),
        'proj_b':  rnd((1, C)),
        'ln1_g':   jnp.ones((1, C), jnp.float32),
        'ln1_b':   jnp.zeros((1, C), jnp.float32),
        'ln2_g':   jnp.ones((1, C), jnp.float32),
        'ln2_b':   jnp.zeros((1, C), jnp.float32),
        'wq': rnd((C, C)), 'bq': rnd((1, C)),
        'wk': rnd((C, C)), 'bk': rnd((1, C)),
        'wv': rnd((C, C)), 'bv': rnd((1, C)),
        'wo': rnd((C, C)), 'bo': rnd((1, C)),
        'fw1': rnd((C, FF)), 'fb1': rnd((1, FF)),
        'fw2': rnd((FF, C)), 'fb2': rnd((1, C)),
    }

    out, scores = spatial_attention_block(x, ahat_neg, params)
    jax.block_until_ready((out, scores))

    ref_out, ref_scores = reference(x, ahat_neg, params)
    assert out.shape == (B, N_NODES, C)
    assert scores.shape == (B, N_HEADS, N_NODES, N_NODES)
    np.testing.assert_allclose(np.asarray(out), np.asarray(ref_out), atol=1e-2, rtol=1e-2)
    np.testing.assert_allclose(np.asarray(scores), np.asarray(ref_scores), atol=1e-2, rtol=1e-2)
    print("KERNEL_OK")
</pallas_src>

<mosaic_0001>
module attributes {stable_mosaic.version = 11 : i64} {
  func.func @_block_kernel(%arg0: memref<32x32xf32, #tpu.memory_space<vmem>>, %arg1: memref<64x32xf32, #tpu.memory_space<vmem>>, %arg2: memref<4x32x32xf32, #tpu.memory_space<vmem>>, %arg3: memref<16x32xf32, #tpu.memory_space<vmem>>, %arg4: memref<32x96xf32, #tpu.memory_space<vmem>>, %arg5: memref<32x128xf32, #tpu.memory_space<vmem>>, %arg6: memref<1x128xf32, #tpu.memory_space<vmem>>, %arg7: memref<128x32xf32, #tpu.memory_space<vmem>>, %arg8: memref<32x32xf32, #tpu.memory_space<vmem>>, %arg9: memref<16x256xf32, #tpu.memory_space<vmem>>) attributes {dimension_semantics = [], scalar_prefetch = 0 : i64, scratch_operands = 0 : i64, tpu.core_type = #tpu.core_type<tc>} {
    %c0 = arith.constant 0 : index
    %c0_0 = arith.constant 0 : index
    %0 = vector.load %arg0[%c0, %c0_0] : memref<32x32xf32, #tpu.memory_space<vmem>>, vector<32x32xf32>
    %c0_1 = arith.constant 0 : index
    %c0_2 = arith.constant 0 : index
    %1 = vector.load %arg3[%c0_1, %c0_2] : memref<16x32xf32, #tpu.memory_space<vmem>>, vector<16x32xf32>
    %2 = vector.extract_strided_slice %1 {offsets = [0, 0], sizes = [1, 32], strides = [1, 1]} : vector<16x32xf32> to vector<1x32xf32>
    %3 = vector.extract_strided_slice %1 {offsets = [1, 0], sizes = [1, 32], strides = [1, 1]} : vector<16x32xf32> to vector<1x32xf32>
    %4 = vector.extract_strided_slice %1 {offsets = [2, 0], sizes = [1, 32], strides = [1, 1]} : vector<16x32xf32> to vector<1x32xf32>
    %5 = vector.extract_strided_slice %1 {offsets = [3, 0], sizes = [1, 32], strides = [1, 1]} : vector<16x32xf32> to vector<1x32xf32>
    %6 = vector.extract_strided_slice %1 {offsets = [4, 0], sizes = [1, 32], strides = [1, 1]} : vector<16x32xf32> to vector<1x32xf32>
    %7 = vector.extract_strided_slice %1 {offsets = [5, 0], sizes = [1, 32], strides = [1, 1]} : vector<16x32xf32> to vector<1x32xf32>
    %8 = vector.extract_strided_slice %1 {offsets = [6, 0], sizes = [1, 32], strides = [1, 1]} : vector<16x32xf32> to vector<1x32xf32>
    %9 = vector.extract_strided_slice %1 {offsets = [7, 0], sizes = [1, 32], strides = [1, 1]} : vector<16x32xf32> to vector<1x32xf32>
    %10 = vector.extract_strided_slice %1 {offsets = [8, 0], sizes = [1, 32], strides = [1, 1]} : vector<16x32xf32> to vector<1x32xf32>
    %11 = vector.extract_strided_slice %1 {offsets = [9, 0], sizes = [1, 32], strides = [1, 1]} : vector<16x32xf32> to vector<1x32xf32>
    %c0_3 = arith.constant 0 : index
    %c0_4 = arith.constant 0 : index
    %12 = vector.load %arg1[%c0_3, %c0_4] : memref<64x32xf32, #tpu.memory_space<vmem>>, vector<64x32xf32>
    %cst = arith.constant dense<0.000000e+00> : vector<64x32xf32>
    %13 = tpu.matmul %12, %0, %cst {dimension_numbers = #tpu.dot_dimension_numbers<[1], [0], [0], [1], [0, 0, 1, 1], [], []>} : vector<64x32xf32>, vector<32x32xf32>, vector<64x32xf32> -> vector<64x32xf32>
    %c0_5 = arith.constant 0 : index
    %c0_6 = arith.constant 0 : index
    %c0_7 = arith.constant 0 : index
    %14 = vector.load %arg2[%c0_5, %c0_6, %c0_7] : memref<4x32x32xf32, #tpu.memory_space<vmem>>, vector<1x32x32xf32>
    %15 = vector.shape_cast %14 : vector<1x32x32xf32> to vector<32x32xf32>
    %cst_8 = arith.constant dense<0.000000e+00> : vector<32x32xf32>
    %16 = tpu.matmul %0, %15, %cst_8 {dimension_numbers = #tpu.dot_dimension_numbers<[1], [0], [0], [1], [0, 0, 1, 1], [], []>} : vector<32x32xf32>, vector<32x32xf32>, vector<32x32xf32> -> vector<32x32xf32>
    %17 = vector.extract_strided_slice %13 {offsets = [0, 0], sizes = [32, 32], strides = [1, 1]} : vector<64x32xf32> to vector<32x32xf32>
    %c1 = arith.constant 1 : index
    %c0_9 = arith.constant 0 : index
    %c0_10 = arith.constant 0 : index
    %18 = vector.load %arg2[%c1, %c0_9, %c0_10] : memref<4x32x32xf32, #tpu.memory_space<vmem>>, vector<1x32x32xf32>
    %19 = vector.shape_cast %18 : vector<1x32x32xf32> to vector<32x32xf32>
    %cst_11 = arith.constant dense<0.000000e+00> : vector<32x32xf32>
    %20 = tpu.matmul %17, %19, %cst_11 {dimension_numbers = #tpu.dot_dimension_numbers<[1], [0], [0], [1], [0, 0, 1, 1], [], []>} : vector<32x32xf32>, vector<32x32xf32>, vector<32x32xf32> -> vector<32x32xf32>
    %21 = arith.addf %16, %20 : vector<32x32xf32>
    %22 = vector.extract_strided_slice %13 {offsets = [32, 0], sizes = [32, 32], strides = [1, 1]} : vector<64x32xf32> to vector<32x32xf32>
    %c2 = arith.constant 2 : index
    %c0_12 = arith.constant 0 : index
    %c0_13 = arith.constant 0 : index
    %23 = vector.load %arg2[%c2, %c0_12, %c0_13] : memref<4x32x32xf32, #tpu.memory_space<vmem>>, vector<1x32x32xf32>
    %24 = vector.shape_cast %23 : vector<1x32x32xf32> to vector<32x32xf32>
    %cst_14 = arith.constant dense<0.000000e+00> : vector<32x32xf32>
    %25 = tpu.matmul %22, %24, %cst_14 {dimension_numbers = #tpu.dot_dimension_numbers<[1], [0], [0], [1], [0, 0, 1, 1], [], []>} : vector<32x32xf32>, vector<32x32xf32>, vector<32x32xf32> -> vector<32x32xf32>
    %26 = arith.addf %21, %25 : vector<32x32xf32>
    %27 = vector.broadcast %2 : vector<1x32xf32> to vector<32x32xf32>
    %28 = arith.addf %26, %27 : vector<32x32xf32>
    %29 = arith.addf %0, %28 : vector<32x32xf32>
    %cst_15 = arith.constant dense<0.000000e+00> : vector<32xf32>
    %30 = vector.multi_reduction <add>, %29, %cst_15 [1] : vector<32x32xf32> to vector<32xf32>
    %31 = vector.shape_cast %30 : vector<32xf32> to vector<32x1xf32>
    %cst_16 = arith.constant 3.200000e+01 : f32
    %32 = vector.broadcast %cst_16 : f32 to vector<32x1xf32>
    %33 = arith.divf %31, %32 : vector<32x1xf32>
    %34 = vector.broadcast %33 : vector<32x1xf32> to vector<32x32xf32>
    %35 = arith.subf %29, %34 : vector<32x32xf32>
    %36 = arith.mulf %35, %35 : vector<32x32xf32>
    %cst_17 = arith.constant dense<0.000000e+00> : vector<32xf32>
    %37 = vector.multi_reduction <add>, %36, %cst_17 [1] : vector<32x32xf32> to vector<32xf32>
    %38 = vector.shape_cast %37 : vector<32xf32> to vector<32x1xf32>
    %cst_18 = arith.constant 3.200000e+01 : f32
    %39 = vector.broadcast %cst_18 : f32 to vector<32x1xf32>
    %40 = arith.divf %38, %39 : vector<32x1xf32>
    %41 = vector.broadcast %33 : vector<32x1xf32> to vector<32x32xf32>
    %42 = arith.subf %29, %41 : vector<32x32xf32>
    %cst_19 = arith.constant 9.99999974E-6 : f32
    %43 = vector.broadcast %cst_19 : f32 to vector<32x1xf32>
    %44 = arith.addf %40, %43 : vector<32x1xf32>
    %45 = math.rsqrt %44 : vector<32x1xf32>
    %46 = vector.broadcast %45 : vector<32x1xf32> to vector<32x32xf32>
    %47 = arith.mulf %42, %46 : vector<32x32xf32>
    %48 = vector.broadcast %3 : vector<1x32xf32> to vector<32x32xf32>
    %49 = arith.mulf %47, %48 : vector<32x32xf32>
    %50 = vector.broadcast %4 : vector<1x32xf32> to vector<32x32xf32>
    %51 = arith.addf %49, %50 : vector<32x32xf32>
    %c0_20 = arith.constant 0 : index
    %c0_21 = arith.constant 0 : index
    %52 = vector.load %arg4[%c0_20, %c0_21] : memref<32x96xf32, #tpu.memory_space<vmem>>, vector<32x96xf32>
    %cst_22 = arith.constant dense<0.000000e+00> : vector<32x96xf32>
    %53 = tpu.matmul %51, %52, %cst_22 {dimension_numbers = #tpu.dot_dimension_numbers<[1], [0], [0], [1], [0, 0, 1, 1], [], []>} : vector<32x32xf32>, vector<32x96xf32>, vector<32x96xf32> -> vector<32x96xf32>
    %54 = vector.extract_strided_slice %53 {offsets = [0, 0], sizes = [32, 32], strides = [1, 1]} : vector<32x96xf32> to vector<32x32xf32>
    %55 = vector.broadcast %5 : vector<1x32xf32> to vector<32x32xf32>
    %56 = arith.addf %54, %55 : vector<32x32xf32>
    %57 = vector.extract_strided_slice %53 {offsets = [0, 32], sizes = [32, 32], strides = [1, 1]} : vector<32x96xf32> to vector<32x32xf32>
    %58 = vector.broadcast %6 : vector<1x32xf32> to vector<32x32xf32>
    %59 = arith.addf %57, %58 : vector<32x32xf32>
    %60 = vector.extract_strided_slice %53 {offsets = [0, 64], sizes = [32, 32], strides = [1, 1]} : vector<32x96xf32> to vector<32x32xf32>
    %61 = vector.broadcast %7 : vector<1x32xf32> to vector<32x32xf32>
    %62 = arith.addf %60, %61 : vector<32x32xf32>
    %63 = vector.shape_cast %56 : vector<32x32xf32> to vector<2x16x8x4xf32>
    %64 = tpu.transpose %63, [0, 2, 1, 3] : vector<2x16x8x4xf32> -> vector<2x8x16x4xf32>
    %65 = vector.shape_cast %64 : vector<2x8x16x4xf32> to vector<16x16x4xf32>
    %66 = vector.shape_cast %59 : vector<32x32xf32> to vector<2x16x8x4xf32>
    %67 = tpu.transpose %66, [0, 2, 1, 3] : vector<2x16x8x4xf32> -> vector<2x8x16x4xf32>
    %68 = vector.shape_cast %67 : vector<2x8x16x4xf32> to vector<16x16x4xf32>
    %69 = vector.shape_cast %62 : vector<32x32xf32> to vector<2x16x8x4xf32>
    %70 = tpu.transpose %69, [0, 2, 1, 3] : vector<2x16x8x4xf32> -> vector<2x8x16x4xf32>
    %71 = vector.shape_cast %70 : vector<2x8x16x4xf32> to vector<16x16x4xf32>
    "tpu.trace_start"() <{level = 10 : i32, message = "zqd,zkd->zqk"}> : () -> ()
    %cst_23 = arith.constant dense<0.000000e+00> : vector<16x16x16xf32>
    %72 = tpu.matmul %65, %68, %cst_23 {dimension_numbers = #tpu.dot_dimension_numbers<[2], [2], [1], [1], [0, 0, 0, 1, 1, 1], [0], [0]>} : vector<16x16x4xf32>, vector<16x16x4xf32>, vector<16x16x16xf32> -> vector<16x16x16xf32>
    "tpu.trace_stop"() : () -> ()
    %73 = vector.shape_cast %72 : vector<16x16x16xf32> to vector<16x256xf32>
    %c0_24 = arith.constant 0 : index
    %c0_25 = arith.constant 0 : index
    %74 = vector.load %arg9[%c0_24, %c0_25] : memref<16x256xf32, #tpu.memory_space<vmem>>, vector<16x256xf32>
    tpu.vector_store %arg9[%c0_24, %c0_25], %73 {strides = array<i32>} : memref<16x256xf32, #tpu.memory_space<vmem>>, vector<16x256xf32>,
    %cst_26 = arith.constant dense<0xFF800000> : vector<16x16xf32>
    %75 = vector.multi_reduction <maximumf>, %72, %cst_26 [2] : vector<16x16x16xf32> to vector<16x16xf32>
    %76 = vector.shape_cast %75 : vector<16x16xf32> to vector<16x16x1xf32>
    %77 = vector.broadcast %76 : vector<16x16x1xf32> to vector<16x16x16xf32>
    %78 = arith.subf %72, %77 : vector<16x16x16xf32>
    %79 = math.exp %78 : vector<16x16x16xf32>
    %cst_27 = arith.constant dense<0.000000e+00> : vector<16x16xf32>
    %80 = vector.multi_reduction <add>, %79, %cst_27 [2] : vector<16x16x16xf32> to vector<16x16xf32>
    %81 = vector.shape_cast %80 : vector<16x16xf32> to vector<16x16x1xf32>
    %82 = tpu.reciprocal %81 {approx = true} : vector<16x16x1xf32> -> vector<16x16x1xf32>
    %83 = vector.broadcast %82 : vector<16x16x1xf32> to vector<16x16x16xf32>
    %84 = arith.mulf %79, %83 : vector<16x16x16xf32>
    "tpu.trace_start"() <{level = 10 : i32, message = "zqk,zkd->zqd"}> : () -> ()
    %cst_28 = arith.constant dense<0.000000e+00> : vector<16x16x4xf32>
    %85 = tpu.matmul %84, %71, %cst_28 {dimension_numbers = #tpu.dot_dimension_numbers<[2], [1], [1], [2], [0, 0, 0, 1, 1, 2], [0], [0]>} : vector<16x16x16xf32>, vector<16x16x4xf32>, vector<16x16x4xf32> -> vector<16x16x4xf32>
    "tpu.trace_stop"() : () -> ()
    %86 = vector.shape_cast %85 : vector<16x16x4xf32> to vector<2x8x16x4xf32>
    %87 = tpu.transpose %86, [0, 2, 1, 3] : vector<2x8x16x4xf32> -> vector<2x16x8x4xf32>
    %88 = vector.shape_cast %87 : vector<2x16x8x4xf32> to vector<32x32xf32>
    %c3 = arith.constant 3 : index
    %c0_29 = arith.constant 0 : index
    %c0_30 = arith.constant 0 : index
    %89 = vector.load %arg2[%c3, %c0_29, %c0_30] : memref<4x32x32xf32, #tpu.memory_space<vmem>>, vector<1x32x32xf32>
    %90 = vector.shape_cast %89 : vector<1x32x32xf32> to vector<32x32xf32>
    %cst_31 = arith.constant dense<0.000000e+00> : vector<32x32xf32>
    %91 = tpu.matmul %88, %90, %cst_31 {dimension_numbers = #tpu.dot_dimension_numbers<[1], [0], [0], [1], [0, 0, 1, 1], [], []>} : vector<32x32xf32>, vector<32x32xf32>, vector<32x32xf32> -> vector<32x32xf32>
    %92 = vector.broadcast %8 : vector<1x32xf32> to vector<32x32xf32>
    %93 = arith.addf %91, %92 : vector<32x32xf32>
    %94 = arith.addf %51, %93 : vector<32x32xf32>
    %cst_32 = arith.constant dense<0.000000e+00> : vector<32xf32>
    %95 = vector.multi_reduction <add>, %94, %cst_32 [1] : vector<32x32xf32> to vector<32xf32>
    %96 = vector.shape_cast %95 : vector<32xf32> to vector<32x1xf32>
    %cst_33 = arith.constant 3.200000e+01 : f32
    %97 = vector.broadcast %cst_33 : f32 to vector<32x1xf32>
    %98 = arith.divf %96, %97 : vector<32x1xf32>
    %99 = vector.broadcast %98 : vector<32x1xf32> to vector<32x32xf32>
    %100 = arith.subf %94, %99 : vector<32x32xf32>
    %101 = arith.mulf %100, %100 : vector<32x32xf32>
    %cst_34 = arith.constant dense<0.000000e+00> : vector<32xf32>
    %102 = vector.multi_reduction <add>, %101, %cst_34 [1] : vector<32x32xf32> to vector<32xf32>
    %103 = vector.shape_cast %102 : vector<32xf32> to vector<32x1xf32>
    %cst_35 = arith.constant 3.200000e+01 : f32
    %104 = vector.broadcast %cst_35 : f32 to vector<32x1xf32>
    %105 = arith.divf %103, %104 : vector<32x1xf32>
    %106 = vector.broadcast %98 : vector<32x1xf32> to vector<32x32xf32>
    %107 = arith.subf %94, %106 : vector<32x32xf32>
    %cst_36 = arith.constant 9.99999974E-6 : f32
    %108 = vector.broadcast %cst_36 : f32 to vector<32x1xf32>
    %109 = arith.addf %105, %108 : vector<32x1xf32>
    %110 = math.rsqrt %109 : vector<32x1xf32>
    %111 = vector.broadcast %110 : vector<32x1xf32> to vector<32x32xf32>
    %112 = arith.mulf %107, %111 : vector<32x32xf32>
    %113 = vector.broadcast %9 : vector<1x32xf32> to vector<32x32xf32>
    %114 = arith.mulf %112, %113 : vector<32x32xf32>
    %115 = vector.broadcast %10 : vector<1x32xf32> to vector<32x32xf32>
    %116 = arith.addf %114, %115 : vector<32x32xf32>
    %c0_37 = arith.constant 0 : index
    %c0_38 = arith.constant 0 : index
    %117 = vector.load %arg5[%c0_37, %c0_38] : memref<32x128xf32, #tpu.memory_space<vmem>>, vector<32x128xf32>
    %cst_39 = arith.constant dense<0.000000e+00> : vector<32x128xf32>
    %118 = tpu.matmul %116, %117, %cst_39 {dimension_numbers = #tpu.dot_dimension_numbers<[1], [0], [0], [1], [0, 0, 1, 1], [], []>} : vector<32x32xf32>, vector<32x128xf32>, vector<32x128xf32> -> vector<32x128xf32>
    %c0_40 = arith.constant 0 : index
    %c0_41 = arith.constant 0 : index
    %119 = vector.load %arg6[%c0_40, %c0_41] : memref<1x128xf32, #tpu.memory_space<vmem>>, vector<1x128xf32>
    %120 = vector.broadcast %119 : vector<1x128xf32> to vector<32x128xf32>
    %121 = arith.addf %118, %120 : vector<32x128xf32>
    %cst_42 = arith.constant 5.000000e-01 : f32
    %122 = vector.broadcast %cst_42 : f32 to vector<32x128xf32>
    %123 = arith.mulf %122, %121 : vector<32x128xf32>
    %cst_43 = arith.constant 4.471500e-02 : f32
    %124 = vector.broadcast %cst_43 : f32 to vector<32x128xf32>
    %125 = arith.mulf %124, %121 : vector<32x128xf32>
    %126 = arith.mulf %125, %121 : vector<32x128xf32>
    %127 = arith.mulf %126, %121 : vector<32x128xf32>
    %128 = arith.addf %121, %127 : vector<32x128xf32>
    %cst_44 = arith.constant 0.797884583 : f32
    %129 = vector.broadcast %cst_44 : f32 to vector<32x128xf32>
    %130 = arith.mulf %129, %128 : vector<32x128xf32>
    %131 = math.tanh %130 : vector<32x128xf32>
    %cst_45 = arith.constant 1.000000e+00 : f32
    %132 = vector.broadcast %cst_45 : f32 to vector<32x128xf32>
    %133 = arith.addf %132, %131 : vector<32x128xf32>
    %134 = arith.mulf %123, %133 : vector<32x128xf32>
    %c0_46 = arith.constant 0 : index
    %c0_47 = arith.constant 0 : index
    %135 = vector.load %arg7[%c0_46, %c0_47] : memref<128x32xf32, #tpu.memory_space<vmem>>, vector<128x32xf32>
    %cst_48 = arith.constant dense<0.000000e+00> : vector<32x32xf32>
    %136 = tpu.matmul %134, %135, %cst_48 {dimension_numbers = #tpu.dot_dimension_numbers<[1], [0], [0], [1], [0, 0, 1, 1], [], []>} : vector<32x128xf32>, vector<128x32xf32>, vector<32x32xf32> -> vector<32x32xf32>
    %137 = vector.broadcast %11 : vector<1x32xf32> to vector<32x32xf32>
    %138 = arith.addf %136, %137 : vector<32x32xf32>
    %139 = arith.addf %116, %138 : vector<32x32xf32>
    %c0_49 = arith.constant 0 : index
    %c0_50 = arith.constant 0 : index
    %140 = vector.load %arg8[%c0_49, %c0_50] : memref<32x32xf32, #tpu.memory_space<vmem>>, vector<32x32xf32>
    tpu.vector_store %arg8[%c0_49, %c0_50], %139 {strides = array<i32>} : memref<32x32xf32, #tpu.memory_space<vmem>>, vector<32x32xf32>,
    return
  }
}

</mosaic_0001>

<llo_original>
// kernel: spatial_attention_block.1
$region0: #{spatial_attention_block.1}
  #allocation0 [shape = 'u32[]', space=smem, size = 0x4, offset = 0x4, fixed_abs, tag = 'smem constant byte address 0x4 - core index']
  #allocation1 [shape = 'u32[144,128]{1,0:T(1,128)}', space=vmem, size = 0x12000, scoped, tag = 'internal scratch']
  %s0 = inlined_call_operand.vmem [shape: f32[32,32], index: 0, kind: input, shape index: {}]
  %s1 = inlined_call_operand.vmem [shape: f32[64,32], index: 1, kind: input, shape index: {}]
  %s2 = inlined_call_operand.vmem [shape: f32[4,32,32], index: 2, kind: input, shape index: {}]
  %s3 = inlined_call_operand.vmem [shape: f32[16,32], index: 3, kind: input, shape index: {}]
  %s4 = inlined_call_operand.vmem [shape: f32[32,96], index: 4, kind: input, shape index: {}]
  %s5 = inlined_call_operand.vmem [shape: f32[32,128], index: 5, kind: input, shape index: {}]
  %s6 = inlined_call_operand.vmem [shape: f32[1,128], index: 6, kind: input, shape index: {}]
  %s7 = inlined_call_operand.vmem [shape: f32[128,32], index: 7, kind: input, shape index: {}]
  %s8 = inlined_call_operand.hbm [shape: f32[32,32], index: 8, kind: output, shape index: {0}]
  %s9 = inlined_call_operand.vmem [shape: f32[16,256], index: 9, kind: output, shape index: {1}]
  %10 = xla_tuple %s8, %s9
  %s11 = sld [smem:[#allocation0]]
  $region50: #{spatial_attention_block.1} parent=0
    _
  %s13 = ssub.s32 1, %s11
  %s14 = scalar_select 0, %s13, %s11
  $region1: #{spatial_attention_block.1} parent=0
    #allocation2 [shape = 'u8[16384]{0}', space=vmem, size = 0x4000, scoped, tag = 'output window, operand 0, single buffered']
    #allocation3 [shape = 's32[1]{0}', space=sflag, size = 0x4, scoped, tag = 'scoped memory for spatial_attention_block.1']
    %15 = vsyncpa [#allocation3], 0
    // Predicated region
    $region2: #{spatial_attention_block.1} parent=1 // pred_check
      _
    $region3: #{spatial_attention_block.1} parent=1 // pred_check_branch
      %17 = sbr.rel (0) target = $region5
    $region4: #{spatial_attention_block.1} parent=1 // pred_region
      _
    $region5: #{spatial_attention_block.1} parent=1 // pred_fallthru
      _
    // Predicated region
    $region6: #{spatial_attention_block.1} parent=1 // pred_check
      _
    $region7: #{spatial_attention_block.1} parent=1 // pred_check_branch
      %19 = sbr.rel (0) target = $region9
    $region8: #{spatial_attention_block.1} parent=1 // pred_region
      _
    $region9: #{spatial_attention_block.1} parent=1 // pred_fallthru
      _
    // Predicated region
    $region10: #{spatial_attention_block.1} parent=1 // pred_check
      _
    $region11: #{spatial_attention_block.1} parent=1 // pred_check_branch
      %21 = sbr.rel (0) target = $region13
    $region12: #{spatial_attention_block.1} parent=1 // pred_region
      _
    $region13: #{spatial_attention_block.1} parent=1 // pred_fallthru
      _
    // Predicated region
    $region14: #{spatial_attention_block.1} parent=1 // pred_check
      _
    $region15: #{spatial_attention_block.1} parent=1 // pred_check_branch
      %23 = sbr.rel (0) target = $region17
    $region16: #{spatial_attention_block.1} parent=1 // pred_region
      _
    $region17: #{spatial_attention_block.1} parent=1 // pred_fallthru
      _
    // Predicated region
    $region18: #{spatial_attention_block.1} parent=1 // pred_check
      _
    $region19: #{spatial_attention_block.1} parent=1 // pred_check_branch
      %25 = sbr.rel (0) target = $region21
    $region20: #{spatial_attention_block.1} parent=1 // pred_region
      _
    $region21: #{spatial_attention_block.1} parent=1 // pred_fallthru
      _
    // Predicated region
    $region22: #{spatial_attention_block.1} parent=1 // pred_check
      _
    $region23: #{spatial_attention_block.1} parent=1 // pred_check_branch
      %27 = sbr.rel (0) target = $region25
    $region24: #{spatial_attention_block.1} parent=1 // pred_region
      _
    $region25: #{spatial_attention_block.1} parent=1 // pred_fallthru
      _
    // Predicated region
    $region26: #{spatial_attention_block.1} parent=1 // pred_check
      _
    $region27: #{spatial_attention_block.1} parent=1 // pred_check_branch
      %29 = sbr.rel (0) target = $region29
    $region28: #{spatial_attention_block.1} parent=1 // pred_region
      _
    $region29: #{spatial_attention_block.1} parent=1 // pred_fallthru
      _
    // Predicated region
    $region30: #{spatial_attention_block.1} parent=1 // pred_check
      _
    $region31: #{spatial_attention_block.1} parent=1 // pred_check_branch
      %31 = sbr.rel (0) target = $region33
    $region32: #{spatial_attention_block.1} parent=1 // pred_region
      _
    $region33: #{spatial_attention_block.1} parent=1 // pred_fallthru
      _
    %v32 = vld [vmem:[%s0] sm:$0xff]
    %v33 = vld [vmem:[%s0 + $0x8] sm:$0xff]
    %v34 = vld [vmem:[%s0 + $0x10] sm:$0xff]
    %v35 = vld [vmem:[%s0 + $0x18] sm:$0xff]
    %v36 = vld [vmem:[%s3] sm:$0xff]
    %v37 = vld [vmem:[%s3 + $0x8] sm:$0xff]
    %v38 = vld [vmem:[%s1] sm:$0xff]
    %v39 = vld [vmem:[%s1 + $0x8] sm:$0xff]
    %v40 = vld [vmem:[%s1 + $0x10] sm:$0xff]
    %v41 = vld [vmem:[%s1 + $0x18] sm:$0xff]
    %v42 = vld [vmem:[%s1 + $0x20] sm:$0xff]
    %v43 = vld [vmem:[%s1 + $0x28] sm:$0xff]
    %v44 = vld [vmem:[%s1 + $0x30] sm:$0xff]
    %v45 = vld [vmem:[%s1 + $0x38] sm:$0xff]
    %vm46 = vcmask 261120
    %v48 = vsel %vm46, %v38, 0
    %v51 = vsel %vm46, %v39, 0
    %v54 = vsel %vm46, %v40, 0
    %v57 = vsel %vm46, %v41, 0
    %v60 = vsel %vm46, %v42, 0
    %v63 = vsel %vm46, %v43, 0
    %v66 = vsel %vm46, %v44, 0
    %v69 = vsel %vm46, %v45, 0
    %71 = vmatprep.subr.mxu0 0.0
    %72 = vmatpush1.msra.mxu0 0.0
    %73 = vmatprep.subr.mxu0 0.0
    %74 = vmatpush1.msra.mxu0 0.0
    %75 = vmatprep.subr.mxu0 0.0
    %76 = vmatpush1.msra.mxu0 0.0
    %77 = vmatprep.subr.mxu0 0.0
    %78 = vmatpush1.msra.mxu0 0.0
    %79 = vmatprep.subr.mxu0 0.0
    %80 = vmatpush1.msra.mxu0 0.0
    %81 = vmatprep.subr.mxu0 0.0
    %82 = vmatpush1.msra.mxu0 0.0
    %83 = vmatprep.subr.mxu0 0.0
    %84 = vmatpush1.msra.mxu0 0.0
    %85 = vmatprep.subr.mxu0 0.0
    %86 = vmatpush1.msra.mxu0 0.0
    %87 = vmatprep.subr.mxu0 0.0
    %88 = vmatpush1.msra.mxu0 0.0
    %89 = vmatprep.subr.mxu0 0.0
    %90 = vmatpush1.msra.mxu0 0.0
    %91 = vmatprep.subr.mxu0 0.0
    %92 = vmatpush1.msra.mxu0 0.0
    %93 = vmatprep.subr.mxu0 0.0
    %94 = vmatpush1.msra.mxu0 0.0
    %95 = vmatprep.subr.mxu0 0.0
    %96 = vmatpush1.msra.mxu0 %v35
    %97 = vmatprep.subr.mxu0 0.0
    %98 = vmatpush1.msra.mxu0 %v34
    %99 = vmatprep.subr.mxu0 0.0
    %100 = vmatpush1.msra.mxu0 %v33
    %101 = vmatprep.subr.mxu0 0.0
    %102 = vmatpush1.msra.mxu0 %v32
    %103 = vmatprep.subr.mxu0 0.0
    %104 = vmatpush2.msra.mxu0 0.0
    %105 = vmatprep.subr.mxu0 0.0
    %106 = vmatpush2.msra.mxu0 0.0
    %107 = vmatprep.subr.mxu0 0.0
    %108 = vmatpush2.msra.mxu0 0.0
    %109 = vmatprep.subr.mxu0 0.0
    %110 = vmatpush2.msra.mxu0 0.0
    %111 = vmatprep.subr.mxu0 0.0
    %112 = vmatpush2.msra.mxu0 0.0
    %113 = vmatprep.subr.mxu0 0.0
    %114 = vmatpush2.msra.mxu0 0.0
    %115 = vmatprep.subr.mxu0 0.0
    %116 = vmatpush2.msra.mxu0 0.0
    %117 = vmatprep.subr.mxu0 0.0
    %118 = vmatpush2.msra.mxu0 0.0
    %119 = vmatprep.subr.mxu0 0.0
    %120 = vmatpush2.msra.mxu0 0.0
    %121 = vmatprep.subr.mxu0 0.0
    %122 = vmatpush2.msra.mxu0 0.0
    %123 = vmatprep.subr.mxu0 0.0
    %124 = vmatpush2.msra.mxu0 0.0
    %125 = vmatprep.subr.mxu0 0.0
    %126 = vmatpush2.msra.mxu0 0.0
    %127 = vmatprep.subr.mxu0 0.0
    %128 = vmatpush2.msra.mxu0 0.0
    %129 = vmatprep.subr.mxu0 0.0
    %130 = vmatpush2.msra.mxu0 0.0
    %131 = vmatprep.subr.mxu0 0.0
    %132 = vmatpush2.msra.mxu0 0.0
    %133 = vmatprep.subr.mxu0 0.0
    %134 = vmatpush2.msra.mxu0 0.0
    %135 = vmatprep.mubr.f32.mxu0 0.0
    %136 = vmatmul.mubr.f32.gmra.mxu0 %v48
    %v137 = vpop.f32.mrf.mxu0
    %v138 = vadd.f32 0.0, %v137
    %v139 = vpop.f32.mrf.mxu0
    %140 = vmatprep.mubr.f32.mxu0 0.0
    %141 = vmatmul.mubr.f32.gmra.mxu0 %v51
    %v142 = vpop.f32.mrf.mxu0
    %v143 = vadd.f32 0.0, %v142
    %v144 = vpop.f32.mrf.mxu0
    %145 = vmatprep.mubr.f32.mxu0 0.0
    %146 = vmatmul.mubr.f32.gmra.mxu0 %v54
    %v147 = vpop.f32.mrf.mxu0
    %v148 = vadd.f32 0.0, %v147
    %v149 = vpop.f32.mrf.mxu0
    %150 = vmatprep.mubr.f32.mxu0 0.0
    %151 = vmatmul.mubr.f32.gmra.mxu0 %v57
    %v152 = vpop.f32.mrf.mxu0
    %v153 = vadd.f32 0.0, %v152
    %v154 = vpop.f32.mrf.mxu0
    %155 = vmatprep.mubr.f32.mxu0 0.0
    %156 = vmatmul.mubr.f32.gmra.mxu0 %v60
    %v157 = vpop.f32.mrf.mxu0
    %v158 = vadd.f32 0.0, %v157
    %v159 = vpop.f32.mrf.mxu0
    %160 = vmatprep.mubr.f32.mxu0 0.0
    %161 = vmatmul.mubr.f32.gmra.mxu0 %v63
    %v162 = vpop.f32.mrf.mxu0
    %v163 = vadd.f32 0.0, %v162
    %v164 = vpop.f32.mrf.mxu0
    %165 = vmatprep.mubr.f32.mxu0 0.0
    %166 = vmatmul.mubr.f32.gmra.mxu0 %v66
    %v167 = vpop.f32.mrf.mxu0
    %v168 = vadd.f32 0.0, %v167
    %v169 = vpop.f32.mrf.mxu0
    %170 = vmatprep.mubr.f32.mxu0 0.0
    %171 = vmatmul.mubr.f32.gmra.mxu0 %v69
    %v172 = vpop.f32.mrf.mxu0
    %v173 = vadd.f32 0.0, %v172
    %v174 = vpop.f32.mrf.mxu0
    %175 = vdwg.mxu0
    %v176 = vld [vmem:[%s2] sm:$0xff]
    %v177 = vld [vmem:[%s2 + $0x8] sm:$0xff]
    %v178 = vld [vmem:[%s2 + $0x10] sm:$0xff]
    %v179 = vld [vmem:[%s2 + $0x18] sm:$0xff]
    %s180 = scalar_lea.vmem %s2, 32
    %v181 = vld [vmem:[%s180] sm:$0xff]
    %v182 = vld [vmem:[%s180 + $0x8] sm:$0xff]
    %v183 = vld [vmem:[%s180 + $0x10] sm:$0xff]
    %v184 = vld [vmem:[%s180 + $0x18] sm:$0xff]
    %v186 = vsel %vm46, %v138, 0
    %v189 = vsel %vm46, %v143, 0
    %v192 = vsel %vm46, %v148, 0
    %v195 = vsel %vm46, %v153, 0
    %197 = vmatprep.subr.mxu0 0.0
    %198 = vmatpush1.msra.mxu0 0.0
    %199 = vmatprep.subr.mxu0 0.0
    %200 = vmatpush1.msra.mxu0 0.0
    %201 = vmatprep.subr.mxu0 0.0
    %202 = vmatpush1.msra.mxu0 0.0
    %203 = vmatprep.subr.mxu0 0.0
    %204 = vmatpush1.msra.mxu0 0.0
    %205 = vmatprep.subr.mxu0 0.0
    %206 = vmatpush1.msra.mxu0 0.0
    %207 = vmatprep.subr.mxu0 0.0
    %208 = vmatpush1.msra.mxu0 0.0
    %209 = vmatprep.subr.mxu0 0.0
    %210 = vmatpush1.msra.mxu0 0.0
    %211 = vmatprep.subr.mxu0 0.0
    %212 = vmatpush1.msra.mxu0 0.0
    %213 = vmatprep.subr.mxu0 0.0
    %214 = vmatpush1.msra.mxu0 0.0
    %215 = vmatprep.subr.mxu0 0.0
    %216 = vmatpush1.msra.mxu0 0.0
    %217 = vmatprep.subr.mxu0 0.0
    %218 = vmatpush1.msra.mxu0 0.0
    %219 = vmatprep.subr.mxu0 0.0
    %220 = vmatpush1.msra.mxu0 0.0
    %221 = vmatprep.subr.mxu0 0.0
    %222 = vmatpush1.msra.mxu0 %v184
    %223 = vmatprep.subr.mxu0 0.0
    %224 = vmatpush1.msra.mxu0 %v183
    %225 = vmatprep.subr.mxu0 0.0
    %226 = vmatpush1.msra.mxu0 %v182
    %227 = vmatprep.subr.mxu0 0.0
    %228 = vmatpush1.msra.mxu0 %v181
    %229 = vmatprep.subr.mxu0 0.0
    %230 = vmatpush2.msra.mxu0 0.0
    %231 = vmatprep.subr.mxu0 0.0
    %232 = vmatpush2.msra.mxu0 0.0
    %233 = vmatprep.subr.mxu0 0.0
    %234 = vmatpush2.msra.mxu0 0.0
    %235 = vmatprep.subr.mxu0 0.0
    %236 = vmatpush2.msra.mxu0 0.0
    %237 = vmatprep.subr.mxu0 0.0
    %238 = vmatpush2.msra.mxu0 0.0
    %239 = vmatprep.subr.mxu0 0.0
    %240 = vmatpush2.msra.mxu0 0.0
    %241 = vmatprep.subr.mxu0 0.0
    %242 = vmatpush2.msra.mxu0 0.0
    %243 = vmatprep.subr.mxu0 0.0
    %244 = vmatpush2.msra.mxu0 0.0
    %245 = vmatprep.subr.mxu0 0.0
    %246 = vmatpush2.msra.mxu0 0.0
    %247 = vmatprep.subr.mxu0 0.0
    %248 = vmatpush2.msra.mxu0 0.0
    %249 = vmatprep.subr.mxu0 0.0
    %250 = vmatpush2.msra.mxu0 0.0
    %251 = vmatprep.subr.mxu0 0.0
    %252 = vmatpush2.msra.mxu0 0.0
    %253 = vmatprep.subr.mxu0 0.0
    %254 = vmatpush2.msra.mxu0 0.0
    %255 = vmatprep.subr.mxu0 0.0
    %256 = vmatpush2.msra.mxu0 0.0
    %257 = vmatprep.subr.mxu0 0.0
    %258 = vmatpush2.msra.mxu0 0.0
    %259 = vmatprep.subr.mxu0 0.0
    %260 = vmatpush2.msra.mxu0 0.0
    %261 = vmatprep.mubr.f32.mxu0 0.0
    %262 = vmatmul.mubr.f32.gmra.mxu0 %v186
    %v263 = vpop.f32.mrf.mxu0
    %v264 = vadd.f32 0.0, %v263
    %v265 = vpop.f32.mrf.mxu0
    %266 = vmatprep.mubr.f32.mxu0 0.0
    %267 = vmatmul.mubr.f32.gmra.mxu0 %v189
    %v268 = vpop.f32.mrf.mxu0
    %v269 = vadd.f32 0.0, %v268
    %v270 = vpop.f32.mrf.mxu0
    %271 = vmatprep.mubr.f32.mxu0 0.0
    %272 = vmatmul.mubr.f32.gmra.mxu0 %v192
    %v273 = vpop.f32.mrf.mxu0
    %v274 = vadd.f32 0.0, %v273
    %v275 = vpop.f32.mrf.mxu0
    %276 = vmatprep.mubr.f32.mxu0 0.0
    %277 = vmatmul.mubr.f32.gmra.mxu0 %v195
    %v278 = vpop.f32.mrf.mxu0
    %v279 = vadd.f32 0.0, %v278
    %v280 = vpop.f32.mrf.mxu0
    %281 = vdwg.mxu0
    %v283 = vsel %vm46, %v32, 0
    %v286 = vsel %vm46, %v33, 0
    %v289 = vsel %vm46, %v34, 0
    %v292 = vsel %vm46, %v35, 0
    %294 = vmatprep.subr.mxu0 0.0
    %295 = vmatpush1.msra.mxu0 0.0
    %296 = vmatprep.subr.mxu0 0.0
    %297 = vmatpush1.msra.mxu0 0.0
    %298 = vmatprep.subr.mxu0 0.0
    %299 = vmatpush1.msra.mxu0 0.0
    %300 = vmatprep.subr.mxu0 0.0
    %301 = vmatpush1.msra.mxu0 0.0
    %302 = vmatprep.subr.mxu0 0.0
    %303 = vmatpush1.msra.mxu0 0.0
    %304 = vmatprep.subr.mxu0 0.0
    %305 = vmatpush1.msra.mxu0 0.0
    %306 = vmatprep.subr.mxu0 0.0
    %307 = vmatpush1.msra.mxu0 0.0
    %308 = vmatprep.subr.mxu0 0.0
    %309 = vmatpush1.msra.mxu0 0.0
    %310 = vmatprep.subr.mxu0 0.0
    %311 = vmatpush1.msra.mxu0 0.0
    %312 = vmatprep.subr.mxu0 0.0
    %313 = vmatpush1.msra.mxu0 0.0
    %314 = vmatprep.subr.mxu0 0.0
    %315 = vmatpush1.msra.mxu0 0.0
    %316 = vmatprep.subr.mxu0 0.0
    %317 = vmatpush1.msra.mxu0 0.0
    %318 = vmatprep.subr.mxu0 0.0
    %319 = vmatpush1.msra.mxu0 %v179
    %320 = vmatprep.subr.mxu0 0.0
    %321 = vmatpush1.msra.mxu0 %v178
    %322 = vmatprep.subr.mxu0 0.0
    %323 = vmatpush1.msra.mxu0 %v177
    %324 = vmatprep.subr.mxu0 0.0
    %325 = vmatpush1.msra.mxu0 %v176
    %326 = vmatprep.subr.mxu0 0.0
    %327 = vmatpush2.msra.mxu0 0.0
    %328 = vmatprep.subr.mxu0 0.0
    %329 = vmatpush2.msra.mxu0 0.0
    %330 = vmatprep.subr.mxu0 0.0
    %331 = vmatpush2.msra.mxu0 0.0
    %332 = vmatprep.subr.mxu0 0.0
    %333 = vmatpush2.msra.mxu0 0.0
    %334 = vmatprep.subr.mxu0 0.0
    %335 = vmatpush2.msra.mxu0 0.0
    %336 = vmatprep.subr.mxu0 0.0
    %337 = vmatpush2.msra.mxu0 0.0
    %338 = vmatprep.subr.mxu0 0.0
    %339 = vmatpush2.msra.mxu0 0.0
    %340 = vmatprep.subr.mxu0 0.0
    %341 = vmatpush2.msra.mxu0 0.0
    %342 = vmatprep.subr.mxu0 0.0
    %343 = vmatpush2.msra.mxu0 0.0
    %344 = vmatprep.subr.mxu0 0.0
    %345 = vmatpush2.msra.mxu0 0.0
    %346 = vmatprep.subr.mxu0 0.0
    %347 = vmatpush2.msra.mxu0 0.0
    %348 = vmatprep.subr.mxu0 0.0
    %349 = vmatpush2.msra.mxu0 0.0
    %350 = vmatprep.subr.mxu0 0.0
    %351 = vmatpush2.msra.mxu0 0.0
    %352 = vmatprep.subr.mxu0 0.0
    %353 = vmatpush2.msra.mxu0 0.0
    %354 = vmatprep.subr.mxu0 0.0
    %355 = vmatpush2.msra.mxu0 0.0
    %356 = vmatprep.subr.mxu0 0.0
    %357 = vmatpush2.msra.mxu0 0.0
    %358 = vmatprep.mubr.f32.mxu0 0.0
    %359 = vmatmul.mubr.f32.gmra.mxu0 %v283
    %v360 = vpop.f32.mrf.mxu0
    %v361 = vadd.f32 %v264, %v360
    %v362 = vpop.f32.mrf.mxu0
    %363 = vmatprep.mubr.f32.mxu0 0.0
    %364 = vmatmul.mubr.f32.gmra.mxu0 %v286
    %v365 = vpop.f32.mrf.mxu0
    %v366 = vadd.f32 %v269, %v365
    %v367 = vpop.f32.mrf.mxu0
    %368 = vmatprep.mubr.f32.mxu0 0.0
    %369 = vmatmul.mubr.f32.gmra.mxu0 %v289
    %v370 = vpop.f32.mrf.mxu0
    %v371 = vadd.f32 %v274, %v370
    %v372 = vpop.f32.mrf.mxu0
    %373 = vmatprep.mubr.f32.mxu0 0.0
    %374 = vmatmul.mubr.f32.gmra.mxu0 %v292
    %v375 = vpop.f32.mrf.mxu0
    %v376 = vadd.f32 %v279, %v375
    %v377 = vpop.f32.mrf.mxu0
    %378 = vdwg.mxu0
    %s379 = scalar_lea.vmem %s2, 64
    %v380 = vld [vmem:[%s379] sm:$0xff]
    %v381 = vld [vmem:[%s379 + $0x8] sm:$0xff]
    %v382 = vld [vmem:[%s379 + $0x10] sm:$0xff]
    %v383 = vld [vmem:[%s379 + $0x18] sm:$0xff]
    %v385 = vsel %vm46, %v158, 0
    %v388 = vsel %vm46, %v163, 0
    %v391 = vsel %vm46, %v168, 0
    %v394 = vsel %vm46, %v173, 0
    %396 = vmatprep.subr.mxu0 0.0
    %397 = vmatpush1.msra.mxu0 0.0
    %398 = vmatprep.subr.mxu0 0.0
    %399 = vmatpush1.msra.mxu0 0.0
    %400 = vmatprep.subr.mxu0 0.0
    %401 = vmatpush1.msra.mxu0 0.0
    %402 = vmatprep.subr.mxu0 0.0
    %403 = vmatpush1.msra.mxu0 0.0
    %404 = vmatprep.subr.mxu0 0.0
    %405 = vmatpush1.msra.mxu0 0.0
    %406 = vmatprep.subr.mxu0 0.0
    %407 = vmatpush1.msra.mxu0 0.0
    %408 = vmatprep.subr.mxu0 0.0
    %409 = vmatpush1.msra.mxu0 0.0
    %410 = vmatprep.subr.mxu0 0.0
    %411 = vmatpush1.msra.mxu0 0.0
    %412 = vmatprep.subr.mxu0 0.0
    %413 = vmatpush1.msra.mxu0 0.0
    %414 = vmatprep.subr.mxu0 0.0
    %415 = vmatpush1.msra.mxu0 0.0
    %416 = vmatprep.subr.mxu0 0.0
    %417 = vmatpush1.msra.mxu0 0.0
    %418 = vmatprep.subr.mxu0 0.0
    %419 = vmatpush1.msra.mxu0 0.0
    %420 = vmatprep.subr.mxu0 0.0
    %421 = vmatpush1.msra.mxu0 %v383
    %422 = vmatprep.subr.mxu0 0.0
    %423 = vmatpush1.msra.mxu0 %v382
    %424 = vmatprep.subr.mxu0 0.0
    %425 = vmatpush1.msra.mxu0 %v381
    %426 = vmatprep.subr.mxu0 0.0
    %427 = vmatpush1.msra.mxu0 %v380
    %428 = vmatprep.subr.mxu0 0.0
    %429 = vmatpush2.msra.mxu0 0.0
    %430 = vmatprep.subr.mxu0 0.0
    %431 = vmatpush2.msra.mxu0 0.0
    %432 = vmatprep.subr.mxu0 0.0
    %433 = vmatpush2.msra.mxu0 0.0
    %434 = vmatprep.subr.mxu0 0.0
    %435 = vmatpush2.msra.mxu0 0.0
    %436 = vmatprep.subr.mxu0 0.0
    %437 = vmatpush2.msra.mxu0 0.0
    %438 = vmatprep.subr.mxu0 0.0
    %439 = vmatpush2.msra.mxu0 0.0
    %440 = vmatprep.subr.mxu0 0.0
    %441 = vmatpush2.msra.mxu0 0.0
    %442 = vmatprep.subr.mxu0 0.0
    %443 = vmatpush2.msra.mxu0 0.0
    %444 = vmatprep.subr.mxu0 0.0
    %445 = vmatpush2.msra.mxu0 0.0
    %446 = vmatprep.subr.mxu0 0.0
    %447 = vmatpush2.msra.mxu0 0.0
    %448 = vmatprep.subr.mxu0 0.0
    %449 = vmatpush2.msra.mxu0 0.0
    %450 = vmatprep.subr.mxu0 0.0
    %451 = vmatpush2.msra.mxu0 0.0
    %452 = vmatprep.subr.mxu0 0.0
    %453 = vmatpush2.msra.mxu0 0.0
    %454 = vmatprep.subr.mxu0 0.0
    %455 = vmatpush2.msra.mxu0 0.0
    %456 = vmatprep.subr.mxu0 0.0
    %457 = vmatpush2.msra.mxu0 0.0
    %458 = vmatprep.subr.mxu0 0.0
    %459 = vmatpush2.msra.mxu0 0.0
    %460 = vmatprep.mubr.f32.mxu0 0.0
    %461 = vmatmul.mubr.f32.gmra.mxu0 %v385
    %v462 = vpop.f32.mrf.mxu0
    %v463 = vadd.f32 0.0, %v462
    %v464 = vpop.f32.mrf.mxu0
    %465 = vmatprep.mubr.f32.mxu0 0.0
    %466 = vmatmul.mubr.f32.gmra.mxu0 %v388
    %v467 = vpop.f32.mrf.mxu0
    %v468 = vadd.f32 0.0, %v467
    %v469 = vpop.f32.mrf.mxu0
    %470 = vmatprep.mubr.f32.mxu0 0.0
    %471 = vmatmul.mubr.f32.gmra.mxu0 %v391
    %v472 = vpop.f32.mrf.mxu0
    %v473 = vadd.f32 0.0, %v472
    %v474 = vpop.f32.mrf.mxu0
    %475 = vmatprep.mubr.f32.mxu0 0.0
    %476 = vmatmul.mubr.f32.gmra.mxu0 %v394
    %v477 = vpop.f32.mrf.mxu0
    %v478 = vadd.f32 0.0, %v477
    %v479 = vpop.f32.mrf.mxu0
    %480 = vdwg.mxu0
    %v481 = vadd.f32 %v361, %v463
    %v482 = vadd.f32 %v366, %v468
    %v483 = vadd.f32 %v371, %v473
    %v484 = vadd.f32 %v376, %v478
    %v485 = vlaneseq
    %v486 = vshrl.u32 %v485, 7
    %v487 = vsub.s32 0, %v486
    %v488 = vrot.slane %v36, %v487
    %v489 = vadd.f32 %v481, %v488
    %v490 = vadd.f32 %v482, %v488
    %v491 = vadd.f32 %v483, %v488
    %v492 = vadd.f32 %v484, %v488
    %v493 = vadd.f32 %v32, %v489
    %v494 = vadd.f32 %v33, %v490
    %v495 = vadd.f32 %v34, %v491
    %v496 = vadd.f32 %v35, %v492
    %v497 = vsel %vm46, %v493, 0.0
    %498 = vadd.xlane.f32.xlu0 %v497
    %v499 = vpop.xlane.xlu0 %498
    %v500 = vsel %vm46, %v494, 0.0
    %501 = vadd.xlane.f32.xlu0 %v500
    %v502 = vpop.xlane.xlu0 %501
    %v503 = vsel %vm46, %v495, 0.0
    %504 = vadd.xlane.f32.xlu0 %v503
    %v505 = vpop.xlane.xlu0 %504
    %v506 = vsel %vm46, %v496, 0.0
    %507 = vadd.xlane.f32.xlu0 %v506
    %v508 = vpop.xlane.xlu0 %507
    %v509 = vrcp.pop 32.0
    %v510 = vmul.f32 %v499, %v509
    %v511 = vmul.f32 %v502, %v509
    %v512 = vmul.f32 %v505, %v509
    %v513 = vmul.f32 %v508, %v509
    %v514 = vsub.f32 %v493, %v510
    %v515 = vsub.f32 %v494, %v511
    %v516 = vsub.f32 %v495, %v512
    %v517 = vsub.f32 %v496, %v513
    %v518 = vmul.f32 %v514, %v514
    %v519 = vmul.f32 %v515, %v515
    %v520 = vmul.f32 %v516, %v516
    %v521 = vmul.f32 %v517, %v517
    %v522 = vsel %vm46, %v518, 0.0
    %523 = vadd.xlane.f32.xlu0 %v522
    %v524 = vpop.xlane.xlu0 %523
    %v525 = vsel %vm46, %v519, 0.0
    %526 = vadd.xlane.f32.xlu0 %v525
    %v527 = vpop.xlane.xlu0 %526
    %v528 = vsel %vm46, %v520, 0.0
    %529 = vadd.xlane.f32.xlu0 %v528
    %v530 = vpop.xlane.xlu0 %529
    %v531 = vsel %vm46, %v521, 0.0
    %532 = vadd.xlane.f32.xlu0 %v531
    %v533 = vpop.xlane.xlu0 %532
    %v534 = vmul.f32 %v524, %v509
    %v535 = vmul.f32 %v527, %v509
    %v536 = vmul.f32 %v530, %v509
    %v537 = vmul.f32 %v533, %v509
    %v538 = vadd.f32 %v534, 1e-05
    %v539 = vadd.f32 %v535, 1e-05
    %v540 = vadd.f32 %v536, 1e-05
    %v541 = vadd.f32 %v537, 1e-05
    %v542 = vrsqrt.pop %v538
    %v543 = vrsqrt.pop %v539
    %v544 = vrsqrt.pop %v540
    %v545 = vrsqrt.pop %v541
    %v546 = vmul.f32 %v514, %v542
    %v547 = vmul.f32 %v515, %v543
    %v548 = vmul.f32 %v516, %v544
    %v549 = vmul.f32 %v517, %v545
    %v550 = vlaneseq
    %v551 = vshrl.u32 %v550, 7
    %v552 = vsub.s32 1, %v551
    %v553 = vrot.slane %v36, %v552
    %v554 = vmul.f32 %v546, %v553
    %v555 = vmul.f32 %v547, %v553
    %v556 = vmul.f32 %v548, %v553
    %v557 = vmul.f32 %v549, %v553
    %v558 = vlaneseq
    %v559 = vshrl.u32 %v558, 7
    %v560 = vsub.s32 2, %v559
    %v561 = vrot.slane %v36, %v560
    %v562 = vadd.f32 %v554, %v561
    %v563 = vadd.f32 %v555, %v561
    %v564 = vadd.f32 %v556, %v561
    %v565 = vadd.f32 %v557, %v561
    %v566 = vld [vmem:[%s4] sm:$0xff]
    %v567 = vld [vmem:[%s4 + $0x8] sm:$0xff]
    %v568 = vld [vmem:[%s4 + $0x10] sm:$0xff]
    %v569 = vld [vmem:[%s4 + $0x18] sm:$0xff]
    %v571 = vsel %vm46, %v562, 0
    %v574 = vsel %vm46, %v563, 0
    %v577 = vsel %vm46, %v564, 0
    %v580 = vsel %vm46, %v565, 0
    %582 = vmatprep.subr.mxu0 0.0
    %583 = vmatpush1.msra.mxu0 0.0
    %584 = vmatprep.subr.mxu0 0.0
    %585 = vmatpush1.msra.mxu0 0.0
    %586 = vmatprep.subr.mxu0 0.0
    %587 = vmatpush1.msra.mxu0 0.0
    %588 = vmatprep.subr.mxu0 0.0
    %589 = vmatpush1.msra.mxu0 0.0
    %590 = vmatprep.subr.mxu0 0.0
    %591 = vmatpush1.msra.mxu0 0.0
    %592 = vmatprep.subr.mxu0 0.0
    %593 = vmatpush1.msra.mxu0 0.0
    %594 = vmatprep.subr.mxu0 0.0
    %595 = vmatpush1.msra.mxu0 0.0
    %596 = vmatprep.subr.mxu0 0.0
    %597 = vmatpush1.msra.mxu0 0.0
    %598 = vmatprep.subr.mxu0 0.0
    %599 = vmatpush1.msra.mxu0 0.0
    %600 = vmatprep.subr.mxu0 0.0
    %601 = vmatpush1.msra.mxu0 0.0
    %602 = vmatprep.subr.mxu0 0.0
    %603 = vmatpush1.msra.mxu0 0.0
    %604 = vmatprep.subr.mxu0 0.0
    %605 = vmatpush1.msra.mxu0 0.0
    %606 = vmatprep.subr.mxu0 0.0
    %607 = vmatpush1.msra.mxu0 %v569
    %608 = vmatprep.subr.mxu0 0.0
    %609 = vmatpush1.msra.mxu0 %v568
    %610 = vmatprep.subr.mxu0 0.0
    %611 = vmatpush1.msra.mxu0 %v567
    %612 = vmatprep.subr.mxu0 0.0
    %613 = vmatpush1.msra.mxu0 %v566
    %614 = vmatprep.subr.mxu0 0.0
    %615 = vmatpush2.msra.mxu0 0.0
    %616 = vmatprep.subr.mxu0 0.0
    %617 = vmatpush2.msra.mxu0 0.0
    %618 = vmatprep.subr.mxu0 0.0
    %619 = vmatpush2.msra.mxu0 0.0
    %620 = vmatprep.subr.mxu0 0.0
    %621 = vmatpush2.msra.mxu0 0.0
    %622 = vmatprep.subr.mxu0 0.0
    %623 = vmatpush2.msra.mxu0 0.0
    %624 = vmatprep.subr.mxu0 0.0
    %625 = vmatpush2.msra.mxu0 0.0
    %626 = vmatprep.subr.mxu0 0.0
    %627 = vmatpush2.msra.mxu0 0.0
    %628 = vmatprep.subr.mxu0 0.0
    %629 = vmatpush2.msra.mxu0 0.0
    %630 = vmatprep.subr.mxu0 0.0
    %631 = vmatpush2.msra.mxu0 0.0
    %632 = vmatprep.subr.mxu0 0.0
    %633 = vmatpush2.msra.mxu0 0.0
    %634 = vmatprep.subr.mxu0 0.0
    %635 = vmatpush2.msra.mxu0 0.0
    %636 = vmatprep.subr.mxu0 0.0
    %637 = vmatpush2.msra.mxu0 0.0
    %638 = vmatprep.subr.mxu0 0.0
    %639 = vmatpush2.msra.mxu0 0.0
    %640 = vmatprep.subr.mxu0 0.0
    %641 = vmatpush2.msra.mxu0 0.0
    %642 = vmatprep.subr.mxu0 0.0
    %643 = vmatpush2.msra.mxu0 0.0
    %644 = vmatprep.subr.mxu0 0.0
    %645 = vmatpush2.msra.mxu0 0.0
    %646 = vmatprep.mubr.f32.mxu0 0.0
    %647 = vmatmul.mubr.f32.gmra.mxu0 %v571
    %v648 = vpop.f32.mrf.mxu0
    %v649 = vadd.f32 0.0, %v648
    %v650 = vpop.f32.mrf.mxu0
    %651 = vmatprep.mubr.f32.mxu0 0.0
    %652 = vmatmul.mubr.f32.gmra.mxu0 %v574
    %v653 = vpop.f32.mrf.mxu0
    %v654 = vadd.f32 0.0, %v653
    %v655 = vpop.f32.mrf.mxu0
    %656 = vmatprep.mubr.f32.mxu0 0.0
    %657 = vmatmul.mubr.f32.gmra.mxu0 %v577
    %v658 = vpop.f32.mrf.mxu0
    %v659 = vadd.f32 0.0, %v658
    %v660 = vpop.f32.mrf.mxu0
    %661 = vmatprep.mubr.f32.mxu0 0.0
    %662 = vmatmul.mubr.f32.gmra.mxu0 %v580
    %v663 = vpop.f32.mrf.mxu0
    %v664 = vadd.f32 0.0, %v663
    %v665 = vpop.f32.mrf.mxu0
    %666 = vdwg.mxu0
    %v667 = vlaneseq
    %v668 = vshrl.u32 %v667, 7
    %v669 = vsub.s32 3, %v668
    %v670 = vrot.slane %v36, %v669
    %v671 = vadd.f32 %v649, %v670
    %v672 = vadd.f32 %v654, %v670
    %v673 = vadd.f32 %v659, %v670
    %v674 = vadd.f32 %v664, %v670
    %v675 = vlaneseq
    %v676 = vshrl.u32 %v675, 7
    %v677 = vsub.s32 4, %v676
    %v678 = vrot.slane %v36, %v677
    %680 = vrot.lane.b32.xlu0 %v678, 32
    %v681 = vpop.permute.xlu0 %680
    %v683 = vadd.f32 %v649, %v681
    %v684 = vadd.f32 %v654, %v681
    %v685 = vadd.f32 %v659, %v681
    %v686 = vadd.f32 %v664, %v681
    %v687 = vlaneseq
    %v688 = vshrl.u32 %v687, 7
    %v689 = vsub.s32 5, %v688
    %v690 = vrot.slane %v36, %v689
    %692 = vrot.lane.b32.xlu0 %v690, 64
    %v693 = vpop.permute.xlu0 %692
    %v695 = vadd.f32 %v649, %v693
    %v696 = vadd.f32 %v654, %v693
    %v697 = vadd.f32 %v659, %v693
    %v698 = vadd.f32 %v664, %v693
    %703 = vrot.lane.b32.xlu0 %v671, 124
    %v704 = vpop.permute.xlu0 %703
    %705 = vrot.lane.b32.xlu0 %v672, 124
    %v706 = vpop.permute.xlu0 %705
    %707 = vrot.lane.b32.xlu0 %v673, 124
    %v708 = vpop.permute.xlu0 %707
    %709 = vrot.lane.b32.xlu0 %v674, 124
    %v710 = vpop.permute.xlu0 %709
    %715 = vrot.lane.b32.xlu0 %v671, 120
    %v716 = vpop.permute.xlu0 %715
    %717 = vrot.lane.b32.xlu0 %v672, 120
    %v718 = vpop.permute.xlu0 %717
    %719 = vrot.lane.b32.xlu0 %v673, 120
    %v720 = vpop.permute.xlu0 %719
    %721 = vrot.lane.b32.xlu0 %v674, 120
    %v722 = vpop.permute.xlu0 %721
    %727 = vrot.lane.b32.xlu0 %v671, 116
    %v728 = vpop.permute.xlu0 %727
    %729 = vrot.lane.b32.xlu0 %v672, 116
    %v730 = vpop.permute.xlu0 %729
    %731 = vrot.lane.b32.xlu0 %v673, 116
    %v732 = vpop.permute.xlu0 %731
    %733 = vrot.lane.b32.xlu0 %v674, 116
    %v734 = vpop.permute.xlu0 %733
    %739 = vrot.lane.b32.xlu0 %v671, 112
    %v740 = vpop.permute.xlu0 %739
    %741 = vrot.lane.b32.xlu0 %v672, 112
    %v742 = vpop.permute.xlu0 %741
    %743 = vrot.lane.b32.xlu0 %v673, 112
    %v744 = vpop.permute.xlu0 %743
    %745 = vrot.lane.b32.xlu0 %v674, 112
    %v746 = vpop.permute.xlu0 %745
    %751 = vrot.lane.b32.xlu0 %v671, 108
    %v752 = vpop.permute.xlu0 %751
    %753 = vrot.lane.b32.xlu0 %v672, 108
    %v754 = vpop.permute.xlu0 %753
    %755 = vrot.lane.b32.xlu0 %v673, 108
    %v756 = vpop.permute.xlu0 %755
    %757 = vrot.lane.b32.xlu0 %v674, 108
    %v758 = vpop.permute.xlu0 %757
    %763 = vrot.lane.b32.xlu0 %v671, 104
    %v764 = vpop.permute.xlu0 %763
    %765 = vrot.lane.b32.xlu0 %v672, 104
    %v766 = vpop.permute.xlu0 %765
    %767 = vrot.lane.b32.xlu0 %v673, 104
    %v768 = vpop.permute.xlu0 %767
    %769 = vrot.lane.b32.xlu0 %v674, 104
    %v770 = vpop.permute.xlu0 %769
    %775 = vrot.lane.b32.xlu0 %v671, 100
    %v776 = vpop.permute.xlu0 %775
    %777 = vrot.lane.b32.xlu0 %v672, 100
    %v778 = vpop.permute.xlu0 %777
    %779 = vrot.lane.b32.xlu0 %v673, 100
    %v780 = vpop.permute.xlu0 %779
    %781 = vrot.lane.b32.xlu0 %v674, 100
    %v782 = vpop.permute.xlu0 %781
    %v787 = vcombine.low %v671, %v716
    %v788 = vcombine.high %v671, %v716
    %v790 = vunpack.c.l.s4 1983009808
    %v791 = vunpack.c.0.s8 %v790
    %v792 = vlaneseq
    %v793 = vshrl.u32 %v792, 7
    %v794 = vsub.s32 %v791, %v793
    %v795 = vrot.slane %v787, %v794
    %v797 = vunpack.c.l.s4 1983009808
    %v798 = vunpack.c.0.s8 %v797
    %v799 = vlaneseq
    %v800 = vshrl.u32 %v799, 7
    %v801 = vsub.s32 %v798, %v800
    %v802 = vrot.slane %v788, %v801
    %v803 = vcombine.low %v704, %v728
    %v804 = vcombine.high %v704, %v728
    %v806 = vunpack.c.l.s4 1983009808
    %v807 = vunpack.c.0.s8 %v806
    %v808 = vlaneseq
    %v809 = vshrl.u32 %v808, 7
    %v810 = vsub.s32 %v807, %v809
    %v811 = vrot.slane %v803, %v810
    %v813 = vunpack.c.l.s4 1983009808
    %v814 = vunpack.c.0.s8 %v813
    %v815 = vlaneseq
    %v816 = vshrl.u32 %v815, 7
    %v817 = vsub.s32 %v814, %v816
    %v818 = vrot.slane %v804, %v817
    %v819 = vcombine.low %v740, %v764
    %v820 = vcombine.high %v740, %v764
    %v822 = vunpack.c.l.s4 1983009808
    %v823 = vunpack.c.0.s8 %v822
    %v824 = vlaneseq
    %v825 = vshrl.u32 %v824, 7
    %v826 = vsub.s32 %v823, %v825
    %v827 = vrot.slane %v819, %v826
    %v829 = vunpack.c.l.s4 1983009808
    %v830 = vunpack.c.0.s8 %v829
    %v831 = vlaneseq
    %v832 = vshrl.u32 %v831, 7
    %v833 = vsub.s32 %v830, %v832
    %v834 = vrot.slane %v820, %v833
    %v835 = vcombine.low %v752, %v776
    %v836 = vcombine.high %v752, %v776
    %v838 = vunpack.c.l.s4 1983009808
    %v839 = vunpack.c.0.s8 %v838
    %v840 = vlaneseq
    %v841 = vshrl.u32 %v840, 7
    %v842 = vsub.s32 %v839, %v841
    %v843 = vrot.slane %v835, %v842
    %v845 = vunpack.c.l.s4 1983009808
    %v846 = vunpack.c.0.s8 %v845
    %v847 = vlaneseq
    %v848 = vshrl.u32 %v847, 7
    %v849 = vsub.s32 %v846, %v848
    %v850 = vrot.slane %v836, %v849
    %v851 = vcombine.low %v795, %v811
    %v852 = vcombine.high %v795, %v811
    %v854 = vunpack.c.l.s4 1934713408
    %v855 = vunpack.c.0.s8 %v854
    %v856 = vlaneseq
    %v857 = vshrl.u32 %v856, 7
    %v858 = vsub.s32 %v855, %v857
    %v859 = vrot.slane %v851, %v858
    %v861 = vunpack.c.l.s4 1934713408
    %v862 = vunpack.c.0.s8 %v861
    %v863 = vlaneseq
    %v864 = vshrl.u32 %v863, 7
    %v865 = vsub.s32 %v862, %v864
    %v866 = vrot.slane %v852, %v865
    %v867 = vcombine.low %v802, %v818
    %v868 = vcombine.high %v802, %v818
    %v870 = vunpack.c.l.s4 1934713408
    %v871 = vunpack.c.0.s8 %v870
    %v872 = vlaneseq
    %v873 = vshrl.u32 %v872, 7
    %v874 = vsub.s32 %v871, %v873
    %v875 = vrot.slane %v867, %v874
    %v877 = vunpack.c.l.s4 1934713408
    %v878 = vunpack.c.0.s8 %v877
    %v879 = vlaneseq
    %v880 = vshrl.u32 %v879, 7
    %v881 = vsub.s32 %v878, %v880
    %v882 = vrot.slane %v868, %v881
    %v883 = vcombine.low %v827, %v843
    %v884 = vcombine.high %v827, %v843
    %v886 = vunpack.c.l.s4 1934713408
    %v887 = vunpack.c.0.s8 %v886
    %v888 = vlaneseq
    %v889 = vshrl.u32 %v888, 7
    %v890 = vsub.s32 %v887, %v889
    %v891 = vrot.slane %v883, %v890
    %v893 = vunpack.c.l.s4 1934713408
    %v894 = vunpack.c.0.s8 %v893
    %v895 = vlaneseq
    %v896 = vshrl.u32 %v895, 7
    %v897 = vsub.s32 %v894, %v896
    %v898 = vrot.slane %v884, %v897
    %v899 = vcombine.low %v834, %v850
    %v900 = vcombine.high %v834, %v850
    %v902 = vunpack.c.l.s4 1934713408
    %v903 = vunpack.c.0.s8 %v902
    %v904 = vlaneseq
    %v905 = vshrl.u32 %v904, 7
    %v906 = vsub.s32 %v903, %v905
    %v907 = vrot.slane %v899, %v906
    %v909 = vunpack.c.l.s4 1934713408
    %v910 = vunpack.c.0.s8 %v909
    %v911 = vlaneseq
    %v912 = vshrl.u32 %v911, 7
    %v913 = vsub.s32 %v910, %v912
    %v914 = vrot.slane %v900, %v913
    %v915 = vcombine.low %v859, %v891
    %v916 = vcombine.high %v859, %v891
    %v917 = vcombine.low %v866, %v898
    %v918 = vcombine.high %v866, %v898
    %v919 = vcombine.low %v875, %v907
    %v920 = vcombine.high %v875, %v907
    %v921 = vcombine.low %v882, %v914
    %v922 = vcombine.high %v882, %v914
    %v923 = vcombine.low %v672, %v718
    %v924 = vcombine.high %v672, %v718
    %v926 = vunpack.c.l.s4 1983009808
    %v927 = vunpack.c.0.s8 %v926
    %v928 = vlaneseq
    %v929 = vshrl.u32 %v928, 7
    %v930 = vsub.s32 %v927, %v929
    %v931 = vrot.slane %v923, %v930
    %v933 = vunpack.c.l.s4 1983009808
    %v934 = vunpack.c.0.s8 %v933
    %v935 = vlaneseq
    %v936 = vshrl.u32 %v935, 7
    %v937 = vsub.s32 %v934, %v936
    %v938 = vrot.slane %v924, %v937
    %v939 = vcombine.low %v706, %v730
    %v940 = vcombine.high %v706, %v730
    %v942 = vunpack.c.l.s4 1983009808
    %v943 = vunpack.c.0.s8 %v942
    %v944 = vlaneseq
    %v945 = vshrl.u32 %v944, 7
    %v946 = vsub.s32 %v943, %v945
    %v947 = vrot.slane %v939, %v946
    %v949 = vunpack.c.l.s4 1983009808
    %v950 = vunpack.c.0.s8 %v949
    %v951 = vlaneseq
    %v952 = vshrl.u32 %v951, 7
    %v953 = vsub.s32 %v950, %v952
    %v954 = vrot.slane %v940, %v953
    %v955 = vcombine.low %v742, %v766
    %v956 = vcombine.high %v742, %v766
    %v958 = vunpack.c.l.s4 1983009808
    %v959 = vunpack.c.0.s8 %v958
    %v960 = vlaneseq
    %v961 = vshrl.u32 %v960, 7
    %v962 = vsub.s32 %v959, %v961
    %v963 = vrot.slane %v955, %v962
    %v965 = vunpack.c.l.s4 1983009808
    %v966 = vunpack.c.0.s8 %v965
    %v967 = vlaneseq
    %v968 = vshrl.u32 %v967, 7
    %v969 = vsub.s32 %v966, %v968
    %v970 = vrot.slane %v956, %v969
    %v971 = vcombine.low %v754, %v778
    %v972 = vcombine.high %v754, %v778
    %v974 = vunpack.c.l.s4 1983009808
    %v975 = vunpack.c.0.s8 %v974
    %v976 = vlaneseq
    %v977 = vshrl.u32 %v976, 7
    %v978 = vsub.s32 %v975, %v977
    %v979 = vrot.slane %v971, %v978
    %v981 = vunpack.c.l.s4 1983009808
    %v982 = vunpack.c.0.s8 %v981
    %v983 = vlaneseq
    %v984 = vshrl.u32 %v983, 7
    %v985 = vsub.s32 %v982, %v984
    %v986 = vrot.slane %v972, %v985
    %v987 = vcombine.low %v931, %v947
    %v988 = vcombine.high %v931, %v947
    %v990 = vunpack.c.l.s4 1934713408
    %v991 = vunpack.c.0.s8 %v990
    %v992 = vlaneseq
    %v993 = vshrl.u32 %v992, 7
    %v994 = vsub.s32 %v991, %v993
    %v995 = vrot.slane %v987, %v994
    %v997 = vunpack.c.l.s4 1934713408
    %v998 = vunpack.c.0.s8 %v997
    %v999 = vlaneseq
    %v1000 = vshrl.u32 %v999, 7
    %v1001 = vsub.s32 %v998, %v1000
    %v1002 = vrot.slane %v988, %v1001
    %v1003 = vcombine.low %v938, %v954
    %v1004 = vcombine.high %v938, %v954
    %v1006 = vunpack.c.l.s4 1934713408
    %v1007 = vunpack.c.0.s8 %v1006
    %v1008 = vlaneseq
    %v1009 = vshrl.u32 %v1008, 7
    %v1010 = vsub.s32 %v1007, %v1009
    %v1011 = vrot.slane %v1003, %v1010
    %v1013 = vunpack.c.l.s4 1934713408
    %v1014 = vunpack.c.0.s8 %v1013
    %v1015 = vlaneseq
    %v1016 = vshrl.u32 %v1015, 7
    %v1017 = vsub.s32 %v1014, %v1016
    %v1018 = vrot.slane %v1004, %v1017
    %v1019 = vcombine.low %v963, %v979
    %v1020 = vcombine.high %v963, %v979
    %v1022 = vunpack.c.l.s4 1934713408
    %v1023 = vunpack.c.0.s8 %v1022
    %v1024 = vlaneseq
    %v1025 = vshrl.u32 %v1024, 7
    %v1026 = vsub.s32 %v1023, %v1025
    %v1027 = vrot.slane %v1019, %v1026
    %v1029 = vunpack.c.l.s4 1934713408
    %v1030 = vunpack.c.0.s8 %v1029
    %v1031 = vlaneseq
    %v1032 = vshrl.u32 %v1031, 7
    %v1033 = vsub.s32 %v1030, %v1032
    %v1034 = vrot.slane %v1020, %v1033
    %v1035 = vcombine.low %v970, %v986
    %v1036 = vcombine.high %v970, %v986
    %v1038 = vunpack.c.l.s4 1934713408
    %v1039 = vunpack.c.0.s8 %v1038
    %v1040 = vlaneseq
    %v1041 = vshrl.u32 %v1040, 7
    %v1042 = vsub.s32 %v1039, %v1041
    %v1043 = vrot.slane %v1035, %v1042
    %v1045 = vunpack.c.l.s4 1934713408
    %v1046 = vunpack.c.0.s8 %v1045
    %v1047 = vlaneseq
    %v1048 = vshrl.u32 %v1047, 7
    %v1049 = vsub.s32 %v1046, %v1048
    %v1050 = vrot.slane %v1036, %v1049
    %v1051 = vcombine.low %v995, %v1027
    %v1052 = vcombine.high %v995, %v1027
    %v1053 = vcombine.low %v1002, %v1034
    %v1054 = vcombine.high %v1002, %v1034
    %v1055 = vcombine.low %v1011, %v1043
    %v1056 = vcombine.high %v1011, %v1043
    %v1057 = vcombine.low %v1018, %v1050
    %v1058 = vcombine.high %v1018, %v1050
    %v1059 = vcombine.low %v673, %v720
    %v1060 = vcombine.high %v673, %v720
    %v1062 = vunpack.c.l.s4 1983009808
    %v1063 = vunpack.c.0.s8 %v1062
    %v1064 = vlaneseq
    %v1065 = vshrl.u32 %v1064, 7
    %v1066 = vsub.s32 %v1063, %v1065
    %v1067 = vrot.slane %v1059, %v1066
    %v1069 = vunpack.c.l.s4 1983009808
    %v1070 = vunpack.c.0.s8 %v1069
    %v1071 = vlaneseq
    %v1072 = vshrl.u32 %v1071, 7
    %v1073 = vsub.s32 %v1070, %v1072
    %v1074 = vrot.slane %v1060, %v1073
    %v1075 = vcombine.low %v708, %v732
    %v1076 = vcombine.high %v708, %v732
    %v1078 = vunpack.c.l.s4 1983009808
    %v1079 = vunpack.c.0.s8 %v1078
    %v1080 = vlaneseq
    %v1081 = vshrl.u32 %v1080, 7
    %v1082 = vsub.s32 %v1079, %v1081
    %v1083 = vrot.slane %v1075, %v1082
    %v1085 = vunpack.c.l.s4 1983009808
    %v1086 = vunpack.c.0.s8 %v1085
    %v1087 = vlaneseq
    %v1088 = vshrl.u32 %v1087, 7
    %v1089 = vsub.s32 %v1086, %v1088
    %v1090 = vrot.slane %v1076, %v1089
    %v1091 = vcombine.low %v744, %v768
    %v1092 = vcombine.high %v744, %v768
    %v1094 = vunpack.c.l.s4 1983009808
    %v1095 = vunpack.c.0.s8 %v1094
    %v1096 = vlaneseq
    %v1097 = vshrl.u32 %v1096, 7
    %v1098 = vsub.s32 %v1095, %v1097
    %v1099 = vrot.slane %v1091, %v1098
    %v1101 = vunpack.c.l.s4 1983009808
    %v1102 = vunpack.c.0.s8 %v1101
    %v1103 = vlaneseq
    %v1104 = vshrl.u32 %v1103, 7
    %v1105 = vsub.s32 %v1102, %v1104
    %v1106 = vrot.slane %v1092, %v1105
    %v1107 = vcombine.low %v756, %v780
    %v1108 = vcombine.high %v756, %v780
    %v1110 = vunpack.c.l.s4 1983009808
    %v1111 = vunpack.c.0.s8 %v1110
    %v1112 = vlaneseq
    %v1113 = vshrl.u32 %v1112, 7
    %v1114 = vsub.s32 %v1111, %v1113
    %v1115 = vrot.slane %v1107, %v1114
    %v1117 = vunpack.c.l.s4 1983009808
    %v1118 = vunpack.c.0.s8 %v1117
    %v1119 = vlaneseq
    %v1120 = vshrl.u32 %v1119, 7
    %v1121 = vsub.s32 %v1118, %v1120
    %v1122 = vrot.slane %v1108, %v1121
    %v1123 = vcombine.low %v1067, %v1083
    %v1124 = vcombine.high %v1067, %v1083
    %v1126 = vunpack.c.l.s4 1934713408
    %v1127 = vunpack.c.0.s8 %v1126
    %v1128 = vlaneseq
    %v1129 = vshrl.u32 %v1128, 7
    %v1130 = vsub.s32 %v1127, %v1129
    %v1131 = vrot.slane %v1123, %v1130
    %v1133 = vunpack.c.l.s4 1934713408
    %v1134 = vunpack.c.0.s8 %v1133
    %v1135 = vlaneseq
    %v1136 = vshrl.u32 %v1135, 7
    %v1137 = vsub.s32 %v1134, %v1136
    %v1138 = vrot.slane %v1124, %v1137
    %v1139 = vcombine.low %v1074, %v1090
    %v1140 = vcombine.high %v1074, %v1090
    %v1142 = vunpack.c.l.s4 1934713408
    %v1143 = vunpack.c.0.s8 %v1142
    %v1144 = vlaneseq
    %v1145 = vshrl.u32 %v1144, 7
    %v1146 = vsub.s32 %v1143, %v1145
    %v1147 = vrot.slane %v1139, %v1146
    %v1149 = vunpack.c.l.s4 1934713408
    %v1150 = vunpack.c.0.s8 %v1149
    %v1151 = vlaneseq
    %v1152 = vshrl.u32 %v1151, 7
    %v1153 = vsub.s32 %v1150, %v1152
    %v1154 = vrot.slane %v1140, %v1153
    %v1155 = vcombine.low %v1099, %v1115
    %v1156 = vcombine.high %v1099, %v1115
    %v1158 = vunpack.c.l.s4 1934713408
    %v1159 = vunpack.c.0.s8 %v1158
    %v1160 = vlaneseq
    %v1161 = vshrl.u32 %v1160, 7
    %v1162 = vsub.s32 %v1159, %v1161
    %v1163 = vrot.slane %v1155, %v1162
    %v1165 = vunpack.c.l.s4 1934713408
    %v1166 = vunpack.c.0.s8 %v1165
    %v1167 = vlaneseq
    %v1168 = vshrl.u32 %v1167, 7
    %v1169 = vsub.s32 %v1166, %v1168
    %v1170 = vrot.slane %v1156, %v1169
    %v1171 = vcombine.low %v1106, %v1122
    %v1172 = vcombine.high %v1106, %v1122
    %v1174 = vunpack.c.l.s4 1934713408
    %v1175 = vunpack.c.0.s8 %v1174
    %v1176 = vlaneseq
    %v1177 = vshrl.u32 %v1176, 7
    %v1178 = vsub.s32 %v1175, %v1177
    %v1179 = vrot.slane %v1171, %v1178
    %v1181 = vunpack.c.l.s4 1934713408
    %v1182 = vunpack.c.0.s8 %v1181
    %v1183 = vlaneseq
    %v1184 = vshrl.u32 %v1183, 7
    %v1185 = vsub.s32 %v1182, %v1184
    %v1186 = vrot.slane %v1172, %v1185
    %v1187 = vcombine.low %v1131, %v1163
    %v1188 = vcombine.high %v1131, %v1163
    %v1189 = vcombine.low %v1138, %v1170
    %v1190 = vcombine.high %v1138, %v1170
    %v1191 = vcombine.low %v1147, %v1179
    %v1192 = vcombine.high %v1147, %v1179
    %v1193 = vcombine.low %v1154, %v1186
    %v1194 = vcombine.high %v1154, %v1186
    %v1195 = vcombine.low %v674, %v722
    %v1196 = vcombine.high %v674, %v722
    %v1198 = vunpack.c.l.s4 1983009808
    %v1199 = vunpack.c.0.s8 %v1198
    %v1200 = vlaneseq
    %v1201 = vshrl.u32 %v1200, 7
    %v1202 = vsub.s32 %v1199, %v1201
    %v1203 = vrot.slane %v1195, %v1202
    %v1205 = vunpack.c.l.s4 1983009808
    %v1206 = vunpack.c.0.s8 %v1205
    %v1207 = vlaneseq
    %v1208 = vshrl.u32 %v1207, 7
    %v1209 = vsub.s32 %v1206, %v1208
    %v1210 = vrot.slane %v1196, %v1209
    %v1211 = vcombine.low %v710, %v734
    %v1212 = vcombine.high %v710, %v734
    %v1214 = vunpack.c.l.s4 1983009808
    %v1215 = vunpack.c.0.s8 %v1214
    %v1216 = vlaneseq
    %v1217 = vshrl.u32 %v1216, 7
    %v1218 = vsub.s32 %v1215, %v1217
    %v1219 = vrot.slane %v1211, %v1218
    %v1221 = vunpack.c.l.s4 1983009808
    %v1222 = vunpack.c.0.s8 %v1221
    %v1223 = vlaneseq
    %v1224 = vshrl.u32 %v1223, 7
    %v1225 = vsub.s32 %v1222, %v1224
    %v1226 = vrot.slane %v1212, %v1225
    %v1227 = vcombine.low %v746, %v770
    %v1228 = vcombine.high %v746, %v770
    %v1230 = vunpack.c.l.s4 1983009808
    %v1231 = vunpack.c.0.s8 %v1230
    %v1232 = vlaneseq
    %v1233 = vshrl.u32 %v1232, 7
    %v1234 = vsub.s32 %v1231, %v1233
    %v1235 = vrot.slane %v1227, %v1234
    %v1237 = vunpack.c.l.s4 1983009808
    %v1238 = vunpack.c.0.s8 %v1237
    %v1239 = vlaneseq
    %v1240 = vshrl.u32 %v1239, 7
    %v1241 = vsub.s32 %v1238, %v1240
    %v1242 = vrot.slane %v1228, %v1241
    %v1243 = vcombine.low %v758, %v782
    %v1244 = vcombine.high %v758, %v782
    %v1246 = vunpack.c.l.s4 1983009808
    %v1247 = vunpack.c.0.s8 %v1246
    %v1248 = vlaneseq
    %v1249 = vshrl.u32 %v1248, 7
    %v1250 = vsub.s32 %v1247, %v1249
    %v1251 = vrot.slane %v1243, %v1250
    %v1253 = vunpack.c.l.s4 1983009808
    %v1254 = vunpack.c.0.s8 %v1253
    %v1255 = vlaneseq
    %v1256 = vshrl.u32 %v1255, 7
    %v1257 = vsub.s32 %v1254, %v1256
    %v1258 = vrot.slane %v1244, %v1257
    %v1259 = vcombine.low %v1203, %v1219
    %v1260 = vcombine.high %v1203, %v1219
    %v1262 = vunpack.c.l.s4 1934713408
    %v1263 = vunpack.c.0.s8 %v1262
    %v1264 = vlaneseq
    %v1265 = vshrl.u32 %v1264, 7
    %v1266 = vsub.s32 %v1263, %v1265
    %v1267 = vrot.slane %v1259, %v1266
    %v1269 = vunpack.c.l.s4 1934713408
    %v1270 = vunpack.c.0.s8 %v1269
    %v1271 = vlaneseq
    %v1272 = vshrl.u32 %v1271, 7
    %v1273 = vsub.s32 %v1270, %v1272
    %v1274 = vrot.slane %v1260, %v1273
    %v1275 = vcombine.low %v1210, %v1226
    %v1276 = vcombine.high %v1210, %v1226
    %v1278 = vunpack.c.l.s4 1934713408
    %v1279 = vunpack.c.0.s8 %v1278
    %v1280 = vlaneseq
    %v1281 = vshrl.u32 %v1280, 7
    %v1282 = vsub.s32 %v1279, %v1281
    %v1283 = vrot.slane %v1275, %v1282
    %v1285 = vunpack.c.l.s4 1934713408
    %v1286 = vunpack.c.0.s8 %v1285
    %v1287 = vlaneseq
    %v1288 = vshrl.u32 %v1287, 7
    %v1289 = vsub.s32 %v1286, %v1288
    %v1290 = vrot.slane %v1276, %v1289
    %v1291 = vcombine.low %v1235, %v1251
    %v1292 = vcombine.high %v1235, %v1251
    %v1294 = vunpack.c.l.s4 1934713408
    %v1295 = vunpack.c.0.s8 %v1294
    %v1296 = vlaneseq
    %v1297 = vshrl.u32 %v1296, 7
    %v1298 = vsub.s32 %v1295, %v1297
    %v1299 = vrot.slane %v1291, %v1298
    %v1301 = vunpack.c.l.s4 1934713408
    %v1302 = vunpack.c.0.s8 %v1301
    %v1303 = vlaneseq
    %v1304 = vshrl.u32 %v1303, 7
    %v1305 = vsub.s32 %v1302, %v1304
    %v1306 = vrot.slane %v1292, %v1305
    %v1307 = vcombine.low %v1242, %v1258
    %v1308 = vcombine.high %v1242, %v1258
    %v1310 = vunpack.c.l.s4 1934713408
    %v1311 = vunpack.c.0.s8 %v1310
    %v1312 = vlaneseq
    %v1313 = vshrl.u32 %v1312, 7
    %v1314 = vsub.s32 %v1311, %v1313
    %v1315 = vrot.slane %v1307, %v1314
    %v1317 = vunpack.c.l.s4 1934713408
    %v1318 = vunpack.c.0.s8 %v1317
    %v1319 = vlaneseq
    %v1320 = vshrl.u32 %v1319, 7
    %v1321 = vsub.s32 %v1318, %v1320
    %v1322 = vrot.slane %v1308, %v1321
    %v1323 = vcombine.low %v1267, %v1299
    %v1324 = vcombine.high %v1267, %v1299
    %v1325 = vcombine.low %v1274, %v1306
    %v1326 = vcombine.high %v1274, %v1306
    %v1327 = vcombine.low %v1283, %v1315
    %v1328 = vcombine.high %v1283, %v1315
    %v1329 = vcombine.low %v1290, %v1322
    %v1330 = vcombine.high %v1290, %v1322
    %v1331 = vcombine.low %v915, %v917
    %v1332 = vcombine.high %v915, %v917
    %v1334 = vunpack.c.l.s4 1983009808
    %v1335 = vunpack.c.0.s8 %v1334
    %v1336 = vlaneseq
    %v1337 = vshrl.u32 %v1336, 7
    %v1338 = vsub.s32 %v1335, %v1337
    %v1339 = vrot.slane %v1331, %v1338
    %v1341 = vunpack.c.l.s4 1983009808
    %v1342 = vunpack.c.0.s8 %v1341
    %v1343 = vlaneseq
    %v1344 = vshrl.u32 %v1343, 7
    %v1345 = vsub.s32 %v1342, %v1344
    %v1346 = vrot.slane %v1332, %v1345
    %v1347 = vcombine.low %v916, %v918
    %v1348 = vcombine.high %v916, %v918
    %v1350 = vunpack.c.l.s4 1983009808
    %v1351 = vunpack.c.0.s8 %v1350
    %v1352 = vlaneseq
    %v1353 = vshrl.u32 %v1352, 7
    %v1354 = vsub.s32 %v1351, %v1353
    %v1355 = vrot.slane %v1347, %v1354
    %v1357 = vunpack.c.l.s4 1983009808
    %v1358 = vunpack.c.0.s8 %v1357
    %v1359 = vlaneseq
    %v1360 = vshrl.u32 %v1359, 7
    %v1361 = vsub.s32 %v1358, %v1360
    %v1362 = vrot.slane %v1348, %v1361
    %v1363 = vcombine.low %v919, %v921
    %v1364 = vcombine.high %v919, %v921
    %v1366 = vunpack.c.l.s4 1983009808
    %v1367 = vunpack.c.0.s8 %v1366
    %v1368 = vlaneseq
    %v1369 = vshrl.u32 %v1368, 7
    %v1370 = vsub.s32 %v1367, %v1369
    %v1371 = vrot.slane %v1363, %v1370
    %v1373 = vunpack.c.l.s4 1983009808
    %v1374 = vunpack.c.0.s8 %v1373
    %v1375 = vlaneseq
    %v1376 = vshrl.u32 %v1375, 7
    %v1377 = vsub.s32 %v1374, %v1376
    %v1378 = vrot.slane %v1364, %v1377
    %v1379 = vcombine.low %v920, %v922
    %v1380 = vcombine.high %v920, %v922
    %v1382 = vunpack.c.l.s4 1983009808
    %v1383 = vunpack.c.0.s8 %v1382
    %v1384 = vlaneseq
    %v1385 = vshrl.u32 %v1384, 7
    %v1386 = vsub.s32 %v1383, %v1385
    %v1387 = vrot.slane %v1379, %v1386
    %v1389 = vunpack.c.l.s4 1983009808
    %v1390 = vunpack.c.0.s8 %v1389
    %v1391 = vlaneseq
    %v1392 = vshrl.u32 %v1391, 7
    %v1393 = vsub.s32 %v1390, %v1392
    %v1394 = vrot.slane %v1380, %v1393
    %v1395 = vcombine.low %v1339, %v1355
    %v1396 = vcombine.high %v1339, %v1355
    %v1398 = vunpack.c.l.s4 1934713408
    %v1399 = vunpack.c.0.s8 %v1398
    %v1400 = vlaneseq
    %v1401 = vshrl.u32 %v1400, 7
    %v1402 = vsub.s32 %v1399, %v1401
    %v1403 = vrot.slane %v1395, %v1402
    %v1405 = vunpack.c.l.s4 1934713408
    %v1406 = vunpack.c.0.s8 %v1405
    %v1407 = vlaneseq
    %v1408 = vshrl.u32 %v1407, 7
    %v1409 = vsub.s32 %v1406, %v1408
    %v1410 = vrot.slane %v1396, %v1409
    %v1411 = vcombine.low %v1346, %v1362
    %v1412 = vcombine.high %v1346, %v1362
    %v1414 = vunpack.c.l.s4 1934713408
    %v1415 = vunpack.c.0.s8 %v1414
    %v1416 = vlaneseq
    %v1417 = vshrl.u32 %v1416, 7
    %v1418 = vsub.s32 %v1415, %v1417
    %v1419 = vrot.slane %v1411, %v1418
    %v1421 = vunpack.c.l.s4 1934713408
    %v1422 = vunpack.c.0.s8 %v1421
    %v1423 = vlaneseq
    %v1424 = vshrl.u32 %v1423, 7
    %v1425 = vsub.s32 %v1422, %v1424
    %v1426 = vrot.slane %v1412, %v1425
    %v1427 = vcombine.low %v1371, %v1387
    %v1428 = vcombine.high %v1371, %v1387
    %v1430 = vunpack.c.l.s4 1934713408
    %v1431 = vunpack.c.0.s8 %v1430
    %v1432 = vlaneseq
    %v1433 = vshrl.u32 %v1432, 7
    %v1434 = vsub.s32 %v1431, %v1433
    %v1435 = vrot.slane %v1427, %v1434
    %v1437 = vunpack.c.l.s4 1934713408
    %v1438 = vunpack.c.0.s8 %v1437
    %v1439 = vlaneseq
    %v1440 = vshrl.u32 %v1439, 7
    %v1441 = vsub.s32 %v1438, %v1440
    %v1442 = vrot.slane %v1428, %v1441
    %v1443 = vcombine.low %v1378, %v1394
    %v1444 = vcombine.high %v1378, %v1394
    %v1446 = vunpack.c.l.s4 1934713408
    %v1447 = vunpack.c.0.s8 %v1446
    %v1448 = vlaneseq
    %v1449 = vshrl.u32 %v1448, 7
    %v1450 = vsub.s32 %v1447, %v1449
    %v1451 = vrot.slane %v1443, %v1450
    %v1453 = vunpack.c.l.s4 1934713408
    %v1454 = vunpack.c.0.s8 %v1453
    %v1455 = vlaneseq
    %v1456 = vshrl.u32 %v1455, 7
    %v1457 = vsub.s32 %v1454, %v1456
    %v1458 = vrot.slane %v1444, %v1457
    %v1459 = vcombine.low %v1403, %v1435
    %v1460 = vcombine.high %v1403, %v1435
    %v1461 = vcombine.low %v1410, %v1442
    %v1462 = vcombine.high %v1410, %v1442
    %v1463 = vcombine.low %v1419, %v1451
    %v1464 = vcombine.high %v1419, %v1451
    %v1465 = vcombine.low %v1426, %v1458
    %v1466 = vcombine.high %v1426, %v1458
    %v1467 = vcombine.low %v1051, %v1053
    %v1468 = vcombine.high %v1051, %v1053
    %v1470 = vunpack.c.l.s4 1983009808
    %v1471 = vunpack.c.0.s8 %v1470
    %v1472 = vlaneseq
    %v1473 = vshrl.u32 %v1472, 7
    %v1474 = vsub.s32 %v1471, %v1473
    %v1475 = vrot.slane %v1467, %v1474
    %v1477 = vunpack.c.l.s4 1983009808
    %v1478 = vunpack.c.0.s8 %v1477
    %v1479 = vlaneseq
    %v1480 = vshrl.u32 %v1479, 7
    %v1481 = vsub.s32 %v1478, %v1480
    %v1482 = vrot.slane %v1468, %v1481
    %v1483 = vcombine.low %v1052, %v1054
    %v1484 = vcombine.high %v1052, %v1054
    %v1486 = vunpack.c.l.s4 1983009808
    %v1487 = vunpack.c.0.s8 %v1486
    %v1488 = vlaneseq
    %v1489 = vshrl.u32 %v1488, 7
    %v1490 = vsub.s32 %v1487, %v1489
    %v1491 = vrot.slane %v1483, %v1490
    %v1493 = vunpack.c.l.s4 1983009808
    %v1494 = vunpack.c.0.s8 %v1493
    %v1495 = vlaneseq
    %v1496 = vshrl.u32 %v1495, 7
    %v1497 = vsub.s32 %v1494, %v1496
    %v1498 = vrot.slane %v1484, %v1497
    %v1499 = vcombine.low %v1055, %v1057
    %v1500 = vcombine.high %v1055, %v1057
    %v1502 = vunpack.c.l.s4 1983009808
    %v1503 = vunpack.c.0.s8 %v1502
    %v1504 = vlaneseq
    %v1505 = vshrl.u32 %v1504, 7
    %v1506 = vsub.s32 %v1503, %v1505
    %v1507 = vrot.slane %v1499, %v1506
    %v1509 = vunpack.c.l.s4 1983009808
    %v1510 = vunpack.c.0.s8 %v1509
    %v1511 = vlaneseq
    %v1512 = vshrl.u32 %v1511, 7
    %v1513 = vsub.s32 %v1510, %v1512
    %v1514 = vrot.slane %v1500, %v1513
    %v1515 = vcombine.low %v1056, %v1058
    %v1516 = vcombine.high %v1056, %v1058
    %v1518 = vunpack.c.l.s4 1983009808
    %v1519 = vunpack.c.0.s8 %v1518
    %v1520 = vlaneseq
    %v1521 = vshrl.u32 %v1520, 7
    %v1522 = vsub.s32 %v1519, %v1521
    %v1523 = vrot.slane %v1515, %v1522
    %v1525 = vunpack.c.l.s4 1983009808
    %v1526 = vunpack.c.0.s8 %v1525
    %v1527 = vlaneseq
    %v1528 = vshrl.u32 %v1527, 7
    %v1529 = vsub.s32 %v1526, %v1528
    %v1530 = vrot.slane %v1516, %v1529
    %v1531 = vcombine.low %v1475, %v1491
    %v1532 = vcombine.high %v1475, %v1491
    %v1534 = vunpack.c.l.s4 1934713408
    %v1535 = vunpack.c.0.s8 %v1534
    %v1536 = vlaneseq
    %v1537 = vshrl.u32 %v1536, 7
    %v1538 = vsub.s32 %v1535, %v1537
    %v1539 = vrot.slane %v1531, %v1538
    %v1541 = vunpack.c.l.s4 1934713408
    %v1542 = vunpack.c.0.s8 %v1541
    %v1543 = vlaneseq
    %v1544 = vshrl.u32 %v1543, 7
    %v1545 = vsub.s32 %v1542, %v1544
    %v1546 = vrot.slane %v1532, %v1545
    %v1547 = vcombine.low %v1482, %v1498
    %v1548 = vcombine.high %v1482, %v1498
    %v1550 = vunpack.c.l.s4 1934713408
    %v1551 = vunpack.c.0.s8 %v1550
    %v1552 = vlaneseq
    %v1553 = vshrl.u32 %v1552, 7
    %v1554 = vsub.s32 %v1551, %v1553
    %v1555 = vrot.slane %v1547, %v1554
    %v1557 = vunpack.c.l.s4 1934713408
    %v1558 = vunpack.c.0.s8 %v1557
    %v1559 = vlaneseq
    %v1560 = vshrl.u32 %v1559, 7
    %v1561 = vsub.s32 %v1558, %v1560
    %v1562 = vrot.slane %v1548, %v1561
    %v1563 = vcombine.low %v1507, %v1523
    %v1564 = vcombine.high %v1507, %v1523
    %v1566 = vunpack.c.l.s4 1934713408
    %v1567 = vunpack.c.0.s8 %v1566
    %v1568 = vlaneseq
    %v1569 = vshrl.u32 %v1568, 7
    %v1570 = vsub.s32 %v1567, %v1569
    %v1571 = vrot.slane %v1563, %v1570
    %v1573 = vunpack.c.l.s4 1934713408
    %v1574 = vunpack.c.0.s8 %v1573
    %v1575 = vlaneseq
    %v1576 = vshrl.u32 %v1575, 7
    %v1577 = vsub.s32 %v1574, %v1576
    %v1578 = vrot.slane %v1564, %v1577
    %v1579 = vcombine.low %v1514, %v1530
    %v1580 = vcombine.high %v1514, %v1530
    %v1582 = vunpack.c.l.s4 1934713408
    %v1583 = vunpack.c.0.s8 %v1582
    %v1584 = vlaneseq
    %v1585 = vshrl.u32 %v1584, 7
    %v1586 = vsub.s32 %v1583, %v1585
    %v1587 = vrot.slane %v1579, %v1586
    %v1589 = vunpack.c.l.s4 1934713408
    %v1590 = vunpack.c.0.s8 %v1589
    %v1591 = vlaneseq
    %v1592 = vshrl.u32 %v1591, 7
    %v1593 = vsub.s32 %v1590, %v1592
    %v1594 = vrot.slane %v1580, %v1593
    %v1595 = vcombine.low %v1539, %v1571
    %v1596 = vcombine.high %v1539, %v1571
    %v1597 = vcombine.low %v1546, %v1578
    %v1598 = vcombine.high %v1546, %v1578
    %v1599 = vcombine.low %v1555, %v1587
    %v1600 = vcombine.high %v1555, %v1587
    %v1601 = vcombine.low %v1562, %v1594
    %v1602 = vcombine.high %v1562, %v1594
    %v1603 = vcombine.low %v1187, %v1189
    %v1604 = vcombine.high %v1187, %v1189
    %v1606 = vunpack.c.l.s4 1983009808
    %v1607 = vunpack.c.0.s8 %v1606
    %v1608 = vlaneseq
    %v1609 = vshrl.u32 %v1608, 7
    %v1610 = vsub.s32 %v1607, %v1609
    %v1611 = vrot.slane %v1603, %v1610
    %v1613 = vunpack.c.l.s4 1983009808
    %v1614 = vunpack.c.0.s8 %v1613
    %v1615 = vlaneseq
    %v1616 = vshrl.u32 %v1615, 7
    %v1617 = vsub.s32 %v1614, %v1616
    %v1618 = vrot.slane %v1604, %v1617
    %v1619 = vcombine.low %v1188, %v1190
    %v1620 = vcombine.high %v1188, %v1190
    %v1622 = vunpack.c.l.s4 1983009808
    %v1623 = vunpack.c.0.s8 %v1622
    %v1624 = vlaneseq
    %v1625 = vshrl.u32 %v1624, 7
    %v1626 = vsub.s32 %v1623, %v1625
    %v1627 = vrot.slane %v1619, %v1626
    %v1629 = vunpack.c.l.s4 1983009808
    %v1630 = vunpack.c.0.s8 %v1629
    %v1631 = vlaneseq
    %v1632 = vshrl.u32 %v1631, 7
    %v1633 = vsub.s32 %v1630, %v1632
    %v1634 = vrot.slane %v1620, %v1633
    %v1635 = vcombine.low %v1191, %v1193
    %v1636 = vcombine.high %v1191, %v1193
    %v1638 = vunpack.c.l.s4 1983009808
    %v1639 = vunpack.c.0.s8 %v1638
    %v1640 = vlaneseq
    %v1641 = vshrl.u32 %v1640, 7
    %v1642 = vsub.s32 %v1639, %v1641
    %v1643 = vrot.slane %v1635, %v1642
    %v1645 = vunpack.c.l.s4 1983009808
    %v1646 = vunpack.c.0.s8 %v1645
    %v1647 = vlaneseq
    %v1648 = vshrl.u32 %v1647, 7
    %v1649 = vsub.s32 %v1646, %v1648
    %v1650 = vrot.slane %v1636, %v1649
    %v1651 = vcombine.low %v1192, %v1194
    %v1652 = vcombine.high %v1192, %v1194
    %v1654 = vunpack.c.l.s4 1983009808
    %v1655 = vunpack.c.0.s8 %v1654
    %v1656 = vlaneseq
    %v1657 = vshrl.u32 %v1656, 7
    %v1658 = vsub.s32 %v1655, %v1657
    %v1659 = vrot.slane %v1651, %v1658
    %v1661 = vunpack.c.l.s4 1983009808
    %v1662 = vunpack.c.0.s8 %v1661
    %v1663 = vlaneseq
    %v1664 = vshrl.u32 %v1663, 7
    %v1665 = vsub.s32 %v1662, %v1664
    %v1666 = vrot.slane %v1652, %v1665
    %v1667 = vcombine.low %v1611, %v1627
    %v1668 = vcombine.high %v1611, %v1627
    %v1670 = vunpack.c.l.s4 1934713408
    %v1671 = vunpack.c.0.s8 %v1670
    %v1672 = vlaneseq
    %v1673 = vshrl.u32 %v1672, 7
    %v1674 = vsub.s32 %v1671, %v1673
    %v1675 = vrot.slane %v1667, %v1674
    %v1677 = vunpack.c.l.s4 1934713408
    %v1678 = vunpack.c.0.s8 %v1677
    %v1679 = vlaneseq
    %v1680 = vshrl.u32 %v1679, 7
    %v1681 = vsub.s32 %v1678, %v1680
    %v1682 = vrot.slane %v1668, %v1681
    %v1683 = vcombine.low %v1618, %v1634
    %v1684 = vcombine.high %v1618, %v1634
    %v1686 = vunpack.c.l.s4 1934713408
    %v1687 = vunpack.c.0.s8 %v1686
    %v1688 = vlaneseq
    %v1689 = vshrl.u32 %v1688, 7
    %v1690 = vsub.s32 %v1687, %v1689
    %v1691 = vrot.slane %v1683, %v1690
    %v1693 = vunpack.c.l.s4 1934713408
    %v1694 = vunpack.c.0.s8 %v1693
    %v1695 = vlaneseq
    %v1696 = vshrl.u32 %v1695, 7
    %v1697 = vsub.s32 %v1694, %v1696
    %v1698 = vrot.slane %v1684, %v1697
    %v1699 = vcombine.low %v1643, %v1659
    %v1700 = vcombine.high %v1643, %v1659
    %v1702 = vunpack.c.l.s4 1934713408
    %v1703 = vunpack.c.0.s8 %v1702
    %v1704 = vlaneseq
    %v1705 = vshrl.u32 %v1704, 7
    %v1706 = vsub.s32 %v1703, %v1705
    %v1707 = vrot.slane %v1699, %v1706
    %v1709 = vunpack.c.l.s4 1934713408
    %v1710 = vunpack.c.0.s8 %v1709
    %v1711 = vlaneseq
    %v1712 = vshrl.u32 %v1711, 7
    %v1713 = vsub.s32 %v1710, %v1712
    %v1714 = vrot.slane %v1700, %v1713
    %v1715 = vcombine.low %v1650, %v1666
    %v1716 = vcombine.high %v1650, %v1666
    %v1718 = vunpack.c.l.s4 1934713408
    %v1719 = vunpack.c.0.s8 %v1718
    %v1720 = vlaneseq
    %v1721 = vshrl.u32 %v1720, 7
    %v1722 = vsub.s32 %v1719, %v1721
    %v1723 = vrot.slane %v1715, %v1722
    %v1725 = vunpack.c.l.s4 1934713408
    %v1726 = vunpack.c.0.s8 %v1725
    %v1727 = vlaneseq
    %v1728 = vshrl.u32 %v1727, 7
    %v1729 = vsub.s32 %v1726, %v1728
    %v1730 = vrot.slane %v1716, %v1729
    %v1731 = vcombine.low %v1675, %v1707
    %v1732 = vcombine.high %v1675, %v1707
    %v1733 = vcombine.low %v1682, %v1714
    %v1734 = vcombine.high %v1682, %v1714
    %v1735 = vcombine.low %v1691, %v1723
    %v1736 = vcombine.high %v1691, %v1723
    %v1737 = vcombine.low %v1698, %v1730
    %v1738 = vcombine.high %v1698, %v1730
    %v1739 = vcombine.low %v1323, %v1325
    %v1740 = vcombine.high %v1323, %v1325
    %v1742 = vunpack.c.l.s4 1983009808
    %v1743 = vunpack.c.0.s8 %v1742
    %v1744 = vlaneseq
    %v1745 = vshrl.u32 %v1744, 7
    %v1746 = vsub.s32 %v1743, %v1745
    %v1747 = vrot.slane %v1739, %v1746
    %v1749 = vunpack.c.l.s4 1983009808
    %v1750 = vunpack.c.0.s8 %v1749
    %v1751 = vlaneseq
    %v1752 = vshrl.u32 %v1751, 7
    %v1753 = vsub.s32 %v1750, %v1752
    %v1754 = vrot.slane %v1740, %v1753
    %v1755 = vcombine.low %v1324, %v1326
    %v1756 = vcombine.high %v1324, %v1326
    %v1758 = vunpack.c.l.s4 1983009808
    %v1759 = vunpack.c.0.s8 %v1758
    %v1760 = vlaneseq
    %v1761 = vshrl.u32 %v1760, 7
    %v1762 = vsub.s32 %v1759, %v1761
    %v1763 = vrot.slane %v1755, %v1762
    %v1765 = vunpack.c.l.s4 1983009808
    %v1766 = vunpack.c.0.s8 %v1765
    %v1767 = vlaneseq
    %v1768 = vshrl.u32 %v1767, 7
    %v1769 = vsub.s32 %v1766, %v1768
    %v1770 = vrot.slane %v1756, %v1769
    %v1771 = vcombine.low %v1327, %v1329
    %v1772 = vcombine.high %v1327, %v1329
    %v1774 = vunpack.c.l.s4 1983009808
    %v1775 = vunpack.c.0.s8 %v1774
    %v1776 = vlaneseq
    %v1777 = vshrl.u32 %v1776, 7
    %v1778 = vsub.s32 %v1775, %v1777
    %v1779 = vrot.slane %v1771, %v1778
    %v1781 = vunpack.c.l.s4 1983009808
    %v1782 = vunpack.c.0.s8 %v1781
    %v1783 = vlaneseq
    %v1784 = vshrl.u32 %v1783, 7
    %v1785 = vsub.s32 %v1782, %v1784
    %v1786 = vrot.slane %v1772, %v1785
    %v1787 = vcombine.low %v1328, %v1330
    %v1788 = vcombine.high %v1328, %v1330
    %v1790 = vunpack.c.l.s4 1983009808
    %v1791 = vunpack.c.0.s8 %v1790
    %v1792 = vlaneseq
    %v1793 = vshrl.u32 %v1792, 7
    %v1794 = vsub.s32 %v1791, %v1793
    %v1795 = vrot.slane %v1787, %v1794
    %v1797 = vunpack.c.l.s4 1983009808
    %v1798 = vunpack.c.0.s8 %v1797
    %v1799 = vlaneseq
    %v1800 = vshrl.u32 %v1799, 7
    %v1801 = vsub.s32 %v1798, %v1800
    %v1802 = vrot.slane %v1788, %v1801
    %v1803 = vcombine.low %v1747, %v1763
    %v1804 = vcombine.high %v1747, %v1763
    %v1806 = vunpack.c.l.s4 1934713408
    %v1807 = vunpack.c.0.s8 %v1806
    %v1808 = vlaneseq
    %v1809 = vshrl.u32 %v1808, 7
    %v1810 = vsub.s32 %v1807, %v1809
    %v1811 = vrot.slane %v1803, %v1810
    %v1813 = vunpack.c.l.s4 1934713408
    %v1814 = vunpack.c.0.s8 %v1813
    %v1815 = vlaneseq
    %v1816 = vshrl.u32 %v1815, 7
    %v1817 = vsub.s32 %v1814, %v1816
    %v1818 = vrot.slane %v1804, %v1817
    %v1819 = vcombine.low %v1754, %v1770
    %v1820 = vcombine.high %v1754, %v1770
    %v1822 = vunpack.c.l.s4 1934713408
    %v1823 = vunpack.c.0.s8 %v1822
    %v1824 = vlaneseq
    %v1825 = vshrl.u32 %v1824, 7
    %v1826 = vsub.s32 %v1823, %v1825
    %v1827 = vrot.slane %v1819, %v1826
    %v1829 = vunpack.c.l.s4 1934713408
    %v1830 = vunpack.c.0.s8 %v1829
    %v1831 = vlaneseq
    %v1832 = vshrl.u32 %v1831, 7
    %v1833 = vsub.s32 %v1830, %v1832
    %v1834 = vrot.slane %v1820, %v1833
    %v1835 = vcombine.low %v1779, %v1795
    %v1836 = vcombine.high %v1779, %v1795
    %v1838 = vunpack.c.l.s4 1934713408
    %v1839 = vunpack.c.0.s8 %v1838
    %v1840 = vlaneseq
    %v1841 = vshrl.u32 %v1840, 7
    %v1842 = vsub.s32 %v1839, %v1841
    %v1843 = vrot.slane %v1835, %v1842
    %v1845 = vunpack.c.l.s4 1934713408
    %v1846 = vunpack.c.0.s8 %v1845
    %v1847 = vlaneseq
    %v1848 = vshrl.u32 %v1847, 7
    %v1849 = vsub.s32 %v1846, %v1848
    %v1850 = vrot.slane %v1836, %v1849
    %v1851 = vcombine.low %v1786, %v1802
    %v1852 = vcombine.high %v1786, %v1802
    %v1854 = vunpack.c.l.s4 1934713408
    %v1855 = vunpack.c.0.s8 %v1854
    %v1856 = vlaneseq
    %v1857 = vshrl.u32 %v1856, 7
    %v1858 = vsub.s32 %v1855, %v1857
    %v1859 = vrot.slane %v1851, %v1858
    %v1861 = vunpack.c.l.s4 1934713408
    %v1862 = vunpack.c.0.s8 %v1861
    %v1863 = vlaneseq
    %v1864 = vshrl.u32 %v1863, 7
    %v1865 = vsub.s32 %v1862, %v1864
    %v1866 = vrot.slane %v1852, %v1865
    %v1867 = vcombine.low %v1811, %v1843
    %v1868 = vcombine.high %v1811, %v1843
    %v1869 = vcombine.low %v1818, %v1850
    %v1870 = vcombine.high %v1818, %v1850
    %v1871 = vcombine.low %v1827, %v1859
    %v1872 = vcombine.high %v1827, %v1859
    %v1873 = vcombine.low %v1834, %v1866
    %v1874 = vcombine.high %v1834, %v1866
    %1879 = vrot.lane.b32.xlu0 %v683, 124
    %v1880 = vpop.permute.xlu0 %1879
    %1881 = vrot.lane.b32.xlu0 %v684, 124
    %v1882 = vpop.permute.xlu0 %1881
    %1883 = vrot.lane.b32.xlu0 %v685, 124
    %v1884 = vpop.permute.xlu0 %1883
    %1885 = vrot.lane.b32.xlu0 %v686, 124
    %v1886 = vpop.permute.xlu0 %1885
    %1887 = vrot.lane.b32.xlu0 %v683, 120
    %v1888 = vpop.permute.xlu0 %1887
    %1889 = vrot.lane.b32.xlu0 %v684, 120
    %v1890 = vpop.permute.xlu0 %1889
    %1891 = vrot.lane.b32.xlu0 %v685, 120
    %v1892 = vpop.permute.xlu0 %1891
    %1893 = vrot.lane.b32.xlu0 %v686, 120
    %v1894 = vpop.permute.xlu0 %1893
    %1895 = vrot.lane.b32.xlu0 %v683, 116
    %v1896 = vpop.permute.xlu0 %1895
    %1897 = vrot.lane.b32.xlu0 %v684, 116
    %v1898 = vpop.permute.xlu0 %1897
    %1899 = vrot.lane.b32.xlu0 %v685, 116
    %v1900 = vpop.permute.xlu0 %1899
    %1901 = vrot.lane.b32.xlu0 %v686, 116
    %v1902 = vpop.permute.xlu0 %1901
    %1903 = vrot.lane.b32.xlu0 %v683, 112
    %v1904 = vpop.permute.xlu0 %1903
    %1905 = vrot.lane.b32.xlu0 %v684, 112
    %v1906 = vpop.permute.xlu0 %1905
    %1907 = vrot.lane.b32.xlu0 %v685, 112
    %v1908 = vpop.permute.xlu0 %1907
    %1909 = vrot.lane.b32.xlu0 %v686, 112
    %v1910 = vpop.permute.xlu0 %1909
    %1911 = vrot.lane.b32.xlu0 %v683, 108
    %v1912 = vpop.permute.xlu0 %1911
    %1913 = vrot.lane.b32.xlu0 %v684, 108
    %v1914 = vpop.permute.xlu0 %1913
    %1915 = vrot.lane.b32.xlu0 %v685, 108
    %v1916 = vpop.permute.xlu0 %1915
    %1917 = vrot.lane.b32.xlu0 %v686, 108
    %v1918 = vpop.permute.xlu0 %1917
    %1919 = vrot.lane.b32.xlu0 %v683, 104
    %v1920 = vpop.permute.xlu0 %1919
    %1921 = vrot.lane.b32.xlu0 %v684, 104
    %v1922 = vpop.permute.xlu0 %1921
    %1923 = vrot.lane.b32.xlu0 %v685, 104
    %v1924 = vpop.permute.xlu0 %1923
    %1925 = vrot.lane.b32.xlu0 %v686, 104
    %v1926 = vpop.permute.xlu0 %1925
    %1927 = vrot.lane.b32.xlu0 %v683, 100
    %v1928 = vpop.permute.xlu0 %1927
    %1929 = vrot.lane.b32.xlu0 %v684, 100
    %v1930 = vpop.permute.xlu0 %1929
    %1931 = vrot.lane.b32.xlu0 %v685, 100
    %v1932 = vpop.permute.xlu0 %1931
    %1933 = vrot.lane.b32.xlu0 %v686, 100
    %v1934 = vpop.permute.xlu0 %1933
    %1935 = vrot.lane.b32.xlu0 %v683, 96
    %v1936 = vpop.permute.xlu0 %1935
    %1937 = vrot.lane.b32.xlu0 %v684, 96
    %v1938 = vpop.permute.xlu0 %1937
    %1939 = vrot.lane.b32.xlu0 %v685, 96
    %v1940 = vpop.permute.xlu0 %1939
    %1941 = vrot.lane.b32.xlu0 %v686, 96
    %v1942 = vpop.permute.xlu0 %1941
    %1943 = vrot.lane.b32.xlu0 %v1880, 96
    %v1944 = vpop.permute.xlu0 %1943
    %1945 = vrot.lane.b32.xlu0 %v1882, 96
    %v1946 = vpop.permute.xlu0 %1945
    %1947 = vrot.lane.b32.xlu0 %v1884, 96
    %v1948 = vpop.permute.xlu0 %1947
    %1949 = vrot.lane.b32.xlu0 %v1886, 96
    %v1950 = vpop.permute.xlu0 %1949
    %1951 = vrot.lane.b32.xlu0 %v1888, 96
    %v1952 = vpop.permute.xlu0 %1951
    %1953 = vrot.lane.b32.xlu0 %v1890, 96
    %v1954 = vpop.permute.xlu0 %1953
    %1955 = vrot.lane.b32.xlu0 %v1892, 96
    %v1956 = vpop.permute.xlu0 %1955
    %1957 = vrot.lane.b32.xlu0 %v1894, 96
    %v1958 = vpop.permute.xlu0 %1957
    %1959 = vrot.lane.b32.xlu0 %v1896, 96
    %v1960 = vpop.permute.xlu0 %1959
    %1961 = vrot.lane.b32.xlu0 %v1898, 96
    %v1962 = vpop.permute.xlu0 %1961
    %1963 = vrot.lane.b32.xlu0 %v1900, 96
    %v1964 = vpop.permute.xlu0 %1963
    %1965 = vrot.lane.b32.xlu0 %v1902, 96
    %v1966 = vpop.permute.xlu0 %1965
    %1967 = vrot.lane.b32.xlu0 %v1904, 96
    %v1968 = vpop.permute.xlu0 %1967
    %1969 = vrot.lane.b32.xlu0 %v1906, 96
    %v1970 = vpop.permute.xlu0 %1969
    %1971 = vrot.lane.b32.xlu0 %v1908, 96
    %v1972 = vpop.permute.xlu0 %1971
    %1973 = vrot.lane.b32.xlu0 %v1910, 96
    %v1974 = vpop.permute.xlu0 %1973
    %1975 = vrot.lane.b32.xlu0 %v1912, 96
    %v1976 = vpop.permute.xlu0 %1975
    %1977 = vrot.lane.b32.xlu0 %v1914, 96
    %v1978 = vpop.permute.xlu0 %1977
    %1979 = vrot.lane.b32.xlu0 %v1916, 96
    %v1980 = vpop.permute.xlu0 %1979
    %1981 = vrot.lane.b32.xlu0 %v1918, 96
    %v1982 = vpop.permute.xlu0 %1981
    %1983 = vrot.lane.b32.xlu0 %v1920, 96
    %v1984 = vpop.permute.xlu0 %1983
    %1985 = vrot.lane.b32.xlu0 %v1922, 96
    %v1986 = vpop.permute.xlu0 %1985
    %1987 = vrot.lane.b32.xlu0 %v1924, 96
    %v1988 = vpop.permute.xlu0 %1987
    %1989 = vrot.lane.b32.xlu0 %v1926, 96
    %v1990 = vpop.permute.xlu0 %1989
    %1991 = vrot.lane.b32.xlu0 %v1928, 96
    %v1992 = vpop.permute.xlu0 %1991
    %1993 = vrot.lane.b32.xlu0 %v1930, 96
    %v1994 = vpop.permute.xlu0 %1993
    %1995 = vrot.lane.b32.xlu0 %v1932, 96
    %v1996 = vpop.permute.xlu0 %1995
    %1997 = vrot.lane.b32.xlu0 %v1934, 96
    %v1998 = vpop.permute.xlu0 %1997
    %v2031 = vcombine.low %v1936, %v1952
    %v2032 = vcombine.high %v1936, %v1952
    %v2034 = vunpack.c.l.s4 1983009808
    %v2035 = vunpack.c.0.s8 %v2034
    %v2036 = vlaneseq
    %v2037 = vshrl.u32 %v2036, 7
    %v2038 = vsub.s32 %v2035, %v2037
    %v2039 = vrot.slane %v2031, %v2038
    %v2041 = vunpack.c.l.s4 1983009808
    %v2042 = vunpack.c.0.s8 %v2041
    %v2043 = vlaneseq
    %v2044 = vshrl.u32 %v2043, 7
    %v2045 = vsub.s32 %v2042, %v2044
    %v2046 = vrot.slane %v2032, %v2045
    %v2047 = vcombine.low %v1944, %v1960
    %v2048 = vcombine.high %v1944, %v1960
    %v2050 = vunpack.c.l.s4 1983009808
    %v2051 = vunpack.c.0.s8 %v2050
    %v2052 = vlaneseq
    %v2053 = vshrl.u32 %v2052, 7
    %v2054 = vsub.s32 %v2051, %v2053
    %v2055 = vrot.slane %v2047, %v2054
    %v2057 = vunpack.c.l.s4 1983009808
    %v2058 = vunpack.c.0.s8 %v2057
    %v2059 = vlaneseq
    %v2060 = vshrl.u32 %v2059, 7
    %v2061 = vsub.s32 %v2058, %v2060
    %v2062 = vrot.slane %v2048, %v2061
    %v2063 = vcombine.low %v1968, %v1984
    %v2064 = vcombine.high %v1968, %v1984
    %v2066 = vunpack.c.l.s4 1983009808
    %v2067 = vunpack.c.0.s8 %v2066
    %v2068 = vlaneseq
    %v2069 = vshrl.u32 %v2068, 7
    %v2070 = vsub.s32 %v2067, %v2069
    %v2071 = vrot.slane %v2063, %v2070
    %v2073 = vunpack.c.l.s4 1983009808
    %v2074 = vunpack.c.0.s8 %v2073
    %v2075 = vlaneseq
    %v2076 = vshrl.u32 %v2075, 7
    %v2077 = vsub.s32 %v2074, %v2076
    %v2078 = vrot.slane %v2064, %v2077
    %v2079 = vcombine.low %v1976, %v1992
    %v2080 = vcombine.high %v1976, %v1992
    %v2082 = vunpack.c.l.s4 1983009808
    %v2083 = vunpack.c.0.s8 %v2082
    %v2084 = vlaneseq
    %v2085 = vshrl.u32 %v2084, 7
    %v2086 = vsub.s32 %v2083, %v2085
    %v2087 = vrot.slane %v2079, %v2086
    %v2089 = vunpack.c.l.s4 1983009808
    %v2090 = vunpack.c.0.s8 %v2089
    %v2091 = vlaneseq
    %v2092 = vshrl.u32 %v2091, 7
    %v2093 = vsub.s32 %v2090, %v2092
    %v2094 = vrot.slane %v2080, %v2093
    %v2095 = vcombine.low %v2039, %v2055
    %v2096 = vcombine.high %v2039, %v2055
    %v2098 = vunpack.c.l.s4 1934713408
    %v2099 = vunpack.c.0.s8 %v2098
    %v2100 = vlaneseq
    %v2101 = vshrl.u32 %v2100, 7
    %v2102 = vsub.s32 %v2099, %v2101
    %v2103 = vrot.slane %v2095, %v2102
    %v2105 = vunpack.c.l.s4 1934713408
    %v2106 = vunpack.c.0.s8 %v2105
    %v2107 = vlaneseq
    %v2108 = vshrl.u32 %v2107, 7
    %v2109 = vsub.s32 %v2106, %v2108
    %v2110 = vrot.slane %v2096, %v2109
    %v2111 = vcombine.low %v2046, %v2062
    %v2112 = vcombine.high %v2046, %v2062
    %v2114 = vunpack.c.l.s4 1934713408
    %v2115 = vunpack.c.0.s8 %v2114
    %v2116 = vlaneseq
    %v2117 = vshrl.u32 %v2116, 7
    %v2118 = vsub.s32 %v2115, %v2117
    %v2119 = vrot.slane %v2111, %v2118
    %v2121 = vunpack.c.l.s4 1934713408
    %v2122 = vunpack.c.0.s8 %v2121
    %v2123 = vlaneseq
    %v2124 = vshrl.u32 %v2123, 7
    %v2125 = vsub.s32 %v2122, %v2124
    %v2126 = vrot.slane %v2112, %v2125
    %v2127 = vcombine.low %v2071, %v2087
    %v2128 = vcombine.high %v2071, %v2087
    %v2130 = vunpack.c.l.s4 1934713408
    %v2131 = vunpack.c.0.s8 %v2130
    %v2132 = vlaneseq
    %v2133 = vshrl.u32 %v2132, 7
    %v2134 = vsub.s32 %v2131, %v2133
    %v2135 = vrot.slane %v2127, %v2134
    %v2137 = vunpack.c.l.s4 1934713408
    %v2138 = vunpack.c.0.s8 %v2137
    %v2139 = vlaneseq
    %v2140 = vshrl.u32 %v2139, 7
    %v2141 = vsub.s32 %v2138, %v2140
    %v2142 = vrot.slane %v2128, %v2141
    %v2143 = vcombine.low %v2078, %v2094
    %v2144 = vcombine.high %v2078, %v2094
    %v2146 = vunpack.c.l.s4 1934713408
    %v2147 = vunpack.c.0.s8 %v2146
    %v2148 = vlaneseq
    %v2149 = vshrl.u32 %v2148, 7
    %v2150 = vsub.s32 %v2147, %v2149
    %v2151 = vrot.slane %v2143, %v2150
    %v2153 = vunpack.c.l.s4 1934713408
    %v2154 = vunpack.c.0.s8 %v2153
    %v2155 = vlaneseq
    %v2156 = vshrl.u32 %v2155, 7
    %v2157 = vsub.s32 %v2154, %v2156
    %v2158 = vrot.slane %v2144, %v2157
    %v2159 = vcombine.low %v2103, %v2135
    %v2160 = vcombine.high %v2103, %v2135
    %v2161 = vcombine.low %v2110, %v2142
    %v2162 = vcombine.high %v2110, %v2142
    %v2163 = vcombine.low %v2119, %v2151
    %v2164 = vcombine.high %v2119, %v2151
    %v2165 = vcombine.low %v2126, %v2158
    %v2166 = vcombine.high %v2126, %v2158
    %v2167 = vcombine.low %v1938, %v1954
    %v2168 = vcombine.high %v1938, %v1954
    %v2170 = vunpack.c.l.s4 1983009808
    %v2171 = vunpack.c.0.s8 %v2170
    %v2172 = vlaneseq
    %v2173 = vshrl.u32 %v2172, 7
    %v2174 = vsub.s32 %v2171, %v2173
    %v2175 = vrot.slane %v2167, %v2174
    %v2177 = vunpack.c.l.s4 1983009808
    %v2178 = vunpack.c.0.s8 %v2177
    %v2179 = vlaneseq
    %v2180 = vshrl.u32 %v2179, 7
    %v2181 = vsub.s32 %v2178, %v2180
    %v2182 = vrot.slane %v2168, %v2181
    %v2183 = vcombine.low %v1946, %v1962
    %v2184 = vcombine.high %v1946, %v1962
    %v2186 = vunpack.c.l.s4 1983009808
    %v2187 = vunpack.c.0.s8 %v2186
    %v2188 = vlaneseq
    %v2189 = vshrl.u32 %v2188, 7
    %v2190 = vsub.s32 %v2187, %v2189
    %v2191 = vrot.slane %v2183, %v2190
    %v2193 = vunpack.c.l.s4 1983009808
    %v2194 = vunpack.c.0.s8 %v2193
    %v2195 = vlaneseq
    %v2196 = vshrl.u32 %v2195, 7
    %v2197 = vsub.s32 %v2194, %v2196
    %v2198 = vrot.slane %v2184, %v2197
    %v2199 = vcombine.low %v1970, %v1986
    %v2200 = vcombine.high %v1970, %v1986
    %v2202 = vunpack.c.l.s4 1983009808
    %v2203 = vunpack.c.0.s8 %v2202
    %v2204 = vlaneseq
    %v2205 = vshrl.u32 %v2204, 7
    %v2206 = vsub.s32 %v2203, %v2205
    %v2207 = vrot.slane %v2199, %v2206
    %v2209 = vunpack.c.l.s4 1983009808
    %v2210 = vunpack.c.0.s8 %v2209
    %v2211 = vlaneseq
    %v2212 = vshrl.u32 %v2211, 7
    %v2213 = vsub.s32 %v2210, %v2212
    %v2214 = vrot.slane %v2200, %v2213
    %v2215 = vcombine.low %v1978, %v1994
    %v2216 = vcombine.high %v1978, %v1994
    %v2218 = vunpack.c.l.s4 1983009808
    %v2219 = vunpack.c.0.s8 %v2218
    %v2220 = vlaneseq
    %v2221 = vshrl.u32 %v2220, 7
    %v2222 = vsub.s32 %v2219, %v2221
    %v2223 = vrot.slane %v2215, %v2222
    %v2225 = vunpack.c.l.s4 1983009808
    %v2226 = vunpack.c.0.s8 %v2225
    %v2227 = vlaneseq
    %v2228 = vshrl.u32 %v2227, 7
    %v2229 = vsub.s32 %v2226, %v2228
    %v2230 = vrot.slane %v2216, %v2229
    %v2231 = vcombine.low %v2175, %v2191
    %v2232 = vcombine.high %v2175, %v2191
    %v2234 = vunpack.c.l.s4 1934713408
    %v2235 = vunpack.c.0.s8 %v2234
    %v2236 = vlaneseq
    %v2237 = vshrl.u32 %v2236, 7
    %v2238 = vsub.s32 %v2235, %v2237
    %v2239 = vrot.slane %v2231, %v2238
    %v2241 = vunpack.c.l.s4 1934713408
    %v2242 = vunpack.c.0.s8 %v2241
    %v2243 = vlaneseq
    %v2244 = vshrl.u32 %v2243, 7
    %v2245 = vsub.s32 %v2242, %v2244
    %v2246 = vrot.slane %v2232, %v2245
    %v2247 = vcombine.low %v2182, %v2198
    %v2248 = vcombine.high %v2182, %v2198
    %v2250 = vunpack.c.l.s4 1934713408
    %v2251 = vunpack.c.0.s8 %v2250
    %v2252 = vlaneseq
    %v2253 = vshrl.u32 %v2252, 7
    %v2254 = vsub.s32 %v2251, %v2253
    %v2255 = vrot.slane %v2247, %v2254
    %v2257 = vunpack.c.l.s4 1934713408
    %v2258 = vunpack.c.0.s8 %v2257
    %v2259 = vlaneseq
    %v2260 = vshrl.u32 %v2259, 7
    %v2261 = vsub.s32 %v2258, %v2260
    %v2262 = vrot.slane %v2248, %v2261
    %v2263 = vcombine.low %v2207, %v2223
    %v2264 = vcombine.high %v2207, %v2223
    %v2266 = vunpack.c.l.s4 1934713408
    %v2267 = vunpack.c.0.s8 %v2266
    %v2268 = vlaneseq
    %v2269 = vshrl.u32 %v2268, 7
    %v2270 = vsub.s32 %v2267, %v2269
    %v2271 = vrot.slane %v2263, %v2270
    %v2273 = vunpack.c.l.s4 1934713408
    %v2274 = vunpack.c.0.s8 %v2273
    %v2275 = vlaneseq
    %v2276 = vshrl.u32 %v2275, 7
    %v2277 = vsub.s32 %v2274, %v2276
    %v2278 = vrot.slane %v2264, %v2277
    %v2279 = vcombine.low %v2214, %v2230
    %v2280 = vcombine.high %v2214, %v2230
    %v2282 = vunpack.c.l.s4 1934713408
    %v2283 = vunpack.c.0.s8 %v2282
    %v2284 = vlaneseq
    %v2285 = vshrl.u32 %v2284, 7
    %v2286 = vsub.s32 %v2283, %v2285
    %v2287 = vrot.slane %v2279, %v2286
    %v2289 = vunpack.c.l.s4 1934713408
    %v2290 = vunpack.c.0.s8 %v2289
    %v2291 = vlaneseq
    %v2292 = vshrl.u32 %v2291, 7
    %v2293 = vsub.s32 %v2290, %v2292
    %v2294 = vrot.slane %v2280, %v2293
    %v2295 = vcombine.low %v2239, %v2271
    %v2296 = vcombine.high %v2239, %v2271
    %v2297 = vcombine.low %v2246, %v2278
    %v2298 = vcombine.high %v2246, %v2278
    %v2299 = vcombine.low %v2255, %v2287
    %v2300 = vcombine.high %v2255, %v2287
    %v2301 = vcombine.low %v2262, %v2294
    %v2302 = vcombine.high %v2262, %v2294
    %v2303 = vcombine.low %v1940, %v1956
    %v2304 = vcombine.high %v1940, %v1956
    %v2306 = vunpack.c.l.s4 1983009808
    %v2307 = vunpack.c.0.s8 %v2306
    %v2308 = vlaneseq
    %v2309 = vshrl.u32 %v2308, 7
    %v2310 = vsub.s32 %v2307, %v2309
    %v2311 = vrot.slane %v2303, %v2310
    %v2313 = vunpack.c.l.s4 1983009808
    %v2314 = vunpack.c.0.s8 %v2313
    %v2315 = vlaneseq
    %v2316 = vshrl.u32 %v2315, 7
    %v2317 = vsub.s32 %v2314, %v2316
    %v2318 = vrot.slane %v2304, %v2317
    %v2319 = vcombine.low %v1948, %v1964
    %v2320 = vcombine.high %v1948, %v1964
    %v2322 = vunpack.c.l.s4 1983009808
    %v2323 = vunpack.c.0.s8 %v2322
    %v2324 = vlaneseq
    %v2325 = vshrl.u32 %v2324, 7
    %v2326 = vsub.s32 %v2323, %v2325
    %v2327 = vrot.slane %v2319, %v2326
    %v2329 = vunpack.c.l.s4 1983009808
    %v2330 = vunpack.c.0.s8 %v2329
    %v2331 = vlaneseq
    %v2332 = vshrl.u32 %v2331, 7
    %v2333 = vsub.s32 %v2330, %v2332
    %v2334 = vrot.slane %v2320, %v2333
    %v2335 = vcombine.low %v1972, %v1988
    %v2336 = vcombine.high %v1972, %v1988
    %v2338 = vunpack.c.l.s4 1983009808
    %v2339 = vunpack.c.0.s8 %v2338
    %v2340 = vlaneseq
    %v2341 = vshrl.u32 %v2340, 7
    %v2342 = vsub.s32 %v2339, %v2341
    %v2343 = vrot.slane %v2335, %v2342
    %v2345 = vunpack.c.l.s4 1983009808
    %v2346 = vunpack.c.0.s8 %v2345
    %v2347 = vlaneseq
    %v2348 = vshrl.u32 %v2347, 7
    %v2349 = vsub.s32 %v2346, %v2348
    %v2350 = vrot.slane %v2336, %v2349
    %v2351 = vcombine.low %v1980, %v1996
    %v2352 = vcombine.high %v1980, %v1996
    %v2354 = vunpack.c.l.s4 1983009808
    %v2355 = vunpack.c.0.s8 %v2354
    %v2356 = vlaneseq
    %v2357 = vshrl.u32 %v2356, 7
    %v2358 = vsub.s32 %v2355, %v2357
    %v2359 = vrot.slane %v2351, %v2358
    %v2361 = vunpack.c.l.s4 1983009808
    %v2362 = vunpack.c.0.s8 %v2361
    %v2363 = vlaneseq
    %v2364 = vshrl.u32 %v2363, 7
    %v2365 = vsub.s32 %v2362, %v2364
    %v2366 = vrot.slane %v2352, %v2365
    %v2367 = vcombine.low %v2311, %v2327
    %v2368 = vcombine.high %v2311, %v2327
    %v2370 = vunpack.c.l.s4 1934713408
    %v2371 = vunpack.c.0.s8 %v2370
    %v2372 = vlaneseq
    %v2373 = vshrl.u32 %v2372, 7
    %v2374 = vsub.s32 %v2371, %v2373
    %v2375 = vrot.slane %v2367, %v2374
    %v2377 = vunpack.c.l.s4 1934713408
    %v2378 = vunpack.c.0.s8 %v2377
    %v2379 = vlaneseq
    %v2380 = vshrl.u32 %v2379, 7
    %v2381 = vsub.s32 %v2378, %v2380
    %v2382 = vrot.slane %v2368, %v2381
    %v2383 = vcombine.low %v2318, %v2334
    %v2384 = vcombine.high %v2318, %v2334
    %v2386 = vunpack.c.l.s4 1934713408
    %v2387 = vunpack.c.0.s8 %v2386
    %v2388 = vlaneseq
    %v2389 = vshrl.u32 %v2388, 7
    %v2390 = vsub.s32 %v2387, %v2389
    %v2391 = vrot.slane %v2383, %v2390
    %v2393 = vunpack.c.l.s4 1934713408
    %v2394 = vunpack.c.0.s8 %v2393
    %v2395 = vlaneseq
    %v2396 = vshrl.u32 %v2395, 7
    %v2397 = vsub.s32 %v2394, %v2396
    %v2398 = vrot.slane %v2384, %v2397
    %v2399 = vcombine.low %v2343, %v2359
    %v2400 = vcombine.high %v2343, %v2359
    %v2402 = vunpack.c.l.s4 1934713408
    %v2403 = vunpack.c.0.s8 %v2402
    %v2404 = vlaneseq
    %v2405 = vshrl.u32 %v2404, 7
    %v2406 = vsub.s32 %v2403, %v2405
    %v2407 = vrot.slane %v2399, %v2406
    %v2409 = vunpack.c.l.s4 1934713408
    %v2410 = vunpack.c.0.s8 %v2409
    %v2411 = vlaneseq
    %v2412 = vshrl.u32 %v2411, 7
    %v2413 = vsub.s32 %v2410, %v2412
    %v2414 = vrot.slane %v2400, %v2413
    %v2415 = vcombine.low %v2350, %v2366
    %v2416 = vcombine.high %v2350, %v2366
    %v2418 = vunpack.c.l.s4 1934713408
    %v2419 = vunpack.c.0.s8 %v2418
    %v2420 = vlaneseq
    %v2421 = vshrl.u32 %v2420, 7
    %v2422 = vsub.s32 %v2419, %v2421
    %v2423 = vrot.slane %v2415, %v2422
    %v2425 = vunpack.c.l.s4 1934713408
    %v2426 = vunpack.c.0.s8 %v2425
    %v2427 = vlaneseq
    %v2428 = vshrl.u32 %v2427, 7
    %v2429 = vsub.s32 %v2426, %v2428
    %v2430 = vrot.slane %v2416, %v2429
    %v2431 = vcombine.low %v2375, %v2407
    %v2432 = vcombine.high %v2375, %v2407
    %v2433 = vcombine.low %v2382, %v2414
    %v2434 = vcombine.high %v2382, %v2414
    %v2435 = vcombine.low %v2391, %v2423
    %v2436 = vcombine.high %v2391, %v2423
    %v2437 = vcombine.low %v2398, %v2430
    %v2438 = vcombine.high %v2398, %v2430
    %v2439 = vcombine.low %v1942, %v1958
    %v2440 = vcombine.high %v1942, %v1958
    %v2442 = vunpack.c.l.s4 1983009808
    %v2443 = vunpack.c.0.s8 %v2442
    %v2444 = vlaneseq
    %v2445 = vshrl.u32 %v2444, 7
    %v2446 = vsub.s32 %v2443, %v2445
    %v2447 = vrot.slane %v2439, %v2446
    %v2449 = vunpack.c.l.s4 1983009808
    %v2450 = vunpack.c.0.s8 %v2449
    %v2451 = vlaneseq
    %v2452 = vshrl.u32 %v2451, 7
    %v2453 = vsub.s32 %v2450, %v2452
    %v2454 = vrot.slane %v2440, %v2453
    %v2455 = vcombine.low %v1950, %v1966
    %v2456 = vcombine.high %v1950, %v1966
    %v2458 = vunpack.c.l.s4 1983009808
    %v2459 = vunpack.c.0.s8 %v2458
    %v2460 = vlaneseq
    %v2461 = vshrl.u32 %v2460, 7
    %v2462 = vsub.s32 %v2459, %v2461
    %v2463 = vrot.slane %v2455, %v2462
    %v2465 = vunpack.c.l.s4 1983009808
    %v2466 = vunpack.c.0.s8 %v2465
    %v2467 = vlaneseq
    %v2468 = vshrl.u32 %v2467, 7
    %v2469 = vsub.s32 %v2466, %v2468
    %v2470 = vrot.slane %v2456, %v2469
    %v2471 = vcombine.low %v1974, %v1990
    %v2472 = vcombine.high %v1974, %v1990
    %v2474 = vunpack.c.l.s4 1983009808
    %v2475 = vunpack.c.0.s8 %v2474
    %v2476 = vlaneseq
    %v2477 = vshrl.u32 %v2476, 7
    %v2478 = vsub.s32 %v2475, %v2477
    %v2479 = vrot.slane %v2471, %v2478
    %v2481 = vunpack.c.l.s4 1983009808
    %v2482 = vunpack.c.0.s8 %v2481
    %v2483 = vlaneseq
    %v2484 = vshrl.u32 %v2483, 7
    %v2485 = vsub.s32 %v2482, %v2484
    %v2486 = vrot.slane %v2472, %v2485
    %v2487 = vcombine.low %v1982, %v1998
    %v2488 = vcombine.high %v1982, %v1998
    %v2490 = vunpack.c.l.s4 1983009808
    %v2491 = vunpack.c.0.s8 %v2490
    %v2492 = vlaneseq
    %v2493 = vshrl.u32 %v2492, 7
    %v2494 = vsub.s32 %v2491, %v2493
    %v2495 = vrot.slane %v2487, %v2494
    %v2497 = vunpack.c.l.s4 1983009808
    %v2498 = vunpack.c.0.s8 %v2497
    %v2499 = vlaneseq
    %v2500 = vshrl.u32 %v2499, 7
    %v2501 = vsub.s32 %v2498, %v2500
    %v2502 = vrot.slane %v2488, %v2501
    %v2503 = vcombine.low %v2447, %v2463
    %v2504 = vcombine.high %v2447, %v2463
    %v2506 = vunpack.c.l.s4 1934713408
    %v2507 = vunpack.c.0.s8 %v2506
    %v2508 = vlaneseq
    %v2509 = vshrl.u32 %v2508, 7
    %v2510 = vsub.s32 %v2507, %v2509
    %v2511 = vrot.slane %v2503, %v2510
    %v2513 = vunpack.c.l.s4 1934713408
    %v2514 = vunpack.c.0.s8 %v2513
    %v2515 = vlaneseq
    %v2516 = vshrl.u32 %v2515, 7
    %v2517 = vsub.s32 %v2514, %v2516
    %v2518 = vrot.slane %v2504, %v2517
    %v2519 = vcombine.low %v2454, %v2470
    %v2520 = vcombine.high %v2454, %v2470
    %v2522 = vunpack.c.l.s4 1934713408
    %v2523 = vunpack.c.0.s8 %v2522
    %v2524 = vlaneseq
    %v2525 = vshrl.u32 %v2524, 7
    %v2526 = vsub.s32 %v2523, %v2525
    %v2527 = vrot.slane %v2519, %v2526
    %v2529 = vunpack.c.l.s4 1934713408
    %v2530 = vunpack.c.0.s8 %v2529
    %v2531 = vlaneseq
    %v2532 = vshrl.u32 %v2531, 7
    %v2533 = vsub.s32 %v2530, %v2532
    %v2534 = vrot.slane %v2520, %v2533
    %v2535 = vcombine.low %v2479, %v2495
    %v2536 = vcombine.high %v2479, %v2495
    %v2538 = vunpack.c.l.s4 1934713408
    %v2539 = vunpack.c.0.s8 %v2538
    %v2540 = vlaneseq
    %v2541 = vshrl.u32 %v2540, 7
    %v2542 = vsub.s32 %v2539, %v2541
    %v2543 = vrot.slane %v2535, %v2542
    %v2545 = vunpack.c.l.s4 1934713408
    %v2546 = vunpack.c.0.s8 %v2545
    %v2547 = vlaneseq
    %v2548 = vshrl.u32 %v2547, 7
    %v2549 = vsub.s32 %v2546, %v2548
    %v2550 = vrot.slane %v2536, %v2549
    %v2551 = vcombine.low %v2486, %v2502
    %v2552 = vcombine.high %v2486, %v2502
    %v2554 = vunpack.c.l.s4 1934713408
    %v2555 = vunpack.c.0.s8 %v2554
    %v2556 = vlaneseq
    %v2557 = vshrl.u32 %v2556, 7
    %v2558 = vsub.s32 %v2555, %v2557
    %v2559 = vrot.slane %v2551, %v2558
    %v2561 = vunpack.c.l.s4 1934713408
    %v2562 = vunpack.c.0.s8 %v2561
    %v2563 = vlaneseq
    %v2564 = vshrl.u32 %v2563, 7
    %v2565 = vsub.s32 %v2562, %v2564
    %v2566 = vrot.slane %v2552, %v2565
    %v2567 = vcombine.low %v2511, %v2543
    %v2568 = vcombine.high %v2511, %v2543
    %v2569 = vcombine.low %v2518, %v2550
    %v2570 = vcombine.high %v2518, %v2550
    %v2571 = vcombine.low %v2527, %v2559
    %v2572 = vcombine.high %v2527, %v2559
    %v2573 = vcombine.low %v2534, %v2566
    %v2574 = vcombine.high %v2534, %v2566
    %v2575 = vcombine.low %v2159, %v2161
    %v2576 = vcombine.high %v2159, %v2161
    %v2578 = vunpack.c.l.s4 1983009808
    %v2579 = vunpack.c.0.s8 %v2578
    %v2580 = vlaneseq
    %v2581 = vshrl.u32 %v2580, 7
    %v2582 = vsub.s32 %v2579, %v2581
    %v2583 = vrot.slane %v2575, %v2582
    %v2585 = vunpack.c.l.s4 1983009808
    %v2586 = vunpack.c.0.s8 %v2585
    %v2587 = vlaneseq
    %v2588 = vshrl.u32 %v2587, 7
    %v2589 = vsub.s32 %v2586, %v2588
    %v2590 = vrot.slane %v2576, %v2589
    %v2591 = vcombine.low %v2160, %v2162
    %v2592 = vcombine.high %v2160, %v2162
    %v2594 = vunpack.c.l.s4 1983009808
    %v2595 = vunpack.c.0.s8 %v2594
    %v2596 = vlaneseq
    %v2597 = vshrl.u32 %v2596, 7
    %v2598 = vsub.s32 %v2595, %v2597
    %v2599 = vrot.slane %v2591, %v2598
    %v2601 = vunpack.c.l.s4 1983009808
    %v2602 = vunpack.c.0.s8 %v2601
    %v2603 = vlaneseq
    %v2604 = vshrl.u32 %v2603, 7
    %v2605 = vsub.s32 %v2602, %v2604
    %v2606 = vrot.slane %v2592, %v2605
    %v2607 = vcombine.low %v2163, %v2165
    %v2608 = vcombine.high %v2163, %v2165
    %v2610 = vunpack.c.l.s4 1983009808
    %v2611 = vunpack.c.0.s8 %v2610
    %v2612 = vlaneseq
    %v2613 = vshrl.u32 %v2612, 7
    %v2614 = vsub.s32 %v2611, %v2613
    %v2615 = vrot.slane %v2607, %v2614
    %v2617 = vunpack.c.l.s4 1983009808
    %v2618 = vunpack.c.0.s8 %v2617
    %v2619 = vlaneseq
    %v2620 = vshrl.u32 %v2619, 7
    %v2621 = vsub.s32 %v2618, %v2620
    %v2622 = vrot.slane %v2608, %v2621
    %v2623 = vcombine.low %v2164, %v2166
    %v2624 = vcombine.high %v2164, %v2166
    %v2626 = vunpack.c.l.s4 1983009808
    %v2627 = vunpack.c.0.s8 %v2626
    %v2628 = vlaneseq
    %v2629 = vshrl.u32 %v2628, 7
    %v2630 = vsub.s32 %v2627, %v2629
    %v2631 = vrot.slane %v2623, %v2630
    %v2633 = vunpack.c.l.s4 1983009808
    %v2634 = vunpack.c.0.s8 %v2633
    %v2635 = vlaneseq
    %v2636 = vshrl.u32 %v2635, 7
    %v2637 = vsub.s32 %v2634, %v2636
    %v2638 = vrot.slane %v2624, %v2637
    %v2639 = vcombine.low %v2583, %v2599
    %v2640 = vcombine.high %v2583, %v2599
    %v2642 = vunpack.c.l.s4 1934713408
    %v2643 = vunpack.c.0.s8 %v2642
    %v2644 = vlaneseq
    %v2645 = vshrl.u32 %v2644, 7
    %v2646 = vsub.s32 %v2643, %v2645
    %v2647 = vrot.slane %v2639, %v2646
    %v2649 = vunpack.c.l.s4 1934713408
    %v2650 = vunpack.c.0.s8 %v2649
    %v2651 = vlaneseq
    %v2652 = vshrl.u32 %v2651, 7
    %v2653 = vsub.s32 %v2650, %v2652
    %v2654 = vrot.slane %v2640, %v2653
    %v2655 = vcombine.low %v2590, %v2606
    %v2656 = vcombine.high %v2590, %v2606
    %v2658 = vunpack.c.l.s4 1934713408
    %v2659 = vunpack.c.0.s8 %v2658
    %v2660 = vlaneseq
    %v2661 = vshrl.u32 %v2660, 7
    %v2662 = vsub.s32 %v2659, %v2661
    %v2663 = vrot.slane %v2655, %v2662
    %v2665 = vunpack.c.l.s4 1934713408
    %v2666 = vunpack.c.0.s8 %v2665
    %v2667 = vlaneseq
    %v2668 = vshrl.u32 %v2667, 7
    %v2669 = vsub.s32 %v2666, %v2668
    %v2670 = vrot.slane %v2656, %v2669
    %v2671 = vcombine.low %v2615, %v2631
    %v2672 = vcombine.high %v2615, %v2631
    %v2674 = vunpack.c.l.s4 1934713408
    %v2675 = vunpack.c.0.s8 %v2674
    %v2676 = vlaneseq
    %v2677 = vshrl.u32 %v2676, 7
    %v2678 = vsub.s32 %v2675, %v2677
    %v2679 = vrot.slane %v2671, %v2678
    %v2681 = vunpack.c.l.s4 1934713408
    %v2682 = vunpack.c.0.s8 %v2681
    %v2683 = vlaneseq
    %v2684 = vshrl.u32 %v2683, 7
    %v2685 = vsub.s32 %v2682, %v2684
    %v2686 = vrot.slane %v2672, %v2685
    %v2687 = vcombine.low %v2622, %v2638
    %v2688 = vcombine.high %v2622, %v2638
    %v2690 = vunpack.c.l.s4 1934713408
    %v2691 = vunpack.c.0.s8 %v2690
    %v2692 = vlaneseq
    %v2693 = vshrl.u32 %v2692, 7
    %v2694 = vsub.s32 %v2691, %v2693
    %v2695 = vrot.slane %v2687, %v2694
    %v2697 = vunpack.c.l.s4 1934713408
    %v2698 = vunpack.c.0.s8 %v2697
    %v2699 = vlaneseq
    %v2700 = vshrl.u32 %v2699, 7
    %v2701 = vsub.s32 %v2698, %v2700
    %v2702 = vrot.slane %v2688, %v2701
    %v2703 = vcombine.low %v2647, %v2679
    %v2704 = vcombine.high %v2647, %v2679
    %v2705 = vcombine.low %v2654, %v2686
    %v2706 = vcombine.high %v2654, %v2686
    %v2707 = vcombine.low %v2663, %v2695
    %v2708 = vcombine.high %v2663, %v2695
    %v2709 = vcombine.low %v2670, %v2702
    %v2710 = vcombine.high %v2670, %v2702
    %v2711 = vcombine.low %v2295, %v2297
    %v2712 = vcombine.high %v2295, %v2297
    %v2714 = vunpack.c.l.s4 1983009808
    %v2715 = vunpack.c.0.s8 %v2714
    %v2716 = vlaneseq
    %v2717 = vshrl.u32 %v2716, 7
    %v2718 = vsub.s32 %v2715, %v2717
    %v2719 = vrot.slane %v2711, %v2718
    %v2721 = vunpack.c.l.s4 1983009808
    %v2722 = vunpack.c.0.s8 %v2721
    %v2723 = vlaneseq
    %v2724 = vshrl.u32 %v2723, 7
    %v2725 = vsub.s32 %v2722, %v2724
    %v2726 = vrot.slane %v2712, %v2725
    %v2727 = vcombine.low %v2296, %v2298
    %v2728 = vcombine.high %v2296, %v2298
    %v2730 = vunpack.c.l.s4 1983009808
    %v2731 = vunpack.c.0.s8 %v2730
    %v2732 = vlaneseq
    %v2733 = vshrl.u32 %v2732, 7
    %v2734 = vsub.s32 %v2731, %v2733
    %v2735 = vrot.slane %v2727, %v2734
    %v2737 = vunpack.c.l.s4 1983009808
    %v2738 = vunpack.c.0.s8 %v2737
    %v2739 = vlaneseq
    %v2740 = vshrl.u32 %v2739, 7
    %v2741 = vsub.s32 %v2738, %v2740
    %v2742 = vrot.slane %v2728, %v2741
    %v2743 = vcombine.low %v2299, %v2301
    %v2744 = vcombine.high %v2299, %v2301
    %v2746 = vunpack.c.l.s4 1983009808
    %v2747 = vunpack.c.0.s8 %v2746
    %v2748 = vlaneseq
    %v2749 = vshrl.u32 %v2748, 7
    %v2750 = vsub.s32 %v2747, %v2749
    %v2751 = vrot.slane %v2743, %v2750
    %v2753 = vunpack.c.l.s4 1983009808
    %v2754 = vunpack.c.0.s8 %v2753
    %v2755 = vlaneseq
    %v2756 = vshrl.u32 %v2755, 7
    %v2757 = vsub.s32 %v2754, %v2756
    %v2758 = vrot.slane %v2744, %v2757
    %v2759 = vcombine.low %v2300, %v2302
    %v2760 = vcombine.high %v2300, %v2302
    %v2762 = vunpack.c.l.s4 1983009808
    %v2763 = vunpack.c.0.s8 %v2762
    %v2764 = vlaneseq
    %v2765 = vshrl.u32 %v2764, 7
    %v2766 = vsub.s32 %v2763, %v2765
    %v2767 = vrot.slane %v2759, %v2766
    %v2769 = vunpack.c.l.s4 1983009808
    %v2770 = vunpack.c.0.s8 %v2769
    %v2771 = vlaneseq
    %v2772 = vshrl.u32 %v2771, 7
    %v2773 = vsub.s32 %v2770, %v2772
    %v2774 = vrot.slane %v2760, %v2773
    %v2775 = vcombine.low %v2719, %v2735
    %v2776 = vcombine.high %v2719, %v2735
    %v2778 = vunpack.c.l.s4 1934713408
    %v2779 = vunpack.c.0.s8 %v2778
    %v2780 = vlaneseq
    %v2781 = vshrl.u32 %v2780, 7
    %v2782 = vsub.s32 %v2779, %v2781
    %v2783 = vrot.slane %v2775, %v2782
    %v2785 = vunpack.c.l.s4 1934713408
    %v2786 = vunpack.c.0.s8 %v2785
    %v2787 = vlaneseq
    %v2788 = vshrl.u32 %v2787, 7
    %v2789 = vsub.s32 %v2786, %v2788
    %v2790 = vrot.slane %v2776, %v2789
    %v2791 = vcombine.low %v2726, %v2742
    %v2792 = vcombine.high %v2726, %v2742
    %v2794 = vunpack.c.l.s4 1934713408
    %v2795 = vunpack.c.0.s8 %v2794
    %v2796 = vlaneseq
    %v2797 = vshrl.u32 %v2796, 7
    %v2798 = vsub.s32 %v2795, %v2797
    %v2799 = vrot.slane %v2791, %v2798
    %v2801 = vunpack.c.l.s4 1934713408
    %v2802 = vunpack.c.0.s8 %v2801
    %v2803 = vlaneseq
    %v2804 = vshrl.u32 %v2803, 7
    %v2805 = vsub.s32 %v2802, %v2804
    %v2806 = vrot.slane %v2792, %v2805
    %v2807 = vcombine.low %v2751, %v2767
    %v2808 = vcombine.high %v2751, %v2767
    %v2810 = vunpack.c.l.s4 1934713408
    %v2811 = vunpack.c.0.s8 %v2810
    %v2812 = vlaneseq
    %v2813 = vshrl.u32 %v2812, 7
    %v2814 = vsub.s32 %v2811, %v2813
    %v2815 = vrot.slane %v2807, %v2814
    %v2817 = vunpack.c.l.s4 1934713408
    %v2818 = vunpack.c.0.s8 %v2817
    %v2819 = vlaneseq
    %v2820 = vshrl.u32 %v2819, 7
    %v2821 = vsub.s32 %v2818, %v2820
    %v2822 = vrot.slane %v2808, %v2821
    %v2823 = vcombine.low %v2758, %v2774
    %v2824 = vcombine.high %v2758, %v2774
    %v2826 = vunpack.c.l.s4 1934713408
    %v2827 = vunpack.c.0.s8 %v2826
    %v2828 = vlaneseq
    %v2829 = vshrl.u32 %v2828, 7
    %v2830 = vsub.s32 %v2827, %v2829
    %v2831 = vrot.slane %v2823, %v2830
    %v2833 = vunpack.c.l.s4 1934713408
    %v2834 = vunpack.c.0.s8 %v2833
    %v2835 = vlaneseq
    %v2836 = vshrl.u32 %v2835, 7
    %v2837 = vsub.s32 %v2834, %v2836
    %v2838 = vrot.slane %v2824, %v2837
    %v2839 = vcombine.low %v2783, %v2815
    %v2840 = vcombine.high %v2783, %v2815
    %v2841 = vcombine.low %v2790, %v2822
    %v2842 = vcombine.high %v2790, %v2822
    %v2843 = vcombine.low %v2799, %v2831
    %v2844 = vcombine.high %v2799, %v2831
    %v2845 = vcombine.low %v2806, %v2838
    %v2846 = vcombine.high %v2806, %v2838
    %v2847 = vcombine.low %v2431, %v2433
    %v2848 = vcombine.high %v2431, %v2433
    %v2850 = vunpack.c.l.s4 1983009808
    %v2851 = vunpack.c.0.s8 %v2850
    %v2852 = vlaneseq
    %v2853 = vshrl.u32 %v2852, 7
    %v2854 = vsub.s32 %v2851, %v2853
    %v2855 = vrot.slane %v2847, %v2854
    %v2857 = vunpack.c.l.s4 1983009808
    %v2858 = vunpack.c.0.s8 %v2857
    %v2859 = vlaneseq
    %v2860 = vshrl.u32 %v2859, 7
    %v2861 = vsub.s32 %v2858, %v2860
    %v2862 = vrot.slane %v2848, %v2861
    %v2863 = vcombine.low %v2432, %v2434
    %v2864 = vcombine.high %v2432, %v2434
    %v2866 = vunpack.c.l.s4 1983009808
    %v2867 = vunpack.c.0.s8 %v2866
    %v2868 = vlaneseq
    %v2869 = vshrl.u32 %v2868, 7
    %v2870 = vsub.s32 %v2867, %v2869
    %v2871 = vrot.slane %v2863, %v2870
    %v2873 = vunpack.c.l.s4 1983009808
    %v2874 = vunpack.c.0.s8 %v2873
    %v2875 = vlaneseq
    %v2876 = vshrl.u32 %v2875, 7
    %v2877 = vsub.s32 %v2874, %v2876
    %v2878 = vrot.slane %v2864, %v2877
    %v2879 = vcombine.low %v2435, %v2437
    %v2880 = vcombine.high %v2435, %v2437
    %v2882 = vunpack.c.l.s4 1983009808
    %v2883 = vunpack.c.0.s8 %v2882
    %v2884 = vlaneseq
    %v2885 = vshrl.u32 %v2884, 7
    %v2886 = vsub.s32 %v2883, %v2885
    %v2887 = vrot.slane %v2879, %v2886
    %v2889 = vunpack.c.l.s4 1983009808
    %v2890 = vunpack.c.0.s8 %v2889
    %v2891 = vlaneseq
    %v2892 = vshrl.u32 %v2891, 7
    %v2893 = vsub.s32 %v2890, %v2892
    %v2894 = vrot.slane %v2880, %v2893
    %v2895 = vcombine.low %v2436, %v2438
    %v2896 = vcombine.high %v2436, %v2438
    %v2898 = vunpack.c.l.s4 1983009808
    %v2899 = vunpack.c.0.s8 %v2898
    %v2900 = vlaneseq
    %v2901 = vshrl.u32 %v2900, 7
    %v2902 = vsub.s32 %v2899, %v2901
    %v2903 = vrot.slane %v2895, %v2902
    %v2905 = vunpack.c.l.s4 1983009808
    %v2906 = vunpack.c.0.s8 %v2905
    %v2907 = vlaneseq
    %v2908 = vshrl.u32 %v2907, 7
    %v2909 = vsub.s32 %v2906, %v2908
    %v2910 = vrot.slane %v2896, %v2909
    %v2911 = vcombine.low %v2855, %v2871
    %v2912 = vcombine.high %v2855, %v2871
    %v2914 = vunpack.c.l.s4 1934713408
    %v2915 = vunpack.c.0.s8 %v2914
    %v2916 = vlaneseq
    %v2917 = vshrl.u32 %v2916, 7
    %v2918 = vsub.s32 %v2915, %v2917
    %v2919 = vrot.slane %v2911, %v2918
    %v2921 = vunpack.c.l.s4 1934713408
    %v2922 = vunpack.c.0.s8 %v2921
    %v2923 = vlaneseq
    %v2924 = vshrl.u32 %v2923, 7
    %v2925 = vsub.s32 %v2922, %v2924
    %v2926 = vrot.slane %v2912, %v2925
    %v2927 = vcombine.low %v2862, %v2878
    %v2928 = vcombine.high %v2862, %v2878
    %v2930 = vunpack.c.l.s4 1934713408
    %v2931 = vunpack.c.0.s8 %v2930
    %v2932 = vlaneseq
    %v2933 = vshrl.u32 %v2932, 7
    %v2934 = vsub.s32 %v2931, %v2933
    %v2935 = vrot.slane %v2927, %v2934
    %v2937 = vunpack.c.l.s4 1934713408
    %v2938 = vunpack.c.0.s8 %v2937
    %v2939 = vlaneseq
    %v2940 = vshrl.u32 %v2939, 7
    %v2941 = vsub.s32 %v2938, %v2940
    %v2942 = vrot.slane %v2928, %v2941
    %v2943 = vcombine.low %v2887, %v2903
    %v2944 = vcombine.high %v2887, %v2903
    %v2946 = vunpack.c.l.s4 1934713408
    %v2947 = vunpack.c.0.s8 %v2946
    %v2948 = vlaneseq
    %v2949 = vshrl.u32 %v2948, 7
    %v2950 = vsub.s32 %v2947, %v2949
    %v2951 = vrot.slane %v2943, %v2950
    %v2953 = vunpack.c.l.s4 1934713408
    %v2954 = vunpack.c.0.s8 %v2953
    %v2955 = vlaneseq
    %v2956 = vshrl.u32 %v2955, 7
    %v2957 = vsub.s32 %v2954, %v2956
    %v2958 = vrot.slane %v2944, %v2957
    %v2959 = vcombine.low %v2894, %v2910
    %v2960 = vcombine.high %v2894, %v2910
    %v2962 = vunpack.c.l.s4 1934713408
    %v2963 = vunpack.c.0.s8 %v2962
    %v2964 = vlaneseq
    %v2965 = vshrl.u32 %v2964, 7
    %v2966 = vsub.s32 %v2963, %v2965
    %v2967 = vrot.slane %v2959, %v2966
    %v2969 = vunpack.c.l.s4 1934713408
    %v2970 = vunpack.c.0.s8 %v2969
    %v2971 = vlaneseq
    %v2972 = vshrl.u32 %v2971, 7
    %v2973 = vsub.s32 %v2970, %v2972
    %v2974 = vrot.slane %v2960, %v2973
    %v2975 = vcombine.low %v2919, %v2951
    %v2976 = vcombine.high %v2919, %v2951
    %v2977 = vcombine.low %v2926, %v2958
    %v2978 = vcombine.high %v2926, %v2958
    %v2979 = vcombine.low %v2935, %v2967
    %v2980 = vcombine.high %v2935, %v2967
    %v2981 = vcombine.low %v2942, %v2974
    %v2982 = vcombine.high %v2942, %v2974
    %v2983 = vcombine.low %v2567, %v2569
    %v2984 = vcombine.high %v2567, %v2569
    %v2986 = vunpack.c.l.s4 1983009808
    %v2987 = vunpack.c.0.s8 %v2986
    %v2988 = vlaneseq
    %v2989 = vshrl.u32 %v2988, 7
    %v2990 = vsub.s32 %v2987, %v2989
    %v2991 = vrot.slane %v2983, %v2990
    %v2993 = vunpack.c.l.s4 1983009808
    %v2994 = vunpack.c.0.s8 %v2993
    %v2995 = vlaneseq
    %v2996 = vshrl.u32 %v2995, 7
    %v2997 = vsub.s32 %v2994, %v2996
    %v2998 = vrot.slane %v2984, %v2997
    %v2999 = vcombine.low %v2568, %v2570
    %v3000 = vcombine.high %v2568, %v2570
    %v3002 = vunpack.c.l.s4 1983009808
    %v3003 = vunpack.c.0.s8 %v3002
    %v3004 = vlaneseq
    %v3005 = vshrl.u32 %v3004, 7
    %v3006 = vsub.s32 %v3003, %v3005
    %v3007 = vrot.slane %v2999, %v3006
    %v3009 = vunpack.c.l.s4 1983009808
    %v3010 = vunpack.c.0.s8 %v3009
    %v3011 = vlaneseq
    %v3012 = vshrl.u32 %v3011, 7
    %v3013 = vsub.s32 %v3010, %v3012
    %v3014 = vrot.slane %v3000, %v3013
    %v3015 = vcombine.low %v2571, %v2573
    %v3016 = vcombine.high %v2571, %v2573
    %v3018 = vunpack.c.l.s4 1983009808
    %v3019 = vunpack.c.0.s8 %v3018
    %v3020 = vlaneseq
    %v3021 = vshrl.u32 %v3020, 7
    %v3022 = vsub.s32 %v3019, %v3021
    %v3023 = vrot.slane %v3015, %v3022
    %v3025 = vunpack.c.l.s4 1983009808
    %v3026 = vunpack.c.0.s8 %v3025
    %v3027 = vlaneseq
    %v3028 = vshrl.u32 %v3027, 7
    %v3029 = vsub.s32 %v3026, %v3028
    %v3030 = vrot.slane %v3016, %v3029
    %v3031 = vcombine.low %v2572, %v2574
    %v3032 = vcombine.high %v2572, %v2574
    %v3034 = vunpack.c.l.s4 1983009808
    %v3035 = vunpack.c.0.s8 %v3034
    %v3036 = vlaneseq
    %v3037 = vshrl.u32 %v3036, 7
    %v3038 = vsub.s32 %v3035, %v3037
    %v3039 = vrot.slane %v3031, %v3038
    %v3041 = vunpack.c.l.s4 1983009808
    %v3042 = vunpack.c.0.s8 %v3041
    %v3043 = vlaneseq
    %v3044 = vshrl.u32 %v3043, 7
    %v3045 = vsub.s32 %v3042, %v3044
    %v3046 = vrot.slane %v3032, %v3045
    %v3047 = vcombine.low %v2991, %v3007
    %v3048 = vcombine.high %v2991, %v3007
    %v3050 = vunpack.c.l.s4 1934713408
    %v3051 = vunpack.c.0.s8 %v3050
    %v3052 = vlaneseq
    %v3053 = vshrl.u32 %v3052, 7
    %v3054 = vsub.s32 %v3051, %v3053
    %v3055 = vrot.slane %v3047, %v3054
    %v3057 = vunpack.c.l.s4 1934713408
    %v3058 = vunpack.c.0.s8 %v3057
    %v3059 = vlaneseq
    %v3060 = vshrl.u32 %v3059, 7
    %v3061 = vsub.s32 %v3058, %v3060
    %v3062 = vrot.slane %v3048, %v3061
    %v3063 = vcombine.low %v2998, %v3014
    %v3064 = vcombine.high %v2998, %v3014
    %v3066 = vunpack.c.l.s4 1934713408
    %v3067 = vunpack.c.0.s8 %v3066
    %v3068 = vlaneseq
    %v3069 = vshrl.u32 %v3068, 7
    %v3070 = vsub.s32 %v3067, %v3069
    %v3071 = vrot.slane %v3063, %v3070
    %v3073 = vunpack.c.l.s4 1934713408
    %v3074 = vunpack.c.0.s8 %v3073
    %v3075 = vlaneseq
    %v3076 = vshrl.u32 %v3075, 7
    %v3077 = vsub.s32 %v3074, %v3076
    %v3078 = vrot.slane %v3064, %v3077
    %v3079 = vcombine.low %v3023, %v3039
    %v3080 = vcombine.high %v3023, %v3039
    %v3082 = vunpack.c.l.s4 1934713408
    %v3083 = vunpack.c.0.s8 %v3082
    %v3084 = vlaneseq
    %v3085 = vshrl.u32 %v3084, 7
    %v3086 = vsub.s32 %v3083, %v3085
    %v3087 = vrot.slane %v3079, %v3086
    %v3089 = vunpack.c.l.s4 1934713408
    %v3090 = vunpack.c.0.s8 %v3089
    %v3091 = vlaneseq
    %v3092 = vshrl.u32 %v3091, 7
    %v3093 = vsub.s32 %v3090, %v3092
    %v3094 = vrot.slane %v3080, %v3093
    %v3095 = vcombine.low %v3030, %v3046
    %v3096 = vcombine.high %v3030, %v3046
    %v3098 = vunpack.c.l.s4 1934713408
    %v3099 = vunpack.c.0.s8 %v3098
    %v3100 = vlaneseq
    %v3101 = vshrl.u32 %v3100, 7
    %v3102 = vsub.s32 %v3099, %v3101
    %v3103 = vrot.slane %v3095, %v3102
    %v3105 = vunpack.c.l.s4 1934713408
    %v3106 = vunpack.c.0.s8 %v3105
    %v3107 = vlaneseq
    %v3108 = vshrl.u32 %v3107, 7
    %v3109 = vsub.s32 %v3106, %v3108
    %v3110 = vrot.slane %v3096, %v3109
    %v3111 = vcombine.low %v3055, %v3087
    %v3112 = vcombine.high %v3055, %v3087
    %v3113 = vcombine.low %v3062, %v3094
    %v3114 = vcombine.high %v3062, %v3094
    %v3115 = vcombine.low %v3071, %v3103
    %v3116 = vcombine.high %v3071, %v3103
    %v3117 = vcombine.low %v3078, %v3110
    %v3118 = vcombine.high %v3078, %v3110
    %3123 = vrot.lane.b32.xlu0 %v695, 124
    %v3124 = vpop.permute.xlu0 %3123
    %3125 = vrot.lane.b32.xlu0 %v696, 124
    %v3126 = vpop.permute.xlu0 %3125
    %3127 = vrot.lane.b32.xlu0 %v697, 124
    %v3128 = vpop.permute.xlu0 %3127
    %3129 = vrot.lane.b32.xlu0 %v698, 124
    %v3130 = vpop.permute.xlu0 %3129
    %3131 = vrot.lane.b32.xlu0 %v695, 120
    %v3132 = vpop.permute.xlu0 %3131
    %3133 = vrot.lane.b32.xlu0 %v696, 120
    %v3134 = vpop.permute.xlu0 %3133
    %3135 = vrot.lane.b32.xlu0 %v697, 120
    %v3136 = vpop.permute.xlu0 %3135
    %3137 = vrot.lane.b32.xlu0 %v698, 120
    %v3138 = vpop.permute.xlu0 %3137
    %3139 = vrot.lane.b32.xlu0 %v695, 116
    %v3140 = vpop.permute.xlu0 %3139
    %3141 = vrot.lane.b32.xlu0 %v696, 116
    %v3142 = vpop.permute.xlu0 %3141
    %3143 = vrot.lane.b32.xlu0 %v697, 116
    %v3144 = vpop.permute.xlu0 %3143
    %3145 = vrot.lane.b32.xlu0 %v698, 116
    %v3146 = vpop.permute.xlu0 %3145
    %3147 = vrot.lane.b32.xlu0 %v695, 112
    %v3148 = vpop.permute.xlu0 %3147
    %3149 = vrot.lane.b32.xlu0 %v696, 112
    %v3150 = vpop.permute.xlu0 %3149
    %3151 = vrot.lane.b32.xlu0 %v697, 112
    %v3152 = vpop.permute.xlu0 %3151
    %3153 = vrot.lane.b32.xlu0 %v698, 112
    %v3154 = vpop.permute.xlu0 %3153
    %3155 = vrot.lane.b32.xlu0 %v695, 108
    %v3156 = vpop.permute.xlu0 %3155
    %3157 = vrot.lane.b32.xlu0 %v696, 108
    %v3158 = vpop.permute.xlu0 %3157
    %3159 = vrot.lane.b32.xlu0 %v697, 108
    %v3160 = vpop.permute.xlu0 %3159
    %3161 = vrot.lane.b32.xlu0 %v698, 108
    %v3162 = vpop.permute.xlu0 %3161
    %3163 = vrot.lane.b32.xlu0 %v695, 104
    %v3164 = vpop.permute.xlu0 %3163
    %3165 = vrot.lane.b32.xlu0 %v696, 104
    %v3166 = vpop.permute.xlu0 %3165
    %3167 = vrot.lane.b32.xlu0 %v697, 104
    %v3168 = vpop.permute.xlu0 %3167
    %3169 = vrot.lane.b32.xlu0 %v698, 104
    %v3170 = vpop.permute.xlu0 %3169
    %3171 = vrot.lane.b32.xlu0 %v695, 100
    %v3172 = vpop.permute.xlu0 %3171
    %3173 = vrot.lane.b32.xlu0 %v696, 100
    %v3174 = vpop.permute.xlu0 %3173
    %3175 = vrot.lane.b32.xlu0 %v697, 100
    %v3176 = vpop.permute.xlu0 %3175
    %3177 = vrot.lane.b32.xlu0 %v698, 100
    %v3178 = vpop.permute.xlu0 %3177
    %3179 = vrot.lane.b32.xlu0 %v695, 64
    %v3180 = vpop.permute.xlu0 %3179
    %3181 = vrot.lane.b32.xlu0 %v696, 64
    %v3182 = vpop.permute.xlu0 %3181
    %3183 = vrot.lane.b32.xlu0 %v697, 64
    %v3184 = vpop.permute.xlu0 %3183
    %3185 = vrot.lane.b32.xlu0 %v698, 64
    %v3186 = vpop.permute.xlu0 %3185
    %3187 = vrot.lane.b32.xlu0 %v3124, 64
    %v3188 = vpop.permute.xlu0 %3187
    %3189 = vrot.lane.b32.xlu0 %v3126, 64
    %v3190 = vpop.permute.xlu0 %3189
    %3191 = vrot.lane.b32.xlu0 %v3128, 64
    %v3192 = vpop.permute.xlu0 %3191
    %3193 = vrot.lane.b32.xlu0 %v3130, 64
    %v3194 = vpop.permute.xlu0 %3193
    %3195 = vrot.lane.b32.xlu0 %v3132, 64
    %v3196 = vpop.permute.xlu0 %3195
    %3197 = vrot.lane.b32.xlu0 %v3134, 64
    %v3198 = vpop.permute.xlu0 %3197
    %3199 = vrot.lane.b32.xlu0 %v3136, 64
    %v3200 = vpop.permute.xlu0 %3199
    %3201 = vrot.lane.b32.xlu0 %v3138, 64
    %v3202 = vpop.permute.xlu0 %3201
    %3203 = vrot.lane.b32.xlu0 %v3140, 64
    %v3204 = vpop.permute.xlu0 %3203
    %3205 = vrot.lane.b32.xlu0 %v3142, 64
    %v3206 = vpop.permute.xlu0 %3205
    %3207 = vrot.lane.b32.xlu0 %v3144, 64
    %v3208 = vpop.permute.xlu0 %3207
    %3209 = vrot.lane.b32.xlu0 %v3146, 64
    %v3210 = vpop.permute.xlu0 %3209
    %3211 = vrot.lane.b32.xlu0 %v3148, 64
    %v3212 = vpop.permute.xlu0 %3211
    %3213 = vrot.lane.b32.xlu0 %v3150, 64
    %v3214 = vpop.permute.xlu0 %3213
    %3215 = vrot.lane.b32.xlu0 %v3152, 64
    %v3216 = vpop.permute.xlu0 %3215
    %3217 = vrot.lane.b32.xlu0 %v3154, 64
    %v3218 = vpop.permute.xlu0 %3217
    %3219 = vrot.lane.b32.xlu0 %v3156, 64
    %v3220 = vpop.permute.xlu0 %3219
    %3221 = vrot.lane.b32.xlu0 %v3158, 64
    %v3222 = vpop.permute.xlu0 %3221
    %3223 = vrot.lane.b32.xlu0 %v3160, 64
    %v3224 = vpop.permute.xlu0 %3223
    %3225 = vrot.lane.b32.xlu0 %v3162, 64
    %v3226 = vpop.permute.xlu0 %3225
    %3227 = vrot.lane.b32.xlu0 %v3164, 64
    %v3228 = vpop.permute.xlu0 %3227
    %3229 = vrot.lane.b32.xlu0 %v3166, 64
    %v3230 = vpop.permute.xlu0 %3229
    %3231 = vrot.lane.b32.xlu0 %v3168, 64
    %v3232 = vpop.permute.xlu0 %3231
    %3233 = vrot.lane.b32.xlu0 %v3170, 64
    %v3234 = vpop.permute.xlu0 %3233
    %3235 = vrot.lane.b32.xlu0 %v3172, 64
    %v3236 = vpop.permute.xlu0 %3235
    %3237 = vrot.lane.b32.xlu0 %v3174, 64
    %v3238 = vpop.permute.xlu0 %3237
    %3239 = vrot.lane.b32.xlu0 %v3176, 64
    %v3240 = vpop.permute.xlu0 %3239
    %3241 = vrot.lane.b32.xlu0 %v3178, 64
    %v3242 = vpop.permute.xlu0 %3241
    %v3275 = vcombine.low %v3180, %v3196
    %v3276 = vcombine.high %v3180, %v3196
    %v3278 = vunpack.c.l.s4 1983009808
    %v3279 = vunpack.c.0.s8 %v3278
    %v3280 = vlaneseq
    %v3281 = vshrl.u32 %v3280, 7
    %v3282 = vsub.s32 %v3279, %v3281
    %v3283 = vrot.slane %v3275, %v3282
    %v3285 = vunpack.c.l.s4 1983009808
    %v3286 = vunpack.c.0.s8 %v3285
    %v3287 = vlaneseq
    %v3288 = vshrl.u32 %v3287, 7
    %v3289 = vsub.s32 %v3286, %v3288
    %v3290 = vrot.slane %v3276, %v3289
    %v3291 = vcombine.low %v3188, %v3204
    %v3292 = vcombine.high %v3188, %v3204
    %v3294 = vunpack.c.l.s4 1983009808
    %v3295 = vunpack.c.0.s8 %v3294
    %v3296 = vlaneseq
    %v3297 = vshrl.u32 %v3296, 7
    %v3298 = vsub.s32 %v3295, %v3297
    %v3299 = vrot.slane %v3291, %v3298
    %v3301 = vunpack.c.l.s4 1983009808
    %v3302 = vunpack.c.0.s8 %v3301
    %v3303 = vlaneseq
    %v3304 = vshrl.u32 %v3303, 7
    %v3305 = vsub.s32 %v3302, %v3304
    %v3306 = vrot.slane %v3292, %v3305
    %v3307 = vcombine.low %v3212, %v3228
    %v3308 = vcombine.high %v3212, %v3228
    %v3310 = vunpack.c.l.s4 1983009808
    %v3311 = vunpack.c.0.s8 %v3310
    %v3312 = vlaneseq
    %v3313 = vshrl.u32 %v3312, 7
    %v3314 = vsub.s32 %v3311, %v3313
    %v3315 = vrot.slane %v3307, %v3314
    %v3317 = vunpack.c.l.s4 1983009808
    %v3318 = vunpack.c.0.s8 %v3317
    %v3319 = vlaneseq
    %v3320 = vshrl.u32 %v3319, 7
    %v3321 = vsub.s32 %v3318, %v3320
    %v3322 = vrot.slane %v3308, %v3321
    %v3323 = vcombine.low %v3220, %v3236
    %v3324 = vcombine.high %v3220, %v3236
    %v3326 = vunpack.c.l.s4 1983009808
    %v3327 = vunpack.c.0.s8 %v3326
    %v3328 = vlaneseq
    %v3329 = vshrl.u32 %v3328, 7
    %v3330 = vsub.s32 %v3327, %v3329
    %v3331 = vrot.slane %v3323, %v3330
    %v3333 = vunpack.c.l.s4 1983009808
    %v3334 = vunpack.c.0.s8 %v3333
    %v3335 = vlaneseq
    %v3336 = vshrl.u32 %v3335, 7
    %v3337 = vsub.s32 %v3334, %v3336
    %v3338 = vrot.slane %v3324, %v3337
    %v3339 = vcombine.low %v3283, %v3299
    %v3340 = vcombine.high %v3283, %v3299
    %v3342 = vunpack.c.l.s4 1934713408
    %v3343 = vunpack.c.0.s8 %v3342
    %v3344 = vlaneseq
    %v3345 = vshrl.u32 %v3344, 7
    %v3346 = vsub.s32 %v3343, %v3345
    %v3347 = vrot.slane %v3339, %v3346
    %v3349 = vunpack.c.l.s4 1934713408
    %v3350 = vunpack.c.0.s8 %v3349
    %v3351 = vlaneseq
    %v3352 = vshrl.u32 %v3351, 7
    %v3353 = vsub.s32 %v3350, %v3352
    %v3354 = vrot.slane %v3340, %v3353
    %v3355 = vcombine.low %v3290, %v3306
    %v3356 = vcombine.high %v3290, %v3306
    %v3358 = vunpack.c.l.s4 1934713408
    %v3359 = vunpack.c.0.s8 %v3358
    %v3360 = vlaneseq
    %v3361 = vshrl.u32 %v3360, 7
    %v3362 = vsub.s32 %v3359, %v3361
    %v3363 = vrot.slane %v3355, %v3362
    %v3365 = vunpack.c.l.s4 1934713408
    %v3366 = vunpack.c.0.s8 %v3365
    %v3367 = vlaneseq
    %v3368 = vshrl.u32 %v3367, 7
    %v3369 = vsub.s32 %v3366, %v3368
    %v3370 = vrot.slane %v3356, %v3369
    %v3371 = vcombine.low %v3315, %v3331
    %v3372 = vcombine.high %v3315, %v3331
    %v3374 = vunpack.c.l.s4 1934713408
    %v3375 = vunpack.c.0.s8 %v3374
    %v3376 = vlaneseq
    %v3377 = vshrl.u32 %v3376, 7
    %v3378 = vsub.s32 %v3375, %v3377
    %v3379 = vrot.slane %v3371, %v3378
    %v3381 = vunpack.c.l.s4 1934713408
    %v3382 = vunpack.c.0.s8 %v3381
    %v3383 = vlaneseq
    %v3384 = vshrl.u32 %v3383, 7
    %v3385 = vsub.s32 %v3382, %v3384
    %v3386 = vrot.slane %v3372, %v3385
    %v3387 = vcombine.low %v3322, %v3338
    %v3388 = vcombine.high %v3322, %v3338
    %v3390 = vunpack.c.l.s4 1934713408
    %v3391 = vunpack.c.0.s8 %v3390
    %v3392 = vlaneseq
    %v3393 = vshrl.u32 %v3392, 7
    %v3394 = vsub.s32 %v3391, %v3393
    %v3395 = vrot.slane %v3387, %v3394
    %v3397 = vunpack.c.l.s4 1934713408
    %v3398 = vunpack.c.0.s8 %v3397
    %v3399 = vlaneseq
    %v3400 = vshrl.u32 %v3399, 7
    %v3401 = vsub.s32 %v3398, %v3400
    %v3402 = vrot.slane %v3388, %v3401
    %v3403 = vcombine.low %v3347, %v3379
    %v3404 = vcombine.high %v3347, %v3379
    %v3405 = vcombine.low %v3354, %v3386
    %v3406 = vcombine.high %v3354, %v3386
    %v3407 = vcombine.low %v3363, %v3395
    %v3408 = vcombine.high %v3363, %v3395
    %v3409 = vcombine.low %v3370, %v3402
    %v3410 = vcombine.high %v3370, %v3402
    %v3411 = vcombine.low %v3182, %v3198
    %v3412 = vcombine.high %v3182, %v3198
    %v3414 = vunpack.c.l.s4 1983009808
    %v3415 = vunpack.c.0.s8 %v3414
    %v3416 = vlaneseq
    %v3417 = vshrl.u32 %v3416, 7
    %v3418 = vsub.s32 %v3415, %v3417
    %v3419 = vrot.slane %v3411, %v3418
    %v3421 = vunpack.c.l.s4 1983009808
    %v3422 = vunpack.c.0.s8 %v3421
    %v3423 = vlaneseq
    %v3424 = vshrl.u32 %v3423, 7
    %v3425 = vsub.s32 %v3422, %v3424
    %v3426 = vrot.slane %v3412, %v3425
    %v3427 = vcombine.low %v3190, %v3206
    %v3428 = vcombine.high %v3190, %v3206
    %v3430 = vunpack.c.l.s4 1983009808
    %v3431 = vunpack.c.0.s8 %v3430
    %v3432 = vlaneseq
    %v3433 = vshrl.u32 %v3432, 7
    %v3434 = vsub.s32 %v3431, %v3433
    %v3435 = vrot.slane %v3427, %v3434
    %v3437 = vunpack.c.l.s4 1983009808
    %v3438 = vunpack.c.0.s8 %v3437
    %v3439 = vlaneseq
    %v3440 = vshrl.u32 %v3439, 7
    %v3441 = vsub.s32 %v3438, %v3440
    %v3442 = vrot.slane %v3428, %v3441
    %v3443 = vcombine.low %v3214, %v3230
    %v3444 = vcombine.high %v3214, %v3230
    %v3446 = vunpack.c.l.s4 1983009808
    %v3447 = vunpack.c.0.s8 %v3446
    %v3448 = vlaneseq
    %v3449 = vshrl.u32 %v3448, 7
    %v3450 = vsub.s32 %v3447, %v3449
    %v3451 = vrot.slane %v3443, %v3450
    %v3453 = vunpack.c.l.s4 1983009808
    %v3454 = vunpack.c.0.s8 %v3453
    %v3455 = vlaneseq
    %v3456 = vshrl.u32 %v3455, 7
    %v3457 = vsub.s32 %v3454, %v3456
    %v3458 = vrot.slane %v3444, %v3457
    %v3459 = vcombine.low %v3222, %v3238
    %v3460 = vcombine.high %v3222, %v3238
    %v3462 = vunpack.c.l.s4 1983009808
    %v3463 = vunpack.c.0.s8 %v3462
    %v3464 = vlaneseq
    %v3465 = vshrl.u32 %v3464, 7
    %v3466 = vsub.s32 %v3463, %v3465
    %v3467 = vrot.slane %v3459, %v3466
    %v3469 = vunpack.c.l.s4 1983009808
    %v3470 = vunpack.c.0.s8 %v3469
    %v3471 = vlaneseq
    %v3472 = vshrl.u32 %v3471, 7
    %v3473 = vsub.s32 %v3470, %v3472
    %v3474 = vrot.slane %v3460, %v3473
    %v3475 = vcombine.low %v3419, %v3435
    %v3476 = vcombine.high %v3419, %v3435
    %v3478 = vunpack.c.l.s4 1934713408
    %v3479 = vunpack.c.0.s8 %v3478
    %v3480 = vlaneseq
    %v3481 = vshrl.u32 %v3480, 7
    %v3482 = vsub.s32 %v3479, %v3481
    %v3483 = vrot.slane %v3475, %v3482
    %v3485 = vunpack.c.l.s4 1934713408
    %v3486 = vunpack.c.0.s8 %v3485
    %v3487 = vlaneseq
    %v3488 = vshrl.u32 %v3487, 7
    %v3489 = vsub.s32 %v3486, %v3488
    %v3490 = vrot.slane %v3476, %v3489
    %v3491 = vcombine.low %v3426, %v3442
    %v3492 = vcombine.high %v3426, %v3442
    %v3494 = vunpack.c.l.s4 1934713408
    %v3495 = vunpack.c.0.s8 %v3494
    %v3496 = vlaneseq
    %v3497 = vshrl.u32 %v3496, 7
    %v3498 = vsub.s32 %v3495, %v3497
    %v3499 = vrot.slane %v3491, %v3498
    %v3501 = vunpack.c.l.s4 1934713408
    %v3502 = vunpack.c.0.s8 %v3501
    %v3503 = vlaneseq
    %v3504 = vshrl.u32 %v3503, 7
    %v3505 = vsub.s32 %v3502, %v3504
    %v3506 = vrot.slane %v3492, %v3505
    %v3507 = vcombine.low %v3451, %v3467
    %v3508 = vcombine.high %v3451, %v3467
    %v3510 = vunpack.c.l.s4 1934713408
    %v3511 = vunpack.c.0.s8 %v3510
    %v3512 = vlaneseq
    %v3513 = vshrl.u32 %v3512, 7
    %v3514 = vsub.s32 %v3511, %v3513
    %v3515 = vrot.slane %v3507, %v3514
    %v3517 = vunpack.c.l.s4 1934713408
    %v3518 = vunpack.c.0.s8 %v3517
    %v3519 = vlaneseq
    %v3520 = vshrl.u32 %v3519, 7
    %v3521 = vsub.s32 %v3518, %v3520
    %v3522 = vrot.slane %v3508, %v3521
    %v3523 = vcombine.low %v3458, %v3474
    %v3524 = vcombine.high %v3458, %v3474
    %v3526 = vunpack.c.l.s4 1934713408
    %v3527 = vunpack.c.0.s8 %v3526
    %v3528 = vlaneseq
    %v3529 = vshrl.u32 %v3528, 7
    %v3530 = vsub.s32 %v3527, %v3529
    %v3531 = vrot.slane %v3523, %v3530
    %v3533 = vunpack.c.l.s4 1934713408
    %v3534 = vunpack.c.0.s8 %v3533
    %v3535 = vlaneseq
    %v3536 = vshrl.u32 %v3535, 7
    %v3537 = vsub.s32 %v3534, %v3536
    %v3538 = vrot.slane %v3524, %v3537
    %v3539 = vcombine.low %v3483, %v3515
    %v3540 = vcombine.high %v3483, %v3515
    %v3541 = vcombine.low %v3490, %v3522
    %v3542 = vcombine.high %v3490, %v3522
    %v3543 = vcombine.low %v3499, %v3531
    %v3544 = vcombine.high %v3499, %v3531
    %v3545 = vcombine.low %v3506, %v3538
    %v3546 = vcombine.high %v3506, %v3538
    %v3547 = vcombine.low %v3184, %v3200
    %v3548 = vcombine.high %v3184, %v3200
    %v3550 = vunpack.c.l.s4 1983009808
    %v3551 = vunpack.c.0.s8 %v3550
    %v3552 = vlaneseq
    %v3553 = vshrl.u32 %v3552, 7
    %v3554 = vsub.s32 %v3551, %v3553
    %v3555 = vrot.slane %v3547, %v3554
    %v3557 = vunpack.c.l.s4 1983009808
    %v3558 = vunpack.c.0.s8 %v3557
    %v3559 = vlaneseq
    %v3560 = vshrl.u32 %v3559, 7
    %v3561 = vsub.s32 %v3558, %v3560
    %v3562 = vrot.slane %v3548, %v3561
    %v3563 = vcombine.low %v3192, %v3208
    %v3564 = vcombine.high %v3192, %v3208
    %v3566 = vunpack.c.l.s4 1983009808
    %v3567 = vunpack.c.0.s8 %v3566
    %v3568 = vlaneseq
    %v3569 = vshrl.u32 %v3568, 7
    %v3570 = vsub.s32 %v3567, %v3569
    %v3571 = vrot.slane %v3563, %v3570
    %v3573 = vunpack.c.l.s4 1983009808
    %v3574 = vunpack.c.0.s8 %v3573
    %v3575 = vlaneseq
    %v3576 = vshrl.u32 %v3575, 7
    %v3577 = vsub.s32 %v3574, %v3576
    %v3578 = vrot.slane %v3564, %v3577
    %v3579 = vcombine.low %v3216, %v3232
    %v3580 = vcombine.high %v3216, %v3232
    %v3582 = vunpack.c.l.s4 1983009808
    %v3583 = vunpack.c.0.s8 %v3582
    %v3584 = vlaneseq
    %v3585 = vshrl.u32 %v3584, 7
    %v3586 = vsub.s32 %v3583, %v3585
    %v3587 = vrot.slane %v3579, %v3586
    %v3589 = vunpack.c.l.s4 1983009808
    %v3590 = vunpack.c.0.s8 %v3589
    %v3591 = vlaneseq
    %v3592 = vshrl.u32 %v3591, 7
    %v3593 = vsub.s32 %v3590, %v3592
    %v3594 = vrot.slane %v3580, %v3593
    %v3595 = vcombine.low %v3224, %v3240
    %v3596 = vcombine.high %v3224, %v3240
    %v3598 = vunpack.c.l.s4 1983009808
    %v3599 = vunpack.c.0.s8 %v3598
    %v3600 = vlaneseq
    %v3601 = vshrl.u32 %v3600, 7
    %v3602 = vsub.s32 %v3599, %v3601
    %v3603 = vrot.slane %v3595, %v3602
    %v3605 = vunpack.c.l.s4 1983009808
    %v3606 = vunpack.c.0.s8 %v3605
    %v3607 = vlaneseq
    %v3608 = vshrl.u32 %v3607, 7
    %v3609 = vsub.s32 %v3606, %v3608
    %v3610 = vrot.slane %v3596, %v3609
    %v3611 = vcombine.low %v3555, %v3571
    %v3612 = vcombine.high %v3555, %v3571
    %v3614 = vunpack.c.l.s4 1934713408
    %v3615 = vunpack.c.0.s8 %v3614
    %v3616 = vlaneseq
    %v3617 = vshrl.u32 %v3616, 7
    %v3618 = vsub.s32 %v3615, %v3617
    %v3619 = vrot.slane %v3611, %v3618
    %v3621 = vunpack.c.l.s4 1934713408
    %v3622 = vunpack.c.0.s8 %v3621
    %v3623 = vlaneseq
    %v3624 = vshrl.u32 %v3623, 7
    %v3625 = vsub.s32 %v3622, %v3624
    %v3626 = vrot.slane %v3612, %v3625
    %v3627 = vcombine.low %v3562, %v3578
    %v3628 = vcombine.high %v3562, %v3578
    %v3630 = vunpack.c.l.s4 1934713408
    %v3631 = vunpack.c.0.s8 %v3630
    %v3632 = vlaneseq
    %v3633 = vshrl.u32 %v3632, 7
    %v3634 = vsub.s32 %v3631, %v3633
    %v3635 = vrot.slane %v3627, %v3634
    %v3637 = vunpack.c.l.s4 1934713408
    %v3638 = vunpack.c.0.s8 %v3637
    %v3639 = vlaneseq
    %v3640 = vshrl.u32 %v3639, 7
    %v3641 = vsub.s32 %v3638, %v3640
    %v3642 = vrot.slane %v3628, %v3641
    %v3643 = vcombine.low %v3587, %v3603
    %v3644 = vcombine.high %v3587, %v3603
    %v3646 = vunpack.c.l.s4 1934713408
    %v3647 = vunpack.c.0.s8 %v3646
    %v3648 = vlaneseq
    %v3649 = vshrl.u32 %v3648, 7
    %v3650 = vsub.s32 %v3647, %v3649
    %v3651 = vrot.slane %v3643, %v3650
    %v3653 = vunpack.c.l.s4 1934713408
    %v3654 = vunpack.c.0.s8 %v3653
    %v3655 = vlaneseq
    %v3656 = vshrl.u32 %v3655, 7
    %v3657 = vsub.s32 %v3654, %v3656
    %v3658 = vrot.slane %v3644, %v3657
    %v3659 = vcombine.low %v3594, %v3610
    %v3660 = vcombine.high %v3594, %v3610
    %v3662 = vunpack.c.l.s4 1934713408
    %v3663 = vunpack.c.0.s8 %v3662
    %v3664 = vlaneseq
    %v3665 = vshrl.u32 %v3664, 7
    %v3666 = vsub.s32 %v3663, %v3665
    %v3667 = vrot.slane %v3659, %v3666
    %v3669 = vunpack.c.l.s4 1934713408
    %v3670 = vunpack.c.0.s8 %v3669
    %v3671 = vlaneseq
    %v3672 = vshrl.u32 %v3671, 7
    %v3673 = vsub.s32 %v3670, %v3672
    %v3674 = vrot.slane %v3660, %v3673
    %v3675 = vcombine.low %v3619, %v3651
    %v3676 = vcombine.high %v3619, %v3651
    %v3677 = vcombine.low %v3626, %v3658
    %v3678 = vcombine.high %v3626, %v3658
    %v3679 = vcombine.low %v3635, %v3667
    %v3680 = vcombine.high %v3635, %v3667
    %v3681 = vcombine.low %v3642, %v3674
    %v3682 = vcombine.high %v3642, %v3674
    %v3683 = vcombine.low %v3186, %v3202
    %v3684 = vcombine.high %v3186, %v3202
    %v3686 = vunpack.c.l.s4 1983009808
    %v3687 = vunpack.c.0.s8 %v3686
    %v3688 = vlaneseq
    %v3689 = vshrl.u32 %v3688, 7
    %v3690 = vsub.s32 %v3687, %v3689
    %v3691 = vrot.slane %v3683, %v3690
    %v3693 = vunpack.c.l.s4 1983009808
    %v3694 = vunpack.c.0.s8 %v3693
    %v3695 = vlaneseq
    %v3696 = vshrl.u32 %v3695, 7
    %v3697 = vsub.s32 %v3694, %v3696
    %v3698 = vrot.slane %v3684, %v3697
    %v3699 = vcombine.low %v3194, %v3210
    %v3700 = vcombine.high %v3194, %v3210
    %v3702 = vunpack.c.l.s4 1983009808
    %v3703 = vunpack.c.0.s8 %v3702
    %v3704 = vlaneseq
    %v3705 = vshrl.u32 %v3704, 7
    %v3706 = vsub.s32 %v3703, %v3705
    %v3707 = vrot.slane %v3699, %v3706
    %v3709 = vunpack.c.l.s4 1983009808
    %v3710 = vunpack.c.0.s8 %v3709
    %v3711 = vlaneseq
    %v3712 = vshrl.u32 %v3711, 7
    %v3713 = vsub.s32 %v3710, %v3712
    %v3714 = vrot.slane %v3700, %v3713
    %v3715 = vcombine.low %v3218, %v3234
    %v3716 = vcombine.high %v3218, %v3234
    %v3718 = vunpack.c.l.s4 1983009808
    %v3719 = vunpack.c.0.s8 %v3718
    %v3720 = vlaneseq
    %v3721 = vshrl.u32 %v3720, 7
    %v3722 = vsub.s32 %v3719, %v3721
    %v3723 = vrot.slane %v3715, %v3722
    %v3725 = vunpack.c.l.s4 1983009808
    %v3726 = vunpack.c.0.s8 %v3725
    %v3727 = vlaneseq
    %v3728 = vshrl.u32 %v3727, 7
    %v3729 = vsub.s32 %v3726, %v3728
    %v3730 = vrot.slane %v3716, %v3729
    %v3731 = vcombine.low %v3226, %v3242
    %v3732 = vcombine.high %v3226, %v3242
    %v3734 = vunpack.c.l.s4 1983009808
    %v3735 = vunpack.c.0.s8 %v3734
    %v3736 = vlaneseq
    %v3737 = vshrl.u32 %v3736, 7
    %v3738 = vsub.s32 %v3735, %v3737
    %v3739 = vrot.slane %v3731, %v3738
    %v3741 = vunpack.c.l.s4 1983009808
    %v3742 = vunpack.c.0.s8 %v3741
    %v3743 = vlaneseq
    %v3744 = vshrl.u32 %v3743, 7
    %v3745 = vsub.s32 %v3742, %v3744
    %v3746 = vrot.slane %v3732, %v3745
    %v3747 = vcombine.low %v3691, %v3707
    %v3748 = vcombine.high %v3691, %v3707
    %v3750 = vunpack.c.l.s4 1934713408
    %v3751 = vunpack.c.0.s8 %v3750
    %v3752 = vlaneseq
    %v3753 = vshrl.u32 %v3752, 7
    %v3754 = vsub.s32 %v3751, %v3753
    %v3755 = vrot.slane %v3747, %v3754
    %v3757 = vunpack.c.l.s4 1934713408
    %v3758 = vunpack.c.0.s8 %v3757
    %v3759 = vlaneseq
    %v3760 = vshrl.u32 %v3759, 7
    %v3761 = vsub.s32 %v3758, %v3760
    %v3762 = vrot.slane %v3748, %v3761
    %v3763 = vcombine.low %v3698, %v3714
    %v3764 = vcombine.high %v3698, %v3714
    %v3766 = vunpack.c.l.s4 1934713408
    %v3767 = vunpack.c.0.s8 %v3766
    %v3768 = vlaneseq
    %v3769 = vshrl.u32 %v3768, 7
    %v3770 = vsub.s32 %v3767, %v3769
    %v3771 = vrot.slane %v3763, %v3770
    %v3773 = vunpack.c.l.s4 1934713408
    %v3774 = vunpack.c.0.s8 %v3773
    %v3775 = vlaneseq
    %v3776 = vshrl.u32 %v3775, 7
    %v3777 = vsub.s32 %v3774, %v3776
    %v3778 = vrot.slane %v3764, %v3777
    %v3779 = vcombine.low %v3723, %v3739
    %v3780 = vcombine.high %v3723, %v3739
    %v3782 = vunpack.c.l.s4 1934713408
    %v3783 = vunpack.c.0.s8 %v3782
    %v3784 = vlaneseq
    %v3785 = vshrl.u32 %v3784, 7
    %v3786 = vsub.s32 %v3783, %v3785
    %v3787 = vrot.slane %v3779, %v3786
    %v3789 = vunpack.c.l.s4 1934713408
    %v3790 = vunpack.c.0.s8 %v3789
    %v3791 = vlaneseq
    %v3792 = vshrl.u32 %v3791, 7
    %v3793 = vsub.s32 %v3790, %v3792
    %v3794 = vrot.slane %v3780, %v3793
    %v3795 = vcombine.low %v3730, %v3746
    %v3796 = vcombine.high %v3730, %v3746
    %v3798 = vunpack.c.l.s4 1934713408
    %v3799 = vunpack.c.0.s8 %v3798
    %v3800 = vlaneseq
    %v3801 = vshrl.u32 %v3800, 7
    %v3802 = vsub.s32 %v3799, %v3801
    %v3803 = vrot.slane %v3795, %v3802
    %v3805 = vunpack.c.l.s4 1934713408
    %v3806 = vunpack.c.0.s8 %v3805
    %v3807 = vlaneseq
    %v3808 = vshrl.u32 %v3807, 7
    %v3809 = vsub.s32 %v3806, %v3808
    %v3810 = vrot.slane %v3796, %v3809
    %v3811 = vcombine.low %v3755, %v3787
    %v3812 = vcombine.high %v3755, %v3787
    %v3813 = vcombine.low %v3762, %v3794
    %v3814 = vcombine.high %v3762, %v3794
    %v3815 = vcombine.low %v3771, %v3803
    %v3816 = vcombine.high %v3771, %v3803
    %v3817 = vcombine.low %v3778, %v3810
    %v3818 = vcombine.high %v3778, %v3810
    %v3819 = vcombine.low %v3403, %v3405
    %v3820 = vcombine.high %v3403, %v3405
    %v3822 = vunpack.c.l.s4 1983009808
    %v3823 = vunpack.c.0.s8 %v3822
    %v3824 = vlaneseq
    %v3825 = vshrl.u32 %v3824, 7
    %v3826 = vsub.s32 %v3823, %v3825
    %v3827 = vrot.slane %v3819, %v3826
    %v3829 = vunpack.c.l.s4 1983009808
    %v3830 = vunpack.c.0.s8 %v3829
    %v3831 = vlaneseq
    %v3832 = vshrl.u32 %v3831, 7
    %v3833 = vsub.s32 %v3830, %v3832
    %v3834 = vrot.slane %v3820, %v3833
    %v3835 = vcombine.low %v3404, %v3406
    %v3836 = vcombine.high %v3404, %v3406
    %v3838 = vunpack.c.l.s4 1983009808
    %v3839 = vunpack.c.0.s8 %v3838
    %v3840 = vlaneseq
    %v3841 = vshrl.u32 %v3840, 7
    %v3842 = vsub.s32 %v3839, %v3841
    %v3843 = vrot.slane %v3835, %v3842
    %v3845 = vunpack.c.l.s4 1983009808
    %v3846 = vunpack.c.0.s8 %v3845
    %v3847 = vlaneseq
    %v3848 = vshrl.u32 %v3847, 7
    %v3849 = vsub.s32 %v3846, %v3848
    %v3850 = vrot.slane %v3836, %v3849
    %v3851 = vcombine.low %v3407, %v3409
    %v3852 = vcombine.high %v3407, %v3409
    %v3854 = vunpack.c.l.s4 1983009808
    %v3855 = vunpack.c.0.s8 %v3854
    %v3856 = vlaneseq
    %v3857 = vshrl.u32 %v3856, 7
    %v3858 = vsub.s32 %v3855, %v3857
    %v3859 = vrot.slane %v3851, %v3858
    %v3861 = vunpack.c.l.s4 1983009808
    %v3862 = vunpack.c.0.s8 %v3861
    %v3863 = vlaneseq
    %v3864 = vshrl.u32 %v3863, 7
    %v3865 = vsub.s32 %v3862, %v3864
    %v3866 = vrot.slane %v3852, %v3865
    %v3867 = vcombine.low %v3408, %v3410
    %v3868 = vcombine.high %v3408, %v3410
    %v3870 = vunpack.c.l.s4 1983009808
    %v3871 = vunpack.c.0.s8 %v3870
    %v3872 = vlaneseq
    %v3873 = vshrl.u32 %v3872, 7
    %v3874 = vsub.s32 %v3871, %v3873
    %v3875 = vrot.slane %v3867, %v3874
    %v3877 = vunpack.c.l.s4 1983009808
    %v3878 = vunpack.c.0.s8 %v3877
    %v3879 = vlaneseq
    %v3880 = vshrl.u32 %v3879, 7
    %v3881 = vsub.s32 %v3878, %v3880
    %v3882 = vrot.slane %v3868, %v3881
    %v3883 = vcombine.low %v3827, %v3843
    %v3884 = vcombine.high %v3827, %v3843
    %v3886 = vunpack.c.l.s4 1934713408
    %v3887 = vunpack.c.0.s8 %v3886
    %v3888 = vlaneseq
    %v3889 = vshrl.u32 %v3888, 7
    %v3890 = vsub.s32 %v3887, %v3889
    %v3891 = vrot.slane %v3883, %v3890
    %v3893 = vunpack.c.l.s4 1934713408
    %v3894 = vunpack.c.0.s8 %v3893
    %v3895 = vlaneseq
    %v3896 = vshrl.u32 %v3895, 7
    %v3897 = vsub.s32 %v3894, %v3896
    %v3898 = vrot.slane %v3884, %v3897
    %v3899 = vcombine.low %v3834, %v3850
    %v3900 = vcombine.high %v3834, %v3850
    %v3902 = vunpack.c.l.s4 1934713408
    %v3903 = vunpack.c.0.s8 %v3902
    %v3904 = vlaneseq
    %v3905 = vshrl.u32 %v3904, 7
    %v3906 = vsub.s32 %v3903, %v3905
    %v3907 = vrot.slane %v3899, %v3906
    %v3909 = vunpack.c.l.s4 1934713408
    %v3910 = vunpack.c.0.s8 %v3909
    %v3911 = vlaneseq
    %v3912 = vshrl.u32 %v3911, 7
    %v3913 = vsub.s32 %v3910, %v3912
    %v3914 = vrot.slane %v3900, %v3913
    %v3915 = vcombine.low %v3859, %v3875
    %v3916 = vcombine.high %v3859, %v3875
    %v3918 = vunpack.c.l.s4 1934713408
    %v3919 = vunpack.c.0.s8 %v3918
    %v3920 = vlaneseq
    %v3921 = vshrl.u32 %v3920, 7
    %v3922 = vsub.s32 %v3919, %v3921
    %v3923 = vrot.slane %v3915, %v3922
    %v3925 = vunpack.c.l.s4 1934713408
    %v3926 = vunpack.c.0.s8 %v3925
    %v3927 = vlaneseq
    %v3928 = vshrl.u32 %v3927, 7
    %v3929 = vsub.s32 %v3926, %v3928
    %v3930 = vrot.slane %v3916, %v3929
    %v3931 = vcombine.low %v3866, %v3882
    %v3932 = vcombine.high %v3866, %v3882
    %v3934 = vunpack.c.l.s4 1934713408
    %v3935 = vunpack.c.0.s8 %v3934
    %v3936 = vlaneseq
    %v3937 = vshrl.u32 %v3936, 7
    %v3938 = vsub.s32 %v3935, %v3937
    %v3939 = vrot.slane %v3931, %v3938
    %v3941 = vunpack.c.l.s4 1934713408
    %v3942 = vunpack.c.0.s8 %v3941
    %v3943 = vlaneseq
    %v3944 = vshrl.u32 %v3943, 7
    %v3945 = vsub.s32 %v3942, %v3944
    %v3946 = vrot.slane %v3932, %v3945
    %v3947 = vcombine.low %v3891, %v3923
    %v3948 = vcombine.high %v3891, %v3923
    %v3949 = vcombine.low %v3898, %v3930
    %v3950 = vcombine.high %v3898, %v3930
    %v3951 = vcombine.low %v3907, %v3939
    %v3952 = vcombine.high %v3907, %v3939
    %v3953 = vcombine.low %v3914, %v3946
    %v3954 = vcombine.high %v3914, %v3946
    %v3955 = vcombine.low %v3539, %v3541
    %v3956 = vcombine.high %v3539, %v3541
    %v3958 = vunpack.c.l.s4 1983009808
    %v3959 = vunpack.c.0.s8 %v3958
    %v3960 = vlaneseq
    %v3961 = vshrl.u32 %v3960, 7
    %v3962 = vsub.s32 %v3959, %v3961
    %v3963 = vrot.slane %v3955, %v3962
    %v3965 = vunpack.c.l.s4 1983009808
    %v3966 = vunpack.c.0.s8 %v3965
    %v3967 = vlaneseq
    %v3968 = vshrl.u32 %v3967, 7
    %v3969 = vsub.s32 %v3966, %v3968
    %v3970 = vrot.slane %v3956, %v3969
    %v3971 = vcombine.low %v3540, %v3542
    %v3972 = vcombine.high %v3540, %v3542
    %v3974 = vunpack.c.l.s4 1983009808
    %v3975 = vunpack.c.0.s8 %v3974
    %v3976 = vlaneseq
    %v3977 = vshrl.u32 %v3976, 7
    %v3978 = vsub.s32 %v3975, %v3977
    %v3979 = vrot.slane %v3971, %v3978
    %v3981 = vunpack.c.l.s4 1983009808
    %v3982 = vunpack.c.0.s8 %v3981
    %v3983 = vlaneseq
    %v3984 = vshrl.u32 %v3983, 7
    %v3985 = vsub.s32 %v3982, %v3984
    %v3986 = vrot.slane %v3972, %v3985
    %v3987 = vcombine.low %v3543, %v3545
    %v3988 = vcombine.high %v3543, %v3545
    %v3990 = vunpack.c.l.s4 1983009808
    %v3991 = vunpack.c.0.s8 %v3990
    %v3992 = vlaneseq
    %v3993 = vshrl.u32 %v3992, 7
    %v3994 = vsub.s32 %v3991, %v3993
    %v3995 = vrot.slane %v3987, %v3994
    %v3997 = vunpack.c.l.s4 1983009808
    %v3998 = vunpack.c.0.s8 %v3997
    %v3999 = vlaneseq
    %v4000 = vshrl.u32 %v3999, 7
    %v4001 = vsub.s32 %v3998, %v4000
    %v4002 = vrot.slane %v3988, %v4001
    %v4003 = vcombine.low %v3544, %v3546
    %v4004 = vcombine.high %v3544, %v3546
    %v4006 = vunpack.c.l.s4 1983009808
    %v4007 = vunpack.c.0.s8 %v4006
    %v4008 = vlaneseq
    %v4009 = vshrl.u32 %v4008, 7
    %v4010 = vsub.s32 %v4007, %v4009
    %v4011 = vrot.slane %v4003, %v4010
    %v4013 = vunpack.c.l.s4 1983009808
    %v4014 = vunpack.c.0.s8 %v4013
    %v4015 = vlaneseq
    %v4016 = vshrl.u32 %v4015, 7
    %v4017 = vsub.s32 %v4014, %v4016
    %v4018 = vrot.slane %v4004, %v4017
    %v4019 = vcombine.low %v3963, %v3979
    %v4020 = vcombine.high %v3963, %v3979
    %v4022 = vunpack.c.l.s4 1934713408
    %v4023 = vunpack.c.0.s8 %v4022
    %v4024 = vlaneseq
    %v4025 = vshrl.u32 %v4024, 7
    %v4026 = vsub.s32 %v4023, %v4025
    %v4027 = vrot.slane %v4019, %v4026
    %v4029 = vunpack.c.l.s4 1934713408
    %v4030 = vunpack.c.0.s8 %v4029
    %v4031 = vlaneseq
    %v4032 = vshrl.u32 %v4031, 7
    %v4033 = vsub.s32 %v4030, %v4032
    %v4034 = vrot.slane %v4020, %v4033
    %v4035 = vcombine.low %v3970, %v3986
    %v4036 = vcombine.high %v3970, %v3986
    %v4038 = vunpack.c.l.s4 1934713408
    %v4039 = vunpack.c.0.s8 %v4038
    %v4040 = vlaneseq
    %v4041 = vshrl.u32 %v4040, 7
    %v4042 = vsub.s32 %v4039, %v4041
    %v4043 = vrot.slane %v4035, %v4042
    %v4045 = vunpack.c.l.s4 1934713408
    %v4046 = vunpack.c.0.s8 %v4045
    %v4047 = vlaneseq
    %v4048 = vshrl.u32 %v4047, 7
    %v4049 = vsub.s32 %v4046, %v4048
    %v4050 = vrot.slane %v4036, %v4049
    %v4051 = vcombine.low %v3995, %v4011
    %v4052 = vcombine.high %v3995, %v4011
    %v4054 = vunpack.c.l.s4 1934713408
    %v4055 = vunpack.c.0.s8 %v4054
    %v4056 = vlaneseq
    %v4057 = vshrl.u32 %v4056, 7
    %v4058 = vsub.s32 %v4055, %v4057
    %v4059 = vrot.slane %v4051, %v4058
    %v4061 = vunpack.c.l.s4 1934713408
    %v4062 = vunpack.c.0.s8 %v4061
    %v4063 = vlaneseq
    %v4064 = vshrl.u32 %v4063, 7
    %v4065 = vsub.s32 %v4062, %v4064
    %v4066 = vrot.slane %v4052, %v4065
    %v4067 = vcombine.low %v4002, %v4018
    %v4068 = vcombine.high %v4002, %v4018
    %v4070 = vunpack.c.l.s4 1934713408
    %v4071 = vunpack.c.0.s8 %v4070
    %v4072 = vlaneseq
    %v4073 = vshrl.u32 %v4072, 7
    %v4074 = vsub.s32 %v4071, %v4073
    %v4075 = vrot.slane %v4067, %v4074
    %v4077 = vunpack.c.l.s4 1934713408
    %v4078 = vunpack.c.0.s8 %v4077
    %v4079 = vlaneseq
    %v4080 = vshrl.u32 %v4079, 7
    %v4081 = vsub.s32 %v4078, %v4080
    %v4082 = vrot.slane %v4068, %v4081
    %v4083 = vcombine.low %v4027, %v4059
    %v4084 = vcombine.high %v4027, %v4059
    %v4085 = vcombine.low %v4034, %v4066
    %v4086 = vcombine.high %v4034, %v4066
    %v4087 = vcombine.low %v4043, %v4075
    %v4088 = vcombine.high %v4043, %v4075
    %v4089 = vcombine.low %v4050, %v4082
    %v4090 = vcombine.high %v4050, %v4082
    %v4091 = vcombine.low %v3675, %v3677
    %v4092 = vcombine.high %v3675, %v3677
    %v4094 = vunpack.c.l.s4 1983009808
    %v4095 = vunpack.c.0.s8 %v4094
    %v4096 = vlaneseq
    %v4097 = vshrl.u32 %v4096, 7
    %v4098 = vsub.s32 %v4095, %v4097
    %v4099 = vrot.slane %v4091, %v4098
    %v4101 = vunpack.c.l.s4 1983009808
    %v4102 = vunpack.c.0.s8 %v4101
    %v4103 = vlaneseq
    %v4104 = vshrl.u32 %v4103, 7
    %v4105 = vsub.s32 %v4102, %v4104
    %v4106 = vrot.slane %v4092, %v4105
    %v4107 = vcombine.low %v3676, %v3678
    %v4108 = vcombine.high %v3676, %v3678
    %v4110 = vunpack.c.l.s4 1983009808
    %v4111 = vunpack.c.0.s8 %v4110
    %v4112 = vlaneseq
    %v4113 = vshrl.u32 %v4112, 7
    %v4114 = vsub.s32 %v4111, %v4113
    %v4115 = vrot.slane %v4107, %v4114
    %v4117 = vunpack.c.l.s4 1983009808
    %v4118 = vunpack.c.0.s8 %v4117
    %v4119 = vlaneseq
    %v4120 = vshrl.u32 %v4119, 7
    %v4121 = vsub.s32 %v4118, %v4120
    %v4122 = vrot.slane %v4108, %v4121
    %v4123 = vcombine.low %v3679, %v3681
    %v4124 = vcombine.high %v3679, %v3681
    %v4126 = vunpack.c.l.s4 1983009808
    %v4127 = vunpack.c.0.s8 %v4126
    %v4128 = vlaneseq
    %v4129 = vshrl.u32 %v4128, 7
    %v4130 = vsub.s32 %v4127, %v4129
    %v4131 = vrot.slane %v4123, %v4130
    %v4133 = vunpack.c.l.s4 1983009808
    %v4134 = vunpack.c.0.s8 %v4133
    %v4135 = vlaneseq
    %v4136 = vshrl.u32 %v4135, 7
    %v4137 = vsub.s32 %v4134, %v4136
    %v4138 = vrot.slane %v4124, %v4137
    %v4139 = vcombine.low %v3680, %v3682
    %v4140 = vcombine.high %v3680, %v3682
    %v4142 = vunpack.c.l.s4 1983009808
    %v4143 = vunpack.c.0.s8 %v4142
    %v4144 = vlaneseq
    %v4145 = vshrl.u32 %v4144, 7
    %v4146 = vsub.s32 %v4143, %v4145
    %v4147 = vrot.slane %v4139, %v4146
    %v4149 = vunpack.c.l.s4 1983009808
    %v4150 = vunpack.c.0.s8 %v4149
    %v4151 = vlaneseq
    %v4152 = vshrl.u32 %v4151, 7
    %v4153 = vsub.s32 %v4150, %v4152
    %v4154 = vrot.slane %v4140, %v4153
    %v4155 = vcombine.low %v4099, %v4115
    %v4156 = vcombine.high %v4099, %v4115
    %v4158 = vunpack.c.l.s4 1934713408
    %v4159 = vunpack.c.0.s8 %v4158
    %v4160 = vlaneseq
    %v4161 = vshrl.u32 %v4160, 7
    %v4162 = vsub.s32 %v4159, %v4161
    %v4163 = vrot.slane %v4155, %v4162
    %v4165 = vunpack.c.l.s4 1934713408
    %v4166 = vunpack.c.0.s8 %v4165
    %v4167 = vlaneseq
    %v4168 = vshrl.u32 %v4167, 7
    %v4169 = vsub.s32 %v4166, %v4168
    %v4170 = vrot.slane %v4156, %v4169
    %v4171 = vcombine.low %v4106, %v4122
    %v4172 = vcombine.high %v4106, %v4122
    %v4174 = vunpack.c.l.s4 1934713408
    %v4175 = vunpack.c.0.s8 %v4174
    %v4176 = vlaneseq
    %v4177 = vshrl.u32 %v4176, 7
    %v4178 = vsub.s32 %v4175, %v4177
    %v4179 = vrot.slane %v4171, %v4178
    %v4181 = vunpack.c.l.s4 1934713408
    %v4182 = vunpack.c.0.s8 %v4181
    %v4183 = vlaneseq
    %v4184 = vshrl.u32 %v4183, 7
    %v4185 = vsub.s32 %v4182, %v4184
    %v4186 = vrot.slane %v4172, %v4185
    %v4187 = vcombine.low %v4131, %v4147
    %v4188 = vcombine.high %v4131, %v4147
    %v4190 = vunpack.c.l.s4 1934713408
    %v4191 = vunpack.c.0.s8 %v4190
    %v4192 = vlaneseq
    %v4193 = vshrl.u32 %v4192, 7
    %v4194 = vsub.s32 %v4191, %v4193
    %v4195 = vrot.slane %v4187, %v4194
    %v4197 = vunpack.c.l.s4 1934713408
    %v4198 = vunpack.c.0.s8 %v4197
    %v4199 = vlaneseq
    %v4200 = vshrl.u32 %v4199, 7
    %v4201 = vsub.s32 %v4198, %v4200
    %v4202 = vrot.slane %v4188, %v4201
    %v4203 = vcombine.low %v4138, %v4154
    %v4204 = vcombine.high %v4138, %v4154
    %v4206 = vunpack.c.l.s4 1934713408
    %v4207 = vunpack.c.0.s8 %v4206
    %v4208 = vlaneseq
    %v4209 = vshrl.u32 %v4208, 7
    %v4210 = vsub.s32 %v4207, %v4209
    %v4211 = vrot.slane %v4203, %v4210
    %v4213 = vunpack.c.l.s4 1934713408
    %v4214 = vunpack.c.0.s8 %v4213
    %v4215 = vlaneseq
    %v4216 = vshrl.u32 %v4215, 7
    %v4217 = vsub.s32 %v4214, %v4216
    %v4218 = vrot.slane %v4204, %v4217
    %v4219 = vcombine.low %v4163, %v4195
    %v4220 = vcombine.high %v4163, %v4195
    %v4221 = vcombine.low %v4170, %v4202
    %v4222 = vcombine.high %v4170, %v4202
    %v4223 = vcombine.low %v4179, %v4211
    %v4224 = vcombine.high %v4179, %v4211
    %v4225 = vcombine.low %v4186, %v4218
    %v4226 = vcombine.high %v4186, %v4218
    %v4227 = vcombine.low %v3811, %v3813
    %v4228 = vcombine.high %v3811, %v3813
    %v4230 = vunpack.c.l.s4 1983009808
    %v4231 = vunpack.c.0.s8 %v4230
    %v4232 = vlaneseq
    %v4233 = vshrl.u32 %v4232, 7
    %v4234 = vsub.s32 %v4231, %v4233
    %v4235 = vrot.slane %v4227, %v4234
    %v4237 = vunpack.c.l.s4 1983009808
    %v4238 = vunpack.c.0.s8 %v4237
    %v4239 = vlaneseq
    %v4240 = vshrl.u32 %v4239, 7
    %v4241 = vsub.s32 %v4238, %v4240
    %v4242 = vrot.slane %v4228, %v4241
    %v4243 = vcombine.low %v3812, %v3814
    %v4244 = vcombine.high %v3812, %v3814
    %v4246 = vunpack.c.l.s4 1983009808
    %v4247 = vunpack.c.0.s8 %v4246
    %v4248 = vlaneseq
    %v4249 = vshrl.u32 %v4248, 7
    %v4250 = vsub.s32 %v4247, %v4249
    %v4251 = vrot.slane %v4243, %v4250
    %v4253 = vunpack.c.l.s4 1983009808
    %v4254 = vunpack.c.0.s8 %v4253
    %v4255 = vlaneseq
    %v4256 = vshrl.u32 %v4255, 7
    %v4257 = vsub.s32 %v4254, %v4256
    %v4258 = vrot.slane %v4244, %v4257
    %v4259 = vcombine.low %v3815, %v3817
    %v4260 = vcombine.high %v3815, %v3817
    %v4262 = vunpack.c.l.s4 1983009808
    %v4263 = vunpack.c.0.s8 %v4262
    %v4264 = vlaneseq
    %v4265 = vshrl.u32 %v4264, 7
    %v4266 = vsub.s32 %v4263, %v4265
    %v4267 = vrot.slane %v4259, %v4266
    %v4269 = vunpack.c.l.s4 1983009808
    %v4270 = vunpack.c.0.s8 %v4269
    %v4271 = vlaneseq
    %v4272 = vshrl.u32 %v4271, 7
    %v4273 = vsub.s32 %v4270, %v4272
    %v4274 = vrot.slane %v4260, %v4273
    %v4275 = vcombine.low %v3816, %v3818
    %v4276 = vcombine.high %v3816, %v3818
    %v4278 = vunpack.c.l.s4 1983009808
    %v4279 = vunpack.c.0.s8 %v4278
    %v4280 = vlaneseq
    %v4281 = vshrl.u32 %v4280, 7
    %v4282 = vsub.s32 %v4279, %v4281
    %v4283 = vrot.slane %v4275, %v4282
    %v4285 = vunpack.c.l.s4 1983009808
    %v4286 = vunpack.c.0.s8 %v4285
    %v4287 = vlaneseq
    %v4288 = vshrl.u32 %v4287, 7
    %v4289 = vsub.s32 %v4286, %v4288
    %v4290 = vrot.slane %v4276, %v4289
    %v4291 = vcombine.low %v4235, %v4251
    %v4292 = vcombine.high %v4235, %v4251
    %v4294 = vunpack.c.l.s4 1934713408
    %v4295 = vunpack.c.0.s8 %v4294
    %v4296 = vlaneseq
    %v4297 = vshrl.u32 %v4296, 7
    %v4298 = vsub.s32 %v4295, %v4297
    %v4299 = vrot.slane %v4291, %v4298
    %v4301 = vunpack.c.l.s4 1934713408
    %v4302 = vunpack.c.0.s8 %v4301
    %v4303 = vlaneseq
    %v4304 = vshrl.u32 %v4303, 7
    %v4305 = vsub.s32 %v4302, %v4304
    %v4306 = vrot.slane %v4292, %v4305
    %v4307 = vcombine.low %v4242, %v4258
    %v4308 = vcombine.high %v4242, %v4258
    %v4310 = vunpack.c.l.s4 1934713408
    %v4311 = vunpack.c.0.s8 %v4310
    %v4312 = vlaneseq
    %v4313 = vshrl.u32 %v4312, 7
    %v4314 = vsub.s32 %v4311, %v4313
    %v4315 = vrot.slane %v4307, %v4314
    %v4317 = vunpack.c.l.s4 1934713408
    %v4318 = vunpack.c.0.s8 %v4317
    %v4319 = vlaneseq
    %v4320 = vshrl.u32 %v4319, 7
    %v4321 = vsub.s32 %v4318, %v4320
    %v4322 = vrot.slane %v4308, %v4321
    %v4323 = vcombine.low %v4267, %v4283
    %v4324 = vcombine.high %v4267, %v4283
    %v4326 = vunpack.c.l.s4 1934713408
    %v4327 = vunpack.c.0.s8 %v4326
    %v4328 = vlaneseq
    %v4329 = vshrl.u32 %v4328, 7
    %v4330 = vsub.s32 %v4327, %v4329
    %v4331 = vrot.slane %v4323, %v4330
    %v4333 = vunpack.c.l.s4 1934713408
    %v4334 = vunpack.c.0.s8 %v4333
    %v4335 = vlaneseq
    %v4336 = vshrl.u32 %v4335, 7
    %v4337 = vsub.s32 %v4334, %v4336
    %v4338 = vrot.slane %v4324, %v4337
    %v4339 = vcombine.low %v4274, %v4290
    %v4340 = vcombine.high %v4274, %v4290
    %v4342 = vunpack.c.l.s4 1934713408
    %v4343 = vunpack.c.0.s8 %v4342
    %v4344 = vlaneseq
    %v4345 = vshrl.u32 %v4344, 7
    %v4346 = vsub.s32 %v4343, %v4345
    %v4347 = vrot.slane %v4339, %v4346
    %v4349 = vunpack.c.l.s4 1934713408
    %v4350 = vunpack.c.0.s8 %v4349
    %v4351 = vlaneseq
    %v4352 = vshrl.u32 %v4351, 7
    %v4353 = vsub.s32 %v4350, %v4352
    %v4354 = vrot.slane %v4340, %v4353
    %v4355 = vcombine.low %v4299, %v4331
    %v4356 = vcombine.high %v4299, %v4331
    %v4357 = vcombine.low %v4306, %v4338
    %v4358 = vcombine.high %v4306, %v4338
    %v4359 = vcombine.low %v4315, %v4347
    %v4360 = vcombine.high %v4315, %v4347
    %v4361 = vcombine.low %v4322, %v4354
    %v4362 = vcombine.high %v4322, %v4354
    %vm4363 = vcmask 31744
    %v4365 = vsel %vm4363, %v1459, 0
    %v4368 = vsel %vm4363, %v1595, 0
    %v4371 = vsel %vm4363, %v2703, 0
    %v4374 = vsel %vm4363, %v2839, 0
    %4376 = vmatprep.subr.mxu0 0.0
    %4377 = vmatpush1.xpose.msra.mxu0 0.0
    %4378 = vmatprep.subr.mxu0 0.0
    %4379 = vmatpush1.xpose.msra.mxu0 0.0
    %4380 = vmatprep.subr.mxu0 0.0
    %4381 = vmatpush1.xpose.msra.mxu0 0.0
    %4382 = vmatprep.subr.mxu0 0.0
    %4383 = vmatpush1.xpose.msra.mxu0 0.0
    %4384 = vmatprep.subr.mxu0 0.0
    %4385 = vmatpush1.xpose.msra.mxu0 0.0
    %4386 = vmatprep.subr.mxu0 0.0
    %4387 = vmatpush1.xpose.msra.mxu0 0.0
    %4388 = vmatprep.subr.mxu0 0.0
    %4389 = vmatpush1.xpose.msra.mxu0 0.0
    %4390 = vmatprep.subr.mxu0 0.0
    %4391 = vmatpush1.xpose.msra.mxu0 0.0
    %4392 = vmatprep.subr.mxu0 0.0
    %4393 = vmatpush1.xpose.msra.mxu0 0.0
    %4394 = vmatprep.subr.mxu0 0.0
    %4395 = vmatpush1.xpose.msra.mxu0 0.0
    %4396 = vmatprep.subr.mxu0 0.0
    %4397 = vmatpush1.xpose.msra.mxu0 0.0
    %4398 = vmatprep.subr.mxu0 0.0
    %4399 = vmatpush1.xpose.msra.mxu0 0.0
    %4400 = vmatprep.subr.mxu0 0.0
    %4401 = vmatpush1.xpose.msra.mxu0 0.0
    %4402 = vmatprep.subr.mxu0 0.0
    %4403 = vmatpush1.xpose.msra.mxu0 0.0
    %4404 = vmatprep.subr.mxu0 0.0
    %4405 = vmatpush1.xpose.msra.mxu0 %v4374
    %4406 = vmatprep.subr.mxu0 0.0
    %4407 = vmatpush1.xpose.msra.mxu0 %v4371
    %4408 = vmatprep.subr.mxu0 0.0
    %4409 = vmatpush2.xpose.msra.mxu0 0.0
    %4410 = vmatprep.subr.mxu0 0.0
    %4411 = vmatpush2.xpose.msra.mxu0 0.0
    %4412 = vmatprep.subr.mxu0 0.0
    %4413 = vmatpush2.xpose.msra.mxu0 0.0
    %4414 = vmatprep.subr.mxu0 0.0
    %4415 = vmatpush2.xpose.msra.mxu0 0.0
    %4416 = vmatprep.subr.mxu0 0.0
    %4417 = vmatpush2.xpose.msra.mxu0 0.0
    %4418 = vmatprep.subr.mxu0 0.0
    %4419 = vmatpush2.xpose.msra.mxu0 0.0
    %4420 = vmatprep.subr.mxu0 0.0
    %4421 = vmatpush2.xpose.msra.mxu0 0.0
    %4422 = vmatprep.subr.mxu0 0.0
    %4423 = vmatpush2.xpose.msra.mxu0 0.0
    %4424 = vmatprep.subr.mxu0 0.0
    %4425 = vmatpush2.xpose.msra.mxu0 0.0
    %4426 = vmatprep.subr.mxu0 0.0
    %4427 = vmatpush2.xpose.msra.mxu0 0.0
    %4428 = vmatprep.subr.mxu0 0.0
    %4429 = vmatpush2.xpose.msra.mxu0 0.0
    %4430 = vmatprep.subr.mxu0 0.0
    %4431 = vmatpush2.xpose.msra.mxu0 0.0
    %4432 = vmatprep.subr.mxu0 0.0
    %4433 = vmatpush2.xpose.msra.mxu0 0.0
    %4434 = vmatprep.subr.mxu0 0.0
    %4435 = vmatpush2.xpose.msra.mxu0 0.0
    %4436 = vmatprep.subr.mxu0 0.0
    %4437 = vmatpush2.xpose.msra.mxu0 0.0
    %4438 = vmatprep.subr.mxu0 0.0
    %4439 = vmatpush2.xpose.msra.mxu0 0.0
    %4440 = vmatprep.mubr.f32.mxu0 0.0
    %4441 = vmatmul.mubr.f32.gmra.mxu0 %v4365
    %v4442 = vpop.f32.mrf.mxu0
    %v4443 = vadd.f32 0.0, %v4442
    %v4444 = vpop.f32.mrf.mxu0
    %4445 = vmatprep.mubr.f32.mxu0 0.0
    %4446 = vmatmul.mubr.f32.gmra.mxu0 %v4368
    %v4447 = vpop.f32.mrf.mxu0
    %v4448 = vadd.f32 0.0, %v4447
    %v4449 = vpop.f32.mrf.mxu0
    %4450 = vdwg.mxu0
    %v4452 = vsel %vm4363, %v1460, 0
    %v4455 = vsel %vm4363, %v1596, 0
    %v4458 = vsel %vm4363, %v2704, 0
    %v4461 = vsel %vm4363, %v2840, 0
    %4463 = vmatprep.subr.mxu0 0.0
    %4464 = vmatpush1.xpose.msra.mxu0 0.0
    %4465 = vmatprep.subr.mxu0 0.0
    %4466 = vmatpush1.xpose.msra.mxu0 0.0
    %4467 = vmatprep.subr.mxu0 0.0
    %4468 = vmatpush1.xpose.msra.mxu0 0.0
    %4469 = vmatprep.subr.mxu0 0.0
    %4470 = vmatpush1.xpose.msra.mxu0 0.0
    %4471 = vmatprep.subr.mxu0 0.0
    %4472 = vmatpush1.xpose.msra.mxu0 0.0
    %4473 = vmatprep.subr.mxu0 0.0
    %4474 = vmatpush1.xpose.msra.mxu0 0.0
    %4475 = vmatprep.subr.mxu0 0.0
    %4476 = vmatpush1.xpose.msra.mxu0 0.0
    %4477 = vmatprep.subr.mxu0 0.0
    %4478 = vmatpush1.xpose.msra.mxu0 0.0
    %4479 = vmatprep.subr.mxu0 0.0
    %4480 = vmatpush1.xpose.msra.mxu0 0.0
    %4481 = vmatprep.subr.mxu0 0.0
    %4482 = vmatpush1.xpose.msra.mxu0 0.0
    %4483 = vmatprep.subr.mxu0 0.0
    %4484 = vmatpush1.xpose.msra.mxu0 0.0
    %4485 = vmatprep.subr.mxu0 0.0
    %4486 = vmatpush1.xpose.msra.mxu0 0.0
    %4487 = vmatprep.subr.mxu0 0.0
    %4488 = vmatpush1.xpose.msra.mxu0 0.0
    %4489 = vmatprep.subr.mxu0 0.0
    %4490 = vmatpush1.xpose.msra.mxu0 0.0
    %4491 = vmatprep.subr.mxu0 0.0
    %4492 = vmatpush1.xpose.msra.mxu0 %v4461
    %4493 = vmatprep.subr.mxu0 0.0
    %4494 = vmatpush1.xpose.msra.mxu0 %v4458
    %4495 = vmatprep.subr.mxu0 0.0
    %4496 = vmatpush2.xpose.msra.mxu0 0.0
    %4497 = vmatprep.subr.mxu0 0.0
    %4498 = vmatpush2.xpose.msra.mxu0 0.0
    %4499 = vmatprep.subr.mxu0 0.0
    %4500 = vmatpush2.xpose.msra.mxu0 0.0
    %4501 = vmatprep.subr.mxu0 0.0
    %4502 = vmatpush2.xpose.msra.mxu0 0.0
    %4503 = vmatprep.subr.mxu0 0.0
    %4504 = vmatpush2.xpose.msra.mxu0 0.0
    %4505 = vmatprep.subr.mxu0 0.0
    %4506 = vmatpush2.xpose.msra.mxu0 0.0
    %4507 = vmatprep.subr.mxu0 0.0
    %4508 = vmatpush2.xpose.msra.mxu0 0.0
    %4509 = vmatprep.subr.mxu0 0.0
    %4510 = vmatpush2.xpose.msra.mxu0 0.0
    %4511 = vmatprep.subr.mxu0 0.0
    %4512 = vmatpush2.xpose.msra.mxu0 0.0
    %4513 = vmatprep.subr.mxu0 0.0
    %4514 = vmatpush2.xpose.msra.mxu0 0.0
    %4515 = vmatprep.subr.mxu0 0.0
    %4516 = vmatpush2.xpose.msra.mxu0 0.0
    %4517 = vmatprep.subr.mxu0 0.0
    %4518 = vmatpush2.xpose.msra.mxu0 0.0
    %4519 = vmatprep.subr.mxu0 0.0
    %4520 = vmatpush2.xpose.msra.mxu0 0.0
    %4521 = vmatprep.subr.mxu0 0.0
    %4522 = vmatpush2.xpose.msra.mxu0 0.0
    %4523 = vmatprep.subr.mxu0 0.0
    %4524 = vmatpush2.xpose.msra.mxu0 0.0
    %4525 = vmatprep.subr.mxu0 0.0
    %4526 = vmatpush2.xpose.msra.mxu0 0.0
    %4527 = vmatprep.mubr.f32.mxu0 0.0
    %4528 = vmatmul.mubr.f32.gmra.mxu0 %v4452
    %v4529 = vpop.f32.mrf.mxu0
    %v4530 = vadd.f32 0.0, %v4529
    %v4531 = vpop.f32.mrf.mxu0
    %4532 = vmatprep.mubr.f32.mxu0 0.0
    %4533 = vmatmul.mubr.f32.gmra.mxu0 %v4455
    %v4534 = vpop.f32.mrf.mxu0
    %v4535 = vadd.f32 0.0, %v4534
    %v4536 = vpop.f32.mrf.mxu0
    %4537 = vdwg.mxu0
    %v4539 = vsel %vm4363, %v1461, 0
    %v4542 = vsel %vm4363, %v1597, 0
    %v4545 = vsel %vm4363, %v2705, 0
    %v4548 = vsel %vm4363, %v2841, 0
    %4550 = vmatprep.subr.mxu0 0.0
    %4551 = vmatpush1.xpose.msra.mxu0 0.0
    %4552 = vmatprep.subr.mxu0 0.0
    %4553 = vmatpush1.xpose.msra.mxu0 0.0
    %4554 = vmatprep.subr.mxu0 0.0
    %4555 = vmatpush1.xpose.msra.mxu0 0.0
    %4556 = vmatprep.subr.mxu0 0.0
    %4557 = vmatpush1.xpose.msra.mxu0 0.0
    %4558 = vmatprep.subr.mxu0 0.0
    %4559 = vmatpush1.xpose.msra.mxu0 0.0
    %4560 = vmatprep.subr.mxu0 0.0
    %4561 = vmatpush1.xpose.msra.mxu0 0.0
    %4562 = vmatprep.subr.mxu0 0.0
    %4563 = vmatpush1.xpose.msra.mxu0 0.0
    %4564 = vmatprep.subr.mxu0 0.0
    %4565 = vmatpush1.xpose.msra.mxu0 0.0
    %4566 = vmatprep.subr.mxu0 0.0
    %4567 = vmatpush1.xpose.msra.mxu0 0.0
    %4568 = vmatprep.subr.mxu0 0.0
    %4569 = vmatpush1.xpose.msra.mxu0 0.0
    %4570 = vmatprep.subr.mxu0 0.0
    %4571 = vmatpush1.xpose.msra.mxu0 0.0
    %4572 = vmatprep.subr.mxu0 0.0
    %4573 = vmatpush1.xpose.msra.mxu0 0.0
    %4574 = vmatprep.subr.mxu0 0.0
    %4575 = vmatpush1.xpose.msra.mxu0 0.0
    %4576 = vmatprep.subr.mxu0 0.0
    %4577 = vmatpush1.xpose.msra.mxu0 0.0
    %4578 = vmatprep.subr.mxu0 0.0
    %4579 = vmatpush1.xpose.msra.mxu0 %v4548
    %4580 = vmatprep.subr.mxu0 0.0
    %4581 = vmatpush1.xpose.msra.mxu0 %v4545
    %4582 = vmatprep.subr.mxu0 0.0
    %4583 = vmatpush2.xpose.msra.mxu0 0.0
    %4584 = vmatprep.subr.mxu0 0.0
    %4585 = vmatpush2.xpose.msra.mxu0 0.0
    %4586 = vmatprep.subr.mxu0 0.0
    %4587 = vmatpush2.xpose.msra.mxu0 0.0
    %4588 = vmatprep.subr.mxu0 0.0
    %4589 = vmatpush2.xpose.msra.mxu0 0.0
    %4590 = vmatprep.subr.mxu0 0.0
    %4591 = vmatpush2.xpose.msra.mxu0 0.0
    %4592 = vmatprep.subr.mxu0 0.0
    %4593 = vmatpush2.xpose.msra.mxu0 0.0
    %4594 = vmatprep.subr.mxu0 0.0
    %4595 = vmatpush2.xpose.msra.mxu0 0.0
    %4596 = vmatprep.subr.mxu0 0.0
    %4597 = vmatpush2.xpose.msra.mxu0 0.0
    %4598 = vmatprep.subr.mxu0 0.0
    %4599 = vmatpush2.xpose.msra.mxu0 0.0
    %4600 = vmatprep.subr.mxu0 0.0
    %4601 = vmatpush2.xpose.msra.mxu0 0.0
    %4602 = vmatprep.subr.mxu0 0.0
    %4603 = vmatpush2.xpose.msra.mxu0 0.0
    %4604 = vmatprep.subr.mxu0 0.0
    %4605 = vmatpush2.xpose.msra.mxu0 0.0
    %4606 = vmatprep.subr.mxu0 0.0
    %4607 = vmatpush2.xpose.msra.mxu0 0.0
    %4608 = vmatprep.subr.mxu0 0.0
    %4609 = vmatpush2.xpose.msra.mxu0 0.0
    %4610 = vmatprep.subr.mxu0 0.0
    %4611 = vmatpush2.xpose.msra.mxu0 0.0
    %4612 = vmatprep.subr.mxu0 0.0
    %4613 = vmatpush2.xpose.msra.mxu0 0.0
    %4614 = vmatprep.mubr.f32.mxu0 0.0
    %4615 = vmatmul.mubr.f32.gmra.mxu0 %v4539
    %v4616 = vpop.f32.mrf.mxu0
    %v4617 = vadd.f32 0.0, %v4616
    %v4618 = vpop.f32.mrf.mxu0
    %4619 = vmatprep.mubr.f32.mxu0 0.0
    %4620 = vmatmul.mubr.f32.gmra.mxu0 %v4542
    %v4621 = vpop.f32.mrf.mxu0
    %v4622 = vadd.f32 0.0, %v4621
    %v4623 = vpop.f32.mrf.mxu0
    %4624 = vdwg.mxu0
    %v4626 = vsel %vm4363, %v1462, 0
    %v4629 = vsel %vm4363, %v1598, 0
    %v4632 = vsel %vm4363, %v2706, 0
    %v4635 = vsel %vm4363, %v2842, 0
    %4637 = vmatprep.subr.mxu0 0.0
    %4638 = vmatpush1.xpose.msra.mxu0 0.0
    %4639 = vmatprep.subr.mxu0 0.0
    %4640 = vmatpush1.xpose.msra.mxu0 0.0
    %4641 = vmatprep.subr.mxu0 0.0
    %4642 = vmatpush1.xpose.msra.mxu0 0.0
    %4643 = vmatprep.subr.mxu0 0.0
    %4644 = vmatpush1.xpose.msra.mxu0 0.0
    %4645 = vmatprep.subr.mxu0 0.0
    %4646 = vmatpush1.xpose.msra.mxu0 0.0
    %4647 = vmatprep.subr.mxu0 0.0
    %4648 = vmatpush1.xpose.msra.mxu0 0.0
    %4649 = vmatprep.subr.mxu0 0.0
    %4650 = vmatpush1.xpose.msra.mxu0 0.0
    %4651 = vmatprep.subr.mxu0 0.0
    %4652 = vmatpush1.xpose.msra.mxu0 0.0
    %4653 = vmatprep.subr.mxu0 0.0
    %4654 = vmatpush1.xpose.msra.mxu0 0.0
    %4655 = vmatprep.subr.mxu0 0.0
    %4656 = vmatpush1.xpose.msra.mxu0 0.0
    %4657 = vmatprep.subr.mxu0 0.0
    %4658 = vmatpush1.xpose.msra.mxu0 0.0
    %4659 = vmatprep.subr.mxu0 0.0
    %4660 = vmatpush1.xpose.msra.mxu0 0.0
    %4661 = vmatprep.subr.mxu0 0.0
    %4662 = vmatpush1.xpose.msra.mxu0 0.0
    %4663 = vmatprep.subr.mxu0 0.0
    %4664 = vmatpush1.xpose.msra.mxu0 0.0
    %4665 = vmatprep.subr.mxu0 0.0
    %4666 = vmatpush1.xpose.msra.mxu0 %v4635
    %4667 = vmatprep.subr.mxu0 0.0
    %4668 = vmatpush1.xpose.msra.mxu0 %v4632
    %4669 = vmatprep.subr.mxu0 0.0
    %4670 = vmatpush2.xpose.msra.mxu0 0.0
    %4671 = vmatprep.subr.mxu0 0.0
    %4672 = vmatpush2.xpose.msra.mxu0 0.0
    %4673 = vmatprep.subr.mxu0 0.0
    %4674 = vmatpush2.xpose.msra.mxu0 0.0
    %4675 = vmatprep.subr.mxu0 0.0
    %4676 = vmatpush2.xpose.msra.mxu0 0.0
    %4677 = vmatprep.subr.mxu0 0.0
    %4678 = vmatpush2.xpose.msra.mxu0 0.0
    %4679 = vmatprep.subr.mxu0 0.0
    %4680 = vmatpush2.xpose.msra.mxu0 0.0
    %4681 = vmatprep.subr.mxu0 0.0
    %4682 = vmatpush2.xpose.msra.mxu0 0.0
    %4683 = vmatprep.subr.mxu0 0.0
    %4684 = vmatpush2.xpose.msra.mxu0 0.0
    %4685 = vmatprep.subr.mxu0 0.0
    %4686 = vmatpush2.xpose.msra.mxu0 0.0
    %4687 = vmatprep.subr.mxu0 0.0
    %4688 = vmatpush2.xpose.msra.mxu0 0.0
    %4689 = vmatprep.subr.mxu0 0.0
    %4690 = vmatpush2.xpose.msra.mxu0 0.0
    %4691 = vmatprep.subr.mxu0 0.0
    %4692 = vmatpush2.xpose.msra.mxu0 0.0
    %4693 = vmatprep.subr.mxu0 0.0
    %4694 = vmatpush2.xpose.msra.mxu0 0.0
    %4695 = vmatprep.subr.mxu0 0.0
    %4696 = vmatpush2.xpose.msra.mxu0 0.0
    %4697 = vmatprep.subr.mxu0 0.0
    %4698 = vmatpush2.xpose.msra.mxu0 0.0
    %4699 = vmatprep.subr.mxu0 0.0
    %4700 = vmatpush2.xpose.msra.mxu0 0.0
    %4701 = vmatprep.mubr.f32.mxu0 0.0
    %4702 = vmatmul.mubr.f32.gmra.mxu0 %v4626
    %v4703 = vpop.f32.mrf.mxu0
    %v4704 = vadd.f32 0.0, %v4703
    %v4705 = vpop.f32.mrf.mxu0
    %4706 = vmatprep.mubr.f32.mxu0 0.0
    %4707 = vmatmul.mubr.f32.gmra.mxu0 %v4629
    %v4708 = vpop.f32.mrf.mxu0
    %v4709 = vadd.f32 0.0, %v4708
    %v4710 = vpop.f32.mrf.mxu0
    %4711 = vdwg.mxu0
    %v4713 = vsel %vm4363, %v1463, 0
    %v4716 = vsel %vm4363, %v1599, 0
    %v4719 = vsel %vm4363, %v2707, 0
    %v4722 = vsel %vm4363, %v2843, 0
    %4724 = vmatprep.subr.mxu0 0.0
    %4725 = vmatpush1.xpose.msra.mxu0 0.0
    %4726 = vmatprep.subr.mxu0 0.0
    %4727 = vmatpush1.xpose.msra.mxu0 0.0
    %4728 = vmatprep.subr.mxu0 0.0
    %4729 = vmatpush1.xpose.msra.mxu0 0.0
    %4730 = vmatprep.subr.mxu0 0.0
    %4731 = vmatpush1.xpose.msra.mxu0 0.0
    %4732 = vmatprep.subr.mxu0 0.0
    %4733 = vmatpush1.xpose.msra.mxu0 0.0
    %4734 = vmatprep.subr.mxu0 0.0
    %4735 = vmatpush1.xpose.msra.mxu0 0.0
    %4736 = vmatprep.subr.mxu0 0.0
    %4737 = vmatpush1.xpose.msra.mxu0 0.0
    %4738 = vmatprep.subr.mxu0 0.0
    %4739 = vmatpush1.xpose.msra.mxu0 0.0
    %4740 = vmatprep.subr.mxu0 0.0
    %4741 = vmatpush1.xpose.msra.mxu0 0.0
    %4742 = vmatprep.subr.mxu0 0.0
    %4743 = vmatpush1.xpose.msra.mxu0 0.0
    %4744 = vmatprep.subr.mxu0 0.0
    %4745 = vmatpush1.xpose.msra.mxu0 0.0
    %4746 = vmatprep.subr.mxu0 0.0
    %4747 = vmatpush1.xpose.msra.mxu0 0.0
    %4748 = vmatprep.subr.mxu0 0.0
    %4749 = vmatpush1.xpose.msra.mxu0 0.0
    %4750 = vmatprep.subr.mxu0 0.0
    %4751 = vmatpush1.xpose.msra.mxu0 0.0
    %4752 = vmatprep.subr.mxu0 0.0
    %4753 = vmatpush1.xpose.msra.mxu0 %v4722
    %4754 = vmatprep.subr.mxu0 0.0
    %4755 = vmatpush1.xpose.msra.mxu0 %v4719
    %4756 = vmatprep.subr.mxu0 0.0
    %4757 = vmatpush2.xpose.msra.mxu0 0.0
    %4758 = vmatprep.subr.mxu0 0.0
    %4759 = vmatpush2.xpose.msra.mxu0 0.0
    %4760 = vmatprep.subr.mxu0 0.0
    %4761 = vmatpush2.xpose.msra.mxu0 0.0
    %4762 = vmatprep.subr.mxu0 0.0
    %4763 = vmatpush2.xpose.msra.mxu0 0.0
    %4764 = vmatprep.subr.mxu0 0.0
    %4765 = vmatpush2.xpose.msra.mxu0 0.0
    %4766 = vmatprep.subr.mxu0 0.0
    %4767 = vmatpush2.xpose.msra.mxu0 0.0
    %4768 = vmatprep.subr.mxu0 0.0
    %4769 = vmatpush2.xpose.msra.mxu0 0.0
    %4770 = vmatprep.subr.mxu0 0.0
    %4771 = vmatpush2.xpose.msra.mxu0 0.0
    %4772 = vmatprep.subr.mxu0 0.0
    %4773 = vmatpush2.xpose.msra.mxu0 0.0
    %4774 = vmatprep.subr.mxu0 0.0
    %4775 = vmatpush2.xpose.msra.mxu0 0.0
    %4776 = vmatprep.subr.mxu0 0.0
    %4777 = vmatpush2.xpose.msra.mxu0 0.0
    %4778 = vmatprep.subr.mxu0 0.0
    %4779 = vmatpush2.xpose.msra.mxu0 0.0
    %4780 = vmatprep.subr.mxu0 0.0
    %4781 = vmatpush2.xpose.msra.mxu0 0.0
    %4782 = vmatprep.subr.mxu0 0.0
    %4783 = vmatpush2.xpose.msra.mxu0 0.0
    %4784 = vmatprep.subr.mxu0 0.0
    %4785 = vmatpush2.xpose.msra.mxu0 0.0
    %4786 = vmatprep.subr.mxu0 0.0
    %4787 = vmatpush2.xpose.msra.mxu0 0.0
    %4788 = vmatprep.mubr.f32.mxu0 0.0
    %4789 = vmatmul.mubr.f32.gmra.mxu0 %v4713
    %v4790 = vpop.f32.mrf.mxu0
    %v4791 = vadd.f32 0.0, %v4790
    %v4792 = vpop.f32.mrf.mxu0
    %4793 = vmatprep.mubr.f32.mxu0 0.0
    %4794 = vmatmul.mubr.f32.gmra.mxu0 %v4716
    %v4795 = vpop.f32.mrf.mxu0
    %v4796 = vadd.f32 0.0, %v4795
    %v4797 = vpop.f32.mrf.mxu0
    %4798 = vdwg.mxu0
    %v4800 = vsel %vm4363, %v1464, 0
    %v4803 = vsel %vm4363, %v1600, 0
    %v4806 = vsel %vm4363, %v2708, 0
    %v4809 = vsel %vm4363, %v2844, 0
    %4811 = vmatprep.subr.mxu0 0.0
    %4812 = vmatpush1.xpose.msra.mxu0 0.0
    %4813 = vmatprep.subr.mxu0 0.0
    %4814 = vmatpush1.xpose.msra.mxu0 0.0
    %4815 = vmatprep.subr.mxu0 0.0
    %4816 = vmatpush1.xpose.msra.mxu0 0.0
    %4817 = vmatprep.subr.mxu0 0.0
    %4818 = vmatpush1.xpose.msra.mxu0 0.0
    %4819 = vmatprep.subr.mxu0 0.0
    %4820 = vmatpush1.xpose.msra.mxu0 0.0
    %4821 = vmatprep.subr.mxu0 0.0
    %4822 = vmatpush1.xpose.msra.mxu0 0.0
    %4823 = vmatprep.subr.mxu0 0.0
    %4824 = vmatpush1.xpose.msra.mxu0 0.0
    %4825 = vmatprep.subr.mxu0 0.0
    %4826 = vmatpush1.xpose.msra.mxu0 0.0
    %4827 = vmatprep.subr.mxu0 0.0
    %4828 = vmatpush1.xpose.msra.mxu0 0.0
    %4829 = vmatprep.subr.mxu0 0.0
    %4830 = vmatpush1.xpose.msra.mxu0 0.0
    %4831 = vmatprep.subr.mxu0 0.0
    %4832 = vmatpush1.xpose.msra.mxu0 0.0
    %4833 = vmatprep.subr.mxu0 0.0
    %4834 = vmatpush1.xpose.msra.mxu0 0.0
    %4835 = vmatprep.subr.mxu0 0.0
    %4836 = vmatpush1.xpose.msra.mxu0 0.0
    %4837 = vmatprep.subr.mxu0 0.0
    %4838 = vmatpush1.xpose.msra.mxu0 0.0
    %4839 = vmatprep.subr.mxu0 0.0
    %4840 = vmatpush1.xpose.msra.mxu0 %v4809
    %4841 = vmatprep.subr.mxu0 0.0
    %4842 = vmatpush1.xpose.msra.mxu0 %v4806
    %4843 = vmatprep.subr.mxu0 0.0
    %4844 = vmatpush2.xpose.msra.mxu0 0.0
    %4845 = vmatprep.subr.mxu0 0.0
    %4846 = vmatpush2.xpose.msra.mxu0 0.0
    %4847 = vmatprep.subr.mxu0 0.0
    %4848 = vmatpush2.xpose.msra.mxu0 0.0
    %4849 = vmatprep.subr.mxu0 0.0
    %4850 = vmatpush2.xpose.msra.mxu0 0.0
    %4851 = vmatprep.subr.mxu0 0.0
    %4852 = vmatpush2.xpose.msra.mxu0 0.0
    %4853 = vmatprep.subr.mxu0 0.0
    %4854 = vmatpush2.xpose.msra.mxu0 0.0
    %4855 = vmatprep.subr.mxu0 0.0
    %4856 = vmatpush2.xpose.msra.mxu0 0.0
    %4857 = vmatprep.subr.mxu0 0.0
    %4858 = vmatpush2.xpose.msra.mxu0 0.0
    %4859 = vmatprep.subr.mxu0 0.0
    %4860 = vmatpush2.xpose.msra.mxu0 0.0
    %4861 = vmatprep.subr.mxu0 0.0
    %4862 = vmatpush2.xpose.msra.mxu0 0.0
    %4863 = vmatprep.subr.mxu0 0.0
    %4864 = vmatpush2.xpose.msra.mxu0 0.0
    %4865 = vmatprep.subr.mxu0 0.0
    %4866 = vmatpush2.xpose.msra.mxu0 0.0
    %4867 = vmatprep.subr.mxu0 0.0
    %4868 = vmatpush2.xpose.msra.mxu0 0.0
    %4869 = vmatprep.subr.mxu0 0.0
    %4870 = vmatpush2.xpose.msra.mxu0 0.0
    %4871 = vmatprep.subr.mxu0 0.0
    %4872 = vmatpush2.xpose.msra.mxu0 0.0
    %4873 = vmatprep.subr.mxu0 0.0
    %4874 = vmatpush2.xpose.msra.mxu0 0.0
    %4875 = vmatprep.mubr.f32.mxu0 0.0
    %4876 = vmatmul.mubr.f32.gmra.mxu0 %v4800
    %v4877 = vpop.f32.mrf.mxu0
    %v4878 = vadd.f32 0.0, %v4877
    %v4879 = vpop.f32.mrf.mxu0
    %4880 = vmatprep.mubr.f32.mxu0 0.0
    %4881 = vmatmul.mubr.f32.gmra.mxu0 %v4803
    %v4882 = vpop.f32.mrf.mxu0
    %v4883 = vadd.f32 0.0, %v4882
    %v4884 = vpop.f32.mrf.mxu0
    %4885 = vdwg.mxu0
    %v4887 = vsel %vm4363, %v1465, 0
    %v4890 = vsel %vm4363, %v1601, 0
    %v4893 = vsel %vm4363, %v2709, 0
    %v4896 = vsel %vm4363, %v2845, 0
    %4898 = vmatprep.subr.mxu0 0.0
    %4899 = vmatpush1.xpose.msra.mxu0 0.0
    %4900 = vmatprep.subr.mxu0 0.0
    %4901 = vmatpush1.xpose.msra.mxu0 0.0
    %4902 = vmatprep.subr.mxu0 0.0
    %4903 = vmatpush1.xpose.msra.mxu0 0.0
    %4904 = vmatprep.subr.mxu0 0.0
    %4905 = vmatpush1.xpose.msra.mxu0 0.0
    %4906 = vmatprep.subr.mxu0 0.0
    %4907 = vmatpush1.xpose.msra.mxu0 0.0
    %4908 = vmatprep.subr.mxu0 0.0
    %4909 = vmatpush1.xpose.msra.mxu0 0.0
    %4910 = vmatprep.subr.mxu0 0.0
    %4911 = vmatpush1.xpose.msra.mxu0 0.0
    %4912 = vmatprep.subr.mxu0 0.0
    %4913 = vmatpush1.xpose.msra.mxu0 0.0
    %4914 = vmatprep.subr.mxu0 0.0
    %4915 = vmatpush1.xpose.msra.mxu0 0.0
    %4916 = vmatprep.subr.mxu0 0.0
    %4917 = vmatpush1.xpose.msra.mxu0 0.0
    %4918 = vmatprep.subr.mxu0 0.0
    %4919 = vmatpush1.xpose.msra.mxu0 0.0
    %4920 = vmatprep.subr.mxu0 0.0
    %4921 = vmatpush1.xpose.msra.mxu0 0.0
    %4922 = vmatprep.subr.mxu0 0.0
    %4923 = vmatpush1.xpose.msra.mxu0 0.0
    %4924 = vmatprep.subr.mxu0 0.0
    %4925 = vmatpush1.xpose.msra.mxu0 0.0
    %4926 = vmatprep.subr.mxu0 0.0
    %4927 = vmatpush1.xpose.msra.mxu0 %v4896
    %4928 = vmatprep.subr.mxu0 0.0
    %4929 = vmatpush1.xpose.msra.mxu0 %v4893
    %4930 = vmatprep.subr.mxu0 0.0
    %4931 = vmatpush2.xpose.msra.mxu0 0.0
    %4932 = vmatprep.subr.mxu0 0.0
    %4933 = vmatpush2.xpose.msra.mxu0 0.0
    %4934 = vmatprep.subr.mxu0 0.0
    %4935 = vmatpush2.xpose.msra.mxu0 0.0
    %4936 = vmatprep.subr.mxu0 0.0
    %4937 = vmatpush2.xpose.msra.mxu0 0.0
    %4938 = vmatprep.subr.mxu0 0.0
    %4939 = vmatpush2.xpose.msra.mxu0 0.0
    %4940 = vmatprep.subr.mxu0 0.0
    %4941 = vmatpush2.xpose.msra.mxu0 0.0
    %4942 = vmatprep.subr.mxu0 0.0
    %4943 = vmatpush2.xpose.msra.mxu0 0.0
    %4944 = vmatprep.subr.mxu0 0.0
    %4945 = vmatpush2.xpose.msra.mxu0 0.0
    %4946 = vmatprep.subr.mxu0 0.0
    %4947 = vmatpush2.xpose.msra.mxu0 0.0
    %4948 = vmatprep.subr.mxu0 0.0
    %4949 = vmatpush2.xpose.msra.mxu0 0.0
    %4950 = vmatprep.subr.mxu0 0.0
    %4951 = vmatpush2.xpose.msra.mxu0 0.0
    %4952 = vmatprep.subr.mxu0 0.0
    %4953 = vmatpush2.xpose.msra.mxu0 0.0
    %4954 = vmatprep.subr.mxu0 0.0
    %4955 = vmatpush2.xpose.msra.mxu0 0.0
    %4956 = vmatprep.subr.mxu0 0.0
    %4957 = vmatpush2.xpose.msra.mxu0 0.0
    %4958 = vmatprep.subr.mxu0 0.0
    %4959 = vmatpush2.xpose.msra.mxu0 0.0
    %4960 = vmatprep.subr.mxu0 0.0
    %4961 = vmatpush2.xpose.msra.mxu0 0.0
    %4962 = vmatprep.mubr.f32.mxu0 0.0
    %4963 = vmatmul.mubr.f32.gmra.mxu0 %v4887
    %v4964 = vpop.f32.mrf.mxu0
    %v4965 = vadd.f32 0.0, %v4964
    %v4966 = vpop.f32.mrf.mxu0
    %4967 = vmatprep.mubr.f32.mxu0 0.0
    %4968 = vmatmul.mubr.f32.gmra.mxu0 %v4890
    %v4969 = vpop.f32.mrf.mxu0
    %v4970 = vadd.f32 0.0, %v4969
    %v4971 = vpop.f32.mrf.mxu0
    %4972 = vdwg.mxu0
    %v4974 = vsel %vm4363, %v1466, 0
    %v4977 = vsel %vm4363, %v1602, 0
    %v4980 = vsel %vm4363, %v2710, 0
    %v4983 = vsel %vm4363, %v2846, 0
    %4985 = vmatprep.subr.mxu0 0.0
    %4986 = vmatpush1.xpose.msra.mxu0 0.0
    %4987 = vmatprep.subr.mxu0 0.0
    %4988 = vmatpush1.xpose.msra.mxu0 0.0
    %4989 = vmatprep.subr.mxu0 0.0
    %4990 = vmatpush1.xpose.msra.mxu0 0.0
    %4991 = vmatprep.subr.mxu0 0.0
    %4992 = vmatpush1.xpose.msra.mxu0 0.0
    %4993 = vmatprep.subr.mxu0 0.0
    %4994 = vmatpush1.xpose.msra.mxu0 0.0
    %4995 = vmatprep.subr.mxu0 0.0
    %4996 = vmatpush1.xpose.msra.mxu0 0.0
    %4997 = vmatprep.subr.mxu0 0.0
    %4998 = vmatpush1.xpose.msra.mxu0 0.0
    %4999 = vmatprep.subr.mxu0 0.0
    %5000 = vmatpush1.xpose.msra.mxu0 0.0
    %5001 = vmatprep.subr.mxu0 0.0
    %5002 = vmatpush1.xpose.msra.mxu0 0.0
    %5003 = vmatprep.subr.mxu0 0.0
    %5004 = vmatpush1.xpose.msra.mxu0 0.0
    %5005 = vmatprep.subr.mxu0 0.0
    %5006 = vmatpush1.xpose.msra.mxu0 0.0
    %5007 = vmatprep.subr.mxu0 0.0
    %5008 = vmatpush1.xpose.msra.mxu0 0.0
    %5009 = vmatprep.subr.mxu0 0.0
    %5010 = vmatpush1.xpose.msra.mxu0 0.0
    %5011 = vmatprep.subr.mxu0 0.0
    %5012 = vmatpush1.xpose.msra.mxu0 0.0
    %5013 = vmatprep.subr.mxu0 0.0
    %5014 = vmatpush1.xpose.msra.mxu0 %v4983
    %5015 = vmatprep.subr.mxu0 0.0
    %5016 = vmatpush1.xpose.msra.mxu0 %v4980
    %5017 = vmatprep.subr.mxu0 0.0
    %5018 = vmatpush2.xpose.msra.mxu0 0.0
    %5019 = vmatprep.subr.mxu0 0.0
    %5020 = vmatpush2.xpose.msra.mxu0 0.0
    %5021 = vmatprep.subr.mxu0 0.0
    %5022 = vmatpush2.xpose.msra.mxu0 0.0
    %5023 = vmatprep.subr.mxu0 0.0
    %5024 = vmatpush2.xpose.msra.mxu0 0.0
    %5025 = vmatprep.subr.mxu0 0.0
    %5026 = vmatpush2.xpose.msra.mxu0 0.0
    %5027 = vmatprep.subr.mxu0 0.0
    %5028 = vmatpush2.xpose.msra.mxu0 0.0
    %5029 = vmatprep.subr.mxu0 0.0
    %5030 = vmatpush2.xpose.msra.mxu0 0.0
    %5031 = vmatprep.subr.mxu0 0.0
    %5032 = vmatpush2.xpose.msra.mxu0 0.0
    %5033 = vmatprep.subr.mxu0 0.0
    %5034 = vmatpush2.xpose.msra.mxu0 0.0
    %5035 = vmatprep.subr.mxu0 0.0
    %5036 = vmatpush2.xpose.msra.mxu0 0.0
    %5037 = vmatprep.subr.mxu0 0.0
    %5038 = vmatpush2.xpose.msra.mxu0 0.0
    %5039 = vmatprep.subr.mxu0 0.0
    %5040 = vmatpush2.xpose.msra.mxu0 0.0
    %5041 = vmatprep.subr.mxu0 0.0
    %5042 = vmatpush2.xpose.msra.mxu0 0.0
    %5043 = vmatprep.subr.mxu0 0.0
    %5044 = vmatpush2.xpose.msra.mxu0 0.0
    %5045 = vmatprep.subr.mxu0 0.0
    %5046 = vmatpush2.xpose.msra.mxu0 0.0
    %5047 = vmatprep.subr.mxu0 0.0
    %5048 = vmatpush2.xpose.msra.mxu0 0.0
    %5049 = vmatprep.mubr.f32.mxu0 0.0
    %5050 = vmatmul.mubr.f32.gmra.mxu0 %v4974
    %v5051 = vpop.f32.mrf.mxu0
    %v5052 = vadd.f32 0.0, %v5051
    %v5053 = vpop.f32.mrf.mxu0
    %5054 = vmatprep.mubr.f32.mxu0 0.0
    %5055 = vmatmul.mubr.f32.gmra.mxu0 %v4977
    %v5056 = vpop.f32.mrf.mxu0
    %v5057 = vadd.f32 0.0, %v5056
    %v5058 = vpop.f32.mrf.mxu0
    %5059 = vdwg.mxu0
    %v5061 = vsel %vm4363, %v1731, 0
    %v5064 = vsel %vm4363, %v1867, 0
    %v5067 = vsel %vm4363, %v2975, 0
    %v5070 = vsel %vm4363, %v3111, 0
    %5072 = vmatprep.subr.mxu0 0.0
    %5073 = vmatpush1.xpose.msra.mxu0 0.0
    %5074 = vmatprep.subr.mxu0 0.0
    %5075 = vmatpush1.xpose.msra.mxu0 0.0
    %5076 = vmatprep.subr.mxu0 0.0
    %5077 = vmatpush1.xpose.msra.mxu0 0.0
    %5078 = vmatprep.subr.mxu0 0.0
    %5079 = vmatpush1.xpose.msra.mxu0 0.0
    %5080 = vmatprep.subr.mxu0 0.0
    %5081 = vmatpush1.xpose.msra.mxu0 0.0
    %5082 = vmatprep.subr.mxu0 0.0
    %5083 = vmatpush1.xpose.msra.mxu0 0.0
    %5084 = vmatprep.subr.mxu0 0.0
    %5085 = vmatpush1.xpose.msra.mxu0 0.0
    %5086 = vmatprep.subr.mxu0 0.0
    %5087 = vmatpush1.xpose.msra.mxu0 0.0
    %5088 = vmatprep.subr.mxu0 0.0
    %5089 = vmatpush1.xpose.msra.mxu0 0.0
    %5090 = vmatprep.subr.mxu0 0.0
    %5091 = vmatpush1.xpose.msra.mxu0 0.0
    %5092 = vmatprep.subr.mxu0 0.0
    %5093 = vmatpush1.xpose.msra.mxu0 0.0
    %5094 = vmatprep.subr.mxu0 0.0
    %5095 = vmatpush1.xpose.msra.mxu0 0.0
    %5096 = vmatprep.subr.mxu0 0.0
    %5097 = vmatpush1.xpose.msra.mxu0 0.0
    %5098 = vmatprep.subr.mxu0 0.0
    %5099 = vmatpush1.xpose.msra.mxu0 0.0
    %5100 = vmatprep.subr.mxu0 0.0
    %5101 = vmatpush1.xpose.msra.mxu0 %v5070
    %5102 = vmatprep.subr.mxu0 0.0
    %5103 = vmatpush1.xpose.msra.mxu0 %v5067
    %5104 = vmatprep.subr.mxu0 0.0
    %5105 = vmatpush2.xpose.msra.mxu0 0.0
    %5106 = vmatprep.subr.mxu0 0.0
    %5107 = vmatpush2.xpose.msra.mxu0 0.0
    %5108 = vmatprep.subr.mxu0 0.0
    %5109 = vmatpush2.xpose.msra.mxu0 0.0
    %5110 = vmatprep.subr.mxu0 0.0
    %5111 = vmatpush2.xpose.msra.mxu0 0.0
    %5112 = vmatprep.subr.mxu0 0.0
    %5113 = vmatpush2.xpose.msra.mxu0 0.0
    %5114 = vmatprep.subr.mxu0 0.0
    %5115 = vmatpush2.xpose.msra.mxu0 0.0
    %5116 = vmatprep.subr.mxu0 0.0
    %5117 = vmatpush2.xpose.msra.mxu0 0.0
    %5118 = vmatprep.subr.mxu0 0.0
    %5119 = vmatpush2.xpose.msra.mxu0 0.0
    %5120 = vmatprep.subr.mxu0 0.0
    %5121 = vmatpush2.xpose.msra.mxu0 0.0
    %5122 = vmatprep.subr.mxu0 0.0
    %5123 = vmatpush2.xpose.msra.mxu0 0.0
    %5124 = vmatprep.subr.mxu0 0.0
    %5125 = vmatpush2.xpose.msra.mxu0 0.0
    %5126 = vmatprep.subr.mxu0 0.0
    %5127 = vmatpush2.xpose.msra.mxu0 0.0
    %5128 = vmatprep.subr.mxu0 0.0
    %5129 = vmatpush2.xpose.msra.mxu0 0.0
    %5130 = vmatprep.subr.mxu0 0.0
    %5131 = vmatpush2.xpose.msra.mxu0 0.0
    %5132 = vmatprep.subr.mxu0 0.0
    %5133 = vmatpush2.xpose.msra.mxu0 0.0
    %5134 = vmatprep.subr.mxu0 0.0
    %5135 = vmatpush2.xpose.msra.mxu0 0.0
    %5136 = vmatprep.mubr.f32.mxu0 0.0
    %5137 = vmatmul.mubr.f32.gmra.mxu0 %v5061
    %v5138 = vpop.f32.mrf.mxu0
    %v5139 = vadd.f32 0.0, %v5138
    %v5140 = vpop.f32.mrf.mxu0
    %5141 = vmatprep.mubr.f32.mxu0 0.0
    %5142 = vmatmul.mubr.f32.gmra.mxu0 %v5064
    %v5143 = vpop.f32.mrf.mxu0
    %v5144 = vadd.f32 0.0, %v5143
    %v5145 = vpop.f32.mrf.mxu0
    %5146 = vdwg.mxu0
    %v5148 = vsel %vm4363, %v1732, 0
    %v5151 = vsel %vm4363, %v1868, 0
    %v5154 = vsel %vm4363, %v2976, 0
    %v5157 = vsel %vm4363, %v3112, 0
    %5159 = vmatprep.subr.mxu0 0.0
    %5160 = vmatpush1.xpose.msra.mxu0 0.0
    %5161 = vmatprep.subr.mxu0 0.0
    %5162 = vmatpush1.xpose.msra.mxu0 0.0
    %5163 = vmatprep.subr.mxu0 0.0
    %5164 = vmatpush1.xpose.msra.mxu0 0.0
    %5165 = vmatprep.subr.mxu0 0.0
    %5166 = vmatpush1.xpose.msra.mxu0 0.0
    %5167 = vmatprep.subr.mxu0 0.0
    %5168 = vmatpush1.xpose.msra.mxu0 0.0
    %5169 = vmatprep.subr.mxu0 0.0
    %5170 = vmatpush1.xpose.msra.mxu0 0.0
    %5171 = vmatprep.subr.mxu0 0.0
    %5172 = vmatpush1.xpose.msra.mxu0 0.0
    %5173 = vmatprep.subr.mxu0 0.0
    %5174 = vmatpush1.xpose.msra.mxu0 0.0
    %5175 = vmatprep.subr.mxu0 0.0
    %5176 = vmatpush1.xpose.msra.mxu0 0.0
    %5177 = vmatprep.subr.mxu0 0.0
    %5178 = vmatpush1.xpose.msra.mxu0 0.0
    %5179 = vmatprep.subr.mxu0 0.0
    %5180 = vmatpush1.xpose.msra.mxu0 0.0
    %5181 = vmatprep.subr.mxu0 0.0
    %5182 = vmatpush1.xpose.msra.mxu0 0.0
    %5183 = vmatprep.subr.mxu0 0.0
    %5184 = vmatpush1.xpose.msra.mxu0 0.0
    %5185 = vmatprep.subr.mxu0 0.0
    %5186 = vmatpush1.xpose.msra.mxu0 0.0
    %5187 = vmatprep.subr.mxu0 0.0
    %5188 = vmatpush1.xpose.msra.mxu0 %v5157
    %5189 = vmatprep.subr.mxu0 0.0
    %5190 = vmatpush1.xpose.msra.mxu0 %v5154
    %5191 = vmatprep.subr.mxu0 0.0
    %5192 = vmatpush2.xpose.msra.mxu0 0.0
    %5193 = vmatprep.subr.mxu0 0.0
    %5194 = vmatpush2.xpose.msra.mxu0 0.0
    %5195 = vmatprep.subr.mxu0 0.0
    %5196 = vmatpush2.xpose.msra.mxu0 0.0
    %5197 = vmatprep.subr.mxu0 0.0
    %5198 = vmatpush2.xpose.msra.mxu0 0.0
    %5199 = vmatprep.subr.mxu0 0.0
    %5200 = vmatpush2.xpose.msra.mxu0 0.0
    %5201 = vmatprep.subr.mxu0 0.0
    %5202 = vmatpush2.xpose.msra.mxu0 0.0
    %5203 = vmatprep.subr.mxu0 0.0
    %5204 = vmatpush2.xpose.msra.mxu0 0.0
    %5205 = vmatprep.subr.mxu0 0.0
    %5206 = vmatpush2.xpose.msra.mxu0 0.0
    %5207 = vmatprep.subr.mxu0 0.0
    %5208 = vmatpush2.xpose.msra.mxu0 0.0
    %5209 = vmatprep.subr.mxu0 0.0
    %5210 = vmatpush2.xpose.msra.mxu0 0.0
    %5211 = vmatprep.subr.mxu0 0.0
    %5212 = vmatpush2.xpose.msra.mxu0 0.0
    %5213 = vmatprep.subr.mxu0 0.0
    %5214 = vmatpush2.xpose.msra.mxu0 0.0
    %5215 = vmatprep.subr.mxu0 0.0
    %5216 = vmatpush2.xpose.msra.mxu0 0.0
    %5217 = vmatprep.subr.mxu0 0.0
    %5218 = vmatpush2.xpose.msra.mxu0 0.0
    %5219 = vmatprep.subr.mxu0 0.0
    %5220 = vmatpush2.xpose.msra.mxu0 0.0
    %5221 = vmatprep.subr.mxu0 0.0
    %5222 = vmatpush2.xpose.msra.mxu0 0.0
    %5223 = vmatprep.mubr.f32.mxu0 0.0
    %5224 = vmatmul.mubr.f32.gmra.mxu0 %v5148
    %v5225 = vpop.f32.mrf.mxu0
    %v5226 = vadd.f32 0.0, %v5225
    %v5227 = vpop.f32.mrf.mxu0
    %5228 = vmatprep.mubr.f32.mxu0 0.0
    %5229 = vmatmul.mubr.f32.gmra.mxu0 %v5151
    %v5230 = vpop.f32.mrf.mxu0
    %v5231 = vadd.f32 0.0, %v5230
    %v5232 = vpop.f32.mrf.mxu0
    %5233 = vdwg.mxu0
    %v5235 = vsel %vm4363, %v1733, 0
    %v5238 = vsel %vm4363, %v1869, 0
    %v5241 = vsel %vm4363, %v2977, 0
    %v5244 = vsel %vm4363, %v3113, 0
    %5246 = vmatprep.subr.mxu0 0.0
    %5247 = vmatpush1.xpose.msra.mxu0 0.0
    %5248 = vmatprep.subr.mxu0 0.0
    %5249 = vmatpush1.xpose.msra.mxu0 0.0
    %5250 = vmatprep.subr.mxu0 0.0
    %5251 = vmatpush1.xpose.msra.mxu0 0.0
    %5252 = vmatprep.subr.mxu0 0.0
    %5253 = vmatpush1.xpose.msra.mxu0 0.0
    %5254 = vmatprep.subr.mxu0 0.0
    %5255 = vmatpush1.xpose.msra.mxu0 0.0
    %5256 = vmatprep.subr.mxu0 0.0
    %5257 = vmatpush1.xpose.msra.mxu0 0.0
    %5258 = vmatprep.subr.mxu0 0.0
    %5259 = vmatpush1.xpose.msra.mxu0 0.0
    %5260 = vmatprep.subr.mxu0 0.0
    %5261 = vmatpush1.xpose.msra.mxu0 0.0
    %5262 = vmatprep.subr.mxu0 0.0
    %5263 = vmatpush1.xpose.msra.mxu0 0.0
    %5264 = vmatprep.subr.mxu0 0.0
    %5265 = vmatpush1.xpose.msra.mxu0 0.0
    %5266 = vmatprep.subr.mxu0 0.0
    %5267 = vmatpush1.xpose.msra.mxu0 0.0
    %5268 = vmatprep.subr.mxu0 0.0
    %5269 = vmatpush1.xpose.msra.mxu0 0.0
    %5270 = vmatprep.subr.mxu0 0.0
    %5271 = vmatpush1.xpose.msra.mxu0 0.0
    %5272 = vmatprep.subr.mxu0 0.0
    %5273 = vmatpush1.xpose.msra.mxu0 0.0
    %5274 = vmatprep.subr.mxu0 0.0
    %5275 = vmatpush1.xpose.msra.mxu0 %v5244
    %5276 = vmatprep.subr.mxu0 0.0
    %5277 = vmatpush1.xpose.msra.mxu0 %v5241
    %5278 = vmatprep.subr.mxu0 0.0
    %5279 = vmatpush2.xpose.msra.mxu0 0.0
    %5280 = vmatprep.subr.mxu0 0.0
    %5281 = vmatpush2.xpose.msra.mxu0 0.0
    %5282 = vmatprep.subr.mxu0 0.0
    %5283 = vmatpush2.xpose.msra.mxu0 0.0
    %5284 = vmatprep.subr.mxu0 0.0
    %5285 = vmatpush2.xpose.msra.mxu0 0.0
    %5286 = vmatprep.subr.mxu0 0.0
    %5287 = vmatpush2.xpose.msra.mxu0 0.0
    %5288 = vmatprep.subr.mxu0 0.0
    %5289 = vmatpush2.xpose.msra.mxu0 0.0
    %5290 = vmatprep.subr.mxu0 0.0
    %5291 = vmatpush2.xpose.msra.mxu0 0.0
    %5292 = vmatprep.subr.mxu0 0.0
    %5293 = vmatpush2.xpose.msra.mxu0 0.0
    %5294 = vmatprep.subr.mxu0 0.0
    %5295 = vmatpush2.xpose.msra.mxu0 0.0
    %5296 = vmatprep.subr.mxu0 0.0
    %5297 = vmatpush2.xpose.msra.mxu0 0.0
    %5298 = vmatprep.subr.mxu0 0.0
    %5299 = vmatpush2.xpose.msra.mxu0 0.0
    %5300 = vmatprep.subr.mxu0 0.0
    %5301 = vmatpush2.xpose.msra.mxu0 0.0
    %5302 = vmatprep.subr.mxu0 0.0
    %5303 = vmatpush2.xpose.msra.mxu0 0.0
    %5304 = vmatprep.subr.mxu0 0.0
    %5305 = vmatpush2.xpose.msra.mxu0 0.0
    %5306 = vmatprep.subr.mxu0 0.0
    %5307 = vmatpush2.xpose.msra.mxu0 0.0
    %5308 = vmatprep.subr.mxu0 0.0
    %5309 = vmatpush2.xpose.msra.mxu0 0.0
    %5310 = vmatprep.mubr.f32.mxu0 0.0
    %5311 = vmatmul.mubr.f32.gmra.mxu0 %v5235
    %v5312 = vpop.f32.mrf.mxu0
    %v5313 = vadd.f32 0.0, %v5312
    %v5314 = vpop.f32.mrf.mxu0
    %5315 = vmatprep.mubr.f32.mxu0 0.0
    %5316 = vmatmul.mubr.f32.gmra.mxu0 %v5238
    %v5317 = vpop.f32.mrf.mxu0
    %v5318 = vadd.f32 0.0, %v5317
    %v5319 = vpop.f32.mrf.mxu0
    %5320 = vdwg.mxu0
    %v5322 = vsel %vm4363, %v1734, 0
    %v5325 = vsel %vm4363, %v1870, 0
    %v5328 = vsel %vm4363, %v2978, 0
    %v5331 = vsel %vm4363, %v3114, 0
    %5333 = vmatprep.subr.mxu0 0.0
    %5334 = vmatpush1.xpose.msra.mxu0 0.0
    %5335 = vmatprep.subr.mxu0 0.0
    %5336 = vmatpush1.xpose.msra.mxu0 0.0
    %5337 = vmatprep.subr.mxu0 0.0
    %5338 = vmatpush1.xpose.msra.mxu0 0.0
    %5339 = vmatprep.subr.mxu0 0.0
    %5340 = vmatpush1.xpose.msra.mxu0 0.0
    %5341 = vmatprep.subr.mxu0 0.0
    %5342 = vmatpush1.xpose.msra.mxu0 0.0
    %5343 = vmatprep.subr.mxu0 0.0
    %5344 = vmatpush1.xpose.msra.mxu0 0.0
    %5345 = vmatprep.subr.mxu0 0.0
    %5346 = vmatpush1.xpose.msra.mxu0 0.0
    %5347 = vmatprep.subr.mxu0 0.0
    %5348 = vmatpush1.xpose.msra.mxu0 0.0
    %5349 = vmatprep.subr.mxu0 0.0
    %5350 = vmatpush1.xpose.msra.mxu0 0.0
    %5351 = vmatprep.subr.mxu0 0.0
    %5352 = vmatpush1.xpose.msra.mxu0 0.0
    %5353 = vmatprep.subr.mxu0 0.0
    %5354 = vmatpush1.xpose.msra.mxu0 0.0
    %5355 = vmatprep.subr.mxu0 0.0
    %5356 = vmatpush1.xpose.msra.mxu0 0.0
    %5357 = vmatprep.subr.mxu0 0.0
    %5358 = vmatpush1.xpose.msra.mxu0 0.0
    %5359 = vmatprep.subr.mxu0 0.0
    %5360 = vmatpush1.xpose.msra.mxu0 0.0
    %5361 = vmatprep.subr.mxu0 0.0
    %5362 = vmatpush1.xpose.msra.mxu0 %v5331
    %5363 = vmatprep.subr.mxu0 0.0
    %5364 = vmatpush1.xpose.msra.mxu0 %v5328
    %5365 = vmatprep.subr.mxu0 0.0
    %5366 = vmatpush2.xpose.msra.mxu0 0.0
    %5367 = vmatprep.subr.mxu0 0.0
    %5368 = vmatpush2.xpose.msra.mxu0 0.0
    %5369 = vmatprep.subr.mxu0 0.0
    %5370 = vmatpush2.xpose.msra.mxu0 0.0
    %5371 = vmatprep.subr.mxu0 0.0
    %5372 = vmatpush2.xpose.msra.mxu0 0.0
    %5373 = vmatprep.subr.mxu0 0.0
    %5374 = vmatpush2.xpose.msra.mxu0 0.0
    %5375 = vmatprep.subr.mxu0 0.0
    %5376 = vmatpush2.xpose.msra.mxu0 0.0
    %5377 = vmatprep.subr.mxu0 0.0
    %5378 = vmatpush2.xpose.msra.mxu0 0.0
    %5379 = vmatprep.subr.mxu0 0.0
    %5380 = vmatpush2.xpose.msra.mxu0 0.0
    %5381 = vmatprep.subr.mxu0 0.0
    %5382 = vmatpush2.xpose.msra.mxu0 0.0
    %5383 = vmatprep.subr.mxu0 0.0
    %5384 = vmatpush2.xpose.msra.mxu0 0.0
    %5385 = vmatprep.subr.mxu0 0.0
    %5386 = vmatpush2.xpose.msra.mxu0 0.0
    %5387 = vmatprep.subr.mxu0 0.0
    %5388 = vmatpush2.xpose.msra.mxu0 0.0
    %5389 = vmatprep.subr.mxu0 0.0
    %5390 = vmatpush2.xpose.msra.mxu0 0.0
    %5391 = vmatprep.subr.mxu0 0.0
    %5392 = vmatpush2.xpose.msra.mxu0 0.0
    %5393 = vmatprep.subr.mxu0 0.0
    %5394 = vmatpush2.xpose.msra.mxu0 0.0
    %5395 = vmatprep.subr.mxu0 0.0
    %5396 = vmatpush2.xpose.msra.mxu0 0.0
    %5397 = vmatprep.mubr.f32.mxu0 0.0
    %5398 = vmatmul.mubr.f32.gmra.mxu0 %v5322
    %v5399 = vpop.f32.mrf.mxu0
    %v5400 = vadd.f32 0.0, %v5399
    %v5401 = vpop.f32.mrf.mxu0
    %5402 = vmatprep.mubr.f32.mxu0 0.0
    %5403 = vmatmul.mubr.f32.gmra.mxu0 %v5325
    %v5404 = vpop.f32.mrf.mxu0
    %v5405 = vadd.f32 0.0, %v5404
    %v5406 = vpop.f32.mrf.mxu0
    %5407 = vdwg.mxu0
    %v5409 = vsel %vm4363, %v1735, 0
    %v5412 = vsel %vm4363, %v1871, 0
    %v5415 = vsel %vm4363, %v2979, 0
    %v5418 = vsel %vm4363, %v3115, 0
    %5420 = vmatprep.subr.mxu0 0.0
    %5421 = vmatpush1.xpose.msra.mxu0 0.0
    %5422 = vmatprep.subr.mxu0 0.0
    %5423 = vmatpush1.xpose.msra.mxu0 0.0
    %5424 = vmatprep.subr.mxu0 0.0
    %5425 = vmatpush1.xpose.msra.mxu0 0.0
    %5426 = vmatprep.subr.mxu0 0.0
    %5427 = vmatpush1.xpose.msra.mxu0 0.0
    %5428 = vmatprep.subr.mxu0 0.0
    %5429 = vmatpush1.xpose.msra.mxu0 0.0
    %5430 = vmatprep.subr.mxu0 0.0
    %5431 = vmatpush1.xpose.msra.mxu0 0.0
    %5432 = vmatprep.subr.mxu0 0.0
    %5433 = vmatpush1.xpose.msra.mxu0 0.0
    %5434 = vmatprep.subr.mxu0 0.0
    %5435 = vmatpush1.xpose.msra.mxu0 0.0
    %5436 = vmatprep.subr.mxu0 0.0
    %5437 = vmatpush1.xpose.msra.mxu0 0.0
    %5438 = vmatprep.subr.mxu0 0.0
    %5439 = vmatpush1.xpose.msra.mxu0 0.0
    %5440 = vmatprep.subr.mxu0 0.0
    %5441 = vmatpush1.xpose.msra.mxu0 0.0
    %5442 = vmatprep.subr.mxu0 0.0
    %5443 = vmatpush1.xpose.msra.mxu0 0.0
    %5444 = vmatprep.subr.mxu0 0.0
    %5445 = vmatpush1.xpose.msra.mxu0 0.0
    %5446 = vmatprep.subr.mxu0 0.0
    %5447 = vmatpush1.xpose.msra.mxu0 0.0
    %5448 = vmatprep.subr.mxu0 0.0
    %5449 = vmatpush1.xpose.msra.mxu0 %v5418
    %5450 = vmatprep.subr.mxu0 0.0
    %5451 = vmatpush1.xpose.msra.mxu0 %v5415
    %5452 = vmatprep.subr.mxu0 0.0
    %5453 = vmatpush2.xpose.msra.mxu0 0.0
    %5454 = vmatprep.subr.mxu0 0.0
    %5455 = vmatpush2.xpose.msra.mxu0 0.0
    %5456 = vmatprep.subr.mxu0 0.0
    %5457 = vmatpush2.xpose.msra.mxu0 0.0
    %5458 = vmatprep.subr.mxu0 0.0
    %5459 = vmatpush2.xpose.msra.mxu0 0.0
    %5460 = vmatprep.subr.mxu0 0.0
    %5461 = vmatpush2.xpose.msra.mxu0 0.0
    %5462 = vmatprep.subr.mxu0 0.0
    %5463 = vmatpush2.xpose.msra.mxu0 0.0
    %5464 = vmatprep.subr.mxu0 0.0
    %5465 = vmatpush2.xpose.msra.mxu0 0.0
    %5466 = vmatprep.subr.mxu0 0.0
    %5467 = vmatpush2.xpose.msra.mxu0 0.0
    %5468 = vmatprep.subr.mxu0 0.0
    %5469 = vmatpush2.xpose.msra.mxu0 0.0
    %5470 = vmatprep.subr.mxu0 0.0
    %5471 = vmatpush2.xpose.msra.mxu0 0.0
    %5472 = vmatprep.subr.mxu0 0.0
    %5473 = vmatpush2.xpose.msra.mxu0 0.0
    %5474 = vmatprep.subr.mxu0 0.0
    %5475 = vmatpush2.xpose.msra.mxu0 0.0
    %5476 = vmatprep.subr.mxu0 0.0
    %5477 = vmatpush2.xpose.msra.mxu0 0.0
    %5478 = vmatprep.subr.mxu0 0.0
    %5479 = vmatpush2.xpose.msra.mxu0 0.0
    %5480 = vmatprep.subr.mxu0 0.0
    %5481 = vmatpush2.xpose.msra.mxu0 0.0
    %5482 = vmatprep.subr.mxu0 0.0
    %5483 = vmatpush2.xpose.msra.mxu0 0.0
    %5484 = vmatprep.mubr.f32.mxu0 0.0
    %5485 = vmatmul.mubr.f32.gmra.mxu0 %v5409
    %v5486 = vpop.f32.mrf.mxu0
    %v5487 = vadd.f32 0.0, %v5486
    %v5488 = vpop.f32.mrf.mxu0
    %5489 = vmatprep.mubr.f32.mxu0 0.0
    %5490 = vmatmul.mubr.f32.gmra.mxu0 %v5412
    %v5491 = vpop.f32.mrf.mxu0
    %v5492 = vadd.f32 0.0, %v5491
    %v5493 = vpop.f32.mrf.mxu0
    %5494 = vdwg.mxu0
    %v5496 = vsel %vm4363, %v1736, 0
    %v5499 = vsel %vm4363, %v1872, 0
    %v5502 = vsel %vm4363, %v2980, 0
    %v5505 = vsel %vm4363, %v3116, 0
    %5507 = vmatprep.subr.mxu0 0.0
    %5508 = vmatpush1.xpose.msra.mxu0 0.0
    %5509 = vmatprep.subr.mxu0 0.0
    %5510 = vmatpush1.xpose.msra.mxu0 0.0
    %5511 = vmatprep.subr.mxu0 0.0
    %5512 = vmatpush1.xpose.msra.mxu0 0.0
    %5513 = vmatprep.subr.mxu0 0.0
    %5514 = vmatpush1.xpose.msra.mxu0 0.0
    %5515 = vmatprep.subr.mxu0 0.0
    %5516 = vmatpush1.xpose.msra.mxu0 0.0
    %5517 = vmatprep.subr.mxu0 0.0
    %5518 = vmatpush1.xpose.msra.mxu0 0.0
    %5519 = vmatprep.subr.mxu0 0.0
    %5520 = vmatpush1.xpose.msra.mxu0 0.0
    %5521 = vmatprep.subr.mxu0 0.0
    %5522 = vmatpush1.xpose.msra.mxu0 0.0
    %5523 = vmatprep.subr.mxu0 0.0
    %5524 = vmatpush1.xpose.msra.mxu0 0.0
    %5525 = vmatprep.subr.mxu0 0.0
    %5526 = vmatpush1.xpose.msra.mxu0 0.0
    %5527 = vmatprep.subr.mxu0 0.0
    %5528 = vmatpush1.xpose.msra.mxu0 0.0
    %5529 = vmatprep.subr.mxu0 0.0
    %5530 = vmatpush1.xpose.msra.mxu0 0.0
    %5531 = vmatprep.subr.mxu0 0.0
    %5532 = vmatpush1.xpose.msra.mxu0 0.0
    %5533 = vmatprep.subr.mxu0 0.0
    %5534 = vmatpush1.xpose.msra.mxu0 0.0
    %5535 = vmatprep.subr.mxu0 0.0
    %5536 = vmatpush1.xpose.msra.mxu0 %v5505
    %5537 = vmatprep.subr.mxu0 0.0
    %5538 = vmatpush1.xpose.msra.mxu0 %v5502
    %5539 = vmatprep.subr.mxu0 0.0
    %5540 = vmatpush2.xpose.msra.mxu0 0.0
    %5541 = vmatprep.subr.mxu0 0.0
    %5542 = vmatpush2.xpose.msra.mxu0 0.0
    %5543 = vmatprep.subr.mxu0 0.0
    %5544 = vmatpush2.xpose.msra.mxu0 0.0
    %5545 = vmatprep.subr.mxu0 0.0
    %5546 = vmatpush2.xpose.msra.mxu0 0.0
    %5547 = vmatprep.subr.mxu0 0.0
    %5548 = vmatpush2.xpose.msra.mxu0 0.0
    %5549 = vmatprep.subr.mxu0 0.0
    %5550 = vmatpush2.xpose.msra.mxu0 0.0
    %5551 = vmatprep.subr.mxu0 0.0
    %5552 = vmatpush2.xpose.msra.mxu0 0.0
    %5553 = vmatprep.subr.mxu0 0.0
    %5554 = vmatpush2.xpose.msra.mxu0 0.0
    %5555 = vmatprep.subr.mxu0 0.0
    %5556 = vmatpush2.xpose.msra.mxu0 0.0
    %5557 = vmatprep.subr.mxu0 0.0
    %5558 = vmatpush2.xpose.msra.mxu0 0.0
    %5559 = vmatprep.subr.mxu0 0.0
    %5560 = vmatpush2.xpose.msra.mxu0 0.0
    %5561 = vmatprep.subr.mxu0 0.0
    %5562 = vmatpush2.xpose.msra.mxu0 0.0
    %5563 = vmatprep.subr.mxu0 0.0
    %5564 = vmatpush2.xpose.msra.mxu0 0.0
    %5565 = vmatprep.subr.mxu0 0.0
    %5566 = vmatpush2.xpose.msra.mxu0 0.0
    %5567 = vmatprep.subr.mxu0 0.0
    %5568 = vmatpush2.xpose.msra.mxu0 0.0
    %5569 = vmatprep.subr.mxu0 0.0
    %5570 = vmatpush2.xpose.msra.mxu0 0.0
    %5571 = vmatprep.mubr.f32.mxu0 0.0
    %5572 = vmatmul.mubr.f32.gmra.mxu0 %v5496
    %v5573 = vpop.f32.mrf.mxu0
    %v5574 = vadd.f32 0.0, %v5573
    %v5575 = vpop.f32.mrf.mxu0
    %5576 = vmatprep.mubr.f32.mxu0 0.0
    %5577 = vmatmul.mubr.f32.gmra.mxu0 %v5499
    %v5578 = vpop.f32.mrf.mxu0
    %v5579 = vadd.f32 0.0, %v5578
    %v5580 = vpop.f32.mrf.mxu0
    %5581 = vdwg.mxu0
    %v5583 = vsel %vm4363, %v1737, 0
    %v5586 = vsel %vm4363, %v1873, 0
    %v5589 = vsel %vm4363, %v2981, 0
    %v5592 = vsel %vm4363, %v3117, 0
    %5594 = vmatprep.subr.mxu0 0.0
    %5595 = vmatpush1.xpose.msra.mxu0 0.0
    %5596 = vmatprep.subr.mxu0 0.0
    %5597 = vmatpush1.xpose.msra.mxu0 0.0
    %5598 = vmatprep.subr.mxu0 0.0
    %5599 = vmatpush1.xpose.msra.mxu0 0.0
    %5600 = vmatprep.subr.mxu0 0.0
    %5601 = vmatpush1.xpose.msra.mxu0 0.0
    %5602 = vmatprep.subr.mxu0 0.0
    %5603 = vmatpush1.xpose.msra.mxu0 0.0
    %5604 = vmatprep.subr.mxu0 0.0
    %5605 = vmatpush1.xpose.msra.mxu0 0.0
    %5606 = vmatprep.subr.mxu0 0.0
    %5607 = vmatpush1.xpose.msra.mxu0 0.0
    %5608 = vmatprep.subr.mxu0 0.0
    %5609 = vmatpush1.xpose.msra.mxu0 0.0
    %5610 = vmatprep.subr.mxu0 0.0
    %5611 = vmatpush1.xpose.msra.mxu0 0.0
    %5612 = vmatprep.subr.mxu0 0.0
    %5613 = vmatpush1.xpose.msra.mxu0 0.0
    %5614 = vmatprep.subr.mxu0 0.0
    %5615 = vmatpush1.xpose.msra.mxu0 0.0
    %5616 = vmatprep.subr.mxu0 0.0
    %5617 = vmatpush1.xpose.msra.mxu0 0.0
    %5618 = vmatprep.subr.mxu0 0.0
    %5619 = vmatpush1.xpose.msra.mxu0 0.0
    %5620 = vmatprep.subr.mxu0 0.0
    %5621 = vmatpush1.xpose.msra.mxu0 0.0
    %5622 = vmatprep.subr.mxu0 0.0
    %5623 = vmatpush1.xpose.msra.mxu0 %v5592
    %5624 = vmatprep.subr.mxu0 0.0
    %5625 = vmatpush1.xpose.msra.mxu0 %v5589
    %5626 = vmatprep.subr.mxu0 0.0
    %5627 = vmatpush2.xpose.msra.mxu0 0.0
    %5628 = vmatprep.subr.mxu0 0.0
    %5629 = vmatpush2.xpose.msra.mxu0 0.0
    %5630 = vmatprep.subr.mxu0 0.0
    %5631 = vmatpush2.xpose.msra.mxu0 0.0
    %5632 = vmatprep.subr.mxu0 0.0
    %5633 = vmatpush2.xpose.msra.mxu0 0.0
    %5634 = vmatprep.subr.mxu0 0.0
    %5635 = vmatpush2.xpose.msra.mxu0 0.0
    %5636 = vmatprep.subr.mxu0 0.0
    %5637 = vmatpush2.xpose.msra.mxu0 0.0
    %5638 = vmatprep.subr.mxu0 0.0
    %5639 = vmatpush2.xpose.msra.mxu0 0.0
    %5640 = vmatprep.subr.mxu0 0.0
    %5641 = vmatpush2.xpose.msra.mxu0 0.0
    %5642 = vmatprep.subr.mxu0 0.0
    %5643 = vmatpush2.xpose.msra.mxu0 0.0
    %5644 = vmatprep.subr.mxu0 0.0
    %5645 = vmatpush2.xpose.msra.mxu0 0.0
    %5646 = vmatprep.subr.mxu0 0.0
    %5647 = vmatpush2.xpose.msra.mxu0 0.0
    %5648 = vmatprep.subr.mxu0 0.0
    %5649 = vmatpush2.xpose.msra.mxu0 0.0
    %5650 = vmatprep.subr.mxu0 0.0
    %5651 = vmatpush2.xpose.msra.mxu0 0.0
    %5652 = vmatprep.subr.mxu0 0.0
    %5653 = vmatpush2.xpose.msra.mxu0 0.0
    %5654 = vmatprep.subr.mxu0 0.0
    %5655 = vmatpush2.xpose.msra.mxu0 0.0
    %5656 = vmatprep.subr.mxu0 0.0
    %5657 = vmatpush2.xpose.msra.mxu0 0.0
    %5658 = vmatprep.mubr.f32.mxu0 0.0
    %5659 = vmatmul.mubr.f32.gmra.mxu0 %v5583
    %v5660 = vpop.f32.mrf.mxu0
    %v5661 = vadd.f32 0.0, %v5660
    %v5662 = vpop.f32.mrf.mxu0
    %5663 = vmatprep.mubr.f32.mxu0 0.0
    %5664 = vmatmul.mubr.f32.gmra.mxu0 %v5586
    %v5665 = vpop.f32.mrf.mxu0
    %v5666 = vadd.f32 0.0, %v5665
    %v5667 = vpop.f32.mrf.mxu0
    %5668 = vdwg.mxu0
    %v5670 = vsel %vm4363, %v1738, 0
    %v5673 = vsel %vm4363, %v1874, 0
    %v5676 = vsel %vm4363, %v2982, 0
    %v5679 = vsel %vm4363, %v3118, 0
    %5681 = vmatprep.subr.mxu0 0.0
    %5682 = vmatpush1.xpose.msra.mxu0 0.0
    %5683 = vmatprep.subr.mxu0 0.0
    %5684 = vmatpush1.xpose.msra.mxu0 0.0
    %5685 = vmatprep.subr.mxu0 0.0
    %5686 = vmatpush1.xpose.msra.mxu0 0.0
    %5687 = vmatprep.subr.mxu0 0.0
    %5688 = vmatpush1.xpose.msra.mxu0 0.0
    %5689 = vmatprep.subr.mxu0 0.0
    %5690 = vmatpush1.xpose.msra.mxu0 0.0
    %5691 = vmatprep.subr.mxu0 0.0
    %5692 = vmatpush1.xpose.msra.mxu0 0.0
    %5693 = vmatprep.subr.mxu0 0.0
    %5694 = vmatpush1.xpose.msra.mxu0 0.0
    %5695 = vmatprep.subr.mxu0 0.0
    %5696 = vmatpush1.xpose.msra.mxu0 0.0
    %5697 = vmatprep.subr.mxu0 0.0
    %5698 = vmatpush1.xpose.msra.mxu0 0.0
    %5699 = vmatprep.subr.mxu0 0.0
    %5700 = vmatpush1.xpose.msra.mxu0 0.0
    %5701 = vmatprep.subr.mxu0 0.0
    %5702 = vmatpush1.xpose.msra.mxu0 0.0
    %5703 = vmatprep.subr.mxu0 0.0
    %5704 = vmatpush1.xpose.msra.mxu0 0.0
    %5705 = vmatprep.subr.mxu0 0.0
    %5706 = vmatpush1.xpose.msra.mxu0 0.0
    %5707 = vmatprep.subr.mxu0 0.0
    %5708 = vmatpush1.xpose.msra.mxu0 0.0
    %5709 = vmatprep.subr.mxu0 0.0
    %5710 = vmatpush1.xpose.msra.mxu0 %v5679
    %5711 = vmatprep.subr.mxu0 0.0
    %5712 = vmatpush1.xpose.msra.mxu0 %v5676
    %5713 = vmatprep.subr.mxu0 0.0
    %5714 = vmatpush2.xpose.msra.mxu0 0.0
    %5715 = vmatprep.subr.mxu0 0.0
    %5716 = vmatpush2.xpose.msra.mxu0 0.0
    %5717 = vmatprep.subr.mxu0 0.0
    %5718 = vmatpush2.xpose.msra.mxu0 0.0
    %5719 = vmatprep.subr.mxu0 0.0
    %5720 = vmatpush2.xpose.msra.mxu0 0.0
    %5721 = vmatprep.subr.mxu0 0.0
    %5722 = vmatpush2.xpose.msra.mxu0 0.0
    %5723 = vmatprep.subr.mxu0 0.0
    %5724 = vmatpush2.xpose.msra.mxu0 0.0
    %5725 = vmatprep.subr.mxu0 0.0
    %5726 = vmatpush2.xpose.msra.mxu0 0.0
    %5727 = vmatprep.subr.mxu0 0.0
    %5728 = vmatpush2.xpose.msra.mxu0 0.0
    %5729 = vmatprep.subr.mxu0 0.0
    %5730 = vmatpush2.xpose.msra.mxu0 0.0
    %5731 = vmatprep.subr.mxu0 0.0
    %5732 = vmatpush2.xpose.msra.mxu0 0.0
    %5733 = vmatprep.subr.mxu0 0.0
    %5734 = vmatpush2.xpose.msra.mxu0 0.0
    %5735 = vmatprep.subr.mxu0 0.0
    %5736 = vmatpush2.xpose.msra.mxu0 0.0
    %5737 = vmatprep.subr.mxu0 0.0
    %5738 = vmatpush2.xpose.msra.mxu0 0.0
    %5739 = vmatprep.subr.mxu0 0.0
    %5740 = vmatpush2.xpose.msra.mxu0 0.0
    %5741 = vmatprep.subr.mxu0 0.0
    %5742 = vmatpush2.xpose.msra.mxu0 0.0
    %5743 = vmatprep.subr.mxu0 0.0
    %5744 = vmatpush2.xpose.msra.mxu0 0.0
    %5745 = vmatprep.mubr.f32.mxu0 0.0
    %5746 = vmatmul.mubr.f32.gmra.mxu0 %v5670
    %v5747 = vpop.f32.mrf.mxu0
    %v5748 = vadd.f32 0.0, %v5747
    %v5749 = vpop.f32.mrf.mxu0
    %5750 = vmatprep.mubr.f32.mxu0 0.0
    %5751 = vmatmul.mubr.f32.gmra.mxu0 %v5673
    %v5752 = vpop.f32.mrf.mxu0
    %v5753 = vadd.f32 0.0, %v5752
    %v5754 = vpop.f32.mrf.mxu0
    %5755 = vdwg.mxu0
    %v5756 = vcombine.low %v4443, %v4617
    %v5757 = vcombine.high %v4443, %v4617
    %v5759 = vunpack.c.l.s4 1983009808
    %v5760 = vunpack.c.0.s8 %v5759
    %v5761 = vlaneseq
    %v5762 = vshrl.u32 %v5761, 7
    %v5763 = vsub.s32 %v5760, %v5762
    %v5764 = vrot.slane %v5756, %v5763
    %v5766 = vunpack.c.l.s4 1983009808
    %v5767 = vunpack.c.0.s8 %v5766
    %v5768 = vlaneseq
    %v5769 = vshrl.u32 %v5768, 7
    %v5770 = vsub.s32 %v5767, %v5769
    %v5771 = vrot.slane %v5757, %v5770
    %v5772 = vcombine.low %v4530, %v4704
    %v5773 = vcombine.high %v4530, %v4704
    %v5775 = vunpack.c.l.s4 1983009808
    %v5776 = vunpack.c.0.s8 %v5775
    %v5777 = vlaneseq
    %v5778 = vshrl.u32 %v5777, 7
    %v5779 = vsub.s32 %v5776, %v5778
    %v5780 = vrot.slane %v5772, %v5779
    %v5782 = vunpack.c.l.s4 1983009808
    %v5783 = vunpack.c.0.s8 %v5782
    %v5784 = vlaneseq
    %v5785 = vshrl.u32 %v5784, 7
    %v5786 = vsub.s32 %v5783, %v5785
    %v5787 = vrot.slane %v5773, %v5786
    %v5788 = vcombine.low %v4791, %v4965
    %v5789 = vcombine.high %v4791, %v4965
    %v5791 = vunpack.c.l.s4 1983009808
    %v5792 = vunpack.c.0.s8 %v5791
    %v5793 = vlaneseq
    %v5794 = vshrl.u32 %v5793, 7
    %v5795 = vsub.s32 %v5792, %v5794
    %v5796 = vrot.slane %v5788, %v5795
    %v5798 = vunpack.c.l.s4 1983009808
    %v5799 = vunpack.c.0.s8 %v5798
    %v5800 = vlaneseq
    %v5801 = vshrl.u32 %v5800, 7
    %v5802 = vsub.s32 %v5799, %v5801
    %v5803 = vrot.slane %v5789, %v5802
    %v5804 = vcombine.low %v4878, %v5052
    %v5805 = vcombine.high %v4878, %v5052
    %v5807 = vunpack.c.l.s4 1983009808
    %v5808 = vunpack.c.0.s8 %v5807
    %v5809 = vlaneseq
    %v5810 = vshrl.u32 %v5809, 7
    %v5811 = vsub.s32 %v5808, %v5810
    %v5812 = vrot.slane %v5804, %v5811
    %v5814 = vunpack.c.l.s4 1983009808
    %v5815 = vunpack.c.0.s8 %v5814
    %v5816 = vlaneseq
    %v5817 = vshrl.u32 %v5816, 7
    %v5818 = vsub.s32 %v5815, %v5817
    %v5819 = vrot.slane %v5805, %v5818
    %v5820 = vcombine.low %v5764, %v5780
    %v5821 = vcombine.high %v5764, %v5780
    %v5823 = vunpack.c.l.s4 1934713408
    %v5824 = vunpack.c.0.s8 %v5823
    %v5825 = vlaneseq
    %v5826 = vshrl.u32 %v5825, 7
    %v5827 = vsub.s32 %v5824, %v5826
    %v5828 = vrot.slane %v5820, %v5827
    %v5830 = vunpack.c.l.s4 1934713408
    %v5831 = vunpack.c.0.s8 %v5830
    %v5832 = vlaneseq
    %v5833 = vshrl.u32 %v5832, 7
    %v5834 = vsub.s32 %v5831, %v5833
    %v5835 = vrot.slane %v5821, %v5834
    %v5836 = vcombine.low %v5771, %v5787
    %v5837 = vcombine.high %v5771, %v5787
    %v5839 = vunpack.c.l.s4 1934713408
    %v5840 = vunpack.c.0.s8 %v5839
    %v5841 = vlaneseq
    %v5842 = vshrl.u32 %v5841, 7
    %v5843 = vsub.s32 %v5840, %v5842
    %v5844 = vrot.slane %v5836, %v5843
    %v5846 = vunpack.c.l.s4 1934713408
    %v5847 = vunpack.c.0.s8 %v5846
    %v5848 = vlaneseq
    %v5849 = vshrl.u32 %v5848, 7
    %v5850 = vsub.s32 %v5847, %v5849
    %v5851 = vrot.slane %v5837, %v5850
    %v5852 = vcombine.low %v5796, %v5812
    %v5853 = vcombine.high %v5796, %v5812
    %v5855 = vunpack.c.l.s4 1934713408
    %v5856 = vunpack.c.0.s8 %v5855
    %v5857 = vlaneseq
    %v5858 = vshrl.u32 %v5857, 7
    %v5859 = vsub.s32 %v5856, %v5858
    %v5860 = vrot.slane %v5852, %v5859
    %v5862 = vunpack.c.l.s4 1934713408
    %v5863 = vunpack.c.0.s8 %v5862
    %v5864 = vlaneseq
    %v5865 = vshrl.u32 %v5864, 7
    %v5866 = vsub.s32 %v5863, %v5865
    %v5867 = vrot.slane %v5853, %v5866
    %v5868 = vcombine.low %v5803, %v5819
    %v5869 = vcombine.high %v5803, %v5819
    %v5871 = vunpack.c.l.s4 1934713408
    %v5872 = vunpack.c.0.s8 %v5871
    %v5873 = vlaneseq
    %v5874 = vshrl.u32 %v5873, 7
    %v5875 = vsub.s32 %v5872, %v5874
    %v5876 = vrot.slane %v5868, %v5875
    %v5878 = vunpack.c.l.s4 1934713408
    %v5879 = vunpack.c.0.s8 %v5878
    %v5880 = vlaneseq
    %v5881 = vshrl.u32 %v5880, 7
    %v5882 = vsub.s32 %v5879, %v5881
    %v5883 = vrot.slane %v5869, %v5882
    %v5884 = vcombine.low %v5828, %v5860
    %v5885 = vcombine.high %v5828, %v5860
    %v5886 = vcombine.low %v5835, %v5867
    %v5887 = vcombine.high %v5835, %v5867
    %v5888 = vcombine.low %v5844, %v5876
    %v5889 = vcombine.high %v5844, %v5876
    %v5890 = vcombine.low %v5851, %v5883
    %v5891 = vcombine.high %v5851, %v5883
    %v5892 = vcombine.low %v5139, %v5313
    %v5893 = vcombine.high %v5139, %v5313
    %v5895 = vunpack.c.l.s4 1983009808
    %v5896 = vunpack.c.0.s8 %v5895
    %v5897 = vlaneseq
    %v5898 = vshrl.u32 %v5897, 7
    %v5899 = vsub.s32 %v5896, %v5898
    %v5900 = vrot.slane %v5892, %v5899
    %v5902 = vunpack.c.l.s4 1983009808
    %v5903 = vunpack.c.0.s8 %v5902
    %v5904 = vlaneseq
    %v5905 = vshrl.u32 %v5904, 7
    %v5906 = vsub.s32 %v5903, %v5905
    %v5907 = vrot.slane %v5893, %v5906
    %v5908 = vcombine.low %v5226, %v5400
    %v5909 = vcombine.high %v5226, %v5400
    %v5911 = vunpack.c.l.s4 1983009808
    %v5912 = vunpack.c.0.s8 %v5911
    %v5913 = vlaneseq
    %v5914 = vshrl.u32 %v5913, 7
    %v5915 = vsub.s32 %v5912, %v5914
    %v5916 = vrot.slane %v5908, %v5915
    %v5918 = vunpack.c.l.s4 1983009808
    %v5919 = vunpack.c.0.s8 %v5918
    %v5920 = vlaneseq
    %v5921 = vshrl.u32 %v5920, 7
    %v5922 = vsub.s32 %v5919, %v5921
    %v5923 = vrot.slane %v5909, %v5922
    %v5924 = vcombine.low %v5487, %v5661
    %v5925 = vcombine.high %v5487, %v5661
    %v5927 = vunpack.c.l.s4 1983009808
    %v5928 = vunpack.c.0.s8 %v5927
    %v5929 = vlaneseq
    %v5930 = vshrl.u32 %v5929, 7
    %v5931 = vsub.s32 %v5928, %v5930
    %v5932 = vrot.slane %v5924, %v5931
    %v5934 = vunpack.c.l.s4 1983009808
    %v5935 = vunpack.c.0.s8 %v5934
    %v5936 = vlaneseq
    %v5937 = vshrl.u32 %v5936, 7
    %v5938 = vsub.s32 %v5935, %v5937
    %v5939 = vrot.slane %v5925, %v5938
    %v5940 = vcombine.low %v5574, %v5748
    %v5941 = vcombine.high %v5574, %v5748
    %v5943 = vunpack.c.l.s4 1983009808
    %v5944 = vunpack.c.0.s8 %v5943
    %v5945 = vlaneseq
    %v5946 = vshrl.u32 %v5945, 7
    %v5947 = vsub.s32 %v5944, %v5946
    %v5948 = vrot.slane %v5940, %v5947
    %v5950 = vunpack.c.l.s4 1983009808
    %v5951 = vunpack.c.0.s8 %v5950
    %v5952 = vlaneseq
    %v5953 = vshrl.u32 %v5952, 7
    %v5954 = vsub.s32 %v5951, %v5953
    %v5955 = vrot.slane %v5941, %v5954
    %v5956 = vcombine.low %v5900, %v5916
    %v5957 = vcombine.high %v5900, %v5916
    %v5959 = vunpack.c.l.s4 1934713408
    %v5960 = vunpack.c.0.s8 %v5959
    %v5961 = vlaneseq
    %v5962 = vshrl.u32 %v5961, 7
    %v5963 = vsub.s32 %v5960, %v5962
    %v5964 = vrot.slane %v5956, %v5963
    %v5966 = vunpack.c.l.s4 1934713408
    %v5967 = vunpack.c.0.s8 %v5966
    %v5968 = vlaneseq
    %v5969 = vshrl.u32 %v5968, 7
    %v5970 = vsub.s32 %v5967, %v5969
    %v5971 = vrot.slane %v5957, %v5970
    %v5972 = vcombine.low %v5907, %v5923
    %v5973 = vcombine.high %v5907, %v5923
    %v5975 = vunpack.c.l.s4 1934713408
    %v5976 = vunpack.c.0.s8 %v5975
    %v5977 = vlaneseq
    %v5978 = vshrl.u32 %v5977, 7
    %v5979 = vsub.s32 %v5976, %v5978
    %v5980 = vrot.slane %v5972, %v5979
    %v5982 = vunpack.c.l.s4 1934713408
    %v5983 = vunpack.c.0.s8 %v5982
    %v5984 = vlaneseq
    %v5985 = vshrl.u32 %v5984, 7
    %v5986 = vsub.s32 %v5983, %v5985
    %v5987 = vrot.slane %v5973, %v5986
    %v5988 = vcombine.low %v5932, %v5948
    %v5989 = vcombine.high %v5932, %v5948
    %v5991 = vunpack.c.l.s4 1934713408
    %v5992 = vunpack.c.0.s8 %v5991
    %v5993 = vlaneseq
    %v5994 = vshrl.u32 %v5993, 7
    %v5995 = vsub.s32 %v5992, %v5994
    %v5996 = vrot.slane %v5988, %v5995
    %v5998 = vunpack.c.l.s4 1934713408
    %v5999 = vunpack.c.0.s8 %v5998
    %v6000 = vlaneseq
    %v6001 = vshrl.u32 %v6000, 7
    %v6002 = vsub.s32 %v5999, %v6001
    %v6003 = vrot.slane %v5989, %v6002
    %v6004 = vcombine.low %v5939, %v5955
    %v6005 = vcombine.high %v5939, %v5955
    %v6007 = vunpack.c.l.s4 1934713408
    %v6008 = vunpack.c.0.s8 %v6007
    %v6009 = vlaneseq
    %v6010 = vshrl.u32 %v6009, 7
    %v6011 = vsub.s32 %v6008, %v6010
    %v6012 = vrot.slane %v6004, %v6011
    %v6014 = vunpack.c.l.s4 1934713408
    %v6015 = vunpack.c.0.s8 %v6014
    %v6016 = vlaneseq
    %v6017 = vshrl.u32 %v6016, 7
    %v6018 = vsub.s32 %v6015, %v6017
    %v6019 = vrot.slane %v6005, %v6018
    %v6020 = vcombine.low %v5964, %v5996
    %v6021 = vcombine.high %v5964, %v5996
    %v6022 = vcombine.low %v5971, %v6003
    %v6023 = vcombine.high %v5971, %v6003
    %v6024 = vcombine.low %v5980, %v6012
    %v6025 = vcombine.high %v5980, %v6012
    %v6026 = vcombine.low %v5987, %v6019
    %v6027 = vcombine.high %v5987, %v6019
    %v6028 = vcombine.low %v4448, %v4622
    %v6029 = vcombine.high %v4448, %v4622
    %v6031 = vunpack.c.l.s4 1983009808
    %v6032 = vunpack.c.0.s8 %v6031
    %v6033 = vlaneseq
    %v6034 = vshrl.u32 %v6033, 7
    %v6035 = vsub.s32 %v6032, %v6034
    %v6036 = vrot.slane %v6028, %v6035
    %v6038 = vunpack.c.l.s4 1983009808
    %v6039 = vunpack.c.0.s8 %v6038
    %v6040 = vlaneseq
    %v6041 = vshrl.u32 %v6040, 7
    %v6042 = vsub.s32 %v6039, %v6041
    %v6043 = vrot.slane %v6029, %v6042
    %v6044 = vcombine.low %v4535, %v4709
    %v6045 = vcombine.high %v4535, %v4709
    %v6047 = vunpack.c.l.s4 1983009808
    %v6048 = vunpack.c.0.s8 %v6047
    %v6049 = vlaneseq
    %v6050 = vshrl.u32 %v6049, 7
    %v6051 = vsub.s32 %v6048, %v6050
    %v6052 = vrot.slane %v6044, %v6051
    %v6054 = vunpack.c.l.s4 1983009808
    %v6055 = vunpack.c.0.s8 %v6054
    %v6056 = vlaneseq
    %v6057 = vshrl.u32 %v6056, 7
    %v6058 = vsub.s32 %v6055, %v6057
    %v6059 = vrot.slane %v6045, %v6058
    %v6060 = vcombine.low %v4796, %v4970
    %v6061 = vcombine.high %v4796, %v4970
    %v6063 = vunpack.c.l.s4 1983009808
    %v6064 = vunpack.c.0.s8 %v6063
    %v6065 = vlaneseq
    %v6066 = vshrl.u32 %v6065, 7
    %v6067 = vsub.s32 %v6064, %v6066
    %v6068 = vrot.slane %v6060, %v6067
    %v6070 = vunpack.c.l.s4 1983009808
    %v6071 = vunpack.c.0.s8 %v6070
    %v6072 = vlaneseq
    %v6073 = vshrl.u32 %v6072, 7
    %v6074 = vsub.s32 %v6071, %v6073
    %v6075 = vrot.slane %v6061, %v6074
    %v6076 = vcombine.low %v4883, %v5057
    %v6077 = vcombine.high %v4883, %v5057
    %v6079 = vunpack.c.l.s4 1983009808
    %v6080 = vunpack.c.0.s8 %v6079
    %v6081 = vlaneseq
    %v6082 = vshrl.u32 %v6081, 7
    %v6083 = vsub.s32 %v6080, %v6082
    %v6084 = vrot.slane %v6076, %v6083
    %v6086 = vunpack.c.l.s4 1983009808
    %v6087 = vunpack.c.0.s8 %v6086
    %v6088 = vlaneseq
    %v6089 = vshrl.u32 %v6088, 7
    %v6090 = vsub.s32 %v6087, %v6089
    %v6091 = vrot.slane %v6077, %v6090
    %v6092 = vcombine.low %v6036, %v6052
    %v6093 = vcombine.high %v6036, %v6052
    %v6095 = vunpack.c.l.s4 1934713408
    %v6096 = vunpack.c.0.s8 %v6095
    %v6097 = vlaneseq
    %v6098 = vshrl.u32 %v6097, 7
    %v6099 = vsub.s32 %v6096, %v6098
    %v6100 = vrot.slane %v6092, %v6099
    %v6102 = vunpack.c.l.s4 1934713408
    %v6103 = vunpack.c.0.s8 %v6102
    %v6104 = vlaneseq
    %v6105 = vshrl.u32 %v6104, 7
    %v6106 = vsub.s32 %v6103, %v6105
    %v6107 = vrot.slane %v6093, %v6106
    %v6108 = vcombine.low %v6043, %v6059
    %v6109 = vcombine.high %v6043, %v6059
    %v6111 = vunpack.c.l.s4 1934713408
    %v6112 = vunpack.c.0.s8 %v6111
    %v6113 = vlaneseq
    %v6114 = vshrl.u32 %v6113, 7
    %v6115 = vsub.s32 %v6112, %v6114
    %v6116 = vrot.slane %v6108, %v6115
    %v6118 = vunpack.c.l.s4 1934713408
    %v6119 = vunpack.c.0.s8 %v6118
    %v6120 = vlaneseq
    %v6121 = vshrl.u32 %v6120, 7
    %v6122 = vsub.s32 %v6119, %v6121
    %v6123 = vrot.slane %v6109, %v6122
    %v6124 = vcombine.low %v6068, %v6084
    %v6125 = vcombine.high %v6068, %v6084
    %v6127 = vunpack.c.l.s4 1934713408
    %v6128 = vunpack.c.0.s8 %v6127
    %v6129 = vlaneseq
    %v6130 = vshrl.u32 %v6129, 7
    %v6131 = vsub.s32 %v6128, %v6130
    %v6132 = vrot.slane %v6124, %v6131
    %v6134 = vunpack.c.l.s4 1934713408
    %v6135 = vunpack.c.0.s8 %v6134
    %v6136 = vlaneseq
    %v6137 = vshrl.u32 %v6136, 7
    %v6138 = vsub.s32 %v6135, %v6137
    %v6139 = vrot.slane %v6125, %v6138
    %v6140 = vcombine.low %v6075, %v6091
    %v6141 = vcombine.high %v6075, %v6091
    %v6143 = vunpack.c.l.s4 1934713408
    %v6144 = vunpack.c.0.s8 %v6143
    %v6145 = vlaneseq
    %v6146 = vshrl.u32 %v6145, 7
    %v6147 = vsub.s32 %v6144, %v6146
    %v6148 = vrot.slane %v6140, %v6147
    %v6150 = vunpack.c.l.s4 1934713408
    %v6151 = vunpack.c.0.s8 %v6150
    %v6152 = vlaneseq
    %v6153 = vshrl.u32 %v6152, 7
    %v6154 = vsub.s32 %v6151, %v6153
    %v6155 = vrot.slane %v6141, %v6154
    %v6156 = vcombine.low %v6100, %v6132
    %v6157 = vcombine.high %v6100, %v6132
    %v6158 = vcombine.low %v6107, %v6139
    %v6159 = vcombine.high %v6107, %v6139
    %v6160 = vcombine.low %v6116, %v6148
    %v6161 = vcombine.high %v6116, %v6148
    %v6162 = vcombine.low %v6123, %v6155
    %v6163 = vcombine.high %v6123, %v6155
    %v6164 = vcombine.low %v5144, %v5318
    %v6165 = vcombine.high %v5144, %v5318
    %v6167 = vunpack.c.l.s4 1983009808
    %v6168 = vunpack.c.0.s8 %v6167
    %v6169 = vlaneseq
    %v6170 = vshrl.u32 %v6169, 7
    %v6171 = vsub.s32 %v6168, %v6170
    %v6172 = vrot.slane %v6164, %v6171
    %v6174 = vunpack.c.l.s4 1983009808
    %v6175 = vunpack.c.0.s8 %v6174
    %v6176 = vlaneseq
    %v6177 = vshrl.u32 %v6176, 7
    %v6178 = vsub.s32 %v6175, %v6177
    %v6179 = vrot.slane %v6165, %v6178
    %v6180 = vcombine.low %v5231, %v5405
    %v6181 = vcombine.high %v5231, %v5405
    %v6183 = vunpack.c.l.s4 1983009808
    %v6184 = vunpack.c.0.s8 %v6183
    %v6185 = vlaneseq
    %v6186 = vshrl.u32 %v6185, 7
    %v6187 = vsub.s32 %v6184, %v6186
    %v6188 = vrot.slane %v6180, %v6187
    %v6190 = vunpack.c.l.s4 1983009808
    %v6191 = vunpack.c.0.s8 %v6190
    %v6192 = vlaneseq
    %v6193 = vshrl.u32 %v6192, 7
    %v6194 = vsub.s32 %v6191, %v6193
    %v6195 = vrot.slane %v6181, %v6194
    %v6196 = vcombine.low %v5492, %v5666
    %v6197 = vcombine.high %v5492, %v5666
    %v6199 = vunpack.c.l.s4 1983009808
    %v6200 = vunpack.c.0.s8 %v6199
    %v6201 = vlaneseq
    %v6202 = vshrl.u32 %v6201, 7
    %v6203 = vsub.s32 %v6200, %v6202
    %v6204 = vrot.slane %v6196, %v6203
    %v6206 = vunpack.c.l.s4 1983009808
    %v6207 = vunpack.c.0.s8 %v6206
    %v6208 = vlaneseq
    %v6209 = vshrl.u32 %v6208, 7
    %v6210 = vsub.s32 %v6207, %v6209
    %v6211 = vrot.slane %v6197, %v6210
    %v6212 = vcombine.low %v5579, %v5753
    %v6213 = vcombine.high %v5579, %v5753
    %v6215 = vunpack.c.l.s4 1983009808
    %v6216 = vunpack.c.0.s8 %v6215
    %v6217 = vlaneseq
    %v6218 = vshrl.u32 %v6217, 7
    %v6219 = vsub.s32 %v6216, %v6218
    %v6220 = vrot.slane %v6212, %v6219
    %v6222 = vunpack.c.l.s4 1983009808
    %v6223 = vunpack.c.0.s8 %v6222
    %v6224 = vlaneseq
    %v6225 = vshrl.u32 %v6224, 7
    %v6226 = vsub.s32 %v6223, %v6225
    %v6227 = vrot.slane %v6213, %v6226
    %v6228 = vcombine.low %v6172, %v6188
    %v6229 = vcombine.high %v6172, %v6188
    %v6231 = vunpack.c.l.s4 1934713408
    %v6232 = vunpack.c.0.s8 %v6231
    %v6233 = vlaneseq
    %v6234 = vshrl.u32 %v6233, 7
    %v6235 = vsub.s32 %v6232, %v6234
    %v6236 = vrot.slane %v6228, %v6235
    %v6238 = vunpack.c.l.s4 1934713408
    %v6239 = vunpack.c.0.s8 %v6238
    %v6240 = vlaneseq
    %v6241 = vshrl.u32 %v6240, 7
    %v6242 = vsub.s32 %v6239, %v6241
    %v6243 = vrot.slane %v6229, %v6242
    %v6244 = vcombine.low %v6179, %v6195
    %v6245 = vcombine.high %v6179, %v6195
    %v6247 = vunpack.c.l.s4 1934713408
    %v6248 = vunpack.c.0.s8 %v6247
    %v6249 = vlaneseq
    %v6250 = vshrl.u32 %v6249, 7
    %v6251 = vsub.s32 %v6248, %v6250
    %v6252 = vrot.slane %v6244, %v6251
    %v6254 = vunpack.c.l.s4 1934713408
    %v6255 = vunpack.c.0.s8 %v6254
    %v6256 = vlaneseq
    %v6257 = vshrl.u32 %v6256, 7
    %v6258 = vsub.s32 %v6255, %v6257
    %v6259 = vrot.slane %v6245, %v6258
    %v6260 = vcombine.low %v6204, %v6220
    %v6261 = vcombine.high %v6204, %v6220
    %v6263 = vunpack.c.l.s4 1934713408
    %v6264 = vunpack.c.0.s8 %v6263
    %v6265 = vlaneseq
    %v6266 = vshrl.u32 %v6265, 7
    %v6267 = vsub.s32 %v6264, %v6266
    %v6268 = vrot.slane %v6260, %v6267
    %v6270 = vunpack.c.l.s4 1934713408
    %v6271 = vunpack.c.0.s8 %v6270
    %v6272 = vlaneseq
    %v6273 = vshrl.u32 %v6272, 7
    %v6274 = vsub.s32 %v6271, %v6273
    %v6275 = vrot.slane %v6261, %v6274
    %v6276 = vcombine.low %v6211, %v6227
    %v6277 = vcombine.high %v6211, %v6227
    %v6279 = vunpack.c.l.s4 1934713408
    %v6280 = vunpack.c.0.s8 %v6279
    %v6281 = vlaneseq
    %v6282 = vshrl.u32 %v6281, 7
    %v6283 = vsub.s32 %v6280, %v6282
    %v6284 = vrot.slane %v6276, %v6283
    %v6286 = vunpack.c.l.s4 1934713408
    %v6287 = vunpack.c.0.s8 %v6286
    %v6288 = vlaneseq
    %v6289 = vshrl.u32 %v6288, 7
    %v6290 = vsub.s32 %v6287, %v6289
    %v6291 = vrot.slane %v6277, %v6290
    %v6292 = vcombine.low %v6236, %v6268
    %v6293 = vcombine.high %v6236, %v6268
    %v6294 = vcombine.low %v6243, %v6275
    %v6295 = vcombine.high %v6243, %v6275
    %v6296 = vcombine.low %v6252, %v6284
    %v6297 = vcombine.high %v6252, %v6284
    %v6298 = vcombine.low %v6259, %v6291
    %v6299 = vcombine.high %v6259, %v6291
    %6302 = vrot.lane.b32.xlu0 %v5885, 16
    %v6303 = vpop.permute.xlu0 %6302
    %6304 = vrot.lane.b32.xlu0 %v6021, 16
    %v6305 = vpop.permute.xlu0 %6304
    %6310 = vrot.lane.b32.xlu0 %v5886, 32
    %v6311 = vpop.permute.xlu0 %6310
    %6312 = vrot.lane.b32.xlu0 %v6022, 32
    %v6313 = vpop.permute.xlu0 %6312
    %6318 = vrot.lane.b32.xlu0 %v5887, 48
    %v6319 = vpop.permute.xlu0 %6318
    %6320 = vrot.lane.b32.xlu0 %v6023, 48
    %v6321 = vpop.permute.xlu0 %6320
    %6326 = vrot.lane.b32.xlu0 %v5888, 64
    %v6327 = vpop.permute.xlu0 %6326
    %6328 = vrot.lane.b32.xlu0 %v6024, 64
    %v6329 = vpop.permute.xlu0 %6328
    %6334 = vrot.lane.b32.xlu0 %v5889, 80
    %v6335 = vpop.permute.xlu0 %6334
    %6336 = vrot.lane.b32.xlu0 %v6025, 80
    %v6337 = vpop.permute.xlu0 %6336
    %6342 = vrot.lane.b32.xlu0 %v5890, 96
    %v6343 = vpop.permute.xlu0 %6342
    %6344 = vrot.lane.b32.xlu0 %v6026, 96
    %v6345 = vpop.permute.xlu0 %6344
    %6350 = vrot.lane.b32.xlu0 %v5891, 112
    %v6351 = vpop.permute.xlu0 %6350
    %6352 = vrot.lane.b32.xlu0 %v6027, 112
    %v6353 = vpop.permute.xlu0 %6352
    %6358 = vrot.lane.b32.xlu0 %v6157, 16
    %v6359 = vpop.permute.xlu0 %6358
    %6360 = vrot.lane.b32.xlu0 %v6293, 16
    %v6361 = vpop.permute.xlu0 %6360
    %6366 = vrot.lane.b32.xlu0 %v6158, 32
    %v6367 = vpop.permute.xlu0 %6366
    %6368 = vrot.lane.b32.xlu0 %v6294, 32
    %v6369 = vpop.permute.xlu0 %6368
    %6374 = vrot.lane.b32.xlu0 %v6159, 48
    %v6375 = vpop.permute.xlu0 %6374
    %6376 = vrot.lane.b32.xlu0 %v6295, 48
    %v6377 = vpop.permute.xlu0 %6376
    %6382 = vrot.lane.b32.xlu0 %v6160, 64
    %v6383 = vpop.permute.xlu0 %6382
    %6384 = vrot.lane.b32.xlu0 %v6296, 64
    %v6385 = vpop.permute.xlu0 %6384
    %6390 = vrot.lane.b32.xlu0 %v6161, 80
    %v6391 = vpop.permute.xlu0 %6390
    %6392 = vrot.lane.b32.xlu0 %v6297, 80
    %v6393 = vpop.permute.xlu0 %6392
    %6398 = vrot.lane.b32.xlu0 %v6162, 96
    %v6399 = vpop.permute.xlu0 %6398
    %6400 = vrot.lane.b32.xlu0 %v6298, 96
    %v6401 = vpop.permute.xlu0 %6400
    %6406 = vrot.lane.b32.xlu0 %v6163, 112
    %v6407 = vpop.permute.xlu0 %6406
    %6408 = vrot.lane.b32.xlu0 %v6299, 112
    %v6409 = vpop.permute.xlu0 %6408
    %vm6412 = vcmask 130048
    %v6413 = vsel %vm6412, %v5884, %v6303
    %v6414 = vsel %vm6412, %v6020, %v6305
    %v6415 = vsel %vm46, %v6413, %v6311
    %v6416 = vsel %vm46, %v6414, %v6313
    %vm6417 = vcmask 392192
    %v6418 = vsel %vm6417, %v6415, %v6319
    %v6419 = vsel %vm6417, %v6416, %v6321
    %vm6420 = vcmask 523264
    %v6421 = vsel %vm6420, %v6418, %v6327
    %v6422 = vsel %vm6420, %v6419, %v6329
    %vm6423 = vcmask 654336
    %v6424 = vsel %vm6423, %v6421, %v6335
    %v6425 = vsel %vm6423, %v6422, %v6337
    %vm6426 = vcmask 785408
    %v6427 = vsel %vm6426, %v6424, %v6343
    %v6428 = vsel %vm6426, %v6425, %v6345
    %vm6429 = vcmask 916480
    %v6430 = vsel %vm6429, %v6427, %v6351
    %v6431 = vsel %vm6429, %v6428, %v6353
    %v6432 = vsel %vm6412, %v6156, %v6359
    %v6433 = vsel %vm6412, %v6292, %v6361
    %v6434 = vsel %vm46, %v6432, %v6367
    %v6435 = vsel %vm46, %v6433, %v6369
    %v6436 = vsel %vm6417, %v6434, %v6375
    %v6437 = vsel %vm6417, %v6435, %v6377
    %v6438 = vsel %vm6420, %v6436, %v6383
    %v6439 = vsel %vm6420, %v6437, %v6385
    %v6440 = vsel %vm6423, %v6438, %v6391
    %v6441 = vsel %vm6423, %v6439, %v6393
    %v6442 = vsel %vm6426, %v6440, %v6399
    %v6443 = vsel %vm6426, %v6441, %v6401
    %v6444 = vsel %vm6429, %v6442, %v6407
    %v6445 = vsel %vm6429, %v6443, %v6409
    %6446 = vst [vmem:[%s9] sm:$0xff] %v6430
    %6447 = vst [vmem:[%s9 + $0x8] sm:$0xff] %v6444
    %6448 = vst [vmem:[%s9 + $0x10] sm:$0xff] %v6431
    %6449 = vst [vmem:[%s9 + $0x18] sm:$0xff] %v6445
    %v6450 = vsel %vm6412, %v4443, -inf
    %6451 = vmax.xlane.f32.xlu0 %v6450
    %v6452 = vpop.xlane.xlu0 %6451
    %v6453 = vsel %vm6412, %v4448, -inf
    %6454 = vmax.xlane.f32.xlu0 %v6453
    %v6455 = vpop.xlane.xlu0 %6454
    %v6456 = vsel %vm6412, %v4530, -inf
    %6457 = vmax.xlane.f32.xlu0 %v6456
    %v6458 = vpop.xlane.xlu0 %6457
    %v6459 = vsel %vm6412, %v4535, -inf
    %6460 = vmax.xlane.f32.xlu0 %v6459
    %v6461 = vpop.xlane.xlu0 %6460
    %v6462 = vsel %vm6412, %v4617, -inf
    %6463 = vmax.xlane.f32.xlu0 %v6462
    %v6464 = vpop.xlane.xlu0 %6463
    %v6465 = vsel %vm6412, %v4622, -inf
    %6466 = vmax.xlane.f32.xlu0 %v6465
    %v6467 = vpop.xlane.xlu0 %6466
    %v6468 = vsel %vm6412, %v4704, -inf
    %6469 = vmax.xlane.f32.xlu0 %v6468
    %v6470 = vpop.xlane.xlu0 %6469
    %v6471 = vsel %vm6412, %v4709, -inf
    %6472 = vmax.xlane.f32.xlu0 %v6471
    %v6473 = vpop.xlane.xlu0 %6472
    %v6474 = vsel %vm6412, %v4791, -inf
    %6475 = vmax.xlane.f32.xlu0 %v6474
    %v6476 = vpop.xlane.xlu0 %6475
    %v6477 = vsel %vm6412, %v4796, -inf
    %6478 = vmax.xlane.f32.xlu0 %v6477
    %v6479 = vpop.xlane.xlu0 %6478
    %v6480 = vsel %vm6412, %v4878, -inf
    %6481 = vmax.xlane.f32.xlu0 %v6480
    %v6482 = vpop.xlane.xlu0 %6481
    %v6483 = vsel %vm6412, %v4883, -inf
    %6484 = vmax.xlane.f32.xlu0 %v6483
    %v6485 = vpop.xlane.xlu0 %6484
    %v6486 = vsel %vm6412, %v4965, -inf
    %6487 = vmax.xlane.f32.xlu0 %v6486
    %v6488 = vpop.xlane.xlu0 %6487
    %v6489 = vsel %vm6412, %v4970, -inf
    %6490 = vmax.xlane.f32.xlu0 %v6489
    %v6491 = vpop.xlane.xlu0 %6490
    %v6492 = vsel %vm6412, %v5052, -inf
    %6493 = vmax.xlane.f32.xlu0 %v6492
    %v6494 = vpop.xlane.xlu0 %6493
    %v6495 = vsel %vm6412, %v5057, -inf
    %6496 = vmax.xlane.f32.xlu0 %v6495
    %v6497 = vpop.xlane.xlu0 %6496
    %v6498 = vsel %vm6412, %v5139, -inf
    %6499 = vmax.xlane.f32.xlu0 %v6498
    %v6500 = vpop.xlane.xlu0 %6499
    %v6501 = vsel %vm6412, %v5144, -inf
    %6502 = vmax.xlane.f32.xlu0 %v6501
    %v6503 = vpop.xlane.xlu0 %6502
    %v6504 = vsel %vm6412, %v5226, -inf
    %6505 = vmax.xlane.f32.xlu0 %v6504
    %v6506 = vpop.xlane.xlu0 %6505
    %v6507 = vsel %vm6412, %v5231, -inf
    %6508 = vmax.xlane.f32.xlu0 %v6507
    %v6509 = vpop.xlane.xlu0 %6508
    %v6510 = vsel %vm6412, %v5313, -inf
    %6511 = vmax.xlane.f32.xlu0 %v6510
    %v6512 = vpop.xlane.xlu0 %6511
    %v6513 = vsel %vm6412, %v5318, -inf
    %6514 = vmax.xlane.f32.xlu0 %v6513
    %v6515 = vpop.xlane.xlu0 %6514
    %v6516 = vsel %vm6412, %v5400, -inf
    %6517 = vmax.xlane.f32.xlu0 %v6516
    %v6518 = vpop.xlane.xlu0 %6517
    %v6519 = vsel %vm6412, %v5405, -inf
    %6520 = vmax.xlane.f32.xlu0 %v6519
    %v6521 = vpop.xlane.xlu0 %6520
    %v6522 = vsel %vm6412, %v5487, -inf
    %6523 = vmax.xlane.f32.xlu0 %v6522
    %v6524 = vpop.xlane.xlu0 %6523
    %v6525 = vsel %vm6412, %v5492, -inf
    %6526 = vmax.xlane.f32.xlu0 %v6525
    %v6527 = vpop.xlane.xlu0 %6526
    %v6528 = vsel %vm6412, %v5574, -inf
    %6529 = vmax.xlane.f32.xlu0 %v6528
    %v6530 = vpop.xlane.xlu0 %6529
    %v6531 = vsel %vm6412, %v5579, -inf
    %6532 = vmax.xlane.f32.xlu0 %v6531
    %v6533 = vpop.xlane.xlu0 %6532
    %v6534 = vsel %vm6412, %v5661, -inf
    %6535 = vmax.xlane.f32.xlu0 %v6534
    %v6536 = vpop.xlane.xlu0 %6535
    %v6537 = vsel %vm6412, %v5666, -inf
    %6538 = vmax.xlane.f32.xlu0 %v6537
    %v6539 = vpop.xlane.xlu0 %6538
    %v6540 = vsel %vm6412, %v5748, -inf
    %6541 = vmax.xlane.f32.xlu0 %v6540
    %v6542 = vpop.xlane.xlu0 %6541
    %v6543 = vsel %vm6412, %v5753, -inf
    %6544 = vmax.xlane.f32.xlu0 %v6543
    %v6545 = vpop.xlane.xlu0 %6544
    %v6546 = vsub.f32 %v4443, %v6452
    %v6547 = vsub.f32 %v4448, %v6455
    %v6548 = vsub.f32 %v4530, %v6458
    %v6549 = vsub.f32 %v4535, %v6461
    %v6550 = vsub.f32 %v4617, %v6464
    %v6551 = vsub.f32 %v4622, %v6467
    %v6552 = vsub.f32 %v4704, %v6470
    %v6553 = vsub.f32 %v4709, %v6473
    %v6554 = vsub.f32 %v4791, %v6476
    %v6555 = vsub.f32 %v4796, %v6479
    %v6556 = vsub.f32 %v4878, %v6482
    %v6557 = vsub.f32 %v4883, %v6485
    %v6558 = vsub.f32 %v4965, %v6488
    %v6559 = vsub.f32 %v4970, %v6491
    %v6560 = vsub.f32 %v5052, %v6494
    %v6561 = vsub.f32 %v5057, %v6497
    %v6562 = vsub.f32 %v5139, %v6500
    %v6563 = vsub.f32 %v5144, %v6503
    %v6564 = vsub.f32 %v5226, %v6506
    %v6565 = vsub.f32 %v5231, %v6509
    %v6566 = vsub.f32 %v5313, %v6512
    %v6567 = vsub.f32 %v5318, %v6515
    %v6568 = vsub.f32 %v5400, %v6518
    %v6569 = vsub.f32 %v5405, %v6521
    %v6570 = vsub.f32 %v5487, %v6524
    %v6571 = vsub.f32 %v5492, %v6527
    %v6572 = vsub.f32 %v5574, %v6530
    %v6573 = vsub.f32 %v5579, %v6533
    %v6574 = vsub.f32 %v5661, %v6536
    %v6575 = vsub.f32 %v5666, %v6539
    %v6576 = vsub.f32 %v5748, %v6542
    %v6577 = vsub.f32 %v5753, %v6545
    %v6578 = vmul.f32 %v6546, 1.442695
    %v6579 = vpow.pop %v6578
    %v6580 = vmul.f32 %v6547, 1.442695
    %v6581 = vpow.pop %v6580
    %v6582 = vmul.f32 %v6548, 1.442695
    %v6583 = vpow.pop %v6582
    %v6584 = vmul.f32 %v6549, 1.442695
    %v6585 = vpow.pop %v6584
    %v6586 = vmul.f32 %v6550, 1.442695
    %v6587 = vpow.pop %v6586
    %v6588 = vmul.f32 %v6551, 1.442695
    %v6589 = vpow.pop %v6588
    %v6590 = vmul.f32 %v6552, 1.442695
    %v6591 = vpow.pop %v6590
    %v6592 = vmul.f32 %v6553, 1.442695
    %v6593 = vpow.pop %v6592
    %v6594 = vmul.f32 %v6554, 1.442695
    %v6595 = vpow.pop %v6594
    %v6596 = vmul.f32 %v6555, 1.442695
    %v6597 = vpow.pop %v6596
    %v6598 = vmul.f32 %v6556, 1.442695
    %v6599 = vpow.pop %v6598
    %v6600 = vmul.f32 %v6557, 1.442695
    %v6601 = vpow.pop %v6600
    %v6602 = vmul.f32 %v6558, 1.442695
    %v6603 = vpow.pop %v6602
    %v6604 = vmul.f32 %v6559, 1.442695
    %v6605 = vpow.pop %v6604
    %v6606 = vmul.f32 %v6560, 1.442695
    %v6607 = vpow.pop %v6606
    %v6608 = vmul.f32 %v6561, 1.442695
    %v6609 = vpow.pop %v6608
    %v6610 = vmul.f32 %v6562, 1.442695
    %v6611 = vpow.pop %v6610
    %v6612 = vmul.f32 %v6563, 1.442695
    %v6613 = vpow.pop %v6612
    %v6614 = vmul.f32 %v6564, 1.442695
    %v6615 = vpow.pop %v6614
    %v6616 = vmul.f32 %v6565, 1.442695
    %v6617 = vpow.pop %v6616
    %v6618 = vmul.f32 %v6566, 1.442695
    %v6619 = vpow.pop %v6618
    %v6620 = vmul.f32 %v6567, 1.442695
    %v6621 = vpow.pop %v6620
    %v6622 = vmul.f32 %v6568, 1.442695
    %v6623 = vpow.pop %v6622
    %v6624 = vmul.f32 %v6569, 1.442695
    %v6625 = vpow.pop %v6624
    %v6626 = vmul.f32 %v6570, 1.442695
    %v6627 = vpow.pop %v6626
    %v6628 = vmul.f32 %v6571, 1.442695
    %v6629 = vpow.pop %v6628
    %v6630 = vmul.f32 %v6572, 1.442695
    %v6631 = vpow.pop %v6630
    %v6632 = vmul.f32 %v6573, 1.442695
    %v6633 = vpow.pop %v6632
    %v6634 = vmul.f32 %v6574, 1.442695
    %v6635 = vpow.pop %v6634
    %v6636 = vmul.f32 %v6575, 1.442695
    %v6637 = vpow.pop %v6636
    %v6638 = vmul.f32 %v6576, 1.442695
    %v6639 = vpow.pop %v6638
    %v6640 = vmul.f32 %v6577, 1.442695
    %v6641 = vpow.pop %v6640
    %v6642 = vsel %vm6412, %v6579, 0.0
    %6643 = vadd.xlane.f32.xlu0 %v6642
    %v6644 = vpop.xlane.xlu0 %6643
    %v6645 = vsel %vm6412, %v6581, 0.0
    %6646 = vadd.xlane.f32.xlu0 %v6645
    %v6647 = vpop.xlane.xlu0 %6646
    %v6648 = vsel %vm6412, %v6583, 0.0
    %6649 = vadd.xlane.f32.xlu0 %v6648
    %v6650 = vpop.xlane.xlu0 %6649
    %v6651 = vsel %vm6412, %v6585, 0.0
    %6652 = vadd.xlane.f32.xlu0 %v6651
    %v6653 = vpop.xlane.xlu0 %6652
    %v6654 = vsel %vm6412, %v6587, 0.0
    %6655 = vadd.xlane.f32.xlu0 %v6654
    %v6656 = vpop.xlane.xlu0 %6655
    %v6657 = vsel %vm6412, %v6589, 0.0
    %6658 = vadd.xlane.f32.xlu0 %v6657
    %v6659 = vpop.xlane.xlu0 %6658
    %v6660 = vsel %vm6412, %v6591, 0.0
    %6661 = vadd.xlane.f32.xlu0 %v6660
    %v6662 = vpop.xlane.xlu0 %6661
    %v6663 = vsel %vm6412, %v6593, 0.0
    %6664 = vadd.xlane.f32.xlu0 %v6663
    %v6665 = vpop.xlane.xlu0 %6664
    %v6666 = vsel %vm6412, %v6595, 0.0
    %6667 = vadd.xlane.f32.xlu0 %v6666
    %v6668 = vpop.xlane.xlu0 %6667
    %v6669 = vsel %vm6412, %v6597, 0.0
    %6670 = vadd.xlane.f32.xlu0 %v6669
    %v6671 = vpop.xlane.xlu0 %6670
    %v6672 = vsel %vm6412, %v6599, 0.0
    %6673 = vadd.xlane.f32.xlu0 %v6672
    %v6674 = vpop.xlane.xlu0 %6673
    %v6675 = vsel %vm6412, %v6601, 0.0
    %6676 = vadd.xlane.f32.xlu0 %v6675
    %v6677 = vpop.xlane.xlu0 %6676
    %v6678 = vsel %vm6412, %v6603, 0.0
    %6679 = vadd.xlane.f32.xlu0 %v6678
    %v6680 = vpop.xlane.xlu0 %6679
    %v6681 = vsel %vm6412, %v6605, 0.0
    %6682 = vadd.xlane.f32.xlu0 %v6681
    %v6683 = vpop.xlane.xlu0 %6682
    %v6684 = vsel %vm6412, %v6607, 0.0
    %6685 = vadd.xlane.f32.xlu0 %v6684
    %v6686 = vpop.xlane.xlu0 %6685
    %v6687 = vsel %vm6412, %v6609, 0.0
    %6688 = vadd.xlane.f32.xlu0 %v6687
    %v6689 = vpop.xlane.xlu0 %6688
    %v6690 = vsel %vm6412, %v6611, 0.0
    %6691 = vadd.xlane.f32.xlu0 %v6690
    %v6692 = vpop.xlane.xlu0 %6691
    %v6693 = vsel %vm6412, %v6613, 0.0
    %6694 = vadd.xlane.f32.xlu0 %v6693
    %v6695 = vpop.xlane.xlu0 %6694
    %v6696 = vsel %vm6412, %v6615, 0.0
    %6697 = vadd.xlane.f32.xlu0 %v6696
    %v6698 = vpop.xlane.xlu0 %6697
    %v6699 = vsel %vm6412, %v6617, 0.0
    %6700 = vadd.xlane.f32.xlu0 %v6699
    %v6701 = vpop.xlane.xlu0 %6700
    %v6702 = vsel %vm6412, %v6619, 0.0
    %6703 = vadd.xlane.f32.xlu0 %v6702
    %v6704 = vpop.xlane.xlu0 %6703
    %v6705 = vsel %vm6412, %v6621, 0.0
    %6706 = vadd.xlane.f32.xlu0 %v6705
    %v6707 = vpop.xlane.xlu0 %6706
    %v6708 = vsel %vm6412, %v6623, 0.0
    %6709 = vadd.xlane.f32.xlu0 %v6708
    %v6710 = vpop.xlane.xlu0 %6709
    %v6711 = vsel %vm6412, %v6625, 0.0
    %6712 = vadd.xlane.f32.xlu0 %v6711
    %v6713 = vpop.xlane.xlu0 %6712
    %v6714 = vsel %vm6412, %v6627, 0.0
    %6715 = vadd.xlane.f32.xlu0 %v6714
    %v6716 = vpop.xlane.xlu0 %6715
    %v6717 = vsel %vm6412, %v6629, 0.0
    %6718 = vadd.xlane.f32.xlu0 %v6717
    %v6719 = vpop.xlane.xlu0 %6718
    %v6720 = vsel %vm6412, %v6631, 0.0
    %6721 = vadd.xlane.f32.xlu0 %v6720
    %v6722 = vpop.xlane.xlu0 %6721
    %v6723 = vsel %vm6412, %v6633, 0.0
    %6724 = vadd.xlane.f32.xlu0 %v6723
    %v6725 = vpop.xlane.xlu0 %6724
    %v6726 = vsel %vm6412, %v6635, 0.0
    %6727 = vadd.xlane.f32.xlu0 %v6726
    %v6728 = vpop.xlane.xlu0 %6727
    %v6729 = vsel %vm6412, %v6637, 0.0
    %6730 = vadd.xlane.f32.xlu0 %v6729
    %v6731 = vpop.xlane.xlu0 %6730
    %v6732 = vsel %vm6412, %v6639, 0.0
    %6733 = vadd.xlane.f32.xlu0 %v6732
    %v6734 = vpop.xlane.xlu0 %6733
    %v6735 = vsel %vm6412, %v6641, 0.0
    %6736 = vadd.xlane.f32.xlu0 %v6735
    %v6737 = vpop.xlane.xlu0 %6736
    %v6738 = vrcp.pop %v6644
    %v6739 = vrcp.pop %v6647
    %v6740 = vrcp.pop %v6650
    %v6741 = vrcp.pop %v6653
    %v6742 = vrcp.pop %v6656
    %v6743 = vrcp.pop %v6659
    %v6744 = vrcp.pop %v6662
    %v6745 = vrcp.pop %v6665
    %v6746 = vrcp.pop %v6668
    %v6747 = vrcp.pop %v6671
    %v6748 = vrcp.pop %v6674
    %v6749 = vrcp.pop %v6677
    %v6750 = vrcp.pop %v6680
    %v6751 = vrcp.pop %v6683
    %v6752 = vrcp.pop %v6686
    %v6753 = vrcp.pop %v6689
    %v6754 = vrcp.pop %v6692
    %v6755 = vrcp.pop %v6695
    %v6756 = vrcp.pop %v6698
    %v6757 = vrcp.pop %v6701
    %v6758 = vrcp.pop %v6704
    %v6759 = vrcp.pop %v6707
    %v6760 = vrcp.pop %v6710
    %v6761 = vrcp.pop %v6713
    %v6762 = vrcp.pop %v6716
    %v6763 = vrcp.pop %v6719
    %v6764 = vrcp.pop %v6722
    %v6765 = vrcp.pop %v6725
    %v6766 = vrcp.pop %v6728
    %v6767 = vrcp.pop %v6731
    %v6768 = vrcp.pop %v6734
    %v6769 = vrcp.pop %v6737
    %v6770 = vmul.f32 %v6579, %v6738
    %v6771 = vmul.f32 %v6581, %v6739
    %v6772 = vmul.f32 %v6583, %v6740
    %v6773 = vmul.f32 %v6585, %v6741
    %v6774 = vmul.f32 %v6587, %v6742
    %v6775 = vmul.f32 %v6589, %v6743
    %v6776 = vmul.f32 %v6591, %v6744
    %v6777 = vmul.f32 %v6593, %v6745
    %v6778 = vmul.f32 %v6595, %v6746
    %v6779 = vmul.f32 %v6597, %v6747
    %v6780 = vmul.f32 %v6599, %v6748
    %v6781 = vmul.f32 %v6601, %v6749
    %v6782 = vmul.f32 %v6603, %v6750
    %v6783 = vmul.f32 %v6605, %v6751
    %v6784 = vmul.f32 %v6607, %v6752
    %v6785 = vmul.f32 %v6609, %v6753
    %v6786 = vmul.f32 %v6611, %v6754
    %v6787 = vmul.f32 %v6613, %v6755
    %v6788 = vmul.f32 %v6615, %v6756
    %v6789 = vmul.f32 %v6617, %v6757
    %v6790 = vmul.f32 %v6619, %v6758
    %v6791 = vmul.f32 %v6621, %v6759
    %v6792 = vmul.f32 %v6623, %v6760
    %v6793 = vmul.f32 %v6625, %v6761
    %v6794 = vmul.f32 %v6627, %v6762
    %v6795 = vmul.f32 %v6629, %v6763
    %v6796 = vmul.f32 %v6631, %v6764
    %v6797 = vmul.f32 %v6633, %v6765
    %v6798 = vmul.f32 %v6635, %v6766
    %v6799 = vmul.f32 %v6637, %v6767
    %v6800 = vmul.f32 %v6639, %v6768
    %v6801 = vmul.f32 %v6641, %v6769
    %v6803 = vsel %vm6412, %v6770, 0
    %v6806 = vsel %vm6412, %v6771, 0
    %6808 = vmatprep.subr.mxu0 0.0
    %6809 = vmatpush1.msra.mxu0 0.0
    %6810 = vmatprep.subr.mxu0 0.0
    %6811 = vmatpush1.msra.mxu0 0.0
    %6812 = vmatprep.subr.mxu0 0.0
    %6813 = vmatpush1.msra.mxu0 0.0
    %6814 = vmatprep.subr.mxu0 0.0
    %6815 = vmatpush1.msra.mxu0 0.0
    %6816 = vmatprep.subr.mxu0 0.0
    %6817 = vmatpush1.msra.mxu0 0.0
    %6818 = vmatprep.subr.mxu0 0.0
    %6819 = vmatpush1.msra.mxu0 0.0
    %6820 = vmatprep.subr.mxu0 0.0
    %6821 = vmatpush1.msra.mxu0 0.0
    %6822 = vmatprep.subr.mxu0 0.0
    %6823 = vmatpush1.msra.mxu0 0.0
    %6824 = vmatprep.subr.mxu0 0.0
    %6825 = vmatpush1.msra.mxu0 0.0
    %6826 = vmatprep.subr.mxu0 0.0
    %6827 = vmatpush1.msra.mxu0 0.0
    %6828 = vmatprep.subr.mxu0 0.0
    %6829 = vmatpush1.msra.mxu0 0.0
    %6830 = vmatprep.subr.mxu0 0.0
    %6831 = vmatpush1.msra.mxu0 0.0
    %6832 = vmatprep.subr.mxu0 0.0
    %6833 = vmatpush1.msra.mxu0 0.0
    %6834 = vmatprep.subr.mxu0 0.0
    %6835 = vmatpush1.msra.mxu0 0.0
    %6836 = vmatprep.subr.mxu0 0.0
    %6837 = vmatpush1.msra.mxu0 %v4083
    %6838 = vmatprep.subr.mxu0 0.0
    %6839 = vmatpush1.msra.mxu0 %v3947
    %6840 = vmatprep.subr.mxu0 0.0
    %6841 = vmatpush2.msra.mxu0 0.0
    %6842 = vmatprep.subr.mxu0 0.0
    %6843 = vmatpush2.msra.mxu0 0.0
    %6844 = vmatprep.subr.mxu0 0.0
    %6845 = vmatpush2.msra.mxu0 0.0
    %6846 = vmatprep.subr.mxu0 0.0
    %6847 = vmatpush2.msra.mxu0 0.0
    %6848 = vmatprep.subr.mxu0 0.0
    %6849 = vmatpush2.msra.mxu0 0.0
    %6850 = vmatprep.subr.mxu0 0.0
    %6851 = vmatpush2.msra.mxu0 0.0
    %6852 = vmatprep.subr.mxu0 0.0
    %6853 = vmatpush2.msra.mxu0 0.0
    %6854 = vmatprep.subr.mxu0 0.0
    %6855 = vmatpush2.msra.mxu0 0.0
    %6856 = vmatprep.subr.mxu0 0.0
    %6857 = vmatpush2.msra.mxu0 0.0
    %6858 = vmatprep.subr.mxu0 0.0
    %6859 = vmatpush2.msra.mxu0 0.0
    %6860 = vmatprep.subr.mxu0 0.0
    %6861 = vmatpush2.msra.mxu0 0.0
    %6862 = vmatprep.subr.mxu0 0.0
    %6863 = vmatpush2.msra.mxu0 0.0
    %6864 = vmatprep.subr.mxu0 0.0
    %6865 = vmatpush2.msra.mxu0 0.0
    %6866 = vmatprep.subr.mxu0 0.0
    %6867 = vmatpush2.msra.mxu0 0.0
    %6868 = vmatprep.subr.mxu0 0.0
    %6869 = vmatpush2.msra.mxu0 0.0
    %6870 = vmatprep.subr.mxu0 0.0
    %6871 = vmatpush2.msra.mxu0 0.0
    %6872 = vmatprep.mubr.f32.mxu0 0.0
    %6873 = vmatmul.mubr.f32.gmra.mxu0 %v6803
    %v6874 = vpop.f32.mrf.mxu0
    %v6875 = vadd.f32 0.0, %v6874
    %v6876 = vpop.f32.mrf.mxu0
    %6877 = vmatprep.mubr.f32.mxu0 0.0
    %6878 = vmatmul.mubr.f32.gmra.mxu0 %v6806
    %v6879 = vpop.f32.mrf.mxu0
    %v6880 = vadd.f32 0.0, %v6879
    %v6881 = vpop.f32.mrf.mxu0
    %6882 = vdwg.mxu0
    %v6884 = vsel %vm6412, %v6772, 0
    %v6887 = vsel %vm6412, %v6773, 0
    %6889 = vmatprep.subr.mxu0 0.0
    %6890 = vmatpush1.msra.mxu0 0.0
    %6891 = vmatprep.subr.mxu0 0.0
    %6892 = vmatpush1.msra.mxu0 0.0
    %6893 = vmatprep.subr.mxu0 0.0
    %6894 = vmatpush1.msra.mxu0 0.0
    %6895 = vmatprep.subr.mxu0 0.0
    %6896 = vmatpush1.msra.mxu0 0.0
    %6897 = vmatprep.subr.mxu0 0.0
    %6898 = vmatpush1.msra.mxu0 0.0
    %6899 = vmatprep.subr.mxu0 0.0
    %6900 = vmatpush1.msra.mxu0 0.0
    %6901 = vmatprep.subr.mxu0 0.0
    %6902 = vmatpush1.msra.mxu0 0.0
    %6903 = vmatprep.subr.mxu0 0.0
    %6904 = vmatpush1.msra.mxu0 0.0
    %6905 = vmatprep.subr.mxu0 0.0
    %6906 = vmatpush1.msra.mxu0 0.0
    %6907 = vmatprep.subr.mxu0 0.0
    %6908 = vmatpush1.msra.mxu0 0.0
    %6909 = vmatprep.subr.mxu0 0.0
    %6910 = vmatpush1.msra.mxu0 0.0
    %6911 = vmatprep.subr.mxu0 0.0
    %6912 = vmatpush1.msra.mxu0 0.0
    %6913 = vmatprep.subr.mxu0 0.0
    %6914 = vmatpush1.msra.mxu0 0.0
    %6915 = vmatprep.subr.mxu0 0.0
    %6916 = vmatpush1.msra.mxu0 0.0
    %6917 = vmatprep.subr.mxu0 0.0
    %6918 = vmatpush1.msra.mxu0 %v4084
    %6919 = vmatprep.subr.mxu0 0.0
    %6920 = vmatpush1.msra.mxu0 %v3948
    %6921 = vmatprep.subr.mxu0 0.0
    %6922 = vmatpush2.msra.mxu0 0.0
    %6923 = vmatprep.subr.mxu0 0.0
    %6924 = vmatpush2.msra.mxu0 0.0
    %6925 = vmatprep.subr.mxu0 0.0
    %6926 = vmatpush2.msra.mxu0 0.0
    %6927 = vmatprep.subr.mxu0 0.0
    %6928 = vmatpush2.msra.mxu0 0.0
    %6929 = vmatprep.subr.mxu0 0.0
    %6930 = vmatpush2.msra.mxu0 0.0
    %6931 = vmatprep.subr.mxu0 0.0
    %6932 = vmatpush2.msra.mxu0 0.0
    %6933 = vmatprep.subr.mxu0 0.0
    %6934 = vmatpush2.msra.mxu0 0.0
    %6935 = vmatprep.subr.mxu0 0.0
    %6936 = vmatpush2.msra.mxu0 0.0
    %6937 = vmatprep.subr.mxu0 0.0
    %6938 = vmatpush2.msra.mxu0 0.0
    %6939 = vmatprep.subr.mxu0 0.0
    %6940 = vmatpush2.msra.mxu0 0.0
    %6941 = vmatprep.subr.mxu0 0.0
    %6942 = vmatpush2.msra.mxu0 0.0
    %6943 = vmatprep.subr.mxu0 0.0
    %6944 = vmatpush2.msra.mxu0 0.0
    %6945 = vmatprep.subr.mxu0 0.0
    %6946 = vmatpush2.msra.mxu0 0.0
    %6947 = vmatprep.subr.mxu0 0.0
    %6948 = vmatpush2.msra.mxu0 0.0
    %6949 = vmatprep.subr.mxu0 0.0
    %6950 = vmatpush2.msra.mxu0 0.0
    %6951 = vmatprep.subr.mxu0 0.0
    %6952 = vmatpush2.msra.mxu0 0.0
    %6953 = vmatprep.mubr.f32.mxu0 0.0
    %6954 = vmatmul.mubr.f32.gmra.mxu0 %v6884
    %v6955 = vpop.f32.mrf.mxu0
    %v6956 = vadd.f32 0.0, %v6955
    %v6957 = vpop.f32.mrf.mxu0
    %6958 = vmatprep.mubr.f32.mxu0 0.0
    %6959 = vmatmul.mubr.f32.gmra.mxu0 %v6887
    %v6960 = vpop.f32.mrf.mxu0
    %v6961 = vadd.f32 0.0, %v6960
    %v6962 = vpop.f32.mrf.mxu0
    %6963 = vdwg.mxu0
    %v6965 = vsel %vm6412, %v6774, 0
    %v6968 = vsel %vm6412, %v6775, 0
    %6970 = vmatprep.subr.mxu0 0.0
    %6971 = vmatpush1.msra.mxu0 0.0
    %6972 = vmatprep.subr.mxu0 0.0
    %6973 = vmatpush1.msra.mxu0 0.0
    %6974 = vmatprep.subr.mxu0 0.0
    %6975 = vmatpush1.msra.mxu0 0.0
    %6976 = vmatprep.subr.mxu0 0.0
    %6977 = vmatpush1.msra.mxu0 0.0
    %6978 = vmatprep.subr.mxu0 0.0
    %6979 = vmatpush1.msra.mxu0 0.0
    %6980 = vmatprep.subr.mxu0 0.0
    %6981 = vmatpush1.msra.mxu0 0.0
    %6982 = vmatprep.subr.mxu0 0.0
    %6983 = vmatpush1.msra.mxu0 0.0
    %6984 = vmatprep.subr.mxu0 0.0
    %6985 = vmatpush1.msra.mxu0 0.0
    %6986 = vmatprep.subr.mxu0 0.0
    %6987 = vmatpush1.msra.mxu0 0.0
    %6988 = vmatprep.subr.mxu0 0.0
    %6989 = vmatpush1.msra.mxu0 0.0
    %6990 = vmatprep.subr.mxu0 0.0
    %6991 = vmatpush1.msra.mxu0 0.0
    %6992 = vmatprep.subr.mxu0 0.0
    %6993 = vmatpush1.msra.mxu0 0.0
    %6994 = vmatprep.subr.mxu0 0.0
    %6995 = vmatpush1.msra.mxu0 0.0
    %6996 = vmatprep.subr.mxu0 0.0
    %6997 = vmatpush1.msra.mxu0 0.0
    %6998 = vmatprep.subr.mxu0 0.0
    %6999 = vmatpush1.msra.mxu0 %v4085
    %7000 = vmatprep.subr.mxu0 0.0
    %7001 = vmatpush1.msra.mxu0 %v3949
    %7002 = vmatprep.subr.mxu0 0.0
    %7003 = vmatpush2.msra.mxu0 0.0
    %7004 = vmatprep.subr.mxu0 0.0
    %7005 = vmatpush2.msra.mxu0 0.0
    %7006 = vmatprep.subr.mxu0 0.0
    %7007 = vmatpush2.msra.mxu0 0.0
    %7008 = vmatprep.subr.mxu0 0.0
    %7009 = vmatpush2.msra.mxu0 0.0
    %7010 = vmatprep.subr.mxu0 0.0
    %7011 = vmatpush2.msra.mxu0 0.0
    %7012 = vmatprep.subr.mxu0 0.0
    %7013 = vmatpush2.msra.mxu0 0.0
    %7014 = vmatprep.subr.mxu0 0.0
    %7015 = vmatpush2.msra.mxu0 0.0
    %7016 = vmatprep.subr.mxu0 0.0
    %7017 = vmatpush2.msra.mxu0 0.0
    %7018 = vmatprep.subr.mxu0 0.0
    %7019 = vmatpush2.msra.mxu0 0.0
    %7020 = vmatprep.subr.mxu0 0.0
    %7021 = vmatpush2.msra.mxu0 0.0
    %7022 = vmatprep.subr.mxu0 0.0
    %7023 = vmatpush2.msra.mxu0 0.0
    %7024 = vmatprep.subr.mxu0 0.0
    %7025 = vmatpush2.msra.mxu0 0.0
    %7026 = vmatprep.subr.mxu0 0.0
    %7027 = vmatpush2.msra.mxu0 0.0
    %7028 = vmatprep.subr.mxu0 0.0
    %7029 = vmatpush2.msra.mxu0 0.0
    %7030 = vmatprep.subr.mxu0 0.0
    %7031 = vmatpush2.msra.mxu0 0.0
    %7032 = vmatprep.subr.mxu0 0.0
    %7033 = vmatpush2.msra.mxu0 0.0
    %7034 = vmatprep.mubr.f32.mxu0 0.0
    %7035 = vmatmul.mubr.f32.gmra.mxu0 %v6965
    %v7036 = vpop.f32.mrf.mxu0
    %v7037 = vadd.f32 0.0, %v7036
    %v7038 = vpop.f32.mrf.mxu0
    %7039 = vmatprep.mubr.f32.mxu0 0.0
    %7040 = vmatmul.mubr.f32.gmra.mxu0 %v6968
    %v7041 = vpop.f32.mrf.mxu0
    %v7042 = vadd.f32 0.0, %v7041
    %v7043 = vpop.f32.mrf.mxu0
    %7044 = vdwg.mxu0
    %v7046 = vsel %vm6412, %v6776, 0
    %v7049 = vsel %vm6412, %v6777, 0
    %7051 = vmatprep.subr.mxu0 0.0
    %7052 = vmatpush1.msra.mxu0 0.0
    %7053 = vmatprep.subr.mxu0 0.0
    %7054 = vmatpush1.msra.mxu0 0.0
    %7055 = vmatprep.subr.mxu0 0.0
    %7056 = vmatpush1.msra.mxu0 0.0
    %7057 = vmatprep.subr.mxu0 0.0
    %7058 = vmatpush1.msra.mxu0 0.0
    %7059 = vmatprep.subr.mxu0 0.0
    %7060 = vmatpush1.msra.mxu0 0.0
    %7061 = vmatprep.subr.mxu0 0.0
    %7062 = vmatpush1.msra.mxu0 0.0
    %7063 = vmatprep.subr.mxu0 0.0
    %7064 = vmatpush1.msra.mxu0 0.0
    %7065 = vmatprep.subr.mxu0 0.0
    %7066 = vmatpush1.msra.mxu0 0.0
    %7067 = vmatprep.subr.mxu0 0.0
    %7068 = vmatpush1.msra.mxu0 0.0
    %7069 = vmatprep.subr.mxu0 0.0
    %7070 = vmatpush1.msra.mxu0 0.0
    %7071 = vmatprep.subr.mxu0 0.0
    %7072 = vmatpush1.msra.mxu0 0.0
    %7073 = vmatprep.subr.mxu0 0.0
    %7074 = vmatpush1.msra.mxu0 0.0
    %7075 = vmatprep.subr.mxu0 0.0
    %7076 = vmatpush1.msra.mxu0 0.0
    %7077 = vmatprep.subr.mxu0 0.0
    %7078 = vmatpush1.msra.mxu0 0.0
    %7079 = vmatprep.subr.mxu0 0.0
    %7080 = vmatpush1.msra.mxu0 %v4086
    %7081 = vmatprep.subr.mxu0 0.0
    %7082 = vmatpush1.msra.mxu0 %v3950
    %7083 = vmatprep.subr.mxu0 0.0
    %7084 = vmatpush2.msra.mxu0 0.0
    %7085 = vmatprep.subr.mxu0 0.0
    %7086 = vmatpush2.msra.mxu0 0.0
    %7087 = vmatprep.subr.mxu0 0.0
    %7088 = vmatpush2.msra.mxu0 0.0
    %7089 = vmatprep.subr.mxu0 0.0
    %7090 = vmatpush2.msra.mxu0 0.0
    %7091 = vmatprep.subr.mxu0 0.0
    %7092 = vmatpush2.msra.mxu0 0.0
    %7093 = vmatprep.subr.mxu0 0.0
    %7094 = vmatpush2.msra.mxu0 0.0
    %7095 = vmatprep.subr.mxu0 0.0
    %7096 = vmatpush2.msra.mxu0 0.0
    %7097 = vmatprep.subr.mxu0 0.0
    %7098 = vmatpush2.msra.mxu0 0.0
    %7099 = vmatprep.subr.mxu0 0.0
    %7100 = vmatpush2.msra.mxu0 0.0
    %7101 = vmatprep.subr.mxu0 0.0
    %7102 = vmatpush2.msra.mxu0 0.0
    %7103 = vmatprep.subr.mxu0 0.0
    %7104 = vmatpush2.msra.mxu0 0.0
    %7105 = vmatprep.subr.mxu0 0.0
    %7106 = vmatpush2.msra.mxu0 0.0
    %7107 = vmatprep.subr.mxu0 0.0
    %7108 = vmatpush2.msra.mxu0 0.0
    %7109 = vmatprep.subr.mxu0 0.0
    %7110 = vmatpush2.msra.mxu0 0.0
    %7111 = vmatprep.subr.mxu0 0.0
    %7112 = vmatpush2.msra.mxu0 0.0
    %7113 = vmatprep.subr.mxu0 0.0
    %7114 = vmatpush2.msra.mxu0 0.0
    %7115 = vmatprep.mubr.f32.mxu0 0.0
    %7116 = vmatmul.mubr.f32.gmra.mxu0 %v7046
    %v7117 = vpop.f32.mrf.mxu0
    %v7118 = vadd.f32 0.0, %v7117
    %v7119 = vpop.f32.mrf.mxu0
    %7120 = vmatprep.mubr.f32.mxu0 0.0
    %7121 = vmatmul.mubr.f32.gmra.mxu0 %v7049
    %v7122 = vpop.f32.mrf.mxu0
    %v7123 = vadd.f32 0.0, %v7122
    %v7124 = vpop.f32.mrf.mxu0
    %7125 = vdwg.mxu0
    %v7127 = vsel %vm6412, %v6778, 0
    %v7130 = vsel %vm6412, %v6779, 0
    %7132 = vmatprep.subr.mxu0 0.0
    %7133 = vmatpush1.msra.mxu0 0.0
    %7134 = vmatprep.subr.mxu0 0.0
    %7135 = vmatpush1.msra.mxu0 0.0
    %7136 = vmatprep.subr.mxu0 0.0
    %7137 = vmatpush1.msra.mxu0 0.0
    %7138 = vmatprep.subr.mxu0 0.0
    %7139 = vmatpush1.msra.mxu0 0.0
    %7140 = vmatprep.subr.mxu0 0.0
    %7141 = vmatpush1.msra.mxu0 0.0
    %7142 = vmatprep.subr.mxu0 0.0
    %7143 = vmatpush1.msra.mxu0 0.0
    %7144 = vmatprep.subr.mxu0 0.0
    %7145 = vmatpush1.msra.mxu0 0.0
    %7146 = vmatprep.subr.mxu0 0.0
    %7147 = vmatpush1.msra.mxu0 0.0
    %7148 = vmatprep.subr.mxu0 0.0
    %7149 = vmatpush1.msra.mxu0 0.0
    %7150 = vmatprep.subr.mxu0 0.0
    %7151 = vmatpush1.msra.mxu0 0.0
    %7152 = vmatprep.subr.mxu0 0.0
    %7153 = vmatpush1.msra.mxu0 0.0
    %7154 = vmatprep.subr.mxu0 0.0
    %7155 = vmatpush1.msra.mxu0 0.0
    %7156 = vmatprep.subr.mxu0 0.0
    %7157 = vmatpush1.msra.mxu0 0.0
    %7158 = vmatprep.subr.mxu0 0.0
    %7159 = vmatpush1.msra.mxu0 0.0
    %7160 = vmatprep.subr.mxu0 0.0
    %7161 = vmatpush1.msra.mxu0 %v4087
    %7162 = vmatprep.subr.mxu0 0.0
    %7163 = vmatpush1.msra.mxu0 %v3951
    %7164 = vmatprep.subr.mxu0 0.0
    %7165 = vmatpush2.msra.mxu0 0.0
    %7166 = vmatprep.subr.mxu0 0.0
    %7167 = vmatpush2.msra.mxu0 0.0
    %7168 = vmatprep.subr.mxu0 0.0
    %7169 = vmatpush2.msra.mxu0 0.0
    %7170 = vmatprep.subr.mxu0 0.0
    %7171 = vmatpush2.msra.mxu0 0.0
    %7172 = vmatprep.subr.mxu0 0.0
    %7173 = vmatpush2.msra.mxu0 0.0
    %7174 = vmatprep.subr.mxu0 0.0
    %7175 = vmatpush2.msra.mxu0 0.0
    %7176 = vmatprep.subr.mxu0 0.0
    %7177 = vmatpush2.msra.mxu0 0.0
    %7178 = vmatprep.subr.mxu0 0.0
    %7179 = vmatpush2.msra.mxu0 0.0
    %7180 = vmatprep.subr.mxu0 0.0
    %7181 = vmatpush2.msra.mxu0 0.0
    %7182 = vmatprep.subr.mxu0 0.0
    %7183 = vmatpush2.msra.mxu0 0.0
    %7184 = vmatprep.subr.mxu0 0.0
    %7185 = vmatpush2.msra.mxu0 0.0
    %7186 = vmatprep.subr.mxu0 0.0
    %7187 = vmatpush2.msra.mxu0 0.0
    %7188 = vmatprep.subr.mxu0 0.0
    %7189 = vmatpush2.msra.mxu0 0.0
    %7190 = vmatprep.subr.mxu0 0.0
    %7191 = vmatpush2.msra.mxu0 0.0
    %7192 = vmatprep.subr.mxu0 0.0
    %7193 = vmatpush2.msra.mxu0 0.0
    %7194 = vmatprep.subr.mxu0 0.0
    %7195 = vmatpush2.msra.mxu0 0.0
    %7196 = vmatprep.mubr.f32.mxu0 0.0
    %7197 = vmatmul.mubr.f32.gmra.mxu0 %v7127
    %v7198 = vpop.f32.mrf.mxu0
    %v7199 = vadd.f32 0.0, %v7198
    %v7200 = vpop.f32.mrf.mxu0
    %7201 = vmatprep.mubr.f32.mxu0 0.0
    %7202 = vmatmul.mubr.f32.gmra.mxu0 %v7130
    %v7203 = vpop.f32.mrf.mxu0
    %v7204 = vadd.f32 0.0, %v7203
    %v7205 = vpop.f32.mrf.mxu0
    %7206 = vdwg.mxu0
    %v7208 = vsel %vm6412, %v6780, 0
    %v7211 = vsel %vm6412, %v6781, 0
    %7213 = vmatprep.subr.mxu0 0.0
    %7214 = vmatpush1.msra.mxu0 0.0
    %7215 = vmatprep.subr.mxu0 0.0
    %7216 = vmatpush1.msra.mxu0 0.0
    %7217 = vmatprep.subr.mxu0 0.0
    %7218 = vmatpush1.msra.mxu0 0.0
    %7219 = vmatprep.subr.mxu0 0.0
    %7220 = vmatpush1.msra.mxu0 0.0
    %7221 = vmatprep.subr.mxu0 0.0
    %7222 = vmatpush1.msra.mxu0 0.0
    %7223 = vmatprep.subr.mxu0 0.0
    %7224 = vmatpush1.msra.mxu0 0.0
    %7225 = vmatprep.subr.mxu0 0.0
    %7226 = vmatpush1.msra.mxu0 0.0
    %7227 = vmatprep.subr.mxu0 0.0
    %7228 = vmatpush1.msra.mxu0 0.0
    %7229 = vmatprep.subr.mxu0 0.0
    %7230 = vmatpush1.msra.mxu0 0.0
    %7231 = vmatprep.subr.mxu0 0.0
    %7232 = vmatpush1.msra.mxu0 0.0
    %7233 = vmatprep.subr.mxu0 0.0
    %7234 = vmatpush1.msra.mxu0 0.0
    %7235 = vmatprep.subr.mxu0 0.0
    %7236 = vmatpush1.msra.mxu0 0.0
    %7237 = vmatprep.subr.mxu0 0.0
    %7238 = vmatpush1.msra.mxu0 0.0
    %7239 = vmatprep.subr.mxu0 0.0
    %7240 = vmatpush1.msra.mxu0 0.0
    %7241 = vmatprep.subr.mxu0 0.0
    %7242 = vmatpush1.msra.mxu0 %v4088
    %7243 = vmatprep.subr.mxu0 0.0
    %7244 = vmatpush1.msra.mxu0 %v3952
    %7245 = vmatprep.subr.mxu0 0.0
    %7246 = vmatpush2.msra.mxu0 0.0
    %7247 = vmatprep.subr.mxu0 0.0
    %7248 = vmatpush2.msra.mxu0 0.0
    %7249 = vmatprep.subr.mxu0 0.0
    %7250 = vmatpush2.msra.mxu0 0.0
    %7251 = vmatprep.subr.mxu0 0.0
    %7252 = vmatpush2.msra.mxu0 0.0
    %7253 = vmatprep.subr.mxu0 0.0
    %7254 = vmatpush2.msra.mxu0 0.0
    %7255 = vmatprep.subr.mxu0 0.0
    %7256 = vmatpush2.msra.mxu0 0.0
    %7257 = vmatprep.subr.mxu0 0.0
    %7258 = vmatpush2.msra.mxu0 0.0
    %7259 = vmatprep.subr.mxu0 0.0
    %7260 = vmatpush2.msra.mxu0 0.0
    %7261 = vmatprep.subr.mxu0 0.0
    %7262 = vmatpush2.msra.mxu0 0.0
    %7263 = vmatprep.subr.mxu0 0.0
    %7264 = vmatpush2.msra.mxu0 0.0
    %7265 = vmatprep.subr.mxu0 0.0
    %7266 = vmatpush2.msra.mxu0 0.0
    %7267 = vmatprep.subr.mxu0 0.0
    %7268 = vmatpush2.msra.mxu0 0.0
    %7269 = vmatprep.subr.mxu0 0.0
    %7270 = vmatpush2.msra.mxu0 0.0
    %7271 = vmatprep.subr.mxu0 0.0
    %7272 = vmatpush2.msra.mxu0 0.0
    %7273 = vmatprep.subr.mxu0 0.0
    %7274 = vmatpush2.msra.mxu0 0.0
    %7275 = vmatprep.subr.mxu0 0.0
    %7276 = vmatpush2.msra.mxu0 0.0
    %7277 = vmatprep.mubr.f32.mxu0 0.0
    %7278 = vmatmul.mubr.f32.gmra.mxu0 %v7208
    %v7279 = vpop.f32.mrf.mxu0
    %v7280 = vadd.f32 0.0, %v7279
    %v7281 = vpop.f32.mrf.mxu0
    %7282 = vmatprep.mubr.f32.mxu0 0.0
    %7283 = vmatmul.mubr.f32.gmra.mxu0 %v7211
    %v7284 = vpop.f32.mrf.mxu0
    %v7285 = vadd.f32 0.0, %v7284
    %v7286 = vpop.f32.mrf.mxu0
    %7287 = vdwg.mxu0
    %v7289 = vsel %vm6412, %v6782, 0
    %v7292 = vsel %vm6412, %v6783, 0
    %7294 = vmatprep.subr.mxu0 0.0
    %7295 = vmatpush1.msra.mxu0 0.0
    %7296 = vmatprep.subr.mxu0 0.0
    %7297 = vmatpush1.msra.mxu0 0.0
    %7298 = vmatprep.subr.mxu0 0.0
    %7299 = vmatpush1.msra.mxu0 0.0
    %7300 = vmatprep.subr.mxu0 0.0
    %7301 = vmatpush1.msra.mxu0 0.0
    %7302 = vmatprep.subr.mxu0 0.0
    %7303 = vmatpush1.msra.mxu0 0.0
    %7304 = vmatprep.subr.mxu0 0.0
    %7305 = vmatpush1.msra.mxu0 0.0
    %7306 = vmatprep.subr.mxu0 0.0
    %7307 = vmatpush1.msra.mxu0 0.0
    %7308 = vmatprep.subr.mxu0 0.0
    %7309 = vmatpush1.msra.mxu0 0.0
    %7310 = vmatprep.subr.mxu0 0.0
    %7311 = vmatpush1.msra.mxu0 0.0
    %7312 = vmatprep.subr.mxu0 0.0
    %7313 = vmatpush1.msra.mxu0 0.0
    %7314 = vmatprep.subr.mxu0 0.0
    %7315 = vmatpush1.msra.mxu0 0.0
    %7316 = vmatprep.subr.mxu0 0.0
    %7317 = vmatpush1.msra.mxu0 0.0
    %7318 = vmatprep.subr.mxu0 0.0
    %7319 = vmatpush1.msra.mxu0 0.0
    %7320 = vmatprep.subr.mxu0 0.0
    %7321 = vmatpush1.msra.mxu0 0.0
    %7322 = vmatprep.subr.mxu0 0.0
    %7323 = vmatpush1.msra.mxu0 %v4089
    %7324 = vmatprep.subr.mxu0 0.0
    %7325 = vmatpush1.msra.mxu0 %v3953
    %7326 = vmatprep.subr.mxu0 0.0
    %7327 = vmatpush2.msra.mxu0 0.0
    %7328 = vmatprep.subr.mxu0 0.0
    %7329 = vmatpush2.msra.mxu0 0.0
    %7330 = vmatprep.subr.mxu0 0.0
    %7331 = vmatpush2.msra.mxu0 0.0
    %7332 = vmatprep.subr.mxu0 0.0
    %7333 = vmatpush2.msra.mxu0 0.0
    %7334 = vmatprep.subr.mxu0 0.0
    %7335 = vmatpush2.msra.mxu0 0.0
    %7336 = vmatprep.subr.mxu0 0.0
    %7337 = vmatpush2.msra.mxu0 0.0
    %7338 = vmatprep.subr.mxu0 0.0
    %7339 = vmatpush2.msra.mxu0 0.0
    %7340 = vmatprep.subr.mxu0 0.0
    %7341 = vmatpush2.msra.mxu0 0.0
    %7342 = vmatprep.subr.mxu0 0.0
    %7343 = vmatpush2.msra.mxu0 0.0
    %7344 = vmatprep.subr.mxu0 0.0
    %7345 = vmatpush2.msra.mxu0 0.0
    %7346 = vmatprep.subr.mxu0 0.0
    %7347 = vmatpush2.msra.mxu0 0.0
    %7348 = vmatprep.subr.mxu0 0.0
    %7349 = vmatpush2.msra.mxu0 0.0
    %7350 = vmatprep.subr.mxu0 0.0
    %7351 = vmatpush2.msra.mxu0 0.0
    %7352 = vmatprep.subr.mxu0 0.0
    %7353 = vmatpush2.msra.mxu0 0.0
    %7354 = vmatprep.subr.mxu0 0.0
    %7355 = vmatpush2.msra.mxu0 0.0
    %7356 = vmatprep.subr.mxu0 0.0
    %7357 = vmatpush2.msra.mxu0 0.0
    %7358 = vmatprep.mubr.f32.mxu0 0.0
    %7359 = vmatmul.mubr.f32.gmra.mxu0 %v7289
    %v7360 = vpop.f32.mrf.mxu0
    %v7361 = vadd.f32 0.0, %v7360
    %v7362 = vpop.f32.mrf.mxu0
    %7363 = vmatprep.mubr.f32.mxu0 0.0
    %7364 = vmatmul.mubr.f32.gmra.mxu0 %v7292
    %v7365 = vpop.f32.mrf.mxu0
    %v7366 = vadd.f32 0.0, %v7365
    %v7367 = vpop.f32.mrf.mxu0
    %7368 = vdwg.mxu0
    %v7370 = vsel %vm6412, %v6784, 0
    %v7373 = vsel %vm6412, %v6785, 0
    %7375 = vmatprep.subr.mxu0 0.0
    %7376 = vmatpush1.msra.mxu0 0.0
    %7377 = vmatprep.subr.mxu0 0.0
    %7378 = vmatpush1.msra.mxu0 0.0
    %7379 = vmatprep.subr.mxu0 0.0
    %7380 = vmatpush1.msra.mxu0 0.0
    %7381 = vmatprep.subr.mxu0 0.0
    %7382 = vmatpush1.msra.mxu0 0.0
    %7383 = vmatprep.subr.mxu0 0.0
    %7384 = vmatpush1.msra.mxu0 0.0
    %7385 = vmatprep.subr.mxu0 0.0
    %7386 = vmatpush1.msra.mxu0 0.0
    %7387 = vmatprep.subr.mxu0 0.0
    %7388 = vmatpush1.msra.mxu0 0.0
    %7389 = vmatprep.subr.mxu0 0.0
    %7390 = vmatpush1.msra.mxu0 0.0
    %7391 = vmatprep.subr.mxu0 0.0
    %7392 = vmatpush1.msra.mxu0 0.0
    %7393 = vmatprep.subr.mxu0 0.0
    %7394 = vmatpush1.msra.mxu0 0.0
    %7395 = vmatprep.subr.mxu0 0.0
    %7396 = vmatpush1.msra.mxu0 0.0
    %7397 = vmatprep.subr.mxu0 0.0
    %7398 = vmatpush1.msra.mxu0 0.0
    %7399 = vmatprep.subr.mxu0 0.0
    %7400 = vmatpush1.msra.mxu0 0.0
    %7401 = vmatprep.subr.mxu0 0.0
    %7402 = vmatpush1.msra.mxu0 0.0
    %7403 = vmatprep.subr.mxu0 0.0
    %7404 = vmatpush1.msra.mxu0 %v4090
    %7405 = vmatprep.subr.mxu0 0.0
    %7406 = vmatpush1.msra.mxu0 %v3954
    %7407 = vmatprep.subr.mxu0 0.0
    %7408 = vmatpush2.msra.mxu0 0.0
    %7409 = vmatprep.subr.mxu0 0.0
    %7410 = vmatpush2.msra.mxu0 0.0
    %7411 = vmatprep.subr.mxu0 0.0
    %7412 = vmatpush2.msra.mxu0 0.0
    %7413 = vmatprep.subr.mxu0 0.0
    %7414 = vmatpush2.msra.mxu0 0.0
    %7415 = vmatprep.subr.mxu0 0.0
    %7416 = vmatpush2.msra.mxu0 0.0
    %7417 = vmatprep.subr.mxu0 0.0
    %7418 = vmatpush2.msra.mxu0 0.0
    %7419 = vmatprep.subr.mxu0 0.0
    %7420 = vmatpush2.msra.mxu0 0.0
    %7421 = vmatprep.subr.mxu0 0.0
    %7422 = vmatpush2.msra.mxu0 0.0
    %7423 = vmatprep.subr.mxu0 0.0
    %7424 = vmatpush2.msra.mxu0 0.0
    %7425 = vmatprep.subr.mxu0 0.0
    %7426 = vmatpush2.msra.mxu0 0.0
    %7427 = vmatprep.subr.mxu0 0.0
    %7428 = vmatpush2.msra.mxu0 0.0
    %7429 = vmatprep.subr.mxu0 0.0
    %7430 = vmatpush2.msra.mxu0 0.0
    %7431 = vmatprep.subr.mxu0 0.0
    %7432 = vmatpush2.msra.mxu0 0.0
    %7433 = vmatprep.subr.mxu0 0.0
    %7434 = vmatpush2.msra.mxu0 0.0
    %7435 = vmatprep.subr.mxu0 0.0
    %7436 = vmatpush2.msra.mxu0 0.0
    %7437 = vmatprep.subr.mxu0 0.0
    %7438 = vmatpush2.msra.mxu0 0.0
    %7439 = vmatprep.mubr.f32.mxu0 0.0
    %7440 = vmatmul.mubr.f32.gmra.mxu0 %v7370
    %v7441 = vpop.f32.mrf.mxu0
    %v7442 = vadd.f32 0.0, %v7441
    %v7443 = vpop.f32.mrf.mxu0
    %7444 = vmatprep.mubr.f32.mxu0 0.0
    %7445 = vmatmul.mubr.f32.gmra.mxu0 %v7373
    %v7446 = vpop.f32.mrf.mxu0
    %v7447 = vadd.f32 0.0, %v7446
    %v7448 = vpop.f32.mrf.mxu0
    %7449 = vdwg.mxu0
    %v7451 = vsel %vm6412, %v6786, 0
    %v7454 = vsel %vm6412, %v6787, 0
    %7456 = vmatprep.subr.mxu0 0.0
    %7457 = vmatpush1.msra.mxu0 0.0
    %7458 = vmatprep.subr.mxu0 0.0
    %7459 = vmatpush1.msra.mxu0 0.0
    %7460 = vmatprep.subr.mxu0 0.0
    %7461 = vmatpush1.msra.mxu0 0.0
    %7462 = vmatprep.subr.mxu0 0.0
    %7463 = vmatpush1.msra.mxu0 0.0
    %7464 = vmatprep.subr.mxu0 0.0
    %7465 = vmatpush1.msra.mxu0 0.0
    %7466 = vmatprep.subr.mxu0 0.0
    %7467 = vmatpush1.msra.mxu0 0.0
    %7468 = vmatprep.subr.mxu0 0.0
    %7469 = vmatpush1.msra.mxu0 0.0
    %7470 = vmatprep.subr.mxu0 0.0
    %7471 = vmatpush1.msra.mxu0 0.0
    %7472 = vmatprep.subr.mxu0 0.0
    %7473 = vmatpush1.msra.mxu0 0.0
    %7474 = vmatprep.subr.mxu0 0.0
    %7475 = vmatpush1.msra.mxu0 0.0
    %7476 = vmatprep.subr.mxu0 0.0
    %7477 = vmatpush1.msra.mxu0 0.0
    %7478 = vmatprep.subr.mxu0 0.0
    %7479 = vmatpush1.msra.mxu0 0.0
    %7480 = vmatprep.subr.mxu0 0.0
    %7481 = vmatpush1.msra.mxu0 0.0
    %7482 = vmatprep.subr.mxu0 0.0
    %7483 = vmatpush1.msra.mxu0 0.0
    %7484 = vmatprep.subr.mxu0 0.0
    %7485 = vmatpush1.msra.mxu0 %v4355
    %7486 = vmatprep.subr.mxu0 0.0
    %7487 = vmatpush1.msra.mxu0 %v4219
    %7488 = vmatprep.subr.mxu0 0.0
    %7489 = vmatpush2.msra.mxu0 0.0
    %7490 = vmatprep.subr.mxu0 0.0
    %7491 = vmatpush2.msra.mxu0 0.0
    %7492 = vmatprep.subr.mxu0 0.0
    %7493 = vmatpush2.msra.mxu0 0.0
    %7494 = vmatprep.subr.mxu0 0.0
    %7495 = vmatpush2.msra.mxu0 0.0
    %7496 = vmatprep.subr.mxu0 0.0
    %7497 = vmatpush2.msra.mxu0 0.0
    %7498 = vmatprep.subr.mxu0 0.0
    %7499 = vmatpush2.msra.mxu0 0.0
    %7500 = vmatprep.subr.mxu0 0.0
    %7501 = vmatpush2.msra.mxu0 0.0
    %7502 = vmatprep.subr.mxu0 0.0
    %7503 = vmatpush2.msra.mxu0 0.0
    %7504 = vmatprep.subr.mxu0 0.0
    %7505 = vmatpush2.msra.mxu0 0.0
    %7506 = vmatprep.subr.mxu0 0.0
    %7507 = vmatpush2.msra.mxu0 0.0
    %7508 = vmatprep.subr.mxu0 0.0
    %7509 = vmatpush2.msra.mxu0 0.0
    %7510 = vmatprep.subr.mxu0 0.0
    %7511 = vmatpush2.msra.mxu0 0.0
    %7512 = vmatprep.subr.mxu0 0.0
    %7513 = vmatpush2.msra.mxu0 0.0
    %7514 = vmatprep.subr.mxu0 0.0
    %7515 = vmatpush2.msra.mxu0 0.0
    %7516 = vmatprep.subr.mxu0 0.0
    %7517 = vmatpush2.msra.mxu0 0.0
    %7518 = vmatprep.subr.mxu0 0.0
    %7519 = vmatpush2.msra.mxu0 0.0
    %7520 = vmatprep.mubr.f32.mxu0 0.0
    %7521 = vmatmul.mubr.f32.gmra.mxu0 %v7451
    %v7522 = vpop.f32.mrf.mxu0
    %v7523 = vadd.f32 0.0, %v7522
    %v7524 = vpop.f32.mrf.mxu0
    %7525 = vmatprep.mubr.f32.mxu0 0.0
    %7526 = vmatmul.mubr.f32.gmra.mxu0 %v7454
    %v7527 = vpop.f32.mrf.mxu0
    %v7528 = vadd.f32 0.0, %v7527
    %v7529 = vpop.f32.mrf.mxu0
    %7530 = vdwg.mxu0
    %v7532 = vsel %vm6412, %v6788, 0
    %v7535 = vsel %vm6412, %v6789, 0
    %7537 = vmatprep.subr.mxu0 0.0
    %7538 = vmatpush1.msra.mxu0 0.0
    %7539 = vmatprep.subr.mxu0 0.0
    %7540 = vmatpush1.msra.mxu0 0.0
    %7541 = vmatprep.subr.mxu0 0.0
    %7542 = vmatpush1.msra.mxu0 0.0
    %7543 = vmatprep.subr.mxu0 0.0
    %7544 = vmatpush1.msra.mxu0 0.0
    %7545 = vmatprep.subr.mxu0 0.0
    %7546 = vmatpush1.msra.mxu0 0.0
    %7547 = vmatprep.subr.mxu0 0.0
    %7548 = vmatpush1.msra.mxu0 0.0
    %7549 = vmatprep.subr.mxu0 0.0
    %7550 = vmatpush1.msra.mxu0 0.0
    %7551 = vmatprep.subr.mxu0 0.0
    %7552 = vmatpush1.msra.mxu0 0.0
    %7553 = vmatprep.subr.mxu0 0.0
    %7554 = vmatpush1.msra.mxu0 0.0
    %7555 = vmatprep.subr.mxu0 0.0
    %7556 = vmatpush1.msra.mxu0 0.0
    %7557 = vmatprep.subr.mxu0 0.0
    %7558 = vmatpush1.msra.mxu0 0.0
    %7559 = vmatprep.subr.mxu0 0.0
    %7560 = vmatpush1.msra.mxu0 0.0
    %7561 = vmatprep.subr.mxu0 0.0
    %7562 = vmatpush1.msra.mxu0 0.0
    %7563 = vmatprep.subr.mxu0 0.0
    %7564 = vmatpush1.msra.mxu0 0.0
    %7565 = vmatprep.subr.mxu0 0.0
    %7566 = vmatpush1.msra.mxu0 %v4356
    %7567 = vmatprep.subr.mxu0 0.0
    %7568 = vmatpush1.msra.mxu0 %v4220
    %7569 = vmatprep.subr.mxu0 0.0
    %7570 = vmatpush2.msra.mxu0 0.0
    %7571 = vmatprep.subr.mxu0 0.0
    %7572 = vmatpush2.msra.mxu0 0.0
    %7573 = vmatprep.subr.mxu0 0.0
    %7574 = vmatpush2.msra.mxu0 0.0
    %7575 = vmatprep.subr.mxu0 0.0
    %7576 = vmatpush2.msra.mxu0 0.0
    %7577 = vmatprep.subr.mxu0 0.0
    %7578 = vmatpush2.msra.mxu0 0.0
    %7579 = vmatprep.subr.mxu0 0.0
    %7580 = vmatpush2.msra.mxu0 0.0
    %7581 = vmatprep.subr.mxu0 0.0
    %7582 = vmatpush2.msra.mxu0 0.0
    %7583 = vmatprep.subr.mxu0 0.0
    %7584 = vmatpush2.msra.mxu0 0.0
    %7585 = vmatprep.subr.mxu0 0.0
    %7586 = vmatpush2.msra.mxu0 0.0
    %7587 = vmatprep.subr.mxu0 0.0
    %7588 = vmatpush2.msra.mxu0 0.0
    %7589 = vmatprep.subr.mxu0 0.0
    %7590 = vmatpush2.msra.mxu0 0.0
    %7591 = vmatprep.subr.mxu0 0.0
    %7592 = vmatpush2.msra.mxu0 0.0
    %7593 = vmatprep.subr.mxu0 0.0
    %7594 = vmatpush2.msra.mxu0 0.0
    %7595 = vmatprep.subr.mxu0 0.0
    %7596 = vmatpush2.msra.mxu0 0.0
    %7597 = vmatprep.subr.mxu0 0.0
    %7598 = vmatpush2.msra.mxu0 0.0
    %7599 = vmatprep.subr.mxu0 0.0
    %7600 = vmatpush2.msra.mxu0 0.0
    %7601 = vmatprep.mubr.f32.mxu0 0.0
    %7602 = vmatmul.mubr.f32.gmra.mxu0 %v7532
    %v7603 = vpop.f32.mrf.mxu0
    %v7604 = vadd.f32 0.0, %v7603
    %v7605 = vpop.f32.mrf.mxu0
    %7606 = vmatprep.mubr.f32.mxu0 0.0
    %7607 = vmatmul.mubr.f32.gmra.mxu0 %v7535
    %v7608 = vpop.f32.mrf.mxu0
    %v7609 = vadd.f32 0.0, %v7608
    %v7610 = vpop.f32.mrf.mxu0
    %7611 = vdwg.mxu0
    %v7613 = vsel %vm6412, %v6790, 0
    %v7616 = vsel %vm6412, %v6791, 0
    %7618 = vmatprep.subr.mxu0 0.0
    %7619 = vmatpush1.msra.mxu0 0.0
    %7620 = vmatprep.subr.mxu0 0.0
    %7621 = vmatpush1.msra.mxu0 0.0
    %7622 = vmatprep.subr.mxu0 0.0
    %7623 = vmatpush1.msra.mxu0 0.0
    %7624 = vmatprep.subr.mxu0 0.0
    %7625 = vmatpush1.msra.mxu0 0.0
    %7626 = vmatprep.subr.mxu0 0.0
    %7627 = vmatpush1.msra.mxu0 0.0
    %7628 = vmatprep.subr.mxu0 0.0
    %7629 = vmatpush1.msra.mxu0 0.0
    %7630 = vmatprep.subr.mxu0 0.0
    %7631 = vmatpush1.msra.mxu0 0.0
    %7632 = vmatprep.subr.mxu0 0.0
    %7633 = vmatpush1.msra.mxu0 0.0
    %7634 = vmatprep.subr.mxu0 0.0
    %7635 = vmatpush1.msra.mxu0 0.0
    %7636 = vmatprep.subr.mxu0 0.0
    %7637 = vmatpush1.msra.mxu0 0.0
    %7638 = vmatprep.subr.mxu0 0.0
    %7639 = vmatpush1.msra.mxu0 0.0
    %7640 = vmatprep.subr.mxu0 0.0
    %7641 = vmatpush1.msra.mxu0 0.0
    %7642 = vmatprep.subr.mxu0 0.0
    %7643 = vmatpush1.msra.mxu0 0.0
    %7644 = vmatprep.subr.mxu0 0.0
    %7645 = vmatpush1.msra.mxu0 0.0
    %7646 = vmatprep.subr.mxu0 0.0
    %7647 = vmatpush1.msra.mxu0 %v4357
    %7648 = vmatprep.subr.mxu0 0.0
    %7649 = vmatpush1.msra.mxu0 %v4221
    %7650 = vmatprep.subr.mxu0 0.0
    %7651 = vmatpush2.msra.mxu0 0.0
    %7652 = vmatprep.subr.mxu0 0.0
    %7653 = vmatpush2.msra.mxu0 0.0
    %7654 = vmatprep.subr.mxu0 0.0
    %7655 = vmatpush2.msra.mxu0 0.0
    %7656 = vmatprep.subr.mxu0 0.0
    %7657 = vmatpush2.msra.mxu0 0.0
    %7658 = vmatprep.subr.mxu0 0.0
    %7659 = vmatpush2.msra.mxu0 0.0
    %7660 = vmatprep.subr.mxu0 0.0
    %7661 = vmatpush2.msra.mxu0 0.0
    %7662 = vmatprep.subr.mxu0 0.0
    %7663 = vmatpush2.msra.mxu0 0.0
    %7664 = vmatprep.subr.mxu0 0.0
    %7665 = vmatpush2.msra.mxu0 0.0
    %7666 = vmatprep.subr.mxu0 0.0
    %7667 = vmatpush2.msra.mxu0 0.0
    %7668 = vmatprep.subr.mxu0 0.0
    %7669 = vmatpush2.msra.mxu0 0.0
    %7670 = vmatprep.subr.mxu0 0.0
    %7671 = vmatpush2.msra.mxu0 0.0
    %7672 = vmatprep.subr.mxu0 0.0
    %7673 = vmatpush2.msra.mxu0 0.0
    %7674 = vmatprep.subr.mxu0 0.0
    %7675 = vmatpush2.msra.mxu0 0.0
    %7676 = vmatprep.subr.mxu0 0.0
    %7677 = vmatpush2.msra.mxu0 0.0
    %7678 = vmatprep.subr.mxu0 0.0
    %7679 = vmatpush2.msra.mxu0 0.0
    %7680 = vmatprep.subr.mxu0 0.0
    %7681 = vmatpush2.msra.mxu0 0.0
    %7682 = vmatprep.mubr.f32.mxu0 0.0
    %7683 = vmatmul.mubr.f32.gmra.mxu0 %v7613
    %v7684 = vpop.f32.mrf.mxu0
    %v7685 = vadd.f32 0.0, %v7684
    %v7686 = vpop.f32.mrf.mxu0
    %7687 = vmatprep.mubr.f32.mxu0 0.0
    %7688 = vmatmul.mubr.f32.gmra.mxu0 %v7616
    %v7689 = vpop.f32.mrf.mxu0
    %v7690 = vadd.f32 0.0, %v7689
    %v7691 = vpop.f32.mrf.mxu0
    %7692 = vdwg.mxu0
    %v7694 = vsel %vm6412, %v6792, 0
    %v7697 = vsel %vm6412, %v6793, 0
    %7699 = vmatprep.subr.mxu0 0.0
    %7700 = vmatpush1.msra.mxu0 0.0
    %7701 = vmatprep.subr.mxu0 0.0
    %7702 = vmatpush1.msra.mxu0 0.0
    %7703 = vmatprep.subr.mxu0 0.0
    %7704 = vmatpush1.msra.mxu0 0.0
    %7705 = vmatprep.subr.mxu0 0.0
    %7706 = vmatpush1.msra.mxu0 0.0
    %7707 = vmatprep.subr.mxu0 0.0
    %7708 = vmatpush1.msra.mxu0 0.0
    %7709 = vmatprep.subr.mxu0 0.0
    %7710 = vmatpush1.msra.mxu0 0.0
    %7711 = vmatprep.subr.mxu0 0.0
    %7712 = vmatpush1.msra.mxu0 0.0
    %7713 = vmatprep.subr.mxu0 0.0
    %7714 = vmatpush1.msra.mxu0 0.0
    %7715 = vmatprep.subr.mxu0 0.0
    %7716 = vmatpush1.msra.mxu0 0.0
    %7717 = vmatprep.subr.mxu0 0.0
    %7718 = vmatpush1.msra.mxu0 0.0
    %7719 = vmatprep.subr.mxu0 0.0
    %7720 = vmatpush1.msra.mxu0 0.0
    %7721 = vmatprep.subr.mxu0 0.0
    %7722 = vmatpush1.msra.mxu0 0.0
    %7723 = vmatprep.subr.mxu0 0.0
    %7724 = vmatpush1.msra.mxu0 0.0
    %7725 = vmatprep.subr.mxu0 0.0
    %7726 = vmatpush1.msra.mxu0 0.0
    %7727 = vmatprep.subr.mxu0 0.0
    %7728 = vmatpush1.msra.mxu0 %v4358
    %7729 = vmatprep.subr.mxu0 0.0
    %7730 = vmatpush1.msra.mxu0 %v4222
    %7731 = vmatprep.subr.mxu0 0.0
    %7732 = vmatpush2.msra.mxu0 0.0
    %7733 = vmatprep.subr.mxu0 0.0
    %7734 = vmatpush2.msra.mxu0 0.0
    %7735 = vmatprep.subr.mxu0 0.0
    %7736 = vmatpush2.msra.mxu0 0.0
    %7737 = vmatprep.subr.mxu0 0.0
    %7738 = vmatpush2.msra.mxu0 0.0
    %7739 = vmatprep.subr.mxu0 0.0
    %7740 = vmatpush2.msra.mxu0 0.0
    %7741 = vmatprep.subr.mxu0 0.0
    %7742 = vmatpush2.msra.mxu0 0.0
    %7743 = vmatprep.subr.mxu0 0.0
    %7744 = vmatpush2.msra.mxu0 0.0
    %7745 = vmatprep.subr.mxu0 0.0
    %7746 = vmatpush2.msra.mxu0 0.0
    %7747 = vmatprep.subr.mxu0 0.0
    %7748 = vmatpush2.msra.mxu0 0.0
    %7749 = vmatprep.subr.mxu0 0.0
    %7750 = vmatpush2.msra.mxu0 0.0
    %7751 = vmatprep.subr.mxu0 0.0
    %7752 = vmatpush2.msra.mxu0 0.0
    %7753 = vmatprep.subr.mxu0 0.0
    %7754 = vmatpush2.msra.mxu0 0.0
    %7755 = vmatprep.subr.mxu0 0.0
    %7756 = vmatpush2.msra.mxu0 0.0
    %7757 = vmatprep.subr.mxu0 0.0
    %7758 = vmatpush2.msra.mxu0 0.0
    %7759 = vmatprep.subr.mxu0 0.0
    %7760 = vmatpush2.msra.mxu0 0.0
    %7761 = vmatprep.subr.mxu0 0.0
    %7762 = vmatpush2.msra.mxu0 0.0
    %7763 = vmatprep.mubr.f32.mxu0 0.0
    %7764 = vmatmul.mubr.f32.gmra.mxu0 %v7694
    %v7765 = vpop.f32.mrf.mxu0
    %v7766 = vadd.f32 0.0, %v7765
    %v7767 = vpop.f32.mrf.mxu0
    %7768 = vmatprep.mubr.f32.mxu0 0.0
    %7769 = vmatmul.mubr.f32.gmra.mxu0 %v7697
    %v7770 = vpop.f32.mrf.mxu0
    %v7771 = vadd.f32 0.0, %v7770
    %v7772 = vpop.f32.mrf.mxu0
    %7773 = vdwg.mxu0
    %v7775 = vsel %vm6412, %v6794, 0
    %v7778 = vsel %vm6412, %v6795, 0
    %7780 = vmatprep.subr.mxu0 0.0
    %7781 = vmatpush1.msra.mxu0 0.0
    %7782 = vmatprep.subr.mxu0 0.0
    %7783 = vmatpush1.msra.mxu0 0.0
    %7784 = vmatprep.subr.mxu0 0.0
    %7785 = vmatpush1.msra.mxu0 0.0
    %7786 = vmatprep.subr.mxu0 0.0
    %7787 = vmatpush1.msra.mxu0 0.0
    %7788 = vmatprep.subr.mxu0 0.0
    %7789 = vmatpush1.msra.mxu0 0.0
    %7790 = vmatprep.subr.mxu0 0.0
    %7791 = vmatpush1.msra.mxu0 0.0
    %7792 = vmatprep.subr.mxu0 0.0
    %7793 = vmatpush1.msra.mxu0 0.0
    %7794 = vmatprep.subr.mxu0 0.0
    %7795 = vmatpush1.msra.mxu0 0.0
    %7796 = vmatprep.subr.mxu0 0.0
    %7797 = vmatpush1.msra.mxu0 0.0
    %7798 = vmatprep.subr.mxu0 0.0
    %7799 = vmatpush1.msra.mxu0 0.0
    %7800 = vmatprep.subr.mxu0 0.0
    %7801 = vmatpush1.msra.mxu0 0.0
    %7802 = vmatprep.subr.mxu0 0.0
    %7803 = vmatpush1.msra.mxu0 0.0
    %7804 = vmatprep.subr.mxu0 0.0
    %7805 = vmatpush1.msra.mxu0 0.0
    %7806 = vmatprep.subr.mxu0 0.0
    %7807 = vmatpush1.msra.mxu0 0.0
    %7808 = vmatprep.subr.mxu0 0.0
    %7809 = vmatpush1.msra.mxu0 %v4359
    %7810 = vmatprep.subr.mxu0 0.0
    %7811 = vmatpush1.msra.mxu0 %v4223
    %7812 = vmatprep.subr.mxu0 0.0
    %7813 = vmatpush2.msra.mxu0 0.0
    %7814 = vmatprep.subr.mxu0 0.0
    %7815 = vmatpush2.msra.mxu0 0.0
    %7816 = vmatprep.subr.mxu0 0.0
    %7817 = vmatpush2.msra.mxu0 0.0
    %7818 = vmatprep.subr.mxu0 0.0
    %7819 = vmatpush2.msra.mxu0 0.0
    %7820 = vmatprep.subr.mxu0 0.0
    %7821 = vmatpush2.msra.mxu0 0.0
    %7822 = vmatprep.subr.mxu0 0.0
    %7823 = vmatpush2.msra.mxu0 0.0
    %7824 = vmatprep.subr.mxu0 0.0
    %7825 = vmatpush2.msra.mxu0 0.0
    %7826 = vmatprep.subr.mxu0 0.0
    %7827 = vmatpush2.msra.mxu0 0.0
    %7828 = vmatprep.subr.mxu0 0.0
    %7829 = vmatpush2.msra.mxu0 0.0
    %7830 = vmatprep.subr.mxu0 0.0
    %7831 = vmatpush2.msra.mxu0 0.0
    %7832 = vmatprep.subr.mxu0 0.0
    %7833 = vmatpush2.msra.mxu0 0.0
    %7834 = vmatprep.subr.mxu0 0.0
    %7835 = vmatpush2.msra.mxu0 0.0
    %7836 = vmatprep.subr.mxu0 0.0
    %7837 = vmatpush2.msra.mxu0 0.0
    %7838 = vmatprep.subr.mxu0 0.0
    %7839 = vmatpush2.msra.mxu0 0.0
    %7840 = vmatprep.subr.mxu0 0.0
    %7841 = vmatpush2.msra.mxu0 0.0
    %7842 = vmatprep.subr.mxu0 0.0
    %7843 = vmatpush2.msra.mxu0 0.0
    %7844 = vmatprep.mubr.f32.mxu0 0.0
    %7845 = vmatmul.mubr.f32.gmra.mxu0 %v7775
    %v7846 = vpop.f32.mrf.mxu0
    %v7847 = vadd.f32 0.0, %v7846
    %v7848 = vpop.f32.mrf.mxu0
    %7849 = vmatprep.mubr.f32.mxu0 0.0
    %7850 = vmatmul.mubr.f32.gmra.mxu0 %v7778
    %v7851 = vpop.f32.mrf.mxu0
    %v7852 = vadd.f32 0.0, %v7851
    %v7853 = vpop.f32.mrf.mxu0
    %7854 = vdwg.mxu0
    %v7856 = vsel %vm6412, %v6796, 0
    %v7859 = vsel %vm6412, %v6797, 0
    %7861 = vmatprep.subr.mxu0 0.0
    %7862 = vmatpush1.msra.mxu0 0.0
    %7863 = vmatprep.subr.mxu0 0.0
    %7864 = vmatpush1.msra.mxu0 0.0
    %7865 = vmatprep.subr.mxu0 0.0
    %7866 = vmatpush1.msra.mxu0 0.0
    %7867 = vmatprep.subr.mxu0 0.0
    %7868 = vmatpush1.msra.mxu0 0.0
    %7869 = vmatprep.subr.mxu0 0.0
    %7870 = vmatpush1.msra.mxu0 0.0
    %7871 = vmatprep.subr.mxu0 0.0
    %7872 = vmatpush1.msra.mxu0 0.0
    %7873 = vmatprep.subr.mxu0 0.0
    %7874 = vmatpush1.msra.mxu0 0.0
    %7875 = vmatprep.subr.mxu0 0.0
    %7876 = vmatpush1.msra.mxu0 0.0
    %7877 = vmatprep.subr.mxu0 0.0
    %7878 = vmatpush1.msra.mxu0 0.0
    %7879 = vmatprep.subr.mxu0 0.0
    %7880 = vmatpush1.msra.mxu0 0.0
    %7881 = vmatprep.subr.mxu0 0.0
    %7882 = vmatpush1.msra.mxu0 0.0
    %7883 = vmatprep.subr.mxu0 0.0
    %7884 = vmatpush1.msra.mxu0 0.0
    %7885 = vmatprep.subr.mxu0 0.0
    %7886 = vmatpush1.msra.mxu0 0.0
    %7887 = vmatprep.subr.mxu0 0.0
    %7888 = vmatpush1.msra.mxu0 0.0
    %7889 = vmatprep.subr.mxu0 0.0
    %7890 = vmatpush1.msra.mxu0 %v4360
    %7891 = vmatprep.subr.mxu0 0.0
    %7892 = vmatpush1.msra.mxu0 %v4224
    %7893 = vmatprep.subr.mxu0 0.0
    %7894 = vmatpush2.msra.mxu0 0.0
    %7895 = vmatprep.subr.mxu0 0.0
    %7896 = vmatpush2.msra.mxu0 0.0
    %7897 = vmatprep.subr.mxu0 0.0
    %7898 = vmatpush2.msra.mxu0 0.0
    %7899 = vmatprep.subr.mxu0 0.0
    %7900 = vmatpush2.msra.mxu0 0.0
    %7901 = vmatprep.subr.mxu0 0.0
    %7902 = vmatpush2.msra.mxu0 0.0
    %7903 = vmatprep.subr.mxu0 0.0
    %7904 = vmatpush2.msra.mxu0 0.0
    %7905 = vmatprep.subr.mxu0 0.0
    %7906 = vmatpush2.msra.mxu0 0.0
    %7907 = vmatprep.subr.mxu0 0.0
    %7908 = vmatpush2.msra.mxu0 0.0
    %7909 = vmatprep.subr.mxu0 0.0
    %7910 = vmatpush2.msra.mxu0 0.0
    %7911 = vmatprep.subr.mxu0 0.0
    %7912 = vmatpush2.msra.mxu0 0.0
    %7913 = vmatprep.subr.mxu0 0.0
    %7914 = vmatpush2.msra.mxu0 0.0
    %7915 = vmatprep.subr.mxu0 0.0
    %7916 = vmatpush2.msra.mxu0 0.0
    %7917 = vmatprep.subr.mxu0 0.0
    %7918 = vmatpush2.msra.mxu0 0.0
    %7919 = vmatprep.subr.mxu0 0.0
    %7920 = vmatpush2.msra.mxu0 0.0
    %7921 = vmatprep.subr.mxu0 0.0
    %7922 = vmatpush2.msra.mxu0 0.0
    %7923 = vmatprep.subr.mxu0 0.0
    %7924 = vmatpush2.msra.mxu0 0.0
    %7925 = vmatprep.mubr.f32.mxu0 0.0
    %7926 = vmatmul.mubr.f32.gmra.mxu0 %v7856
    %v7927 = vpop.f32.mrf.mxu0
    %v7928 = vadd.f32 0.0, %v7927
    %v7929 = vpop.f32.mrf.mxu0
    %7930 = vmatprep.mubr.f32.mxu0 0.0
    %7931 = vmatmul.mubr.f32.gmra.mxu0 %v7859
    %v7932 = vpop.f32.mrf.mxu0
    %v7933 = vadd.f32 0.0, %v7932
    %v7934 = vpop.f32.mrf.mxu0
    %7935 = vdwg.mxu0
    %v7937 = vsel %vm6412, %v6798, 0
    %v7940 = vsel %vm6412, %v6799, 0
    %7942 = vmatprep.subr.mxu0 0.0
    %7943 = vmatpush1.msra.mxu0 0.0
    %7944 = vmatprep.subr.mxu0 0.0
    %7945 = vmatpush1.msra.mxu0 0.0
    %7946 = vmatprep.subr.mxu0 0.0
    %7947 = vmatpush1.msra.mxu0 0.0
    %7948 = vmatprep.subr.mxu0 0.0
    %7949 = vmatpush1.msra.mxu0 0.0
    %7950 = vmatprep.subr.mxu0 0.0
    %7951 = vmatpush1.msra.mxu0 0.0
    %7952 = vmatprep.subr.mxu0 0.0
    %7953 = vmatpush1.msra.mxu0 0.0
    %7954 = vmatprep.subr.mxu0 0.0
    %7955 = vmatpush1.msra.mxu0 0.0
    %7956 = vmatprep.subr.mxu0 0.0
    %7957 = vmatpush1.msra.mxu0 0.0
    %7958 = vmatprep.subr.mxu0 0.0
    %7959 = vmatpush1.msra.mxu0 0.0
    %7960 = vmatprep.subr.mxu0 0.0
    %7961 = vmatpush1.msra.mxu0 0.0
    %7962 = vmatprep.subr.mxu0 0.0
    %7963 = vmatpush1.msra.mxu0 0.0
    %7964 = vmatprep.subr.mxu0 0.0
    %7965 = vmatpush1.msra.mxu0 0.0
    %7966 = vmatprep.subr.mxu0 0.0
    %7967 = vmatpush1.msra.mxu0 0.0
    %7968 = vmatprep.subr.mxu0 0.0
    %7969 = vmatpush1.msra.mxu0 0.0
    %7970 = vmatprep.subr.mxu0 0.0
    %7971 = vmatpush1.msra.mxu0 %v4361
    %7972 = vmatprep.subr.mxu0 0.0
    %7973 = vmatpush1.msra.mxu0 %v4225
    %7974 = vmatprep.subr.mxu0 0.0
    %7975 = vmatpush2.msra.mxu0 0.0
    %7976 = vmatprep.subr.mxu0 0.0
    %7977 = vmatpush2.msra.mxu0 0.0
    %7978 = vmatprep.subr.mxu0 0.0
    %7979 = vmatpush2.msra.mxu0 0.0
    %7980 = vmatprep.subr.mxu0 0.0
    %7981 = vmatpush2.msra.mxu0 0.0
    %7982 = vmatprep.subr.mxu0 0.0
    %7983 = vmatpush2.msra.mxu0 0.0
    %7984 = vmatprep.subr.mxu0 0.0
    %7985 = vmatpush2.msra.mxu0 0.0
    %7986 = vmatprep.subr.mxu0 0.0
    %7987 = vmatpush2.msra.mxu0 0.0
    %7988 = vmatprep.subr.mxu0 0.0
    %7989 = vmatpush2.msra.mxu0 0.0
    %7990 = vmatprep.subr.mxu0 0.0
    %7991 = vmatpush2.msra.mxu0 0.0
    %7992 = vmatprep.subr.mxu0 0.0
    %7993 = vmatpush2.msra.mxu0 0.0
    %7994 = vmatprep.subr.mxu0 0.0
    %7995 = vmatpush2.msra.mxu0 0.0
    %7996 = vmatprep.subr.mxu0 0.0
    %7997 = vmatpush2.msra.mxu0 0.0
    %7998 = vmatprep.subr.mxu0 0.0
    %7999 = vmatpush2.msra.mxu0 0.0
    %8000 = vmatprep.subr.mxu0 0.0
    %8001 = vmatpush2.msra.mxu0 0.0
    %8002 = vmatprep.subr.mxu0 0.0
    %8003 = vmatpush2.msra.mxu0 0.0
    %8004 = vmatprep.subr.mxu0 0.0
    %8005 = vmatpush2.msra.mxu0 0.0
    %8006 = vmatprep.mubr.f32.mxu0 0.0
    %8007 = vmatmul.mubr.f32.gmra.mxu0 %v7937
    %v8008 = vpop.f32.mrf.mxu0
    %v8009 = vadd.f32 0.0, %v8008
    %v8010 = vpop.f32.mrf.mxu0
    %8011 = vmatprep.mubr.f32.mxu0 0.0
    %8012 = vmatmul.mubr.f32.gmra.mxu0 %v7940
    %v8013 = vpop.f32.mrf.mxu0
    %v8014 = vadd.f32 0.0, %v8013
    %v8015 = vpop.f32.mrf.mxu0
    %8016 = vdwg.mxu0
    %v8018 = vsel %vm6412, %v6800, 0
    %v8021 = vsel %vm6412, %v6801, 0
    %8023 = vmatprep.subr.mxu0 0.0
    %8024 = vmatpush1.msra.mxu0 0.0
    %8025 = vmatprep.subr.mxu0 0.0
    %8026 = vmatpush1.msra.mxu0 0.0
    %8027 = vmatprep.subr.mxu0 0.0
    %8028 = vmatpush1.msra.mxu0 0.0
    %8029 = vmatprep.subr.mxu0 0.0
    %8030 = vmatpush1.msra.mxu0 0.0
    %8031 = vmatprep.subr.mxu0 0.0
    %8032 = vmatpush1.msra.mxu0 0.0
    %8033 = vmatprep.subr.mxu0 0.0
    %8034 = vmatpush1.msra.mxu0 0.0
    %8035 = vmatprep.subr.mxu0 0.0
    %8036 = vmatpush1.msra.mxu0 0.0
    %8037 = vmatprep.subr.mxu0 0.0
    %8038 = vmatpush1.msra.mxu0 0.0
    %8039 = vmatprep.subr.mxu0 0.0
    %8040 = vmatpush1.msra.mxu0 0.0
    %8041 = vmatprep.subr.mxu0 0.0
    %8042 = vmatpush1.msra.mxu0 0.0
    %8043 = vmatprep.subr.mxu0 0.0
    %8044 = vmatpush1.msra.mxu0 0.0
    %8045 = vmatprep.subr.mxu0 0.0
    %8046 = vmatpush1.msra.mxu0 0.0
    %8047 = vmatprep.subr.mxu0 0.0
    %8048 = vmatpush1.msra.mxu0 0.0
    %8049 = vmatprep.subr.mxu0 0.0
    %8050 = vmatpush1.msra.mxu0 0.0
    %8051 = vmatprep.subr.mxu0 0.0
    %8052 = vmatpush1.msra.mxu0 %v4362
    %8053 = vmatprep.subr.mxu0 0.0
    %8054 = vmatpush1.msra.mxu0 %v4226
    %8055 = vmatprep.subr.mxu0 0.0
    %8056 = vmatpush2.msra.mxu0 0.0
    %8057 = vmatprep.subr.mxu0 0.0
    %8058 = vmatpush2.msra.mxu0 0.0
    %8059 = vmatprep.subr.mxu0 0.0
    %8060 = vmatpush2.msra.mxu0 0.0
    %8061 = vmatprep.subr.mxu0 0.0
    %8062 = vmatpush2.msra.mxu0 0.0
    %8063 = vmatprep.subr.mxu0 0.0
    %8064 = vmatpush2.msra.mxu0 0.0
    %8065 = vmatprep.subr.mxu0 0.0
    %8066 = vmatpush2.msra.mxu0 0.0
    %8067 = vmatprep.subr.mxu0 0.0
    %8068 = vmatpush2.msra.mxu0 0.0
    %8069 = vmatprep.subr.mxu0 0.0
    %8070 = vmatpush2.msra.mxu0 0.0
    %8071 = vmatprep.subr.mxu0 0.0
    %8072 = vmatpush2.msra.mxu0 0.0
    %8073 = vmatprep.subr.mxu0 0.0
    %8074 = vmatpush2.msra.mxu0 0.0
    %8075 = vmatprep.subr.mxu0 0.0
    %8076 = vmatpush2.msra.mxu0 0.0
    %8077 = vmatprep.subr.mxu0 0.0
    %8078 = vmatpush2.msra.mxu0 0.0
    %8079 = vmatprep.subr.mxu0 0.0
    %8080 = vmatpush2.msra.mxu0 0.0
    %8081 = vmatprep.subr.mxu0 0.0
    %8082 = vmatpush2.msra.mxu0 0.0
    %8083 = vmatprep.subr.mxu0 0.0
    %8084 = vmatpush2.msra.mxu0 0.0
    %8085 = vmatprep.subr.mxu0 0.0
    %8086 = vmatpush2.msra.mxu0 0.0
    %8087 = vmatprep.mubr.f32.mxu0 0.0
    %8088 = vmatmul.mubr.f32.gmra.mxu0 %v8018
    %v8089 = vpop.f32.mrf.mxu0
    %v8090 = vadd.f32 0.0, %v8089
    %v8091 = vpop.f32.mrf.mxu0
    %8092 = vmatprep.mubr.f32.mxu0 0.0
    %8093 = vmatmul.mubr.f32.gmra.mxu0 %v8021
    %v8094 = vpop.f32.mrf.mxu0
    %v8095 = vadd.f32 0.0, %v8094
    %v8096 = vpop.f32.mrf.mxu0
    %8097 = vdwg.mxu0
    %v8098 = vcombine.low %v6875, %v7037
    %v8099 = vcombine.high %v6875, %v7037
    %v8101 = vunpack.c.l.s4 1983009808
    %v8102 = vunpack.c.0.s8 %v8101
    %v8103 = vlaneseq
    %v8104 = vshrl.u32 %v8103, 7
    %v8105 = vsub.s32 %v8102, %v8104
    %v8106 = vrot.slane %v8098, %v8105
    %v8108 = vunpack.c.l.s4 1983009808
    %v8109 = vunpack.c.0.s8 %v8108
    %v8110 = vlaneseq
    %v8111 = vshrl.u32 %v8110, 7
    %v8112 = vsub.s32 %v8109, %v8111
    %v8113 = vrot.slane %v8099, %v8112
    %v8114 = vcombine.low %v6956, %v7118
    %v8115 = vcombine.high %v6956, %v7118
    %v8117 = vunpack.c.l.s4 1983009808
    %v8118 = vunpack.c.0.s8 %v8117
    %v8119 = vlaneseq
    %v8120 = vshrl.u32 %v8119, 7
    %v8121 = vsub.s32 %v8118, %v8120
    %v8122 = vrot.slane %v8114, %v8121
    %v8124 = vunpack.c.l.s4 1983009808
    %v8125 = vunpack.c.0.s8 %v8124
    %v8126 = vlaneseq
    %v8127 = vshrl.u32 %v8126, 7
    %v8128 = vsub.s32 %v8125, %v8127
    %v8129 = vrot.slane %v8115, %v8128
    %v8130 = vcombine.low %v7199, %v7361
    %v8131 = vcombine.high %v7199, %v7361
    %v8133 = vunpack.c.l.s4 1983009808
    %v8134 = vunpack.c.0.s8 %v8133
    %v8135 = vlaneseq
    %v8136 = vshrl.u32 %v8135, 7
    %v8137 = vsub.s32 %v8134, %v8136
    %v8138 = vrot.slane %v8130, %v8137
    %v8140 = vunpack.c.l.s4 1983009808
    %v8141 = vunpack.c.0.s8 %v8140
    %v8142 = vlaneseq
    %v8143 = vshrl.u32 %v8142, 7
    %v8144 = vsub.s32 %v8141, %v8143
    %v8145 = vrot.slane %v8131, %v8144
    %v8146 = vcombine.low %v7280, %v7442
    %v8147 = vcombine.high %v7280, %v7442
    %v8149 = vunpack.c.l.s4 1983009808
    %v8150 = vunpack.c.0.s8 %v8149
    %v8151 = vlaneseq
    %v8152 = vshrl.u32 %v8151, 7
    %v8153 = vsub.s32 %v8150, %v8152
    %v8154 = vrot.slane %v8146, %v8153
    %v8156 = vunpack.c.l.s4 1983009808
    %v8157 = vunpack.c.0.s8 %v8156
    %v8158 = vlaneseq
    %v8159 = vshrl.u32 %v8158, 7
    %v8160 = vsub.s32 %v8157, %v8159
    %v8161 = vrot.slane %v8147, %v8160
    %v8162 = vcombine.low %v8106, %v8122
    %v8163 = vcombine.high %v8106, %v8122
    %v8165 = vunpack.c.l.s4 1934713408
    %v8166 = vunpack.c.0.s8 %v8165
    %v8167 = vlaneseq
    %v8168 = vshrl.u32 %v8167, 7
    %v8169 = vsub.s32 %v8166, %v8168
    %v8170 = vrot.slane %v8162, %v8169
    %v8172 = vunpack.c.l.s4 1934713408
    %v8173 = vunpack.c.0.s8 %v8172
    %v8174 = vlaneseq
    %v8175 = vshrl.u32 %v8174, 7
    %v8176 = vsub.s32 %v8173, %v8175
    %v8177 = vrot.slane %v8163, %v8176
    %v8178 = vcombine.low %v8113, %v8129
    %v8179 = vcombine.high %v8113, %v8129
    %v8181 = vunpack.c.l.s4 1934713408
    %v8182 = vunpack.c.0.s8 %v8181
    %v8183 = vlaneseq
    %v8184 = vshrl.u32 %v8183, 7
    %v8185 = vsub.s32 %v8182, %v8184
    %v8186 = vrot.slane %v8178, %v8185
    %v8188 = vunpack.c.l.s4 1934713408
    %v8189 = vunpack.c.0.s8 %v8188
    %v8190 = vlaneseq
    %v8191 = vshrl.u32 %v8190, 7
    %v8192 = vsub.s32 %v8189, %v8191
    %v8193 = vrot.slane %v8179, %v8192
    %v8194 = vcombine.low %v8138, %v8154
    %v8195 = vcombine.high %v8138, %v8154
    %v8197 = vunpack.c.l.s4 1934713408
    %v8198 = vunpack.c.0.s8 %v8197
    %v8199 = vlaneseq
    %v8200 = vshrl.u32 %v8199, 7
    %v8201 = vsub.s32 %v8198, %v8200
    %v8202 = vrot.slane %v8194, %v8201
    %v8204 = vunpack.c.l.s4 1934713408
    %v8205 = vunpack.c.0.s8 %v8204
    %v8206 = vlaneseq
    %v8207 = vshrl.u32 %v8206, 7
    %v8208 = vsub.s32 %v8205, %v8207
    %v8209 = vrot.slane %v8195, %v8208
    %v8210 = vcombine.low %v8145, %v8161
    %v8211 = vcombine.high %v8145, %v8161
    %v8213 = vunpack.c.l.s4 1934713408
    %v8214 = vunpack.c.0.s8 %v8213
    %v8215 = vlaneseq
    %v8216 = vshrl.u32 %v8215, 7
    %v8217 = vsub.s32 %v8214, %v8216
    %v8218 = vrot.slane %v8210, %v8217
    %v8220 = vunpack.c.l.s4 1934713408
    %v8221 = vunpack.c.0.s8 %v8220
    %v8222 = vlaneseq
    %v8223 = vshrl.u32 %v8222, 7
    %v8224 = vsub.s32 %v8221, %v8223
    %v8225 = vrot.slane %v8211, %v8224
    %v8226 = vcombine.low %v8170, %v8202
    %v8227 = vcombine.high %v8170, %v8202
    %v8228 = vcombine.low %v8177, %v8209
    %v8229 = vcombine.high %v8177, %v8209
    %v8230 = vcombine.low %v8186, %v8218
    %v8231 = vcombine.high %v8186, %v8218
    %v8232 = vcombine.low %v8193, %v8225
    %v8233 = vcombine.high %v8193, %v8225
    %v8234 = vcombine.low %v6880, %v7042
    %v8235 = vcombine.high %v6880, %v7042
    %v8237 = vunpack.c.l.s4 1983009808
    %v8238 = vunpack.c.0.s8 %v8237
    %v8239 = vlaneseq
    %v8240 = vshrl.u32 %v8239, 7
    %v8241 = vsub.s32 %v8238, %v8240
    %v8242 = vrot.slane %v8234, %v8241
    %v8244 = vunpack.c.l.s4 1983009808
    %v8245 = vunpack.c.0.s8 %v8244
    %v8246 = vlaneseq
    %v8247 = vshrl.u32 %v8246, 7
    %v8248 = vsub.s32 %v8245, %v8247
    %v8249 = vrot.slane %v8235, %v8248
    %v8250 = vcombine.low %v6961, %v7123
    %v8251 = vcombine.high %v6961, %v7123
    %v8253 = vunpack.c.l.s4 1983009808
    %v8254 = vunpack.c.0.s8 %v8253
    %v8255 = vlaneseq
    %v8256 = vshrl.u32 %v8255, 7
    %v8257 = vsub.s32 %v8254, %v8256
    %v8258 = vrot.slane %v8250, %v8257
    %v8260 = vunpack.c.l.s4 1983009808
    %v8261 = vunpack.c.0.s8 %v8260
    %v8262 = vlaneseq
    %v8263 = vshrl.u32 %v8262, 7
    %v8264 = vsub.s32 %v8261, %v8263
    %v8265 = vrot.slane %v8251, %v8264
    %v8266 = vcombine.low %v7204, %v7366
    %v8267 = vcombine.high %v7204, %v7366
    %v8269 = vunpack.c.l.s4 1983009808
    %v8270 = vunpack.c.0.s8 %v8269
    %v8271 = vlaneseq
    %v8272 = vshrl.u32 %v8271, 7
    %v8273 = vsub.s32 %v8270, %v8272
    %v8274 = vrot.slane %v8266, %v8273
    %v8276 = vunpack.c.l.s4 1983009808
    %v8277 = vunpack.c.0.s8 %v8276
    %v8278 = vlaneseq
    %v8279 = vshrl.u32 %v8278, 7
    %v8280 = vsub.s32 %v8277, %v8279
    %v8281 = vrot.slane %v8267, %v8280
    %v8282 = vcombine.low %v7285, %v7447
    %v8283 = vcombine.high %v7285, %v7447
    %v8285 = vunpack.c.l.s4 1983009808
    %v8286 = vunpack.c.0.s8 %v8285
    %v8287 = vlaneseq
    %v8288 = vshrl.u32 %v8287, 7
    %v8289 = vsub.s32 %v8286, %v8288
    %v8290 = vrot.slane %v8282, %v8289
    %v8292 = vunpack.c.l.s4 1983009808
    %v8293 = vunpack.c.0.s8 %v8292
    %v8294 = vlaneseq
    %v8295 = vshrl.u32 %v8294, 7
    %v8296 = vsub.s32 %v8293, %v8295
    %v8297 = vrot.slane %v8283, %v8296
    %v8298 = vcombine.low %v8242, %v8258
    %v8299 = vcombine.high %v8242, %v8258
    %v8301 = vunpack.c.l.s4 1934713408
    %v8302 = vunpack.c.0.s8 %v8301
    %v8303 = vlaneseq
    %v8304 = vshrl.u32 %v8303, 7
    %v8305 = vsub.s32 %v8302, %v8304
    %v8306 = vrot.slane %v8298, %v8305
    %v8308 = vunpack.c.l.s4 1934713408
    %v8309 = vunpack.c.0.s8 %v8308
    %v8310 = vlaneseq
    %v8311 = vshrl.u32 %v8310, 7
    %v8312 = vsub.s32 %v8309, %v8311
    %v8313 = vrot.slane %v8299, %v8312
    %v8314 = vcombine.low %v8249, %v8265
    %v8315 = vcombine.high %v8249, %v8265
    %v8317 = vunpack.c.l.s4 1934713408
    %v8318 = vunpack.c.0.s8 %v8317
    %v8319 = vlaneseq
    %v8320 = vshrl.u32 %v8319, 7
    %v8321 = vsub.s32 %v8318, %v8320
    %v8322 = vrot.slane %v8314, %v8321
    %v8324 = vunpack.c.l.s4 1934713408
    %v8325 = vunpack.c.0.s8 %v8324
    %v8326 = vlaneseq
    %v8327 = vshrl.u32 %v8326, 7
    %v8328 = vsub.s32 %v8325, %v8327
    %v8329 = vrot.slane %v8315, %v8328
    %v8330 = vcombine.low %v8274, %v8290
    %v8331 = vcombine.high %v8274, %v8290
    %v8333 = vunpack.c.l.s4 1934713408
    %v8334 = vunpack.c.0.s8 %v8333
    %v8335 = vlaneseq
    %v8336 = vshrl.u32 %v8335, 7
    %v8337 = vsub.s32 %v8334, %v8336
    %v8338 = vrot.slane %v8330, %v8337
    %v8340 = vunpack.c.l.s4 1934713408
    %v8341 = vunpack.c.0.s8 %v8340
    %v8342 = vlaneseq
    %v8343 = vshrl.u32 %v8342, 7
    %v8344 = vsub.s32 %v8341, %v8343
    %v8345 = vrot.slane %v8331, %v8344
    %v8346 = vcombine.low %v8281, %v8297
    %v8347 = vcombine.high %v8281, %v8297
    %v8349 = vunpack.c.l.s4 1934713408
    %v8350 = vunpack.c.0.s8 %v8349
    %v8351 = vlaneseq
    %v8352 = vshrl.u32 %v8351, 7
    %v8353 = vsub.s32 %v8350, %v8352
    %v8354 = vrot.slane %v8346, %v8353
    %v8356 = vunpack.c.l.s4 1934713408
    %v8357 = vunpack.c.0.s8 %v8356
    %v8358 = vlaneseq
    %v8359 = vshrl.u32 %v8358, 7
    %v8360 = vsub.s32 %v8357, %v8359
    %v8361 = vrot.slane %v8347, %v8360
    %v8362 = vcombine.low %v8306, %v8338
    %v8363 = vcombine.high %v8306, %v8338
    %v8364 = vcombine.low %v8313, %v8345
    %v8365 = vcombine.high %v8313, %v8345
    %v8366 = vcombine.low %v8322, %v8354
    %v8367 = vcombine.high %v8322, %v8354
    %v8368 = vcombine.low %v8329, %v8361
    %v8369 = vcombine.high %v8329, %v8361
    %v8370 = vcombine.low %v7523, %v7685
    %v8371 = vcombine.high %v7523, %v7685
    %v8373 = vunpack.c.l.s4 1983009808
    %v8374 = vunpack.c.0.s8 %v8373
    %v8375 = vlaneseq
    %v8376 = vshrl.u32 %v8375, 7
    %v8377 = vsub.s32 %v8374, %v8376
    %v8378 = vrot.slane %v8370, %v8377
    %v8380 = vunpack.c.l.s4 1983009808
    %v8381 = vunpack.c.0.s8 %v8380
    %v8382 = vlaneseq
    %v8383 = vshrl.u32 %v8382, 7
    %v8384 = vsub.s32 %v8381, %v8383
    %v8385 = vrot.slane %v8371, %v8384
    %v8386 = vcombine.low %v7604, %v7766
    %v8387 = vcombine.high %v7604, %v7766
    %v8389 = vunpack.c.l.s4 1983009808
    %v8390 = vunpack.c.0.s8 %v8389
    %v8391 = vlaneseq
    %v8392 = vshrl.u32 %v8391, 7
    %v8393 = vsub.s32 %v8390, %v8392
    %v8394 = vrot.slane %v8386, %v8393
    %v8396 = vunpack.c.l.s4 1983009808
    %v8397 = vunpack.c.0.s8 %v8396
    %v8398 = vlaneseq
    %v8399 = vshrl.u32 %v8398, 7
    %v8400 = vsub.s32 %v8397, %v8399
    %v8401 = vrot.slane %v8387, %v8400
    %v8402 = vcombine.low %v7847, %v8009
    %v8403 = vcombine.high %v7847, %v8009
    %v8405 = vunpack.c.l.s4 1983009808
    %v8406 = vunpack.c.0.s8 %v8405
    %v8407 = vlaneseq
    %v8408 = vshrl.u32 %v8407, 7
    %v8409 = vsub.s32 %v8406, %v8408
    %v8410 = vrot.slane %v8402, %v8409
    %v8412 = vunpack.c.l.s4 1983009808
    %v8413 = vunpack.c.0.s8 %v8412
    %v8414 = vlaneseq
    %v8415 = vshrl.u32 %v8414, 7
    %v8416 = vsub.s32 %v8413, %v8415
    %v8417 = vrot.slane %v8403, %v8416
    %v8418 = vcombine.low %v7928, %v8090
    %v8419 = vcombine.high %v7928, %v8090
    %v8421 = vunpack.c.l.s4 1983009808
    %v8422 = vunpack.c.0.s8 %v8421
    %v8423 = vlaneseq
    %v8424 = vshrl.u32 %v8423, 7
    %v8425 = vsub.s32 %v8422, %v8424
    %v8426 = vrot.slane %v8418, %v8425
    %v8428 = vunpack.c.l.s4 1983009808
    %v8429 = vunpack.c.0.s8 %v8428
    %v8430 = vlaneseq
    %v8431 = vshrl.u32 %v8430, 7
    %v8432 = vsub.s32 %v8429, %v8431
    %v8433 = vrot.slane %v8419, %v8432
    %v8434 = vcombine.low %v8378, %v8394
    %v8435 = vcombine.high %v8378, %v8394
    %v8437 = vunpack.c.l.s4 1934713408
    %v8438 = vunpack.c.0.s8 %v8437
    %v8439 = vlaneseq
    %v8440 = vshrl.u32 %v8439, 7
    %v8441 = vsub.s32 %v8438, %v8440
    %v8442 = vrot.slane %v8434, %v8441
    %v8444 = vunpack.c.l.s4 1934713408
    %v8445 = vunpack.c.0.s8 %v8444
    %v8446 = vlaneseq
    %v8447 = vshrl.u32 %v8446, 7
    %v8448 = vsub.s32 %v8445, %v8447
    %v8449 = vrot.slane %v8435, %v8448
    %v8450 = vcombine.low %v8385, %v8401
    %v8451 = vcombine.high %v8385, %v8401
    %v8453 = vunpack.c.l.s4 1934713408
    %v8454 = vunpack.c.0.s8 %v8453
    %v8455 = vlaneseq
    %v8456 = vshrl.u32 %v8455, 7
    %v8457 = vsub.s32 %v8454, %v8456
    %v8458 = vrot.slane %v8450, %v8457
    %v8460 = vunpack.c.l.s4 1934713408
    %v8461 = vunpack.c.0.s8 %v8460
    %v8462 = vlaneseq
    %v8463 = vshrl.u32 %v8462, 7
    %v8464 = vsub.s32 %v8461, %v8463
    %v8465 = vrot.slane %v8451, %v8464
    %v8466 = vcombine.low %v8410, %v8426
    %v8467 = vcombine.high %v8410, %v8426
    %v8469 = vunpack.c.l.s4 1934713408
    %v8470 = vunpack.c.0.s8 %v8469
    %v8471 = vlaneseq
    %v8472 = vshrl.u32 %v8471, 7
    %v8473 = vsub.s32 %v8470, %v8472
    %v8474 = vrot.slane %v8466, %v8473
    %v8476 = vunpack.c.l.s4 1934713408
    %v8477 = vunpack.c.0.s8 %v8476
    %v8478 = vlaneseq
    %v8479 = vshrl.u32 %v8478, 7
    %v8480 = vsub.s32 %v8477, %v8479
    %v8481 = vrot.slane %v8467, %v8480
    %v8482 = vcombine.low %v8417, %v8433
    %v8483 = vcombine.high %v8417, %v8433
    %v8485 = vunpack.c.l.s4 1934713408
    %v8486 = vunpack.c.0.s8 %v8485
    %v8487 = vlaneseq
    %v8488 = vshrl.u32 %v8487, 7
    %v8489 = vsub.s32 %v8486, %v8488
    %v8490 = vrot.slane %v8482, %v8489
    %v8492 = vunpack.c.l.s4 1934713408
    %v8493 = vunpack.c.0.s8 %v8492
    %v8494 = vlaneseq
    %v8495 = vshrl.u32 %v8494, 7
    %v8496 = vsub.s32 %v8493, %v8495
    %v8497 = vrot.slane %v8483, %v8496
    %v8498 = vcombine.low %v8442, %v8474
    %v8499 = vcombine.high %v8442, %v8474
    %v8500 = vcombine.low %v8449, %v8481
    %v8501 = vcombine.high %v8449, %v8481
    %v8502 = vcombine.low %v8458, %v8490
    %v8503 = vcombine.high %v8458, %v8490
    %v8504 = vcombine.low %v8465, %v8497
    %v8505 = vcombine.high %v8465, %v8497
    %v8506 = vcombine.low %v7528, %v7690
    %v8507 = vcombine.high %v7528, %v7690
    %v8509 = vunpack.c.l.s4 1983009808
    %v8510 = vunpack.c.0.s8 %v8509
    %v8511 = vlaneseq
    %v8512 = vshrl.u32 %v8511, 7
    %v8513 = vsub.s32 %v8510, %v8512
    %v8514 = vrot.slane %v8506, %v8513
    %v8516 = vunpack.c.l.s4 1983009808
    %v8517 = vunpack.c.0.s8 %v8516
    %v8518 = vlaneseq
    %v8519 = vshrl.u32 %v8518, 7
    %v8520 = vsub.s32 %v8517, %v8519
    %v8521 = vrot.slane %v8507, %v8520
    %v8522 = vcombine.low %v7609, %v7771
    %v8523 = vcombine.high %v7609, %v7771
    %v8525 = vunpack.c.l.s4 1983009808
    %v8526 = vunpack.c.0.s8 %v8525
    %v8527 = vlaneseq
    %v8528 = vshrl.u32 %v8527, 7
    %v8529 = vsub.s32 %v8526, %v8528
    %v8530 = vrot.slane %v8522, %v8529
    %v8532 = vunpack.c.l.s4 1983009808
    %v8533 = vunpack.c.0.s8 %v8532
    %v8534 = vlaneseq
    %v8535 = vshrl.u32 %v8534, 7
    %v8536 = vsub.s32 %v8533, %v8535
    %v8537 = vrot.slane %v8523, %v8536
    %v8538 = vcombine.low %v7852, %v8014
    %v8539 = vcombine.high %v7852, %v8014
    %v8541 = vunpack.c.l.s4 1983009808
    %v8542 = vunpack.c.0.s8 %v8541
    %v8543 = vlaneseq
    %v8544 = vshrl.u32 %v8543, 7
    %v8545 = vsub.s32 %v8542, %v8544
    %v8546 = vrot.slane %v8538, %v8545
    %v8548 = vunpack.c.l.s4 1983009808
    %v8549 = vunpack.c.0.s8 %v8548
    %v8550 = vlaneseq
    %v8551 = vshrl.u32 %v8550, 7
    %v8552 = vsub.s32 %v8549, %v8551
    %v8553 = vrot.slane %v8539, %v8552
    %v8554 = vcombine.low %v7933, %v8095
    %v8555 = vcombine.high %v7933, %v8095
    %v8557 = vunpack.c.l.s4 1983009808
    %v8558 = vunpack.c.0.s8 %v8557
    %v8559 = vlaneseq
    %v8560 = vshrl.u32 %v8559, 7
    %v8561 = vsub.s32 %v8558, %v8560
    %v8562 = vrot.slane %v8554, %v8561
    %v8564 = vunpack.c.l.s4 1983009808
    %v8565 = vunpack.c.0.s8 %v8564
    %v8566 = vlaneseq
    %v8567 = vshrl.u32 %v8566, 7
    %v8568 = vsub.s32 %v8565, %v8567
    %v8569 = vrot.slane %v8555, %v8568
    %v8570 = vcombine.low %v8514, %v8530
    %v8571 = vcombine.high %v8514, %v8530
    %v8573 = vunpack.c.l.s4 1934713408
    %v8574 = vunpack.c.0.s8 %v8573
    %v8575 = vlaneseq
    %v8576 = vshrl.u32 %v8575, 7
    %v8577 = vsub.s32 %v8574, %v8576
    %v8578 = vrot.slane %v8570, %v8577
    %v8580 = vunpack.c.l.s4 1934713408
    %v8581 = vunpack.c.0.s8 %v8580
    %v8582 = vlaneseq
    %v8583 = vshrl.u32 %v8582, 7
    %v8584 = vsub.s32 %v8581, %v8583
    %v8585 = vrot.slane %v8571, %v8584
    %v8586 = vcombine.low %v8521, %v8537
    %v8587 = vcombine.high %v8521, %v8537
    %v8589 = vunpack.c.l.s4 1934713408
    %v8590 = vunpack.c.0.s8 %v8589
    %v8591 = vlaneseq
    %v8592 = vshrl.u32 %v8591, 7
    %v8593 = vsub.s32 %v8590, %v8592
    %v8594 = vrot.slane %v8586, %v8593
    %v8596 = vunpack.c.l.s4 1934713408
    %v8597 = vunpack.c.0.s8 %v8596
    %v8598 = vlaneseq
    %v8599 = vshrl.u32 %v8598, 7
    %v8600 = vsub.s32 %v8597, %v8599
    %v8601 = vrot.slane %v8587, %v8600
    %v8602 = vcombine.low %v8546, %v8562
    %v8603 = vcombine.high %v8546, %v8562
    %v8605 = vunpack.c.l.s4 1934713408
    %v8606 = vunpack.c.0.s8 %v8605
    %v8607 = vlaneseq
    %v8608 = vshrl.u32 %v8607, 7
    %v8609 = vsub.s32 %v8606, %v8608
    %v8610 = vrot.slane %v8602, %v8609
    %v8612 = vunpack.c.l.s4 1934713408
    %v8613 = vunpack.c.0.s8 %v8612
    %v8614 = vlaneseq
    %v8615 = vshrl.u32 %v8614, 7
    %v8616 = vsub.s32 %v8613, %v8615
    %v8617 = vrot.slane %v8603, %v8616
    %v8618 = vcombine.low %v8553, %v8569
    %v8619 = vcombine.high %v8553, %v8569
    %v8621 = vunpack.c.l.s4 1934713408
    %v8622 = vunpack.c.0.s8 %v8621
    %v8623 = vlaneseq
    %v8624 = vshrl.u32 %v8623, 7
    %v8625 = vsub.s32 %v8622, %v8624
    %v8626 = vrot.slane %v8618, %v8625
    %v8628 = vunpack.c.l.s4 1934713408
    %v8629 = vunpack.c.0.s8 %v8628
    %v8630 = vlaneseq
    %v8631 = vshrl.u32 %v8630, 7
    %v8632 = vsub.s32 %v8629, %v8631
    %v8633 = vrot.slane %v8619, %v8632
    %v8634 = vcombine.low %v8578, %v8610
    %v8635 = vcombine.high %v8578, %v8610
    %v8636 = vcombine.low %v8585, %v8617
    %v8637 = vcombine.high %v8585, %v8617
    %v8638 = vcombine.low %v8594, %v8626
    %v8639 = vcombine.high %v8594, %v8626
    %v8640 = vcombine.low %v8601, %v8633
    %v8641 = vcombine.high %v8601, %v8633
    %v8642 = vcombine.low %v8226, %v8228
    %v8643 = vcombine.high %v8226, %v8228
    %v8645 = vunpack.c.l.s4 1983009808
    %v8646 = vunpack.c.0.s8 %v8645
    %v8647 = vlaneseq
    %v8648 = vshrl.u32 %v8647, 7
    %v8649 = vsub.s32 %v8646, %v8648
    %v8650 = vrot.slane %v8642, %v8649
    %v8652 = vunpack.c.l.s4 1983009808
    %v8653 = vunpack.c.0.s8 %v8652
    %v8654 = vlaneseq
    %v8655 = vshrl.u32 %v8654, 7
    %v8656 = vsub.s32 %v8653, %v8655
    %v8657 = vrot.slane %v8643, %v8656
    %v8658 = vcombine.low %v8227, %v8229
    %v8659 = vcombine.high %v8227, %v8229
    %v8661 = vunpack.c.l.s4 1983009808
    %v8662 = vunpack.c.0.s8 %v8661
    %v8663 = vlaneseq
    %v8664 = vshrl.u32 %v8663, 7
    %v8665 = vsub.s32 %v8662, %v8664
    %v8666 = vrot.slane %v8658, %v8665
    %v8668 = vunpack.c.l.s4 1983009808
    %v8669 = vunpack.c.0.s8 %v8668
    %v8670 = vlaneseq
    %v8671 = vshrl.u32 %v8670, 7
    %v8672 = vsub.s32 %v8669, %v8671
    %v8673 = vrot.slane %v8659, %v8672
    %v8674 = vcombine.low %v8230, %v8232
    %v8675 = vcombine.high %v8230, %v8232
    %v8677 = vunpack.c.l.s4 1983009808
    %v8678 = vunpack.c.0.s8 %v8677
    %v8679 = vlaneseq
    %v8680 = vshrl.u32 %v8679, 7
    %v8681 = vsub.s32 %v8678, %v8680
    %v8682 = vrot.slane %v8674, %v8681
    %v8684 = vunpack.c.l.s4 1983009808
    %v8685 = vunpack.c.0.s8 %v8684
    %v8686 = vlaneseq
    %v8687 = vshrl.u32 %v8686, 7
    %v8688 = vsub.s32 %v8685, %v8687
    %v8689 = vrot.slane %v8675, %v8688
    %v8690 = vcombine.low %v8231, %v8233
    %v8691 = vcombine.high %v8231, %v8233
    %v8693 = vunpack.c.l.s4 1983009808
    %v8694 = vunpack.c.0.s8 %v8693
    %v8695 = vlaneseq
    %v8696 = vshrl.u32 %v8695, 7
    %v8697 = vsub.s32 %v8694, %v8696
    %v8698 = vrot.slane %v8690, %v8697
    %v8700 = vunpack.c.l.s4 1983009808
    %v8701 = vunpack.c.0.s8 %v8700
    %v8702 = vlaneseq
    %v8703 = vshrl.u32 %v8702, 7
    %v8704 = vsub.s32 %v8701, %v8703
    %v8705 = vrot.slane %v8691, %v8704
    %v8706 = vcombine.low %v8650, %v8666
    %v8707 = vcombine.high %v8650, %v8666
    %v8709 = vunpack.c.l.s4 1934713408
    %v8710 = vunpack.c.0.s8 %v8709
    %v8711 = vlaneseq
    %v8712 = vshrl.u32 %v8711, 7
    %v8713 = vsub.s32 %v8710, %v8712
    %v8714 = vrot.slane %v8706, %v8713
    %v8716 = vunpack.c.l.s4 1934713408
    %v8717 = vunpack.c.0.s8 %v8716
    %v8718 = vlaneseq
    %v8719 = vshrl.u32 %v8718, 7
    %v8720 = vsub.s32 %v8717, %v8719
    %v8721 = vrot.slane %v8707, %v8720
    %v8722 = vcombine.low %v8657, %v8673
    %v8723 = vcombine.high %v8657, %v8673
    %v8725 = vunpack.c.l.s4 1934713408
    %v8726 = vunpack.c.0.s8 %v8725
    %v8727 = vlaneseq
    %v8728 = vshrl.u32 %v8727, 7
    %v8729 = vsub.s32 %v8726, %v8728
    %v8730 = vrot.slane %v8722, %v8729
    %v8732 = vunpack.c.l.s4 1934713408
    %v8733 = vunpack.c.0.s8 %v8732
    %v8734 = vlaneseq
    %v8735 = vshrl.u32 %v8734, 7
    %v8736 = vsub.s32 %v8733, %v8735
    %v8737 = vrot.slane %v8723, %v8736
    %v8738 = vcombine.low %v8682, %v8698
    %v8739 = vcombine.high %v8682, %v8698
    %v8741 = vunpack.c.l.s4 1934713408
    %v8742 = vunpack.c.0.s8 %v8741
    %v8743 = vlaneseq
    %v8744 = vshrl.u32 %v8743, 7
    %v8745 = vsub.s32 %v8742, %v8744
    %v8746 = vrot.slane %v8738, %v8745
    %v8748 = vunpack.c.l.s4 1934713408
    %v8749 = vunpack.c.0.s8 %v8748
    %v8750 = vlaneseq
    %v8751 = vshrl.u32 %v8750, 7
    %v8752 = vsub.s32 %v8749, %v8751
    %v8753 = vrot.slane %v8739, %v8752
    %v8754 = vcombine.low %v8689, %v8705
    %v8755 = vcombine.high %v8689, %v8705
    %v8757 = vunpack.c.l.s4 1934713408
    %v8758 = vunpack.c.0.s8 %v8757
    %v8759 = vlaneseq
    %v8760 = vshrl.u32 %v8759, 7
    %v8761 = vsub.s32 %v8758, %v8760
    %v8762 = vrot.slane %v8754, %v8761
    %v8764 = vunpack.c.l.s4 1934713408
    %v8765 = vunpack.c.0.s8 %v8764
    %v8766 = vlaneseq
    %v8767 = vshrl.u32 %v8766, 7
    %v8768 = vsub.s32 %v8765, %v8767
    %v8769 = vrot.slane %v8755, %v8768
    %v8770 = vcombine.low %v8714, %v8746
    %v8771 = vcombine.high %v8714, %v8746
    %v8772 = vcombine.low %v8721, %v8753
    %v8773 = vcombine.high %v8721, %v8753
    %v8774 = vcombine.low %v8730, %v8762
    %v8775 = vcombine.high %v8730, %v8762
    %v8776 = vcombine.low %v8737, %v8769
    %v8777 = vcombine.high %v8737, %v8769
    %v8778 = vcombine.low %v8362, %v8364
    %v8779 = vcombine.high %v8362, %v8364
    %v8781 = vunpack.c.l.s4 1983009808
    %v8782 = vunpack.c.0.s8 %v8781
    %v8783 = vlaneseq
    %v8784 = vshrl.u32 %v8783, 7
    %v8785 = vsub.s32 %v8782, %v8784
    %v8786 = vrot.slane %v8778, %v8785
    %v8788 = vunpack.c.l.s4 1983009808
    %v8789 = vunpack.c.0.s8 %v8788
    %v8790 = vlaneseq
    %v8791 = vshrl.u32 %v8790, 7
    %v8792 = vsub.s32 %v8789, %v8791
    %v8793 = vrot.slane %v8779, %v8792
    %v8794 = vcombine.low %v8363, %v8365
    %v8795 = vcombine.high %v8363, %v8365
    %v8797 = vunpack.c.l.s4 1983009808
    %v8798 = vunpack.c.0.s8 %v8797
    %v8799 = vlaneseq
    %v8800 = vshrl.u32 %v8799, 7
    %v8801 = vsub.s32 %v8798, %v8800
    %v8802 = vrot.slane %v8794, %v8801
    %v8804 = vunpack.c.l.s4 1983009808
    %v8805 = vunpack.c.0.s8 %v8804
    %v8806 = vlaneseq
    %v8807 = vshrl.u32 %v8806, 7
    %v8808 = vsub.s32 %v8805, %v8807
    %v8809 = vrot.slane %v8795, %v8808
    %v8810 = vcombine.low %v8366, %v8368
    %v8811 = vcombine.high %v8366, %v8368
    %v8813 = vunpack.c.l.s4 1983009808
    %v8814 = vunpack.c.0.s8 %v8813
    %v8815 = vlaneseq
    %v8816 = vshrl.u32 %v8815, 7
    %v8817 = vsub.s32 %v8814, %v8816
    %v8818 = vrot.slane %v8810, %v8817
    %v8820 = vunpack.c.l.s4 1983009808
    %v8821 = vunpack.c.0.s8 %v8820
    %v8822 = vlaneseq
    %v8823 = vshrl.u32 %v8822, 7
    %v8824 = vsub.s32 %v8821, %v8823
    %v8825 = vrot.slane %v8811, %v8824
    %v8826 = vcombine.low %v8367, %v8369
    %v8827 = vcombine.high %v8367, %v8369
    %v8829 = vunpack.c.l.s4 1983009808
    %v8830 = vunpack.c.0.s8 %v8829
    %v8831 = vlaneseq
    %v8832 = vshrl.u32 %v8831, 7
    %v8833 = vsub.s32 %v8830, %v8832
    %v8834 = vrot.slane %v8826, %v8833
    %v8836 = vunpack.c.l.s4 1983009808
    %v8837 = vunpack.c.0.s8 %v8836
    %v8838 = vlaneseq
    %v8839 = vshrl.u32 %v8838, 7
    %v8840 = vsub.s32 %v8837, %v8839
    %v8841 = vrot.slane %v8827, %v8840
    %v8842 = vcombine.low %v8786, %v8802
    %v8843 = vcombine.high %v8786, %v8802
    %v8845 = vunpack.c.l.s4 1934713408
    %v8846 = vunpack.c.0.s8 %v8845
    %v8847 = vlaneseq
    %v8848 = vshrl.u32 %v8847, 7
    %v8849 = vsub.s32 %v8846, %v8848
    %v8850 = vrot.slane %v8842, %v8849
    %v8852 = vunpack.c.l.s4 1934713408
    %v8853 = vunpack.c.0.s8 %v8852
    %v8854 = vlaneseq
    %v8855 = vshrl.u32 %v8854, 7
    %v8856 = vsub.s32 %v8853, %v8855
    %v8857 = vrot.slane %v8843, %v8856
    %v8858 = vcombine.low %v8793, %v8809
    %v8859 = vcombine.high %v8793, %v8809
    %v8861 = vunpack.c.l.s4 1934713408
    %v8862 = vunpack.c.0.s8 %v8861
    %v8863 = vlaneseq
    %v8864 = vshrl.u32 %v8863, 7
    %v8865 = vsub.s32 %v8862, %v8864
    %v8866 = vrot.slane %v8858, %v8865
    %v8868 = vunpack.c.l.s4 1934713408
    %v8869 = vunpack.c.0.s8 %v8868
    %v8870 = vlaneseq
    %v8871 = vshrl.u32 %v8870, 7
    %v8872 = vsub.s32 %v8869, %v8871
    %v8873 = vrot.slane %v8859, %v8872
    %v8874 = vcombine.low %v8818, %v8834
    %v8875 = vcombine.high %v8818, %v8834
    %v8877 = vunpack.c.l.s4 1934713408
    %v8878 = vunpack.c.0.s8 %v8877
    %v8879 = vlaneseq
    %v8880 = vshrl.u32 %v8879, 7
    %v8881 = vsub.s32 %v8878, %v8880
    %v8882 = vrot.slane %v8874, %v8881
    %v8884 = vunpack.c.l.s4 1934713408
    %v8885 = vunpack.c.0.s8 %v8884
    %v8886 = vlaneseq
    %v8887 = vshrl.u32 %v8886, 7
    %v8888 = vsub.s32 %v8885, %v8887
    %v8889 = vrot.slane %v8875, %v8888
    %v8890 = vcombine.low %v8825, %v8841
    %v8891 = vcombine.high %v8825, %v8841
    %v8893 = vunpack.c.l.s4 1934713408
    %v8894 = vunpack.c.0.s8 %v8893
    %v8895 = vlaneseq
    %v8896 = vshrl.u32 %v8895, 7
    %v8897 = vsub.s32 %v8894, %v8896
    %v8898 = vrot.slane %v8890, %v8897
    %v8900 = vunpack.c.l.s4 1934713408
    %v8901 = vunpack.c.0.s8 %v8900
    %v8902 = vlaneseq
    %v8903 = vshrl.u32 %v8902, 7
    %v8904 = vsub.s32 %v8901, %v8903
    %v8905 = vrot.slane %v8891, %v8904
    %v8906 = vcombine.low %v8850, %v8882
    %v8907 = vcombine.high %v8850, %v8882
    %v8908 = vcombine.low %v8857, %v8889
    %v8909 = vcombine.high %v8857, %v8889
    %v8910 = vcombine.low %v8866, %v8898
    %v8911 = vcombine.high %v8866, %v8898
    %v8912 = vcombine.low %v8873, %v8905
    %v8913 = vcombine.high %v8873, %v8905
    %v8914 = vcombine.low %v8498, %v8500
    %v8915 = vcombine.high %v8498, %v8500
    %v8917 = vunpack.c.l.s4 1983009808
    %v8918 = vunpack.c.0.s8 %v8917
    %v8919 = vlaneseq
    %v8920 = vshrl.u32 %v8919, 7
    %v8921 = vsub.s32 %v8918, %v8920
    %v8922 = vrot.slane %v8914, %v8921
    %v8924 = vunpack.c.l.s4 1983009808
    %v8925 = vunpack.c.0.s8 %v8924
    %v8926 = vlaneseq
    %v8927 = vshrl.u32 %v8926, 7
    %v8928 = vsub.s32 %v8925, %v8927
    %v8929 = vrot.slane %v8915, %v8928
    %v8930 = vcombine.low %v8499, %v8501
    %v8931 = vcombine.high %v8499, %v8501
    %v8933 = vunpack.c.l.s4 1983009808
    %v8934 = vunpack.c.0.s8 %v8933
    %v8935 = vlaneseq
    %v8936 = vshrl.u32 %v8935, 7
    %v8937 = vsub.s32 %v8934, %v8936
    %v8938 = vrot.slane %v8930, %v8937
    %v8940 = vunpack.c.l.s4 1983009808
    %v8941 = vunpack.c.0.s8 %v8940
    %v8942 = vlaneseq
    %v8943 = vshrl.u32 %v8942, 7
    %v8944 = vsub.s32 %v8941, %v8943
    %v8945 = vrot.slane %v8931, %v8944
    %v8946 = vcombine.low %v8502, %v8504
    %v8947 = vcombine.high %v8502, %v8504
    %v8949 = vunpack.c.l.s4 1983009808
    %v8950 = vunpack.c.0.s8 %v8949
    %v8951 = vlaneseq
    %v8952 = vshrl.u32 %v8951, 7
    %v8953 = vsub.s32 %v8950, %v8952
    %v8954 = vrot.slane %v8946, %v8953
    %v8956 = vunpack.c.l.s4 1983009808
    %v8957 = vunpack.c.0.s8 %v8956
    %v8958 = vlaneseq
    %v8959 = vshrl.u32 %v8958, 7
    %v8960 = vsub.s32 %v8957, %v8959
    %v8961 = vrot.slane %v8947, %v8960
    %v8962 = vcombine.low %v8503, %v8505
    %v8963 = vcombine.high %v8503, %v8505
    %v8965 = vunpack.c.l.s4 1983009808
    %v8966 = vunpack.c.0.s8 %v8965
    %v8967 = vlaneseq
    %v8968 = vshrl.u32 %v8967, 7
    %v8969 = vsub.s32 %v8966, %v8968
    %v8970 = vrot.slane %v8962, %v8969
    %v8972 = vunpack.c.l.s4 1983009808
    %v8973 = vunpack.c.0.s8 %v8972
    %v8974 = vlaneseq
    %v8975 = vshrl.u32 %v8974, 7
    %v8976 = vsub.s32 %v8973, %v8975
    %v8977 = vrot.slane %v8963, %v8976
    %v8978 = vcombine.low %v8922, %v8938
    %v8979 = vcombine.high %v8922, %v8938
    %v8981 = vunpack.c.l.s4 1934713408
    %v8982 = vunpack.c.0.s8 %v8981
    %v8983 = vlaneseq
    %v8984 = vshrl.u32 %v8983, 7
    %v8985 = vsub.s32 %v8982, %v8984
    %v8986 = vrot.slane %v8978, %v8985
    %v8988 = vunpack.c.l.s4 1934713408
    %v8989 = vunpack.c.0.s8 %v8988
    %v8990 = vlaneseq
    %v8991 = vshrl.u32 %v8990, 7
    %v8992 = vsub.s32 %v8989, %v8991
    %v8993 = vrot.slane %v8979, %v8992
    %v8994 = vcombine.low %v8929, %v8945
    %v8995 = vcombine.high %v8929, %v8945
    %v8997 = vunpack.c.l.s4 1934713408
    %v8998 = vunpack.c.0.s8 %v8997
    %v8999 = vlaneseq
    %v9000 = vshrl.u32 %v8999, 7
    %v9001 = vsub.s32 %v8998, %v9000
    %v9002 = vrot.slane %v8994, %v9001
    %v9004 = vunpack.c.l.s4 1934713408
    %v9005 = vunpack.c.0.s8 %v9004
    %v9006 = vlaneseq
    %v9007 = vshrl.u32 %v9006, 7
    %v9008 = vsub.s32 %v9005, %v9007
    %v9009 = vrot.slane %v8995, %v9008
    %v9010 = vcombine.low %v8954, %v8970
    %v9011 = vcombine.high %v8954, %v8970
    %v9013 = vunpack.c.l.s4 1934713408
    %v9014 = vunpack.c.0.s8 %v9013
    %v9015 = vlaneseq
    %v9016 = vshrl.u32 %v9015, 7
    %v9017 = vsub.s32 %v9014, %v9016
    %v9018 = vrot.slane %v9010, %v9017
    %v9020 = vunpack.c.l.s4 1934713408
    %v9021 = vunpack.c.0.s8 %v9020
    %v9022 = vlaneseq
    %v9023 = vshrl.u32 %v9022, 7
    %v9024 = vsub.s32 %v9021, %v9023
    %v9025 = vrot.slane %v9011, %v9024
    %v9026 = vcombine.low %v8961, %v8977
    %v9027 = vcombine.high %v8961, %v8977
    %v9029 = vunpack.c.l.s4 1934713408
    %v9030 = vunpack.c.0.s8 %v9029
    %v9031 = vlaneseq
    %v9032 = vshrl.u32 %v9031, 7
    %v9033 = vsub.s32 %v9030, %v9032
    %v9034 = vrot.slane %v9026, %v9033
    %v9036 = vunpack.c.l.s4 1934713408
    %v9037 = vunpack.c.0.s8 %v9036
    %v9038 = vlaneseq
    %v9039 = vshrl.u32 %v9038, 7
    %v9040 = vsub.s32 %v9037, %v9039
    %v9041 = vrot.slane %v9027, %v9040
    %v9042 = vcombine.low %v8986, %v9018
    %v9043 = vcombine.high %v8986, %v9018
    %v9044 = vcombine.low %v8993, %v9025
    %v9045 = vcombine.high %v8993, %v9025
    %v9046 = vcombine.low %v9002, %v9034
    %v9047 = vcombine.high %v9002, %v9034
    %v9048 = vcombine.low %v9009, %v9041
    %v9049 = vcombine.high %v9009, %v9041
    %v9050 = vcombine.low %v8634, %v8636
    %v9051 = vcombine.high %v8634, %v8636
    %v9053 = vunpack.c.l.s4 1983009808
    %v9054 = vunpack.c.0.s8 %v9053
    %v9055 = vlaneseq
    %v9056 = vshrl.u32 %v9055, 7
    %v9057 = vsub.s32 %v9054, %v9056
    %v9058 = vrot.slane %v9050, %v9057
    %v9060 = vunpack.c.l.s4 1983009808
    %v9061 = vunpack.c.0.s8 %v9060
    %v9062 = vlaneseq
    %v9063 = vshrl.u32 %v9062, 7
    %v9064 = vsub.s32 %v9061, %v9063
    %v9065 = vrot.slane %v9051, %v9064
    %v9066 = vcombine.low %v8635, %v8637
    %v9067 = vcombine.high %v8635, %v8637
    %v9069 = vunpack.c.l.s4 1983009808
    %v9070 = vunpack.c.0.s8 %v9069
    %v9071 = vlaneseq
    %v9072 = vshrl.u32 %v9071, 7
    %v9073 = vsub.s32 %v9070, %v9072
    %v9074 = vrot.slane %v9066, %v9073
    %v9076 = vunpack.c.l.s4 1983009808
    %v9077 = vunpack.c.0.s8 %v9076
    %v9078 = vlaneseq
    %v9079 = vshrl.u32 %v9078, 7
    %v9080 = vsub.s32 %v9077, %v9079
    %v9081 = vrot.slane %v9067, %v9080
    %v9082 = vcombine.low %v8638, %v8640
    %v9083 = vcombine.high %v8638, %v8640
    %v9085 = vunpack.c.l.s4 1983009808
    %v9086 = vunpack.c.0.s8 %v9085
    %v9087 = vlaneseq
    %v9088 = vshrl.u32 %v9087, 7
    %v9089 = vsub.s32 %v9086, %v9088
    %v9090 = vrot.slane %v9082, %v9089
    %v9092 = vunpack.c.l.s4 1983009808
    %v9093 = vunpack.c.0.s8 %v9092
    %v9094 = vlaneseq
    %v9095 = vshrl.u32 %v9094, 7
    %v9096 = vsub.s32 %v9093, %v9095
    %v9097 = vrot.slane %v9083, %v9096
    %v9098 = vcombine.low %v8639, %v8641
    %v9099 = vcombine.high %v8639, %v8641
    %v9101 = vunpack.c.l.s4 1983009808
    %v9102 = vunpack.c.0.s8 %v9101
    %v9103 = vlaneseq
    %v9104 = vshrl.u32 %v9103, 7
    %v9105 = vsub.s32 %v9102, %v9104
    %v9106 = vrot.slane %v9098, %v9105
    %v9108 = vunpack.c.l.s4 1983009808
    %v9109 = vunpack.c.0.s8 %v9108
    %v9110 = vlaneseq
    %v9111 = vshrl.u32 %v9110, 7
    %v9112 = vsub.s32 %v9109, %v9111
    %v9113 = vrot.slane %v9099, %v9112
    %v9114 = vcombine.low %v9058, %v9074
    %v9115 = vcombine.high %v9058, %v9074
    %v9117 = vunpack.c.l.s4 1934713408
    %v9118 = vunpack.c.0.s8 %v9117
    %v9119 = vlaneseq
    %v9120 = vshrl.u32 %v9119, 7
    %v9121 = vsub.s32 %v9118, %v9120
    %v9122 = vrot.slane %v9114, %v9121
    %v9124 = vunpack.c.l.s4 1934713408
    %v9125 = vunpack.c.0.s8 %v9124
    %v9126 = vlaneseq
    %v9127 = vshrl.u32 %v9126, 7
    %v9128 = vsub.s32 %v9125, %v9127
    %v9129 = vrot.slane %v9115, %v9128
    %v9130 = vcombine.low %v9065, %v9081
    %v9131 = vcombine.high %v9065, %v9081
    %v9133 = vunpack.c.l.s4 1934713408
    %v9134 = vunpack.c.0.s8 %v9133
    %v9135 = vlaneseq
    %v9136 = vshrl.u32 %v9135, 7
    %v9137 = vsub.s32 %v9134, %v9136
    %v9138 = vrot.slane %v9130, %v9137
    %v9140 = vunpack.c.l.s4 1934713408
    %v9141 = vunpack.c.0.s8 %v9140
    %v9142 = vlaneseq
    %v9143 = vshrl.u32 %v9142, 7
    %v9144 = vsub.s32 %v9141, %v9143
    %v9145 = vrot.slane %v9131, %v9144
    %v9146 = vcombine.low %v9090, %v9106
    %v9147 = vcombine.high %v9090, %v9106
    %v9149 = vunpack.c.l.s4 1934713408
    %v9150 = vunpack.c.0.s8 %v9149
    %v9151 = vlaneseq
    %v9152 = vshrl.u32 %v9151, 7
    %v9153 = vsub.s32 %v9150, %v9152
    %v9154 = vrot.slane %v9146, %v9153
    %v9156 = vunpack.c.l.s4 1934713408
    %v9157 = vunpack.c.0.s8 %v9156
    %v9158 = vlaneseq
    %v9159 = vshrl.u32 %v9158, 7
    %v9160 = vsub.s32 %v9157, %v9159
    %v9161 = vrot.slane %v9147, %v9160
    %v9162 = vcombine.low %v9097, %v9113
    %v9163 = vcombine.high %v9097, %v9113
    %v9165 = vunpack.c.l.s4 1934713408
    %v9166 = vunpack.c.0.s8 %v9165
    %v9167 = vlaneseq
    %v9168 = vshrl.u32 %v9167, 7
    %v9169 = vsub.s32 %v9166, %v9168
    %v9170 = vrot.slane %v9162, %v9169
    %v9172 = vunpack.c.l.s4 1934713408
    %v9173 = vunpack.c.0.s8 %v9172
    %v9174 = vlaneseq
    %v9175 = vshrl.u32 %v9174, 7
    %v9176 = vsub.s32 %v9173, %v9175
    %v9177 = vrot.slane %v9163, %v9176
    %v9178 = vcombine.low %v9122, %v9154
    %v9179 = vcombine.high %v9122, %v9154
    %v9180 = vcombine.low %v9129, %v9161
    %v9181 = vcombine.high %v9129, %v9161
    %v9182 = vcombine.low %v9138, %v9170
    %v9183 = vcombine.high %v9138, %v9170
    %v9184 = vcombine.low %v9145, %v9177
    %v9185 = vcombine.high %v9145, %v9177
    %9190 = vrot.lane.b32.xlu0 %v8771, 4
    %v9191 = vpop.permute.xlu0 %9190
    %9192 = vrot.lane.b32.xlu0 %v8907, 4
    %v9193 = vpop.permute.xlu0 %9192
    %9194 = vrot.lane.b32.xlu0 %v9043, 4
    %v9195 = vpop.permute.xlu0 %9194
    %9196 = vrot.lane.b32.xlu0 %v9179, 4
    %v9197 = vpop.permute.xlu0 %9196
    %9206 = vrot.lane.b32.xlu0 %v8772, 8
    %v9207 = vpop.permute.xlu0 %9206
    %9208 = vrot.lane.b32.xlu0 %v8908, 8
    %v9209 = vpop.permute.xlu0 %9208
    %9210 = vrot.lane.b32.xlu0 %v9044, 8
    %v9211 = vpop.permute.xlu0 %9210
    %9212 = vrot.lane.b32.xlu0 %v9180, 8
    %v9213 = vpop.permute.xlu0 %9212
    %9222 = vrot.lane.b32.xlu0 %v8773, 12
    %v9223 = vpop.permute.xlu0 %9222
    %9224 = vrot.lane.b32.xlu0 %v8909, 12
    %v9225 = vpop.permute.xlu0 %9224
    %9226 = vrot.lane.b32.xlu0 %v9045, 12
    %v9227 = vpop.permute.xlu0 %9226
    %9228 = vrot.lane.b32.xlu0 %v9181, 12
    %v9229 = vpop.permute.xlu0 %9228
    %9238 = vrot.lane.b32.xlu0 %v8774, 16
    %v9239 = vpop.permute.xlu0 %9238
    %9240 = vrot.lane.b32.xlu0 %v8910, 16
    %v9241 = vpop.permute.xlu0 %9240
    %9242 = vrot.lane.b32.xlu0 %v9046, 16
    %v9243 = vpop.permute.xlu0 %9242
    %9244 = vrot.lane.b32.xlu0 %v9182, 16
    %v9245 = vpop.permute.xlu0 %9244
    %9254 = vrot.lane.b32.xlu0 %v8775, 20
    %v9255 = vpop.permute.xlu0 %9254
    %9256 = vrot.lane.b32.xlu0 %v8911, 20
    %v9257 = vpop.permute.xlu0 %9256
    %9258 = vrot.lane.b32.xlu0 %v9047, 20
    %v9259 = vpop.permute.xlu0 %9258
    %9260 = vrot.lane.b32.xlu0 %v9183, 20
    %v9261 = vpop.permute.xlu0 %9260
    %9270 = vrot.lane.b32.xlu0 %v8776, 24
    %v9271 = vpop.permute.xlu0 %9270
    %9272 = vrot.lane.b32.xlu0 %v8912, 24
    %v9273 = vpop.permute.xlu0 %9272
    %9274 = vrot.lane.b32.xlu0 %v9048, 24
    %v9275 = vpop.permute.xlu0 %9274
    %9276 = vrot.lane.b32.xlu0 %v9184, 24
    %v9277 = vpop.permute.xlu0 %9276
    %9286 = vrot.lane.b32.xlu0 %v8777, 28
    %v9287 = vpop.permute.xlu0 %9286
    %9288 = vrot.lane.b32.xlu0 %v8913, 28
    %v9289 = vpop.permute.xlu0 %9288
    %9290 = vrot.lane.b32.xlu0 %v9049, 28
    %v9291 = vpop.permute.xlu0 %9290
    %9292 = vrot.lane.b32.xlu0 %v9185, 28
    %v9293 = vpop.permute.xlu0 %9292
    %v9298 = vsel %vm4363, %v8770, %v9191
    %v9299 = vsel %vm4363, %v8906, %v9193
    %v9300 = vsel %vm4363, %v9042, %v9195
    %v9301 = vsel %vm4363, %v9178, %v9197
    %vm9302 = vcmask 64512
    %v9303 = vsel %vm9302, %v9298, %v9207
    %v9304 = vsel %vm9302, %v9299, %v9209
    %v9305 = vsel %vm9302, %v9300, %v9211
    %v9306 = vsel %vm9302, %v9301, %v9213
    %vm9307 = vcmask 97280
    %v9308 = vsel %vm9307, %v9303, %v9223
    %v9309 = vsel %vm9307, %v9304, %v9225
    %v9310 = vsel %vm9307, %v9305, %v9227
    %v9311 = vsel %vm9307, %v9306, %v9229
    %v9312 = vsel %vm6412, %v9308, %v9239
    %v9313 = vsel %vm6412, %v9309, %v9241
    %v9314 = vsel %vm6412, %v9310, %v9243
    %v9315 = vsel %vm6412, %v9311, %v9245
    %vm9316 = vcmask 162816
    %v9317 = vsel %vm9316, %v9312, %v9255
    %v9318 = vsel %vm9316, %v9313, %v9257
    %v9319 = vsel %vm9316, %v9314, %v9259
    %v9320 = vsel %vm9316, %v9315, %v9261
    %vm9321 = vcmask 195584
    %v9322 = vsel %vm9321, %v9317, %v9271
    %v9323 = vsel %vm9321, %v9318, %v9273
    %v9324 = vsel %vm9321, %v9319, %v9275
    %v9325 = vsel %vm9321, %v9320, %v9277
    %vm9326 = vcmask 228352
    %v9327 = vsel %vm9326, %v9322, %v9287
    %v9328 = vsel %vm9326, %v9323, %v9289
    %v9329 = vsel %vm9326, %v9324, %v9291
    %v9330 = vsel %vm9326, %v9325, %v9293
    %s9331 = scalar_lea.vmem %s2, 96
    %v9332 = vld [vmem:[%s9331] sm:$0xff]
    %v9333 = vld [vmem:[%s9331 + $0x8] sm:$0xff]
    %v9334 = vld [vmem:[%s9331 + $0x10] sm:$0xff]
    %v9335 = vld [vmem:[%s9331 + $0x18] sm:$0xff]
    %v9336 = vlaneseq
    %v9337 = vshrl.u32 %v9336, 7
    %v9338 = vsub.s32 6, %v9337
    %v9339 = vrot.slane %v36, %v9338
    %v9341 = vsel %vm46, %v9327, 0
    %v9344 = vsel %vm46, %v9328, 0
    %v9347 = vsel %vm46, %v9329, 0
    %v9350 = vsel %vm46, %v9330, 0
    %9352 = vmatprep.subr.mxu0 0.0
    %9353 = vmatpush1.msra.mxu0 0.0
    %9354 = vmatprep.subr.mxu0 0.0
    %9355 = vmatpush1.msra.mxu0 0.0
    %9356 = vmatprep.subr.mxu0 0.0
    %9357 = vmatpush1.msra.mxu0 0.0
    %9358 = vmatprep.subr.mxu0 0.0
    %9359 = vmatpush1.msra.mxu0 0.0
    %9360 = vmatprep.subr.mxu0 0.0
    %9361 = vmatpush1.msra.mxu0 0.0
    %9362 = vmatprep.subr.mxu0 0.0
    %9363 = vmatpush1.msra.mxu0 0.0
    %9364 = vmatprep.subr.mxu0 0.0
    %9365 = vmatpush1.msra.mxu0 0.0
    %9366 = vmatprep.subr.mxu0 0.0
    %9367 = vmatpush1.msra.mxu0 0.0
    %9368 = vmatprep.subr.mxu0 0.0
    %9369 = vmatpush1.msra.mxu0 0.0
    %9370 = vmatprep.subr.mxu0 0.0
    %9371 = vmatpush1.msra.mxu0 0.0
    %9372 = vmatprep.subr.mxu0 0.0
    %9373 = vmatpush1.msra.mxu0 0.0
    %9374 = vmatprep.subr.mxu0 0.0
    %9375 = vmatpush1.msra.mxu0 0.0
    %9376 = vmatprep.subr.mxu0 0.0
    %9377 = vmatpush1.msra.mxu0 %v9335
    %9378 = vmatprep.subr.mxu0 0.0
    %9379 = vmatpush1.msra.mxu0 %v9334
    %9380 = vmatprep.subr.mxu0 0.0
    %9381 = vmatpush1.msra.mxu0 %v9333
    %9382 = vmatprep.subr.mxu0 0.0
    %9383 = vmatpush1.msra.mxu0 %v9332
    %9384 = vmatprep.subr.mxu0 0.0
    %9385 = vmatpush2.msra.mxu0 0.0
    %9386 = vmatprep.subr.mxu0 0.0
    %9387 = vmatpush2.msra.mxu0 0.0
    %9388 = vmatprep.subr.mxu0 0.0
    %9389 = vmatpush2.msra.mxu0 0.0
    %9390 = vmatprep.subr.mxu0 0.0
    %9391 = vmatpush2.msra.mxu0 0.0
    %9392 = vmatprep.subr.mxu0 0.0
    %9393 = vmatpush2.msra.mxu0 0.0
    %9394 = vmatprep.subr.mxu0 0.0
    %9395 = vmatpush2.msra.mxu0 0.0
    %9396 = vmatprep.subr.mxu0 0.0
    %9397 = vmatpush2.msra.mxu0 0.0
    %9398 = vmatprep.subr.mxu0 0.0
    %9399 = vmatpush2.msra.mxu0 0.0
    %9400 = vmatprep.subr.mxu0 0.0
    %9401 = vmatpush2.msra.mxu0 0.0
    %9402 = vmatprep.subr.mxu0 0.0
    %9403 = vmatpush2.msra.mxu0 0.0
    %9404 = vmatprep.subr.mxu0 0.0
    %9405 = vmatpush2.msra.mxu0 0.0
    %9406 = vmatprep.subr.mxu0 0.0
    %9407 = vmatpush2.msra.mxu0 0.0
    %9408 = vmatprep.subr.mxu0 0.0
    %9409 = vmatpush2.msra.mxu0 0.0
    %9410 = vmatprep.subr.mxu0 0.0
    %9411 = vmatpush2.msra.mxu0 0.0
    %9412 = vmatprep.subr.mxu0 0.0
    %9413 = vmatpush2.msra.mxu0 0.0
    %9414 = vmatprep.subr.mxu0 0.0
    %9415 = vmatpush2.msra.mxu0 0.0
    %9416 = vmatprep.mubr.f32.mxu0 0.0
    %9417 = vmatmul.mubr.f32.gmra.mxu0 %v9341
    %v9418 = vpop.f32.mrf.mxu0
    %v9419 = vadd.f32 %v9339, %v9418
    %v9420 = vpop.f32.mrf.mxu0
    %9421 = vmatprep.mubr.f32.mxu0 0.0
    %9422 = vmatmul.mubr.f32.gmra.mxu0 %v9344
    %v9423 = vpop.f32.mrf.mxu0
    %v9424 = vadd.f32 %v9339, %v9423
    %v9425 = vpop.f32.mrf.mxu0
    %9426 = vmatprep.mubr.f32.mxu0 0.0
    %9427 = vmatmul.mubr.f32.gmra.mxu0 %v9347
    %v9428 = vpop.f32.mrf.mxu0
    %v9429 = vadd.f32 %v9339, %v9428
    %v9430 = vpop.f32.mrf.mxu0
    %9431 = vmatprep.mubr.f32.mxu0 0.0
    %9432 = vmatmul.mubr.f32.gmra.mxu0 %v9350
    %v9433 = vpop.f32.mrf.mxu0
    %v9434 = vadd.f32 %v9339, %v9433
    %v9435 = vpop.f32.mrf.mxu0
    %9436 = vdwg.mxu0
    %v9437 = vadd.f32 %v562, %v9419
    %v9438 = vadd.f32 %v563, %v9424
    %v9439 = vadd.f32 %v564, %v9429
    %v9440 = vadd.f32 %v565, %v9434
    %v9441 = vsel %vm46, %v9437, 0.0
    %9442 = vadd.xlane.f32.xlu0 %v9441
    %v9443 = vpop.xlane.xlu0 %9442
    %v9444 = vsel %vm46, %v9438, 0.0
    %9445 = vadd.xlane.f32.xlu0 %v9444
    %v9446 = vpop.xlane.xlu0 %9445
    %v9447 = vsel %vm46, %v9439, 0.0
    %9448 = vadd.xlane.f32.xlu0 %v9447
    %v9449 = vpop.xlane.xlu0 %9448
    %v9450 = vsel %vm46, %v9440, 0.0
    %9451 = vadd.xlane.f32.xlu0 %v9450
    %v9452 = vpop.xlane.xlu0 %9451
    %v9453 = vmul.f32 %v9443, %v509
    %v9454 = vmul.f32 %v9446, %v509
    %v9455 = vmul.f32 %v9449, %v509
    %v9456 = vmul.f32 %v9452, %v509
    %v9457 = vsub.f32 %v9437, %v9453
    %v9458 = vsub.f32 %v9438, %v9454
    %v9459 = vsub.f32 %v9439, %v9455
    %v9460 = vsub.f32 %v9440, %v9456
    %v9461 = vmul.f32 %v9457, %v9457
    %v9462 = vmul.f32 %v9458, %v9458
    %v9463 = vmul.f32 %v9459, %v9459
    %v9464 = vmul.f32 %v9460, %v9460
    %v9465 = vsel %vm46, %v9461, 0.0
    %9466 = vadd.xlane.f32.xlu0 %v9465
    %v9467 = vpop.xlane.xlu0 %9466
    %v9468 = vsel %vm46, %v9462, 0.0
    %9469 = vadd.xlane.f32.xlu0 %v9468
    %v9470 = vpop.xlane.xlu0 %9469
    %v9471 = vsel %vm46, %v9463, 0.0
    %9472 = vadd.xlane.f32.xlu0 %v9471
    %v9473 = vpop.xlane.xlu0 %9472
    %v9474 = vsel %vm46, %v9464, 0.0
    %9475 = vadd.xlane.f32.xlu0 %v9474
    %v9476 = vpop.xlane.xlu0 %9475
    %v9477 = vmul.f32 %v9467, %v509
    %v9478 = vmul.f32 %v9470, %v509
    %v9479 = vmul.f32 %v9473, %v509
    %v9480 = vmul.f32 %v9476, %v509
    %v9481 = vadd.f32 %v9477, 1e-05
    %v9482 = vadd.f32 %v9478, 1e-05
    %v9483 = vadd.f32 %v9479, 1e-05
    %v9484 = vadd.f32 %v9480, 1e-05
    %v9485 = vrsqrt.pop %v9481
    %v9486 = vrsqrt.pop %v9482
    %v9487 = vrsqrt.pop %v9483
    %v9488 = vrsqrt.pop %v9484
    %v9489 = vmul.f32 %v9457, %v9485
    %v9490 = vmul.f32 %v9458, %v9486
    %v9491 = vmul.f32 %v9459, %v9487
    %v9492 = vmul.f32 %v9460, %v9488
    %v9493 = vlaneseq
    %v9494 = vshrl.u32 %v9493, 7
    %v9495 = vsub.s32 7, %v9494
    %v9496 = vrot.slane %v36, %v9495
    %v9497 = vmul.f32 %v9489, %v9496
    %v9498 = vmul.f32 %v9490, %v9496
    %v9499 = vmul.f32 %v9491, %v9496
    %v9500 = vmul.f32 %v9492, %v9496
    %v9501 = vlaneseq
    %v9502 = vshrl.u32 %v9501, 7
    %v9503 = vsub.s32 0, %v9502
    %v9504 = vrot.slane %v37, %v9503
    %v9505 = vadd.f32 %v9497, %v9504
    %v9506 = vadd.f32 %v9498, %v9504
    %v9507 = vadd.f32 %v9499, %v9504
    %v9508 = vadd.f32 %v9500, %v9504
    %v9509 = vld [vmem:[%s5] sm:$0xff]
    %v9510 = vld [vmem:[%s5 + $0x8] sm:$0xff]
    %v9511 = vld [vmem:[%s5 + $0x10] sm:$0xff]
    %v9512 = vld [vmem:[%s5 + $0x18] sm:$0xff]
    %v9513 = vld [vmem:[%s6] sm:$0x1]
    %v9515 = vlaneseq
    %v9516 = vshrl.u32 %v9515, 7
    %v9517 = vsub.s32 0, %v9516
    %v9518 = vrot.slane %v9513, %v9517
    %v9521 = vsel %vm46, %v9505, 0
    %v9524 = vsel %vm46, %v9506, 0
    %v9527 = vsel %vm46, %v9507, 0
    %v9530 = vsel %vm46, %v9508, 0
    %9532 = vmatprep.subr.mxu0 0.0
    %9533 = vmatpush1.msra.mxu0 0.0
    %9534 = vmatprep.subr.mxu0 0.0
    %9535 = vmatpush1.msra.mxu0 0.0
    %9536 = vmatprep.subr.mxu0 0.0
    %9537 = vmatpush1.msra.mxu0 0.0
    %9538 = vmatprep.subr.mxu0 0.0
    %9539 = vmatpush1.msra.mxu0 0.0
    %9540 = vmatprep.subr.mxu0 0.0
    %9541 = vmatpush1.msra.mxu0 0.0
    %9542 = vmatprep.subr.mxu0 0.0
    %9543 = vmatpush1.msra.mxu0 0.0
    %9544 = vmatprep.subr.mxu0 0.0
    %9545 = vmatpush1.msra.mxu0 0.0
    %9546 = vmatprep.subr.mxu0 0.0
    %9547 = vmatpush1.msra.mxu0 0.0
    %9548 = vmatprep.subr.mxu0 0.0
    %9549 = vmatpush1.msra.mxu0 0.0
    %9550 = vmatprep.subr.mxu0 0.0
    %9551 = vmatpush1.msra.mxu0 0.0
    %9552 = vmatprep.subr.mxu0 0.0
    %9553 = vmatpush1.msra.mxu0 0.0
    %9554 = vmatprep.subr.mxu0 0.0
    %9555 = vmatpush1.msra.mxu0 0.0
    %9556 = vmatprep.subr.mxu0 0.0
    %9557 = vmatpush1.msra.mxu0 %v9512
    %9558 = vmatprep.subr.mxu0 0.0
    %9559 = vmatpush1.msra.mxu0 %v9511
    %9560 = vmatprep.subr.mxu0 0.0
    %9561 = vmatpush1.msra.mxu0 %v9510
    %9562 = vmatprep.subr.mxu0 0.0
    %9563 = vmatpush1.msra.mxu0 %v9509
    %9564 = vmatprep.subr.mxu0 0.0
    %9565 = vmatpush2.msra.mxu0 0.0
    %9566 = vmatprep.subr.mxu0 0.0
    %9567 = vmatpush2.msra.mxu0 0.0
    %9568 = vmatprep.subr.mxu0 0.0
    %9569 = vmatpush2.msra.mxu0 0.0
    %9570 = vmatprep.subr.mxu0 0.0
    %9571 = vmatpush2.msra.mxu0 0.0
    %9572 = vmatprep.subr.mxu0 0.0
    %9573 = vmatpush2.msra.mxu0 0.0
    %9574 = vmatprep.subr.mxu0 0.0
    %9575 = vmatpush2.msra.mxu0 0.0
    %9576 = vmatprep.subr.mxu0 0.0
    %9577 = vmatpush2.msra.mxu0 0.0
    %9578 = vmatprep.subr.mxu0 0.0
    %9579 = vmatpush2.msra.mxu0 0.0
    %9580 = vmatprep.subr.mxu0 0.0
    %9581 = vmatpush2.msra.mxu0 0.0
    %9582 = vmatprep.subr.mxu0 0.0
    %9583 = vmatpush2.msra.mxu0 0.0
    %9584 = vmatprep.subr.mxu0 0.0
    %9585 = vmatpush2.msra.mxu0 0.0
    %9586 = vmatprep.subr.mxu0 0.0
    %9587 = vmatpush2.msra.mxu0 0.0
    %9588 = vmatprep.subr.mxu0 0.0
    %9589 = vmatpush2.msra.mxu0 0.0
    %9590 = vmatprep.subr.mxu0 0.0
    %9591 = vmatpush2.msra.mxu0 0.0
    %9592 = vmatprep.subr.mxu0 0.0
    %9593 = vmatpush2.msra.mxu0 0.0
    %9594 = vmatprep.subr.mxu0 0.0
    %9595 = vmatpush2.msra.mxu0 0.0
    %9596 = vmatprep.mubr.f32.mxu0 0.0
    %9597 = vmatmul.mubr.f32.gmra.mxu0 %v9521
    %v9598 = vpop.f32.mrf.mxu0
    %v9599 = vadd.f32 %v9518, %v9598
    %v9600 = vpop.f32.mrf.mxu0
    %9601 = vmatprep.mubr.f32.mxu0 0.0
    %9602 = vmatmul.mubr.f32.gmra.mxu0 %v9524
    %v9603 = vpop.f32.mrf.mxu0
    %v9604 = vadd.f32 %v9518, %v9603
    %v9605 = vpop.f32.mrf.mxu0
    %9606 = vmatprep.mubr.f32.mxu0 0.0
    %9607 = vmatmul.mubr.f32.gmra.mxu0 %v9527
    %v9608 = vpop.f32.mrf.mxu0
    %v9609 = vadd.f32 %v9518, %v9608
    %v9610 = vpop.f32.mrf.mxu0
    %9611 = vmatprep.mubr.f32.mxu0 0.0
    %9612 = vmatmul.mubr.f32.gmra.mxu0 %v9530
    %v9613 = vpop.f32.mrf.mxu0
    %v9614 = vadd.f32 %v9518, %v9613
    %v9615 = vpop.f32.mrf.mxu0
    %9616 = vdwg.mxu0
    %v9617 = vmul.f32 %v9599, 0.5
    %v9618 = vmul.f32 %v9604, 0.5
    %v9619 = vmul.f32 %v9609, 0.5
    %v9620 = vmul.f32 %v9614, 0.5
    %v9621 = vmul.f32 %v9599, 0.044715
    %v9622 = vmul.f32 %v9604, 0.044715
    %v9623 = vmul.f32 %v9609, 0.044715
    %v9624 = vmul.f32 %v9614, 0.044715
    %v9625 = vmul.f32 %v9621, %v9599
    %v9626 = vmul.f32 %v9622, %v9604
    %v9627 = vmul.f32 %v9623, %v9609
    %v9628 = vmul.f32 %v9624, %v9614
    %v9629 = vmul.f32 %v9625, %v9599
    %v9630 = vmul.f32 %v9626, %v9604
    %v9631 = vmul.f32 %v9627, %v9609
    %v9632 = vmul.f32 %v9628, %v9614
    %v9633 = vadd.f32 %v9599, %v9629
    %v9634 = vadd.f32 %v9604, %v9630
    %v9635 = vadd.f32 %v9609, %v9631
    %v9636 = vadd.f32 %v9614, %v9632
    %v9637 = vmul.f32 %v9633, 0.7978846
    %v9638 = vmul.f32 %v9634, 0.7978846
    %v9639 = vmul.f32 %v9635, 0.7978846
    %v9640 = vmul.f32 %v9636, 0.7978846
    %v9641 = vtanh.pop %v9637
    %v9642 = vtanh.pop %v9638
    %v9643 = vtanh.pop %v9639
    %v9644 = vtanh.pop %v9640
    %v9645 = vadd.f32 %v9641, 1.0
    %v9646 = vadd.f32 %v9642, 1.0
    %v9647 = vadd.f32 %v9643, 1.0
    %v9648 = vadd.f32 %v9644, 1.0
    %v9649 = vmul.f32 %v9617, %v9645
    %v9650 = vmul.f32 %v9618, %v9646
    %v9651 = vmul.f32 %v9619, %v9647
    %v9652 = vmul.f32 %v9620, %v9648
    %v9653 = vld [vmem:[%s7] sm:$0xff]
    %v9654 = vld [vmem:[%s7 + $0x8] sm:$0xff]
    %v9655 = vld [vmem:[%s7 + $0x10] sm:$0xff]
    %v9656 = vld [vmem:[%s7 + $0x18] sm:$0xff]
    %v9657 = vld [vmem:[%s7 + $0x20] sm:$0xff]
    %v9658 = vld [vmem:[%s7 + $0x28] sm:$0xff]
    %v9659 = vld [vmem:[%s7 + $0x30] sm:$0xff]
    %v9660 = vld [vmem:[%s7 + $0x38] sm:$0xff]
    %v9661 = vld [vmem:[%s7 + $0x40] sm:$0xff]
    %v9662 = vld [vmem:[%s7 + $0x48] sm:$0xff]
    %v9663 = vld [vmem:[%s7 + $0x50] sm:$0xff]
    %v9664 = vld [vmem:[%s7 + $0x58] sm:$0xff]
    %v9665 = vld [vmem:[%s7 + $0x60] sm:$0xff]
    %v9666 = vld [vmem:[%s7 + $0x68] sm:$0xff]
    %v9667 = vld [vmem:[%s7 + $0x70] sm:$0xff]
    %v9668 = vld [vmem:[%s7 + $0x78] sm:$0xff]
    %v9669 = vlaneseq
    %v9670 = vshrl.u32 %v9669, 7
    %v9671 = vsub.s32 1, %v9670
    %v9672 = vrot.slane %v37, %v9671
    %9673 = vmatprep.subr.mxu0 0.0
    %9674 = vmatpush1.msra.mxu0 %v9668
    %9675 = vmatprep.subr.mxu0 0.0
    %9676 = vmatpush1.msra.mxu0 %v9667
    %9677 = vmatprep.subr.mxu0 0.0
    %9678 = vmatpush1.msra.mxu0 %v9666
    %9679 = vmatprep.subr.mxu0 0.0
    %9680 = vmatpush1.msra.mxu0 %v9665
    %9681 = vmatprep.subr.mxu0 0.0
    %9682 = vmatpush1.msra.mxu0 %v9664
    %9683 = vmatprep.subr.mxu0 0.0
    %9684 = vmatpush1.msra.mxu0 %v9663
    %9685 = vmatprep.subr.mxu0 0.0
    %9686 = vmatpush1.msra.mxu0 %v9662
    %9687 = vmatprep.subr.mxu0 0.0
    %9688 = vmatpush1.msra.mxu0 %v9661
    %9689 = vmatprep.subr.mxu0 0.0
    %9690 = vmatpush1.msra.mxu0 %v9660
    %9691 = vmatprep.subr.mxu0 0.0
    %9692 = vmatpush1.msra.mxu0 %v9659
    %9693 = vmatprep.subr.mxu0 0.0
    %9694 = vmatpush1.msra.mxu0 %v9658
    %9695 = vmatprep.subr.mxu0 0.0
    %9696 = vmatpush1.msra.mxu0 %v9657
    %9697 = vmatprep.subr.mxu0 0.0
    %9698 = vmatpush1.msra.mxu0 %v9656
    %9699 = vmatprep.subr.mxu0 0.0
    %9700 = vmatpush1.msra.mxu0 %v9655
    %9701 = vmatprep.subr.mxu0 0.0
    %9702 = vmatpush1.msra.mxu0 %v9654
    %9703 = vmatprep.subr.mxu0 0.0
    %9704 = vmatpush1.msra.mxu0 %v9653
    %9705 = vmatprep.subr.mxu0 0.0
    %9706 = vmatpush2.msra.mxu0 0.0
    %9707 = vmatprep.subr.mxu0 0.0
    %9708 = vmatpush2.msra.mxu0 0.0
    %9709 = vmatprep.subr.mxu0 0.0
    %9710 = vmatpush2.msra.mxu0 0.0
    %9711 = vmatprep.subr.mxu0 0.0
    %9712 = vmatpush2.msra.mxu0 0.0
    %9713 = vmatprep.subr.mxu0 0.0
    %9714 = vmatpush2.msra.mxu0 0.0
    %9715 = vmatprep.subr.mxu0 0.0
    %9716 = vmatpush2.msra.mxu0 0.0
    %9717 = vmatprep.subr.mxu0 0.0
    %9718 = vmatpush2.msra.mxu0 0.0
    %9719 = vmatprep.subr.mxu0 0.0
    %9720 = vmatpush2.msra.mxu0 0.0
    %9721 = vmatprep.subr.mxu0 0.0
    %9722 = vmatpush2.msra.mxu0 0.0
    %9723 = vmatprep.subr.mxu0 0.0
    %9724 = vmatpush2.msra.mxu0 0.0
    %9725 = vmatprep.subr.mxu0 0.0
    %9726 = vmatpush2.msra.mxu0 0.0
    %9727 = vmatprep.subr.mxu0 0.0
    %9728 = vmatpush2.msra.mxu0 0.0
    %9729 = vmatprep.subr.mxu0 0.0
    %9730 = vmatpush2.msra.mxu0 0.0
    %9731 = vmatprep.subr.mxu0 0.0
    %9732 = vmatpush2.msra.mxu0 0.0
    %9733 = vmatprep.subr.mxu0 0.0
    %9734 = vmatpush2.msra.mxu0 0.0
    %9735 = vmatprep.subr.mxu0 0.0
    %9736 = vmatpush2.msra.mxu0 0.0
    %9737 = vmatprep.mubr.f32.mxu0 0.0
    %9738 = vmatmul.mubr.f32.gmra.mxu0 %v9649
    %v9739 = vpop.f32.mrf.mxu0
    %v9740 = vadd.f32 %v9672, %v9739
    %v9741 = vpop.f32.mrf.mxu0
    %9742 = vmatprep.mubr.f32.mxu0 0.0
    %9743 = vmatmul.mubr.f32.gmra.mxu0 %v9650
    %v9744 = vpop.f32.mrf.mxu0
    %v9745 = vadd.f32 %v9672, %v9744
    %v9746 = vpop.f32.mrf.mxu0
    %9747 = vmatprep.mubr.f32.mxu0 0.0
    %9748 = vmatmul.mubr.f32.gmra.mxu0 %v9651
    %v9749 = vpop.f32.mrf.mxu0
    %v9750 = vadd.f32 %v9672, %v9749
    %v9751 = vpop.f32.mrf.mxu0
    %9752 = vmatprep.mubr.f32.mxu0 0.0
    %9753 = vmatmul.mubr.f32.gmra.mxu0 %v9652
    %v9754 = vpop.f32.mrf.mxu0
    %v9755 = vadd.f32 %v9672, %v9754
    %v9756 = vpop.f32.mrf.mxu0
    %9757 = vdwg.mxu0
    %v9758 = vadd.f32 %v9505, %v9740
    %v9759 = vadd.f32 %v9506, %v9745
    %v9760 = vadd.f32 %v9507, %v9750
    %v9761 = vadd.f32 %v9508, %v9755
    %9762 = vst.msk [vmem:[#allocation2] sm:$0xff] %vm46, %v9758
    %9763 = vst.msk [vmem:[#allocation2 + $0x8] sm:$0xff] %vm46, %v9759
    %9764 = vst.msk [vmem:[#allocation2 + $0x10] sm:$0xff] %vm46, %v9760
    %9765 = vst.msk [vmem:[#allocation2 + $0x18] sm:$0xff] %vm46, %v9761
    // Predicated region
    $region34: #{spatial_attention_block.1} parent=1 // pred_check
      _
    $region35: #{spatial_attention_block.1} parent=1 // pred_check_branch
      %9767 = sbr.rel (0) target = $region37
    $region36: #{spatial_attention_block.1} parent=1 // pred_region
      %s9769 = ssub.s32 512, 512
      %9770 = vsyncadd [#allocation3], %s9769
      %s9771 = sshll.u32 [#allocation2], 4
      %s9772 = int_to_ptr.vmem [resolvable:$true] %s9771
      %9777 = dma.vmem_to_hbm [thread:$0]  %s9772, 512, %s8, [#allocation3], 128, 128, 8
    $region37: #{spatial_attention_block.1} parent=1 // pred_fallthru
      _
    // Predicated region
    $region38: #{spatial_attention_block.1} parent=1 // pred_check
      _
    $region39: #{spatial_attention_block.1} parent=1 // pred_check_branch
      %9779 = sbr.rel (0) target = $region41
    $region40: #{spatial_attention_block.1} parent=1 // pred_region
      _
    $region41: #{spatial_attention_block.1} parent=1 // pred_fallthru
      _
    // Predicated region
    $region42: #{spatial_attention_block.1} parent=1 // pred_check
      _
    $region43: #{spatial_attention_block.1} parent=1 // pred_check_branch
      %9781 = sbr.rel (0) target = $region45
    $region44: #{spatial_attention_block.1} parent=1 // pred_region
      %9782 = dma.done [#allocation3], 512
    $region45: #{spatial_attention_block.1} parent=1 // pred_fallthru
      _
    // Predicated region
    $region46: #{spatial_attention_block.1} parent=1 // pred_check
      _
    $region47: #{spatial_attention_block.1} parent=1 // pred_check_branch
      %9784 = sbr.rel (0) target = $region49
    $region48: #{spatial_attention_block.1} parent=1 // pred_region
      _
    $region49: #{spatial_attention_block.1} parent=1 // pred_fallthru
      _
    %9785 = vsyncpa [#allocation3], 1

</llo_original>
